<compile_context>
chip_gen: v5e
topology: v5e:2x2
jax: 0.10.0
libtpu: 0.0.40
codegen_flags: <defaults>
</compile_context>

<pallas_src>
import numpy as np

import jax
import jax.numpy as jnp
from jax import lax
from jax.experimental import pallas as pl
from jax.experimental.pallas import tpu as pltpu

_LN_EPS = 1e-5
_SQRT_2_OVER_PI = 0.7978845608028654


def _gelu_tanh(x):
    # TODO(synk): PyTorch's 'gelu' activation is the exact erf form; the tanh
    # approximation is used here (and in the reference) for a safe TPU lowering.
    return 0.5 * x * (1.0 + jnp.tanh(_SQRT_2_OVER_PI * (x + 0.044715 * x * x * x)))


def _encoder_kernel(xprof_ref,   # VMEM (TB*T, Din)      flattened profile block
                    pos_ref,     # VMEM (TB*T, H)        positional embeddings
                    maskb_ref,   # VMEM (TB, T)          0 / -1e30 key-padding bias
                    ew_ref,      # VMEM (Din, H)         expand weight (x @ W form)
                    wqkv_ref,    # VMEM (L*3*NH, H, HD)  per-head q/k/v weights
                    bqkv_ref,    # VMEM (L*3*NH, 1, HD)  per-head q/k/v biases
                    wo_ref,      # VMEM (L*NH, HD, H)    per-head out-proj weights
                    bo_ref,      # VMEM (L, 1, H)        out-proj bias
                    ln_ref,      # VMEM (L*4, 1, H)      [ln1_g, ln1_b, ln2_g, ln2_b]
                    w1_ref,      # VMEM (L, H, F)
                    b1_ref,      # VMEM (L, 1, F)
                    w2_ref,      # VMEM (L, F, H)
                    b2_ref,      # VMEM (L, 1, H)
                    out_ref):    # VMEM (TB, H)
    TB, T = maskb_ref.shape
    H = ew_ref.shape[1]
    HD = wqkv_ref.shape[2]
    NH = H // HD
    L = w1_ref.shape[0]
    N = TB * T
    scale = float(HD) ** -0.5

    def layer_norm(v, idx):
        g = ln_ref[idx]                    # (1, H)
        b = ln_ref[idx + 1]                # (1, H)
        mu = jnp.mean(v, axis=-1, keepdims=True)
        var = jnp.mean(jnp.square(v - mu), axis=-1, keepdims=True)
        return (v - mu) * lax.rsqrt(var + _LN_EPS) * g + b

    # ---- expand Linear(dim_in -> H, bias=False) + positional embedding -----
    x = (jnp.dot(xprof_ref[...], ew_ref[...],
                 preferred_element_type=jnp.float32) + pos_ref[...])     # (N, H)

    mask_bias = maskb_ref[...][:, None, :]                                # (TB, 1, T)

    for l in range(L):                          # static -> fully unrolled
        # ---- multi-head self-attention (post-norm; eval-mode dropout = id) --
        attn = jnp.zeros((N, H), jnp.float32)
        for h in range(NH):                     # static: heads on non-lane axis
            qi = (l * 3 + 0) * NH + h
            ki = (l * 3 + 1) * NH + h
            vi = (l * 3 + 2) * NH + h
            q = jnp.dot(x, wqkv_ref[qi], preferred_element_type=jnp.float32) + bqkv_ref[qi]
            k = jnp.dot(x, wqkv_ref[ki], preferred_element_type=jnp.float32) + bqkv_ref[ki]
            v = jnp.dot(x, wqkv_ref[vi], preferred_element_type=jnp.float32) + bqkv_ref[vi]
            qb = q.reshape(TB, T, HD)
            kb = k.reshape(TB, T, HD)
            vb = v.reshape(TB, T, HD)
            s = jnp.einsum('bqd,bkd->bqk', qb, kb,
                           preferred_element_type=jnp.float32) * scale + mask_bias
            s = s - jnp.max(s, axis=-1, keepdims=True)
            p = jnp.exp(s)
            p = p / jnp.sum(p, axis=-1, keepdims=True)
            ctx = jnp.einsum('bqk,bkd->bqd', p, vb,
                             preferred_element_type=jnp.float32).reshape(N, HD)
            attn = attn + jnp.dot(ctx, wo_ref[l * NH + h],
                                  preferred_element_type=jnp.float32)
        attn = attn + bo_ref[l]
        x = layer_norm(x + attn, 4 * l + 0)

        # ---- feed-forward ----------------------------------------------------
        h1 = jnp.dot(x, w1_ref[l], preferred_element_type=jnp.float32) + b1_ref[l]
        h1 = _gelu_tanh(h1)
        h2 = jnp.dot(h1, w2_ref[l], preferred_element_type=jnp.float32) + b2_ref[l]
        x = layer_norm(x + h2, 4 * l + 2)

    # token 0 of every sequence (the prepended row from tokenize).
    out_ref[...] = x.reshape(TB, T, H)[:, 0, :].astype(out_ref.dtype)


def profile_transformer_forward(profile, time_idx, padding_mask, profile_len,
                                params, num_heads):
    """profile: (B,T,Din) f32; time_idx: (B,T) i32; padding_mask: (B,T) bool;
    profile_len: (B,1) f32.  Returns (B, H+1) = [x[:,0] | profile_len / T]."""
    B, T, Din = profile.shape
    expand_w = params['expand_w']
    H = expand_w.shape[1]
    L, _, F = params['w1'].shape
    NH = num_heads
    HD = H // NH

    # positional-embedding gather (padding_idx row of the table is zero).
    pos = jnp.take(params['pos_table'], time_idx, axis=0)              # (B, T, H)
    mask_bias = jnp.where(padding_mask, jnp.float32(-1e30), jnp.float32(0.0))

    # pad batch to the sublane width; padded rows are unmasked zeros so the
    # in-kernel softmax stays finite (they are sliced off below).
    TB = 8
    B_pad = ((B + TB - 1) // TB) * TB
    pad = B_pad - B
    profile_p = jnp.pad(profile, ((0, pad), (0, 0), (0, 0)))
    pos_p = jnp.pad(pos, ((0, pad), (0, 0), (0, 0)))
    mask_p = jnp.pad(mask_bias, ((0, pad), (0, 0)))

    # flatten (batch, time) so every projection is a single dense 2-D matmul.
    profile_flat = profile_p.reshape(B_pad * T, Din)
    pos_flat = pos_p.reshape(B_pad * T, H)

    # re-layout weights: head index moved to a leading (non-lane) axis.
    wqkv = jnp.stack([params['wq'], params['wk'], params['wv']], axis=1)   # (L,3,H,H)
    wqkv = (wqkv.reshape(L, 3, H, NH, HD)
                 .transpose(0, 1, 3, 2, 4)
                 .reshape(L * 3 * NH, H, HD))
    bqkv = jnp.stack([params['bq'], params['bk'], params['bv']],
                     axis=1).reshape(L * 3 * NH, 1, HD)
    wo = params['wo'].reshape(L * NH, HD, H)
    bo = params['bo'].reshape(L, 1, H)
    ln = jnp.stack([params['ln1_g'], params['ln1_b'],
                    params['ln2_g'], params['ln2_b']],
                   axis=1).reshape(L * 4, 1, H)
    w1 = params['w1']
    b1 = params['b1'].reshape(L, 1, F)
    w2 = params['w2']
    b2 = params['b2'].reshape(L, 1, H)

    out = pl.pallas_call(
        _encoder_kernel,
        out_shape=jax.ShapeDtypeStruct((B_pad, H), jnp.float32),
        grid_spec=pltpu.PrefetchScalarGridSpec(
            num_scalar_prefetch=0,
            grid=(B_pad // TB,),
            in_specs=[
                pl.BlockSpec((TB * T, Din), lambda i: (i, 0)),
                pl.BlockSpec((TB * T, H), lambda i: (i, 0)),
                pl.BlockSpec((TB, T), lambda i: (i, 0)),
                pl.BlockSpec((Din, H), lambda i: (0, 0)),
                pl.BlockSpec((L * 3 * NH, H, HD), lambda i: (0, 0, 0)),
                pl.BlockSpec((L * 3 * NH, 1, HD), lambda i: (0, 0, 0)),
                pl.BlockSpec((L * NH, HD, H), lambda i: (0, 0, 0)),
                pl.BlockSpec((L, 1, H), lambda i: (0, 0, 0)),
                pl.BlockSpec((L * 4, 1, H), lambda i: (0, 0, 0)),
                pl.BlockSpec((L, H, F), lambda i: (0, 0, 0)),
                pl.BlockSpec((L, 1, F), lambda i: (0, 0, 0)),
                pl.BlockSpec((L, F, H), lambda i: (0, 0, 0)),
                pl.BlockSpec((L, 1, H), lambda i: (0, 0, 0)),
            ],
            out_specs=pl.BlockSpec((TB, H), lambda i: (i, 0)),
        ),
        compiler_params=pltpu.CompilerParams(
            dimension_semantics=("parallel",)),
    )(profile_flat, pos_flat, mask_p, expand_w,
      wqkv, bqkv, wo, bo, ln, w1, b1, w2, b2)

    sel = out[:B]                                                 # (B, H)
    meta = profile_len.astype(jnp.float32) / jnp.float32(T)       # metadata column
    return jnp.concatenate([sel, meta], axis=1)                   # (B, H + 1)


# ------------------------------ pure-JAX reference ---------------------------
def reference_forward(profile, time_idx, padding_mask, profile_len,
                      params, num_heads):
    B, T, Din = profile.shape
    expand_w = params['expand_w']
    H = expand_w.shape[1]
    L, _, F = params['w1'].shape
    NH = num_heads
    HD = H // NH

    x = profile @ expand_w + jnp.take(params['pos_table'], time_idx, axis=0)
    mask_bias = jnp.where(padding_mask, -1e30, 0.0)[:, None, None, :]  # (B,1,1,T)

    def layer_norm(v, g, b):
        mu = v.mean(-1, keepdims=True)
        var = ((v - mu) ** 2).mean(-1, keepdims=True)
        return (v - mu) / jnp.sqrt(var + _LN_EPS) * g + b

    for l in range(L):
        def split_heads(w, bvec):
            y = x @ w[l] + bvec[l]
            return y.reshape(B, T, NH, HD).transpose(0, 2, 1, 3)   # (B,NH,T,HD)
        q = split_heads(params['wq'], params['bq'])
        k = split_heads(params['wk'], params['bk'])
        v = split_heads(params['wv'], params['bv'])
        s = jnp.einsum('bhqd,bhkd->bhqk', q, k) / np.sqrt(HD) + mask_bias
        p = jax.nn.softmax(s, axis=-1)
        ctx = jnp.einsum('bhqk,bhkd->bhqd', p, v).transpose(0, 2, 1, 3).reshape(B, T, H)
        attn = ctx @ params['wo'][l] + params['bo'][l]
        x = layer_norm(x + attn, params['ln1_g'][l], params['ln1_b'][l])
        h1 = _gelu_tanh(x @ params['w1'][l] + params['b1'][l])
        h2 = h1 @ params['w2'][l] + params['b2'][l]
        x = layer_norm(x + h2, params['ln2_g'][l], params['ln2_b'][l])

    sel = x[:, 0]
    meta = profile_len.astype(jnp.float32) / jnp.float32(T)
    return jnp.concatenate([sel, meta], axis=1)


if __name__ == "__main__":
    # Small shapes consistent with ProfileTransformer(dim_in=4, dim_hidden=32,
    # target_size=8, num_head=4, num_layers=2, dim_feedforward=64).
    B, T, Din, H, NH, L, F = 2, 8, 4, 32, 4, 2, 64
    V = 8 + 2                      # target_size + 2
    PAD_IDX = V - 1                # Embedding(padding_idx=-1) -> V - 1

    key = jax.random.PRNGKey(0)
    keys = jax.random.split(key, 20)
    s = 1.0 / np.sqrt(H)

    def u(k, shape, scale=s):
        return jax.random.uniform(k, shape, jnp.float32, -scale, scale)

    pos_table = u(keys[1], (V, H)).at[PAD_IDX].set(0.0)   # padding row is zero

    params = dict(
        expand_w=u(keys[0], (Din, H)),
        pos_table=pos_table,
        wq=u(keys[2], (L, H, H)), bq=u(keys[3], (L, H)),
        wk=u(keys[4], (L, H, H)), bk=u(keys[5], (L, H)),
        wv=u(keys[6], (L, H, H)), bv=u(keys[7], (L, H)),
        wo=u(keys[8], (L, H, H)), bo=u(keys[9], (L, H)),
        ln1_g=jnp.ones((L, H), jnp.float32) + 0.1 * u(keys[10], (L, H), 1.0),
        ln1_b=0.1 * u(keys[11], (L, H), 1.0),
        w1=u(keys[12], (L, H, F)), b1=u(keys[13], (L, F)),
        w2=u(keys[14], (L, F, H), 1.0 / np.sqrt(F)), b2=u(keys[15], (L, H)),
        ln2_g=jnp.ones((L, H), jnp.float32) + 0.1 * u(keys[16], (L, H), 1.0),
        ln2_b=0.1 * u(keys[17], (L, H), 1.0),
    )

    # Inputs emulating tokenize(): a zero row prepended, time = [0..len],
    # padded positions marked True in padding_mask.
    lengths = np.array([T, 5])                         # valid tokens (incl. prepended row)
    time_np = np.full((B, T), PAD_IDX, np.int32)
    mask_np = np.ones((B, T), bool)
    prof = np.asarray(jax.random.normal(keys[18], (B, T, Din), jnp.float32)).copy()
    for b in range(B):
        time_np[b, :lengths[b]] = np.arange(lengths[b])
        mask_np[b, :lengths[b]] = False
        prof[b, lengths[b]:] = 0.0
    prof[:, 0, :] = 0.0                                # prepended zero row (F.pad)

    profile = jnp.asarray(prof)
    time_idx = jnp.asarray(time_np)
    padding_mask = jnp.asarray(mask_np)
    profile_len = jnp.asarray((lengths - 1).astype(np.float32))[:, None]   # (B, 1)

    out = profile_transformer_forward(profile, time_idx, padding_mask,
                                      profile_len, params, NH)
    out = jax.block_until_ready(out)
    ref = reference_forward(profile, time_idx, padding_mask,
                            profile_len, params, NH)

    assert out.shape == (B, H + 1), out.shape
    max_diff = float(np.max(np.abs(np.asarray(out) - np.asarray(ref))))
    assert np.allclose(np.asarray(out), np.asarray(ref), atol=1e-2, rtol=1e-2), (
        "max diff %g" % max_diff)

    print("KERNEL_OK")
</pallas_src>

<mosaic_0001>
module attributes {stable_mosaic.version = 11 : i64} {
  func.func @_encoder_kernel(%arg0: i32, %arg1: memref<64x4xf32, #tpu.memory_space<vmem>>, %arg2: memref<64x32xf32, #tpu.memory_space<vmem>>, %arg3: memref<8x8xf32, #tpu.memory_space<vmem>>, %arg4: memref<4x32xf32, #tpu.memory_space<vmem>>, %arg5: memref<24x32x8xf32, #tpu.memory_space<vmem>>, %arg6: memref<24x1x8xf32, #tpu.memory_space<vmem>>, %arg7: memref<8x8x32xf32, #tpu.memory_space<vmem>>, %arg8: memref<2x1x32xf32, #tpu.memory_space<vmem>>, %arg9: memref<8x1x32xf32, #tpu.memory_space<vmem>>, %arg10: memref<2x32x64xf32, #tpu.memory_space<vmem>>, %arg11: memref<2x1x64xf32, #tpu.memory_space<vmem>>, %arg12: memref<2x64x32xf32, #tpu.memory_space<vmem>>, %arg13: memref<2x1x32xf32, #tpu.memory_space<vmem>>, %arg14: memref<8x32xf32, #tpu.memory_space<vmem>>) attributes {dimension_semantics = [#tpu.dimension_semantics<parallel>], iteration_bounds = array<i64: 1>, scalar_prefetch = 0 : i64, scratch_operands = 0 : i64, tpu.core_type = #tpu.core_type<tc>, window_params = [{transform_indices = @transform_0, window_bounds = array<i64: 64, 4>}, {transform_indices = @transform_1, window_bounds = array<i64: 64, 32>}, {transform_indices = @transform_2, window_bounds = array<i64: 8, 8>}, {pipeline_mode = #tpu.pipeline_mode<synchronous>, transform_indices = @transform_3, window_bounds = array<i64: 4, 32>}, {pipeline_mode = #tpu.pipeline_mode<synchronous>, transform_indices = @transform_4, window_bounds = array<i64: 24, 32, 8>}, {pipeline_mode = #tpu.pipeline_mode<synchronous>, transform_indices = @transform_5, window_bounds = array<i64: 24, 1, 8>}, {pipeline_mode = #tpu.pipeline_mode<synchronous>, transform_indices = @transform_6, window_bounds = array<i64: 8, 8, 32>}, {pipeline_mode = #tpu.pipeline_mode<synchronous>, transform_indices = @transform_7, window_bounds = array<i64: 2, 1, 32>}, {pipeline_mode = #tpu.pipeline_mode<synchronous>, transform_indices = @transform_8, window_bounds = array<i64: 8, 1, 32>}, {pipeline_mode = #tpu.pipeline_mode<synchronous>, transform_indices = @transform_9, window_bounds = array<i64: 2, 32, 64>}, {pipeline_mode = #tpu.pipeline_mode<synchronous>, transform_indices = @transform_10, window_bounds = array<i64: 2, 1, 64>}, {pipeline_mode = #tpu.pipeline_mode<synchronous>, transform_indices = @transform_11, window_bounds = array<i64: 2, 64, 32>}, {pipeline_mode = #tpu.pipeline_mode<synchronous>, transform_indices = @transform_12, window_bounds = array<i64: 2, 1, 32>}, {transform_indices = @transform_13, window_bounds = array<i64: 8, 32>}]} {
    %c0 = arith.constant 0 : index
    %c0_0 = arith.constant 0 : index
    %0 = vector.load %arg1[%c0, %c0_0] : memref<64x4xf32, #tpu.memory_space<vmem>>, vector<64x4xf32>
    %c0_1 = arith.constant 0 : index
    %c0_2 = arith.constant 0 : index
    %1 = vector.load %arg4[%c0_1, %c0_2] : memref<4x32xf32, #tpu.memory_space<vmem>>, vector<4x32xf32>
    %cst = arith.constant dense<0.000000e+00> : vector<64x32xf32>
    %2 = tpu.matmul %0, %1, %cst {dimension_numbers = #tpu.dot_dimension_numbers<[1], [0], [0], [1], [0, 0, 1, 1], [], []>} : vector<64x4xf32>, vector<4x32xf32>, vector<64x32xf32> -> vector<64x32xf32>
    %c0_3 = arith.constant 0 : index
    %c0_4 = arith.constant 0 : index
    %3 = vector.load %arg2[%c0_3, %c0_4] : memref<64x32xf32, #tpu.memory_space<vmem>>, vector<64x32xf32>
    %4 = arith.addf %2, %3 : vector<64x32xf32>
    %c0_5 = arith.constant 0 : index
    %c0_6 = arith.constant 0 : index
    %5 = vector.load %arg3[%c0_5, %c0_6] : memref<8x8xf32, #tpu.memory_space<vmem>>, vector<8x8xf32>
    %6 = vector.shape_cast %5 : vector<8x8xf32> to vector<8x1x8xf32>
    %cst_7 = arith.constant 0.000000e+00 : f32
    %7 = vector.broadcast %cst_7 : f32 to vector<64x32xf32>
    %c0_8 = arith.constant 0 : index
    %c0_9 = arith.constant 0 : index
    %c0_10 = arith.constant 0 : index
    %8 = vector.load %arg5[%c0_8, %c0_9, %c0_10] : memref<24x32x8xf32, #tpu.memory_space<vmem>>, vector<1x32x8xf32>
    %9 = vector.shape_cast %8 : vector<1x32x8xf32> to vector<32x8xf32>
    %cst_11 = arith.constant dense<0.000000e+00> : vector<64x8xf32>
    %10 = tpu.matmul %4, %9, %cst_11 {dimension_numbers = #tpu.dot_dimension_numbers<[1], [0], [0], [1], [0, 0, 1, 1], [], []>} : vector<64x32xf32>, vector<32x8xf32>, vector<64x8xf32> -> vector<64x8xf32>
    %c0_12 = arith.constant 0 : index
    %c0_13 = arith.constant 0 : index
    %c0_14 = arith.constant 0 : index
    %11 = vector.load %arg6[%c0_12, %c0_13, %c0_14] : memref<24x1x8xf32, #tpu.memory_space<vmem>>, vector<1x1x8xf32>
    %12 = vector.shape_cast %11 : vector<1x1x8xf32> to vector<1x8xf32>
    %13 = vector.broadcast %12 : vector<1x8xf32> to vector<64x8xf32>
    %14 = arith.addf %10, %13 : vector<64x8xf32>
    %c4 = arith.constant 4 : index
    %c0_15 = arith.constant 0 : index
    %c0_16 = arith.constant 0 : index
    %15 = vector.load %arg5[%c4, %c0_15, %c0_16] : memref<24x32x8xf32, #tpu.memory_space<vmem>>, vector<1x32x8xf32>
    %16 = vector.shape_cast %15 : vector<1x32x8xf32> to vector<32x8xf32>
    %cst_17 = arith.constant dense<0.000000e+00> : vector<64x8xf32>
    %17 = tpu.matmul %4, %16, %cst_17 {dimension_numbers = #tpu.dot_dimension_numbers<[1], [0], [0], [1], [0, 0, 1, 1], [], []>} : vector<64x32xf32>, vector<32x8xf32>, vector<64x8xf32> -> vector<64x8xf32>
    %c4_18 = arith.constant 4 : index
    %c0_19 = arith.constant 0 : index
    %c0_20 = arith.constant 0 : index
    %18 = vector.load %arg6[%c4_18, %c0_19, %c0_20] : memref<24x1x8xf32, #tpu.memory_space<vmem>>, vector<1x1x8xf32>
    %19 = vector.shape_cast %18 : vector<1x1x8xf32> to vector<1x8xf32>
    %20 = vector.broadcast %19 : vector<1x8xf32> to vector<64x8xf32>
    %21 = arith.addf %17, %20 : vector<64x8xf32>
    %c8 = arith.constant 8 : index
    %c0_21 = arith.constant 0 : index
    %c0_22 = arith.constant 0 : index
    %22 = vector.load %arg5[%c8, %c0_21, %c0_22] : memref<24x32x8xf32, #tpu.memory_space<vmem>>, vector<1x32x8xf32>
    %23 = vector.shape_cast %22 : vector<1x32x8xf32> to vector<32x8xf32>
    %cst_23 = arith.constant dense<0.000000e+00> : vector<64x8xf32>
    %24 = tpu.matmul %4, %23, %cst_23 {dimension_numbers = #tpu.dot_dimension_numbers<[1], [0], [0], [1], [0, 0, 1, 1], [], []>} : vector<64x32xf32>, vector<32x8xf32>, vector<64x8xf32> -> vector<64x8xf32>
    %c8_24 = arith.constant 8 : index
    %c0_25 = arith.constant 0 : index
    %c0_26 = arith.constant 0 : index
    %25 = vector.load %arg6[%c8_24, %c0_25, %c0_26] : memref<24x1x8xf32, #tpu.memory_space<vmem>>, vector<1x1x8xf32>
    %26 = vector.shape_cast %25 : vector<1x1x8xf32> to vector<1x8xf32>
    %27 = vector.broadcast %26 : vector<1x8xf32> to vector<64x8xf32>
    %28 = arith.addf %24, %27 : vector<64x8xf32>
    %29 = vector.shape_cast %14 : vector<64x8xf32> to vector<8x8x8xf32>
    %30 = vector.shape_cast %21 : vector<64x8xf32> to vector<8x8x8xf32>
    %31 = vector.shape_cast %28 : vector<64x8xf32> to vector<8x8x8xf32>
    "tpu.trace_start"() <{level = 10 : i32, message = "bqd,bkd->bqk"}> : () -> ()
    %cst_27 = arith.constant dense<0.000000e+00> : vector<8x8x8xf32>
    %32 = tpu.matmul %29, %30, %cst_27 {dimension_numbers = #tpu.dot_dimension_numbers<[2], [2], [1], [1], [0, 0, 0, 1, 1, 1], [0], [0]>} : vector<8x8x8xf32>, vector<8x8x8xf32>, vector<8x8x8xf32> -> vector<8x8x8xf32>
    "tpu.trace_stop"() : () -> ()
    %cst_28 = arith.constant 0.353553385 : f32
    %33 = vector.broadcast %cst_28 : f32 to vector<8x8x8xf32>
    %34 = arith.mulf %32, %33 : vector<8x8x8xf32>
    %35 = vector.broadcast %6 : vector<8x1x8xf32> to vector<8x8x8xf32>
    %36 = arith.addf %34, %35 : vector<8x8x8xf32>
    %cst_29 = arith.constant dense<0xFF800000> : vector<8x8xf32>
    %37 = vector.multi_reduction <maximumf>, %36, %cst_29 [2] : vector<8x8x8xf32> to vector<8x8xf32>
    %38 = vector.shape_cast %37 : vector<8x8xf32> to vector<8x8x1xf32>
    %39 = vector.broadcast %38 : vector<8x8x1xf32> to vector<8x8x8xf32>
    %40 = arith.subf %36, %39 : vector<8x8x8xf32>
    %41 = math.exp %40 : vector<8x8x8xf32>
    %cst_30 = arith.constant dense<0.000000e+00> : vector<8x8xf32>
    %42 = vector.multi_reduction <add>, %41, %cst_30 [2] : vector<8x8x8xf32> to vector<8x8xf32>
    %43 = vector.shape_cast %42 : vector<8x8xf32> to vector<8x8x1xf32>
    %44 = vector.broadcast %43 : vector<8x8x1xf32> to vector<8x8x8xf32>
    %45 = arith.divf %41, %44 : vector<8x8x8xf32>
    "tpu.trace_start"() <{level = 10 : i32, message = "bqk,bkd->bqd"}> : () -> ()
    %cst_31 = arith.constant dense<0.000000e+00> : vector<8x8x8xf32>
    %46 = tpu.matmul %45, %31, %cst_31 {dimension_numbers = #tpu.dot_dimension_numbers<[2], [1], [1], [2], [0, 0, 0, 1, 1, 2], [0], [0]>} : vector<8x8x8xf32>, vector<8x8x8xf32>, vector<8x8x8xf32> -> vector<8x8x8xf32>
    "tpu.trace_stop"() : () -> ()
    %47 = vector.shape_cast %46 : vector<8x8x8xf32> to vector<64x8xf32>
    %c0_32 = arith.constant 0 : index
    %c0_33 = arith.constant 0 : index
    %c0_34 = arith.constant 0 : index
    %48 = vector.load %arg7[%c0_32, %c0_33, %c0_34] : memref<8x8x32xf32, #tpu.memory_space<vmem>>, vector<1x8x32xf32>
    %49 = vector.shape_cast %48 : vector<1x8x32xf32> to vector<8x32xf32>
    %cst_35 = arith.constant dense<0.000000e+00> : vector<64x32xf32>
    %50 = tpu.matmul %47, %49, %cst_35 {dimension_numbers = #tpu.dot_dimension_numbers<[1], [0], [0], [1], [0, 0, 1, 1], [], []>} : vector<64x8xf32>, vector<8x32xf32>, vector<64x32xf32> -> vector<64x32xf32>
    %51 = arith.addf %7, %50 : vector<64x32xf32>
    %c1 = arith.constant 1 : index
    %c0_36 = arith.constant 0 : index
    %c0_37 = arith.constant 0 : index
    %52 = vector.load %arg5[%c1, %c0_36, %c0_37] : memref<24x32x8xf32, #tpu.memory_space<vmem>>, vector<1x32x8xf32>
    %53 = vector.shape_cast %52 : vector<1x32x8xf32> to vector<32x8xf32>
    %cst_38 = arith.constant dense<0.000000e+00> : vector<64x8xf32>
    %54 = tpu.matmul %4, %53, %cst_38 {dimension_numbers = #tpu.dot_dimension_numbers<[1], [0], [0], [1], [0, 0, 1, 1], [], []>} : vector<64x32xf32>, vector<32x8xf32>, vector<64x8xf32> -> vector<64x8xf32>
    %c1_39 = arith.constant 1 : index
    %c0_40 = arith.constant 0 : index
    %c0_41 = arith.constant 0 : index
    %55 = vector.load %arg6[%c1_39, %c0_40, %c0_41] : memref<24x1x8xf32, #tpu.memory_space<vmem>>, vector<1x1x8xf32>
    %56 = vector.shape_cast %55 : vector<1x1x8xf32> to vector<1x8xf32>
    %57 = vector.broadcast %56 : vector<1x8xf32> to vector<64x8xf32>
    %58 = arith.addf %54, %57 : vector<64x8xf32>
    %c5 = arith.constant 5 : index
    %c0_42 = arith.constant 0 : index
    %c0_43 = arith.constant 0 : index
    %59 = vector.load %arg5[%c5, %c0_42, %c0_43] : memref<24x32x8xf32, #tpu.memory_space<vmem>>, vector<1x32x8xf32>
    %60 = vector.shape_cast %59 : vector<1x32x8xf32> to vector<32x8xf32>
    %cst_44 = arith.constant dense<0.000000e+00> : vector<64x8xf32>
    %61 = tpu.matmul %4, %60, %cst_44 {dimension_numbers = #tpu.dot_dimension_numbers<[1], [0], [0], [1], [0, 0, 1, 1], [], []>} : vector<64x32xf32>, vector<32x8xf32>, vector<64x8xf32> -> vector<64x8xf32>
    %c5_45 = arith.constant 5 : index
    %c0_46 = arith.constant 0 : index
    %c0_47 = arith.constant 0 : index
    %62 = vector.load %arg6[%c5_45, %c0_46, %c0_47] : memref<24x1x8xf32, #tpu.memory_space<vmem>>, vector<1x1x8xf32>
    %63 = vector.shape_cast %62 : vector<1x1x8xf32> to vector<1x8xf32>
    %64 = vector.broadcast %63 : vector<1x8xf32> to vector<64x8xf32>
    %65 = arith.addf %61, %64 : vector<64x8xf32>
    %c9 = arith.constant 9 : index
    %c0_48 = arith.constant 0 : index
    %c0_49 = arith.constant 0 : index
    %66 = vector.load %arg5[%c9, %c0_48, %c0_49] : memref<24x32x8xf32, #tpu.memory_space<vmem>>, vector<1x32x8xf32>
    %67 = vector.shape_cast %66 : vector<1x32x8xf32> to vector<32x8xf32>
    %cst_50 = arith.constant dense<0.000000e+00> : vector<64x8xf32>
    %68 = tpu.matmul %4, %67, %cst_50 {dimension_numbers = #tpu.dot_dimension_numbers<[1], [0], [0], [1], [0, 0, 1, 1], [], []>} : vector<64x32xf32>, vector<32x8xf32>, vector<64x8xf32> -> vector<64x8xf32>
    %c9_51 = arith.constant 9 : index
    %c0_52 = arith.constant 0 : index
    %c0_53 = arith.constant 0 : index
    %69 = vector.load %arg6[%c9_51, %c0_52, %c0_53] : memref<24x1x8xf32, #tpu.memory_space<vmem>>, vector<1x1x8xf32>
    %70 = vector.shape_cast %69 : vector<1x1x8xf32> to vector<1x8xf32>
    %71 = vector.broadcast %70 : vector<1x8xf32> to vector<64x8xf32>
    %72 = arith.addf %68, %71 : vector<64x8xf32>
    %73 = vector.shape_cast %58 : vector<64x8xf32> to vector<8x8x8xf32>
    %74 = vector.shape_cast %65 : vector<64x8xf32> to vector<8x8x8xf32>
    %75 = vector.shape_cast %72 : vector<64x8xf32> to vector<8x8x8xf32>
    "tpu.trace_start"() <{level = 10 : i32, message = "bqd,bkd->bqk"}> : () -> ()
    %cst_54 = arith.constant dense<0.000000e+00> : vector<8x8x8xf32>
    %76 = tpu.matmul %73, %74, %cst_54 {dimension_numbers = #tpu.dot_dimension_numbers<[2], [2], [1], [1], [0, 0, 0, 1, 1, 1], [0], [0]>} : vector<8x8x8xf32>, vector<8x8x8xf32>, vector<8x8x8xf32> -> vector<8x8x8xf32>
    "tpu.trace_stop"() : () -> ()
    %cst_55 = arith.constant 0.353553385 : f32
    %77 = vector.broadcast %cst_55 : f32 to vector<8x8x8xf32>
    %78 = arith.mulf %76, %77 : vector<8x8x8xf32>
    %79 = vector.broadcast %6 : vector<8x1x8xf32> to vector<8x8x8xf32>
    %80 = arith.addf %78, %79 : vector<8x8x8xf32>
    %cst_56 = arith.constant dense<0xFF800000> : vector<8x8xf32>
    %81 = vector.multi_reduction <maximumf>, %80, %cst_56 [2] : vector<8x8x8xf32> to vector<8x8xf32>
    %82 = vector.shape_cast %81 : vector<8x8xf32> to vector<8x8x1xf32>
    %83 = vector.broadcast %82 : vector<8x8x1xf32> to vector<8x8x8xf32>
    %84 = arith.subf %80, %83 : vector<8x8x8xf32>
    %85 = math.exp %84 : vector<8x8x8xf32>
    %cst_57 = arith.constant dense<0.000000e+00> : vector<8x8xf32>
    %86 = vector.multi_reduction <add>, %85, %cst_57 [2] : vector<8x8x8xf32> to vector<8x8xf32>
    %87 = vector.shape_cast %86 : vector<8x8xf32> to vector<8x8x1xf32>
    %88 = vector.broadcast %87 : vector<8x8x1xf32> to vector<8x8x8xf32>
    %89 = arith.divf %85, %88 : vector<8x8x8xf32>
    "tpu.trace_start"() <{level = 10 : i32, message = "bqk,bkd->bqd"}> : () -> ()
    %cst_58 = arith.constant dense<0.000000e+00> : vector<8x8x8xf32>
    %90 = tpu.matmul %89, %75, %cst_58 {dimension_numbers = #tpu.dot_dimension_numbers<[2], [1], [1], [2], [0, 0, 0, 1, 1, 2], [0], [0]>} : vector<8x8x8xf32>, vector<8x8x8xf32>, vector<8x8x8xf32> -> vector<8x8x8xf32>
    "tpu.trace_stop"() : () -> ()
    %91 = vector.shape_cast %90 : vector<8x8x8xf32> to vector<64x8xf32>
    %c1_59 = arith.constant 1 : index
    %c0_60 = arith.constant 0 : index
    %c0_61 = arith.constant 0 : index
    %92 = vector.load %arg7[%c1_59, %c0_60, %c0_61] : memref<8x8x32xf32, #tpu.memory_space<vmem>>, vector<1x8x32xf32>
    %93 = vector.shape_cast %92 : vector<1x8x32xf32> to vector<8x32xf32>
    %cst_62 = arith.constant dense<0.000000e+00> : vector<64x32xf32>
    %94 = tpu.matmul %91, %93, %cst_62 {dimension_numbers = #tpu.dot_dimension_numbers<[1], [0], [0], [1], [0, 0, 1, 1], [], []>} : vector<64x8xf32>, vector<8x32xf32>, vector<64x32xf32> -> vector<64x32xf32>
    %95 = arith.addf %51, %94 : vector<64x32xf32>
    %c2 = arith.constant 2 : index
    %c0_63 = arith.constant 0 : index
    %c0_64 = arith.constant 0 : index
    %96 = vector.load %arg5[%c2, %c0_63, %c0_64] : memref<24x32x8xf32, #tpu.memory_space<vmem>>, vector<1x32x8xf32>
    %97 = vector.shape_cast %96 : vector<1x32x8xf32> to vector<32x8xf32>
    %cst_65 = arith.constant dense<0.000000e+00> : vector<64x8xf32>
    %98 = tpu.matmul %4, %97, %cst_65 {dimension_numbers = #tpu.dot_dimension_numbers<[1], [0], [0], [1], [0, 0, 1, 1], [], []>} : vector<64x32xf32>, vector<32x8xf32>, vector<64x8xf32> -> vector<64x8xf32>
    %c2_66 = arith.constant 2 : index
    %c0_67 = arith.constant 0 : index
    %c0_68 = arith.constant 0 : index
    %99 = vector.load %arg6[%c2_66, %c0_67, %c0_68] : memref<24x1x8xf32, #tpu.memory_space<vmem>>, vector<1x1x8xf32>
    %100 = vector.shape_cast %99 : vector<1x1x8xf32> to vector<1x8xf32>
    %101 = vector.broadcast %100 : vector<1x8xf32> to vector<64x8xf32>
    %102 = arith.addf %98, %101 : vector<64x8xf32>
    %c6 = arith.constant 6 : index
    %c0_69 = arith.constant 0 : index
    %c0_70 = arith.constant 0 : index
    %103 = vector.load %arg5[%c6, %c0_69, %c0_70] : memref<24x32x8xf32, #tpu.memory_space<vmem>>, vector<1x32x8xf32>
    %104 = vector.shape_cast %103 : vector<1x32x8xf32> to vector<32x8xf32>
    %cst_71 = arith.constant dense<0.000000e+00> : vector<64x8xf32>
    %105 = tpu.matmul %4, %104, %cst_71 {dimension_numbers = #tpu.dot_dimension_numbers<[1], [0], [0], [1], [0, 0, 1, 1], [], []>} : vector<64x32xf32>, vector<32x8xf32>, vector<64x8xf32> -> vector<64x8xf32>
    %c6_72 = arith.constant 6 : index
    %c0_73 = arith.constant 0 : index
    %c0_74 = arith.constant 0 : index
    %106 = vector.load %arg6[%c6_72, %c0_73, %c0_74] : memref<24x1x8xf32, #tpu.memory_space<vmem>>, vector<1x1x8xf32>
    %107 = vector.shape_cast %106 : vector<1x1x8xf32> to vector<1x8xf32>
    %108 = vector.broadcast %107 : vector<1x8xf32> to vector<64x8xf32>
    %109 = arith.addf %105, %108 : vector<64x8xf32>
    %c10 = arith.constant 10 : index
    %c0_75 = arith.constant 0 : index
    %c0_76 = arith.constant 0 : index
    %110 = vector.load %arg5[%c10, %c0_75, %c0_76] : memref<24x32x8xf32, #tpu.memory_space<vmem>>, vector<1x32x8xf32>
    %111 = vector.shape_cast %110 : vector<1x32x8xf32> to vector<32x8xf32>
    %cst_77 = arith.constant dense<0.000000e+00> : vector<64x8xf32>
    %112 = tpu.matmul %4, %111, %cst_77 {dimension_numbers = #tpu.dot_dimension_numbers<[1], [0], [0], [1], [0, 0, 1, 1], [], []>} : vector<64x32xf32>, vector<32x8xf32>, vector<64x8xf32> -> vector<64x8xf32>
    %c10_78 = arith.constant 10 : index
    %c0_79 = arith.constant 0 : index
    %c0_80 = arith.constant 0 : index
    %113 = vector.load %arg6[%c10_78, %c0_79, %c0_80] : memref<24x1x8xf32, #tpu.memory_space<vmem>>, vector<1x1x8xf32>
    %114 = vector.shape_cast %113 : vector<1x1x8xf32> to vector<1x8xf32>
    %115 = vector.broadcast %114 : vector<1x8xf32> to vector<64x8xf32>
    %116 = arith.addf %112, %115 : vector<64x8xf32>
    %117 = vector.shape_cast %102 : vector<64x8xf32> to vector<8x8x8xf32>
    %118 = vector.shape_cast %109 : vector<64x8xf32> to vector<8x8x8xf32>
    %119 = vector.shape_cast %116 : vector<64x8xf32> to vector<8x8x8xf32>
    "tpu.trace_start"() <{level = 10 : i32, message = "bqd,bkd->bqk"}> : () -> ()
    %cst_81 = arith.constant dense<0.000000e+00> : vector<8x8x8xf32>
    %120 = tpu.matmul %117, %118, %cst_81 {dimension_numbers = #tpu.dot_dimension_numbers<[2], [2], [1], [1], [0, 0, 0, 1, 1, 1], [0], [0]>} : vector<8x8x8xf32>, vector<8x8x8xf32>, vector<8x8x8xf32> -> vector<8x8x8xf32>
    "tpu.trace_stop"() : () -> ()
    %cst_82 = arith.constant 0.353553385 : f32
    %121 = vector.broadcast %cst_82 : f32 to vector<8x8x8xf32>
    %122 = arith.mulf %120, %121 : vector<8x8x8xf32>
    %123 = vector.broadcast %6 : vector<8x1x8xf32> to vector<8x8x8xf32>
    %124 = arith.addf %122, %123 : vector<8x8x8xf32>
    %cst_83 = arith.constant dense<0xFF800000> : vector<8x8xf32>
    %125 = vector.multi_reduction <maximumf>, %124, %cst_83 [2] : vector<8x8x8xf32> to vector<8x8xf32>
    %126 = vector.shape_cast %125 : vector<8x8xf32> to vector<8x8x1xf32>
    %127 = vector.broadcast %126 : vector<8x8x1xf32> to vector<8x8x8xf32>
    %128 = arith.subf %124, %127 : vector<8x8x8xf32>
    %129 = math.exp %128 : vector<8x8x8xf32>
    %cst_84 = arith.constant dense<0.000000e+00> : vector<8x8xf32>
    %130 = vector.multi_reduction <add>, %129, %cst_84 [2] : vector<8x8x8xf32> to vector<8x8xf32>
    %131 = vector.shape_cast %130 : vector<8x8xf32> to vector<8x8x1xf32>
    %132 = vector.broadcast %131 : vector<8x8x1xf32> to vector<8x8x8xf32>
    %133 = arith.divf %129, %132 : vector<8x8x8xf32>
    "tpu.trace_start"() <{level = 10 : i32, message = "bqk,bkd->bqd"}> : () -> ()
    %cst_85 = arith.constant dense<0.000000e+00> : vector<8x8x8xf32>
    %134 = tpu.matmul %133, %119, %cst_85 {dimension_numbers = #tpu.dot_dimension_numbers<[2], [1], [1], [2], [0, 0, 0, 1, 1, 2], [0], [0]>} : vector<8x8x8xf32>, vector<8x8x8xf32>, vector<8x8x8xf32> -> vector<8x8x8xf32>
    "tpu.trace_stop"() : () -> ()
    %135 = vector.shape_cast %134 : vector<8x8x8xf32> to vector<64x8xf32>
    %c2_86 = arith.constant 2 : index
    %c0_87 = arith.constant 0 : index
    %c0_88 = arith.constant 0 : index
    %136 = vector.load %arg7[%c2_86, %c0_87, %c0_88] : memref<8x8x32xf32, #tpu.memory_space<vmem>>, vector<1x8x32xf32>
    %137 = vector.shape_cast %136 : vector<1x8x32xf32> to vector<8x32xf32>
    %cst_89 = arith.constant dense<0.000000e+00> : vector<64x32xf32>
    %138 = tpu.matmul %135, %137, %cst_89 {dimension_numbers = #tpu.dot_dimension_numbers<[1], [0], [0], [1], [0, 0, 1, 1], [], []>} : vector<64x8xf32>, vector<8x32xf32>, vector<64x32xf32> -> vector<64x32xf32>
    %139 = arith.addf %95, %138 : vector<64x32xf32>
    %c3 = arith.constant 3 : index
    %c0_90 = arith.constant 0 : index
    %c0_91 = arith.constant 0 : index
    %140 = vector.load %arg5[%c3, %c0_90, %c0_91] : memref<24x32x8xf32, #tpu.memory_space<vmem>>, vector<1x32x8xf32>
    %141 = vector.shape_cast %140 : vector<1x32x8xf32> to vector<32x8xf32>
    %cst_92 = arith.constant dense<0.000000e+00> : vector<64x8xf32>
    %142 = tpu.matmul %4, %141, %cst_92 {dimension_numbers = #tpu.dot_dimension_numbers<[1], [0], [0], [1], [0, 0, 1, 1], [], []>} : vector<64x32xf32>, vector<32x8xf32>, vector<64x8xf32> -> vector<64x8xf32>
    %c3_93 = arith.constant 3 : index
    %c0_94 = arith.constant 0 : index
    %c0_95 = arith.constant 0 : index
    %143 = vector.load %arg6[%c3_93, %c0_94, %c0_95] : memref<24x1x8xf32, #tpu.memory_space<vmem>>, vector<1x1x8xf32>
    %144 = vector.shape_cast %143 : vector<1x1x8xf32> to vector<1x8xf32>
    %145 = vector.broadcast %144 : vector<1x8xf32> to vector<64x8xf32>
    %146 = arith.addf %142, %145 : vector<64x8xf32>
    %c7 = arith.constant 7 : index
    %c0_96 = arith.constant 0 : index
    %c0_97 = arith.constant 0 : index
    %147 = vector.load %arg5[%c7, %c0_96, %c0_97] : memref<24x32x8xf32, #tpu.memory_space<vmem>>, vector<1x32x8xf32>
    %148 = vector.shape_cast %147 : vector<1x32x8xf32> to vector<32x8xf32>
    %cst_98 = arith.constant dense<0.000000e+00> : vector<64x8xf32>
    %149 = tpu.matmul %4, %148, %cst_98 {dimension_numbers = #tpu.dot_dimension_numbers<[1], [0], [0], [1], [0, 0, 1, 1], [], []>} : vector<64x32xf32>, vector<32x8xf32>, vector<64x8xf32> -> vector<64x8xf32>
    %c7_99 = arith.constant 7 : index
    %c0_100 = arith.constant 0 : index
    %c0_101 = arith.constant 0 : index
    %150 = vector.load %arg6[%c7_99, %c0_100, %c0_101] : memref<24x1x8xf32, #tpu.memory_space<vmem>>, vector<1x1x8xf32>
    %151 = vector.shape_cast %150 : vector<1x1x8xf32> to vector<1x8xf32>
    %152 = vector.broadcast %151 : vector<1x8xf32> to vector<64x8xf32>
    %153 = arith.addf %149, %152 : vector<64x8xf32>
    %c11 = arith.constant 11 : index
    %c0_102 = arith.constant 0 : index
    %c0_103 = arith.constant 0 : index
    %154 = vector.load %arg5[%c11, %c0_102, %c0_103] : memref<24x32x8xf32, #tpu.memory_space<vmem>>, vector<1x32x8xf32>
    %155 = vector.shape_cast %154 : vector<1x32x8xf32> to vector<32x8xf32>
    %cst_104 = arith.constant dense<0.000000e+00> : vector<64x8xf32>
    %156 = tpu.matmul %4, %155, %cst_104 {dimension_numbers = #tpu.dot_dimension_numbers<[1], [0], [0], [1], [0, 0, 1, 1], [], []>} : vector<64x32xf32>, vector<32x8xf32>, vector<64x8xf32> -> vector<64x8xf32>
    %c11_105 = arith.constant 11 : index
    %c0_106 = arith.constant 0 : index
    %c0_107 = arith.constant 0 : index
    %157 = vector.load %arg6[%c11_105, %c0_106, %c0_107] : memref<24x1x8xf32, #tpu.memory_space<vmem>>, vector<1x1x8xf32>
    %158 = vector.shape_cast %157 : vector<1x1x8xf32> to vector<1x8xf32>
    %159 = vector.broadcast %158 : vector<1x8xf32> to vector<64x8xf32>
    %160 = arith.addf %156, %159 : vector<64x8xf32>
    %161 = vector.shape_cast %146 : vector<64x8xf32> to vector<8x8x8xf32>
    %162 = vector.shape_cast %153 : vector<64x8xf32> to vector<8x8x8xf32>
    %163 = vector.shape_cast %160 : vector<64x8xf32> to vector<8x8x8xf32>
    "tpu.trace_start"() <{level = 10 : i32, message = "bqd,bkd->bqk"}> : () -> ()
    %cst_108 = arith.constant dense<0.000000e+00> : vector<8x8x8xf32>
    %164 = tpu.matmul %161, %162, %cst_108 {dimension_numbers = #tpu.dot_dimension_numbers<[2], [2], [1], [1], [0, 0, 0, 1, 1, 1], [0], [0]>} : vector<8x8x8xf32>, vector<8x8x8xf32>, vector<8x8x8xf32> -> vector<8x8x8xf32>
    "tpu.trace_stop"() : () -> ()
    %cst_109 = arith.constant 0.353553385 : f32
    %165 = vector.broadcast %cst_109 : f32 to vector<8x8x8xf32>
    %166 = arith.mulf %164, %165 : vector<8x8x8xf32>
    %167 = vector.broadcast %6 : vector<8x1x8xf32> to vector<8x8x8xf32>
    %168 = arith.addf %166, %167 : vector<8x8x8xf32>
    %cst_110 = arith.constant dense<0xFF800000> : vector<8x8xf32>
    %169 = vector.multi_reduction <maximumf>, %168, %cst_110 [2] : vector<8x8x8xf32> to vector<8x8xf32>
    %170 = vector.shape_cast %169 : vector<8x8xf32> to vector<8x8x1xf32>
    %171 = vector.broadcast %170 : vector<8x8x1xf32> to vector<8x8x8xf32>
    %172 = arith.subf %168, %171 : vector<8x8x8xf32>
    %173 = math.exp %172 : vector<8x8x8xf32>
    %cst_111 = arith.constant dense<0.000000e+00> : vector<8x8xf32>
    %174 = vector.multi_reduction <add>, %173, %cst_111 [2] : vector<8x8x8xf32> to vector<8x8xf32>
    %175 = vector.shape_cast %174 : vector<8x8xf32> to vector<8x8x1xf32>
    %176 = vector.broadcast %175 : vector<8x8x1xf32> to vector<8x8x8xf32>
    %177 = arith.divf %173, %176 : vector<8x8x8xf32>
    "tpu.trace_start"() <{level = 10 : i32, message = "bqk,bkd->bqd"}> : () -> ()
    %cst_112 = arith.constant dense<0.000000e+00> : vector<8x8x8xf32>
    %178 = tpu.matmul %177, %163, %cst_112 {dimension_numbers = #tpu.dot_dimension_numbers<[2], [1], [1], [2], [0, 0, 0, 1, 1, 2], [0], [0]>} : vector<8x8x8xf32>, vector<8x8x8xf32>, vector<8x8x8xf32> -> vector<8x8x8xf32>
    "tpu.trace_stop"() : () -> ()
    %179 = vector.shape_cast %178 : vector<8x8x8xf32> to vector<64x8xf32>
    %c3_113 = arith.constant 3 : index
    %c0_114 = arith.constant 0 : index
    %c0_115 = arith.constant 0 : index
    %180 = vector.load %arg7[%c3_113, %c0_114, %c0_115] : memref<8x8x32xf32, #tpu.memory_space<vmem>>, vector<1x8x32xf32>
    %181 = vector.shape_cast %180 : vector<1x8x32xf32> to vector<8x32xf32>
    %cst_116 = arith.constant dense<0.000000e+00> : vector<64x32xf32>
    %182 = tpu.matmul %179, %181, %cst_116 {dimension_numbers = #tpu.dot_dimension_numbers<[1], [0], [0], [1], [0, 0, 1, 1], [], []>} : vector<64x8xf32>, vector<8x32xf32>, vector<64x32xf32> -> vector<64x32xf32>
    %183 = arith.addf %139, %182 : vector<64x32xf32>
    %c0_117 = arith.constant 0 : index
    %c0_118 = arith.constant 0 : index
    %c0_119 = arith.constant 0 : index
    %184 = vector.load %arg8[%c0_117, %c0_118, %c0_119] : memref<2x1x32xf32, #tpu.memory_space<vmem>>, vector<1x1x32xf32>
    %185 = vector.shape_cast %184 : vector<1x1x32xf32> to vector<1x32xf32>
    %186 = vector.broadcast %185 : vector<1x32xf32> to vector<64x32xf32>
    %187 = arith.addf %183, %186 : vector<64x32xf32>
    %188 = arith.addf %4, %187 : vector<64x32xf32>
    %c0_120 = arith.constant 0 : index
    %c0_121 = arith.constant 0 : index
    %c0_122 = arith.constant 0 : index
    %189 = vector.load %arg9[%c0_120, %c0_121, %c0_122] : memref<8x1x32xf32, #tpu.memory_space<vmem>>, vector<1x1x32xf32>
    %190 = vector.shape_cast %189 : vector<1x1x32xf32> to vector<1x32xf32>
    %c1_123 = arith.constant 1 : index
    %c0_124 = arith.constant 0 : index
    %c0_125 = arith.constant 0 : index
    %191 = vector.load %arg9[%c1_123, %c0_124, %c0_125] : memref<8x1x32xf32, #tpu.memory_space<vmem>>, vector<1x1x32xf32>
    %192 = vector.shape_cast %191 : vector<1x1x32xf32> to vector<1x32xf32>
    %cst_126 = arith.constant dense<0.000000e+00> : vector<64xf32>
    %193 = vector.multi_reduction <add>, %188, %cst_126 [1] : vector<64x32xf32> to vector<64xf32>
    %194 = vector.shape_cast %193 : vector<64xf32> to vector<64x1xf32>
    %cst_127 = arith.constant 3.200000e+01 : f32
    %195 = vector.broadcast %cst_127 : f32 to vector<64x1xf32>
    %196 = arith.divf %194, %195 : vector<64x1xf32>
    %197 = vector.broadcast %196 : vector<64x1xf32> to vector<64x32xf32>
    %198 = arith.subf %188, %197 : vector<64x32xf32>
    %199 = arith.mulf %198, %198 : vector<64x32xf32>
    %cst_128 = arith.constant dense<0.000000e+00> : vector<64xf32>
    %200 = vector.multi_reduction <add>, %199, %cst_128 [1] : vector<64x32xf32> to vector<64xf32>
    %201 = vector.shape_cast %200 : vector<64xf32> to vector<64x1xf32>
    %cst_129 = arith.constant 3.200000e+01 : f32
    %202 = vector.broadcast %cst_129 : f32 to vector<64x1xf32>
    %203 = arith.divf %201, %202 : vector<64x1xf32>
    %204 = vector.broadcast %196 : vector<64x1xf32> to vector<64x32xf32>
    %205 = arith.subf %188, %204 : vector<64x32xf32>
    %cst_130 = arith.constant 9.99999974E-6 : f32
    %206 = vector.broadcast %cst_130 : f32 to vector<64x1xf32>
    %207 = arith.addf %203, %206 : vector<64x1xf32>
    %208 = math.rsqrt %207 : vector<64x1xf32>
    %209 = vector.broadcast %208 : vector<64x1xf32> to vector<64x32xf32>
    %210 = arith.mulf %205, %209 : vector<64x32xf32>
    %211 = vector.broadcast %190 : vector<1x32xf32> to vector<64x32xf32>
    %212 = arith.mulf %210, %211 : vector<64x32xf32>
    %213 = vector.broadcast %192 : vector<1x32xf32> to vector<64x32xf32>
    %214 = arith.addf %212, %213 : vector<64x32xf32>
    %c0_131 = arith.constant 0 : index
    %c0_132 = arith.constant 0 : index
    %c0_133 = arith.constant 0 : index
    %215 = vector.load %arg10[%c0_131, %c0_132, %c0_133] : memref<2x32x64xf32, #tpu.memory_space<vmem>>, vector<1x32x64xf32>
    %216 = vector.shape_cast %215 : vector<1x32x64xf32> to vector<32x64xf32>
    %cst_134 = arith.constant dense<0.000000e+00> : vector<64x64xf32>
    %217 = tpu.matmul %214, %216, %cst_134 {dimension_numbers = #tpu.dot_dimension_numbers<[1], [0], [0], [1], [0, 0, 1, 1], [], []>} : vector<64x32xf32>, vector<32x64xf32>, vector<64x64xf32> -> vector<64x64xf32>
    %c0_135 = arith.constant 0 : index
    %c0_136 = arith.constant 0 : index
    %c0_137 = arith.constant 0 : index
    %218 = vector.load %arg11[%c0_135, %c0_136, %c0_137] : memref<2x1x64xf32, #tpu.memory_space<vmem>>, vector<1x1x64xf32>
    %219 = vector.shape_cast %218 : vector<1x1x64xf32> to vector<1x64xf32>
    %220 = vector.broadcast %219 : vector<1x64xf32> to vector<64x64xf32>
    %221 = arith.addf %217, %220 : vector<64x64xf32>
    %cst_138 = arith.constant 5.000000e-01 : f32
    %222 = vector.broadcast %cst_138 : f32 to vector<64x64xf32>
    %223 = arith.mulf %222, %221 : vector<64x64xf32>
    %cst_139 = arith.constant 4.471500e-02 : f32
    %224 = vector.broadcast %cst_139 : f32 to vector<64x64xf32>
    %225 = arith.mulf %224, %221 : vector<64x64xf32>
    %226 = arith.mulf %225, %221 : vector<64x64xf32>
    %227 = arith.mulf %226, %221 : vector<64x64xf32>
    %228 = arith.addf %221, %227 : vector<64x64xf32>
    %cst_140 = arith.constant 0.797884583 : f32
    %229 = vector.broadcast %cst_140 : f32 to vector<64x64xf32>
    %230 = arith.mulf %229, %228 : vector<64x64xf32>
    %231 = math.tanh %230 : vector<64x64xf32>
    %cst_141 = arith.constant 1.000000e+00 : f32
    %232 = vector.broadcast %cst_141 : f32 to vector<64x64xf32>
    %233 = arith.addf %232, %231 : vector<64x64xf32>
    %234 = arith.mulf %223, %233 : vector<64x64xf32>
    %c0_142 = arith.constant 0 : index
    %c0_143 = arith.constant 0 : index
    %c0_144 = arith.constant 0 : index
    %235 = vector.load %arg12[%c0_142, %c0_143, %c0_144] : memref<2x64x32xf32, #tpu.memory_space<vmem>>, vector<1x64x32xf32>
    %236 = vector.shape_cast %235 : vector<1x64x32xf32> to vector<64x32xf32>
    %cst_145 = arith.constant dense<0.000000e+00> : vector<64x32xf32>
    %237 = tpu.matmul %234, %236, %cst_145 {dimension_numbers = #tpu.dot_dimension_numbers<[1], [0], [0], [1], [0, 0, 1, 1], [], []>} : vector<64x64xf32>, vector<64x32xf32>, vector<64x32xf32> -> vector<64x32xf32>
    %c0_146 = arith.constant 0 : index
    %c0_147 = arith.constant 0 : index
    %c0_148 = arith.constant 0 : index
    %238 = vector.load %arg13[%c0_146, %c0_147, %c0_148] : memref<2x1x32xf32, #tpu.memory_space<vmem>>, vector<1x1x32xf32>
    %239 = vector.shape_cast %238 : vector<1x1x32xf32> to vector<1x32xf32>
    %240 = vector.broadcast %239 : vector<1x32xf32> to vector<64x32xf32>
    %241 = arith.addf %237, %240 : vector<64x32xf32>
    %242 = arith.addf %214, %241 : vector<64x32xf32>
    %c2_149 = arith.constant 2 : index
    %c0_150 = arith.constant 0 : index
    %c0_151 = arith.constant 0 : index
    %243 = vector.load %arg9[%c2_149, %c0_150, %c0_151] : memref<8x1x32xf32, #tpu.memory_space<vmem>>, vector<1x1x32xf32>
    %244 = vector.shape_cast %243 : vector<1x1x32xf32> to vector<1x32xf32>
    %c3_152 = arith.constant 3 : index
    %c0_153 = arith.constant 0 : index
    %c0_154 = arith.constant 0 : index
    %245 = vector.load %arg9[%c3_152, %c0_153, %c0_154] : memref<8x1x32xf32, #tpu.memory_space<vmem>>, vector<1x1x32xf32>
    %246 = vector.shape_cast %245 : vector<1x1x32xf32> to vector<1x32xf32>
    %cst_155 = arith.constant dense<0.000000e+00> : vector<64xf32>
    %247 = vector.multi_reduction <add>, %242, %cst_155 [1] : vector<64x32xf32> to vector<64xf32>
    %248 = vector.shape_cast %247 : vector<64xf32> to vector<64x1xf32>
    %cst_156 = arith.constant 3.200000e+01 : f32
    %249 = vector.broadcast %cst_156 : f32 to vector<64x1xf32>
    %250 = arith.divf %248, %249 : vector<64x1xf32>
    %251 = vector.broadcast %250 : vector<64x1xf32> to vector<64x32xf32>
    %252 = arith.subf %242, %251 : vector<64x32xf32>
    %253 = arith.mulf %252, %252 : vector<64x32xf32>
    %cst_157 = arith.constant dense<0.000000e+00> : vector<64xf32>
    %254 = vector.multi_reduction <add>, %253, %cst_157 [1] : vector<64x32xf32> to vector<64xf32>
    %255 = vector.shape_cast %254 : vector<64xf32> to vector<64x1xf32>
    %cst_158 = arith.constant 3.200000e+01 : f32
    %256 = vector.broadcast %cst_158 : f32 to vector<64x1xf32>
    %257 = arith.divf %255, %256 : vector<64x1xf32>
    %258 = vector.broadcast %250 : vector<64x1xf32> to vector<64x32xf32>
    %259 = arith.subf %242, %258 : vector<64x32xf32>
    %cst_159 = arith.constant 9.99999974E-6 : f32
    %260 = vector.broadcast %cst_159 : f32 to vector<64x1xf32>
    %261 = arith.addf %257, %260 : vector<64x1xf32>
    %262 = math.rsqrt %261 : vector<64x1xf32>
    %263 = vector.broadcast %262 : vector<64x1xf32> to vector<64x32xf32>
    %264 = arith.mulf %259, %263 : vector<64x32xf32>
    %265 = vector.broadcast %244 : vector<1x32xf32> to vector<64x32xf32>
    %266 = arith.mulf %264, %265 : vector<64x32xf32>
    %267 = vector.broadcast %246 : vector<1x32xf32> to vector<64x32xf32>
    %268 = arith.addf %266, %267 : vector<64x32xf32>
    %cst_160 = arith.constant 0.000000e+00 : f32
    %269 = vector.broadcast %cst_160 : f32 to vector<64x32xf32>
    %c12 = arith.constant 12 : index
    %c0_161 = arith.constant 0 : index
    %c0_162 = arith.constant 0 : index
    %270 = vector.load %arg5[%c12, %c0_161, %c0_162] : memref<24x32x8xf32, #tpu.memory_space<vmem>>, vector<1x32x8xf32>
    %271 = vector.shape_cast %270 : vector<1x32x8xf32> to vector<32x8xf32>
    %cst_163 = arith.constant dense<0.000000e+00> : vector<64x8xf32>
    %272 = tpu.matmul %268, %271, %cst_163 {dimension_numbers = #tpu.dot_dimension_numbers<[1], [0], [0], [1], [0, 0, 1, 1], [], []>} : vector<64x32xf32>, vector<32x8xf32>, vector<64x8xf32> -> vector<64x8xf32>
    %c12_164 = arith.constant 12 : index
    %c0_165 = arith.constant 0 : index
    %c0_166 = arith.constant 0 : index
    %273 = vector.load %arg6[%c12_164, %c0_165, %c0_166] : memref<24x1x8xf32, #tpu.memory_space<vmem>>, vector<1x1x8xf32>
    %274 = vector.shape_cast %273 : vector<1x1x8xf32> to vector<1x8xf32>
    %275 = vector.broadcast %274 : vector<1x8xf32> to vector<64x8xf32>
    %276 = arith.addf %272, %275 : vector<64x8xf32>
    %c16 = arith.constant 16 : index
    %c0_167 = arith.constant 0 : index
    %c0_168 = arith.constant 0 : index
    %277 = vector.load %arg5[%c16, %c0_167, %c0_168] : memref<24x32x8xf32, #tpu.memory_space<vmem>>, vector<1x32x8xf32>
    %278 = vector.shape_cast %277 : vector<1x32x8xf32> to vector<32x8xf32>
    %cst_169 = arith.constant dense<0.000000e+00> : vector<64x8xf32>
    %279 = tpu.matmul %268, %278, %cst_169 {dimension_numbers = #tpu.dot_dimension_numbers<[1], [0], [0], [1], [0, 0, 1, 1], [], []>} : vector<64x32xf32>, vector<32x8xf32>, vector<64x8xf32> -> vector<64x8xf32>
    %c16_170 = arith.constant 16 : index
    %c0_171 = arith.constant 0 : index
    %c0_172 = arith.constant 0 : index
    %280 = vector.load %arg6[%c16_170, %c0_171, %c0_172] : memref<24x1x8xf32, #tpu.memory_space<vmem>>, vector<1x1x8xf32>
    %281 = vector.shape_cast %280 : vector<1x1x8xf32> to vector<1x8xf32>
    %282 = vector.broadcast %281 : vector<1x8xf32> to vector<64x8xf32>
    %283 = arith.addf %279, %282 : vector<64x8xf32>
    %c20 = arith.constant 20 : index
    %c0_173 = arith.constant 0 : index
    %c0_174 = arith.constant 0 : index
    %284 = vector.load %arg5[%c20, %c0_173, %c0_174] : memref<24x32x8xf32, #tpu.memory_space<vmem>>, vector<1x32x8xf32>
    %285 = vector.shape_cast %284 : vector<1x32x8xf32> to vector<32x8xf32>
    %cst_175 = arith.constant dense<0.000000e+00> : vector<64x8xf32>
    %286 = tpu.matmul %268, %285, %cst_175 {dimension_numbers = #tpu.dot_dimension_numbers<[1], [0], [0], [1], [0, 0, 1, 1], [], []>} : vector<64x32xf32>, vector<32x8xf32>, vector<64x8xf32> -> vector<64x8xf32>
    %c20_176 = arith.constant 20 : index
    %c0_177 = arith.constant 0 : index
    %c0_178 = arith.constant 0 : index
    %287 = vector.load %arg6[%c20_176, %c0_177, %c0_178] : memref<24x1x8xf32, #tpu.memory_space<vmem>>, vector<1x1x8xf32>
    %288 = vector.shape_cast %287 : vector<1x1x8xf32> to vector<1x8xf32>
    %289 = vector.broadcast %288 : vector<1x8xf32> to vector<64x8xf32>
    %290 = arith.addf %286, %289 : vector<64x8xf32>
    %291 = vector.shape_cast %276 : vector<64x8xf32> to vector<8x8x8xf32>
    %292 = vector.shape_cast %283 : vector<64x8xf32> to vector<8x8x8xf32>
    %293 = vector.shape_cast %290 : vector<64x8xf32> to vector<8x8x8xf32>
    "tpu.trace_start"() <{level = 10 : i32, message = "bqd,bkd->bqk"}> : () -> ()
    %cst_179 = arith.constant dense<0.000000e+00> : vector<8x8x8xf32>
    %294 = tpu.matmul %291, %292, %cst_179 {dimension_numbers = #tpu.dot_dimension_numbers<[2], [2], [1], [1], [0, 0, 0, 1, 1, 1], [0], [0]>} : vector<8x8x8xf32>, vector<8x8x8xf32>, vector<8x8x8xf32> -> vector<8x8x8xf32>
    "tpu.trace_stop"() : () -> ()
    %cst_180 = arith.constant 0.353553385 : f32
    %295 = vector.broadcast %cst_180 : f32 to vector<8x8x8xf32>
    %296 = arith.mulf %294, %295 : vector<8x8x8xf32>
    %297 = vector.broadcast %6 : vector<8x1x8xf32> to vector<8x8x8xf32>
    %298 = arith.addf %296, %297 : vector<8x8x8xf32>
    %cst_181 = arith.constant dense<0xFF800000> : vector<8x8xf32>
    %299 = vector.multi_reduction <maximumf>, %298, %cst_181 [2] : vector<8x8x8xf32> to vector<8x8xf32>
    %300 = vector.shape_cast %299 : vector<8x8xf32> to vector<8x8x1xf32>
    %301 = vector.broadcast %300 : vector<8x8x1xf32> to vector<8x8x8xf32>
    %302 = arith.subf %298, %301 : vector<8x8x8xf32>
    %303 = math.exp %302 : vector<8x8x8xf32>
    %cst_182 = arith.constant dense<0.000000e+00> : vector<8x8xf32>
    %304 = vector.multi_reduction <add>, %303, %cst_182 [2] : vector<8x8x8xf32> to vector<8x8xf32>
    %305 = vector.shape_cast %304 : vector<8x8xf32> to vector<8x8x1xf32>
    %306 = vector.broadcast %305 : vector<8x8x1xf32> to vector<8x8x8xf32>
    %307 = arith.divf %303, %306 : vector<8x8x8xf32>
    "tpu.trace_start"() <{level = 10 : i32, message = "bqk,bkd->bqd"}> : () -> ()
    %cst_183 = arith.constant dense<0.000000e+00> : vector<8x8x8xf32>
    %308 = tpu.matmul %307, %293, %cst_183 {dimension_numbers = #tpu.dot_dimension_numbers<[2], [1], [1], [2], [0, 0, 0, 1, 1, 2], [0], [0]>} : vector<8x8x8xf32>, vector<8x8x8xf32>, vector<8x8x8xf32> -> vector<8x8x8xf32>
    "tpu.trace_stop"() : () -> ()
    %309 = vector.shape_cast %308 : vector<8x8x8xf32> to vector<64x8xf32>
    %c4_184 = arith.constant 4 : index
    %c0_185 = arith.constant 0 : index
    %c0_186 = arith.constant 0 : index
    %310 = vector.load %arg7[%c4_184, %c0_185, %c0_186] : memref<8x8x32xf32, #tpu.memory_space<vmem>>, vector<1x8x32xf32>
    %311 = vector.shape_cast %310 : vector<1x8x32xf32> to vector<8x32xf32>
    %cst_187 = arith.constant dense<0.000000e+00> : vector<64x32xf32>
    %312 = tpu.matmul %309, %311, %cst_187 {dimension_numbers = #tpu.dot_dimension_numbers<[1], [0], [0], [1], [0, 0, 1, 1], [], []>} : vector<64x8xf32>, vector<8x32xf32>, vector<64x32xf32> -> vector<64x32xf32>
    %313 = arith.addf %269, %312 : vector<64x32xf32>
    %c13 = arith.constant 13 : index
    %c0_188 = arith.constant 0 : index
    %c0_189 = arith.constant 0 : index
    %314 = vector.load %arg5[%c13, %c0_188, %c0_189] : memref<24x32x8xf32, #tpu.memory_space<vmem>>, vector<1x32x8xf32>
    %315 = vector.shape_cast %314 : vector<1x32x8xf32> to vector<32x8xf32>
    %cst_190 = arith.constant dense<0.000000e+00> : vector<64x8xf32>
    %316 = tpu.matmul %268, %315, %cst_190 {dimension_numbers = #tpu.dot_dimension_numbers<[1], [0], [0], [1], [0, 0, 1, 1], [], []>} : vector<64x32xf32>, vector<32x8xf32>, vector<64x8xf32> -> vector<64x8xf32>
    %c13_191 = arith.constant 13 : index
    %c0_192 = arith.constant 0 : index
    %c0_193 = arith.constant 0 : index
    %317 = vector.load %arg6[%c13_191, %c0_192, %c0_193] : memref<24x1x8xf32, #tpu.memory_space<vmem>>, vector<1x1x8xf32>
    %318 = vector.shape_cast %317 : vector<1x1x8xf32> to vector<1x8xf32>
    %319 = vector.broadcast %318 : vector<1x8xf32> to vector<64x8xf32>
    %320 = arith.addf %316, %319 : vector<64x8xf32>
    %c17 = arith.constant 17 : index
    %c0_194 = arith.constant 0 : index
    %c0_195 = arith.constant 0 : index
    %321 = vector.load %arg5[%c17, %c0_194, %c0_195] : memref<24x32x8xf32, #tpu.memory_space<vmem>>, vector<1x32x8xf32>
    %322 = vector.shape_cast %321 : vector<1x32x8xf32> to vector<32x8xf32>
    %cst_196 = arith.constant dense<0.000000e+00> : vector<64x8xf32>
    %323 = tpu.matmul %268, %322, %cst_196 {dimension_numbers = #tpu.dot_dimension_numbers<[1], [0], [0], [1], [0, 0, 1, 1], [], []>} : vector<64x32xf32>, vector<32x8xf32>, vector<64x8xf32> -> vector<64x8xf32>
    %c17_197 = arith.constant 17 : index
    %c0_198 = arith.constant 0 : index
    %c0_199 = arith.constant 0 : index
    %324 = vector.load %arg6[%c17_197, %c0_198, %c0_199] : memref<24x1x8xf32, #tpu.memory_space<vmem>>, vector<1x1x8xf32>
    %325 = vector.shape_cast %324 : vector<1x1x8xf32> to vector<1x8xf32>
    %326 = vector.broadcast %325 : vector<1x8xf32> to vector<64x8xf32>
    %327 = arith.addf %323, %326 : vector<64x8xf32>
    %c21 = arith.constant 21 : index
    %c0_200 = arith.constant 0 : index
    %c0_201 = arith.constant 0 : index
    %328 = vector.load %arg5[%c21, %c0_200, %c0_201] : memref<24x32x8xf32, #tpu.memory_space<vmem>>, vector<1x32x8xf32>
    %329 = vector.shape_cast %328 : vector<1x32x8xf32> to vector<32x8xf32>
    %cst_202 = arith.constant dense<0.000000e+00> : vector<64x8xf32>
    %330 = tpu.matmul %268, %329, %cst_202 {dimension_numbers = #tpu.dot_dimension_numbers<[1], [0], [0], [1], [0, 0, 1, 1], [], []>} : vector<64x32xf32>, vector<32x8xf32>, vector<64x8xf32> -> vector<64x8xf32>
    %c21_203 = arith.constant 21 : index
    %c0_204 = arith.constant 0 : index
    %c0_205 = arith.constant 0 : index
    %331 = vector.load %arg6[%c21_203, %c0_204, %c0_205] : memref<24x1x8xf32, #tpu.memory_space<vmem>>, vector<1x1x8xf32>
    %332 = vector.shape_cast %331 : vector<1x1x8xf32> to vector<1x8xf32>
    %333 = vector.broadcast %332 : vector<1x8xf32> to vector<64x8xf32>
    %334 = arith.addf %330, %333 : vector<64x8xf32>
    %335 = vector.shape_cast %320 : vector<64x8xf32> to vector<8x8x8xf32>
    %336 = vector.shape_cast %327 : vector<64x8xf32> to vector<8x8x8xf32>
    %337 = vector.shape_cast %334 : vector<64x8xf32> to vector<8x8x8xf32>
    "tpu.trace_start"() <{level = 10 : i32, message = "bqd,bkd->bqk"}> : () -> ()
    %cst_206 = arith.constant dense<0.000000e+00> : vector<8x8x8xf32>
    %338 = tpu.matmul %335, %336, %cst_206 {dimension_numbers = #tpu.dot_dimension_numbers<[2], [2], [1], [1], [0, 0, 0, 1, 1, 1], [0], [0]>} : vector<8x8x8xf32>, vector<8x8x8xf32>, vector<8x8x8xf32> -> vector<8x8x8xf32>
    "tpu.trace_stop"() : () -> ()
    %cst_207 = arith.constant 0.353553385 : f32
    %339 = vector.broadcast %cst_207 : f32 to vector<8x8x8xf32>
    %340 = arith.mulf %338, %339 : vector<8x8x8xf32>
    %341 = vector.broadcast %6 : vector<8x1x8xf32> to vector<8x8x8xf32>
    %342 = arith.addf %340, %341 : vector<8x8x8xf32>
    %cst_208 = arith.constant dense<0xFF800000> : vector<8x8xf32>
    %343 = vector.multi_reduction <maximumf>, %342, %cst_208 [2] : vector<8x8x8xf32> to vector<8x8xf32>
    %344 = vector.shape_cast %343 : vector<8x8xf32> to vector<8x8x1xf32>
    %345 = vector.broadcast %344 : vector<8x8x1xf32> to vector<8x8x8xf32>
    %346 = arith.subf %342, %345 : vector<8x8x8xf32>
    %347 = math.exp %346 : vector<8x8x8xf32>
    %cst_209 = arith.constant dense<0.000000e+00> : vector<8x8xf32>
    %348 = vector.multi_reduction <add>, %347, %cst_209 [2] : vector<8x8x8xf32> to vector<8x8xf32>
    %349 = vector.shape_cast %348 : vector<8x8xf32> to vector<8x8x1xf32>
    %350 = vector.broadcast %349 : vector<8x8x1xf32> to vector<8x8x8xf32>
    %351 = arith.divf %347, %350 : vector<8x8x8xf32>
    "tpu.trace_start"() <{level = 10 : i32, message = "bqk,bkd->bqd"}> : () -> ()
    %cst_210 = arith.constant dense<0.000000e+00> : vector<8x8x8xf32>
    %352 = tpu.matmul %351, %337, %cst_210 {dimension_numbers = #tpu.dot_dimension_numbers<[2], [1], [1], [2], [0, 0, 0, 1, 1, 2], [0], [0]>} : vector<8x8x8xf32>, vector<8x8x8xf32>, vector<8x8x8xf32> -> vector<8x8x8xf32>
    "tpu.trace_stop"() : () -> ()
    %353 = vector.shape_cast %352 : vector<8x8x8xf32> to vector<64x8xf32>
    %c5_211 = arith.constant 5 : index
    %c0_212 = arith.constant 0 : index
    %c0_213 = arith.constant 0 : index
    %354 = vector.load %arg7[%c5_211, %c0_212, %c0_213] : memref<8x8x32xf32, #tpu.memory_space<vmem>>, vector<1x8x32xf32>
    %355 = vector.shape_cast %354 : vector<1x8x32xf32> to vector<8x32xf32>
    %cst_214 = arith.constant dense<0.000000e+00> : vector<64x32xf32>
    %356 = tpu.matmul %353, %355, %cst_214 {dimension_numbers = #tpu.dot_dimension_numbers<[1], [0], [0], [1], [0, 0, 1, 1], [], []>} : vector<64x8xf32>, vector<8x32xf32>, vector<64x32xf32> -> vector<64x32xf32>
    %357 = arith.addf %313, %356 : vector<64x32xf32>
    %c14 = arith.constant 14 : index
    %c0_215 = arith.constant 0 : index
    %c0_216 = arith.constant 0 : index
    %358 = vector.load %arg5[%c14, %c0_215, %c0_216] : memref<24x32x8xf32, #tpu.memory_space<vmem>>, vector<1x32x8xf32>
    %359 = vector.shape_cast %358 : vector<1x32x8xf32> to vector<32x8xf32>
    %cst_217 = arith.constant dense<0.000000e+00> : vector<64x8xf32>
    %360 = tpu.matmul %268, %359, %cst_217 {dimension_numbers = #tpu.dot_dimension_numbers<[1], [0], [0], [1], [0, 0, 1, 1], [], []>} : vector<64x32xf32>, vector<32x8xf32>, vector<64x8xf32> -> vector<64x8xf32>
    %c14_218 = arith.constant 14 : index
    %c0_219 = arith.constant 0 : index
    %c0_220 = arith.constant 0 : index
    %361 = vector.load %arg6[%c14_218, %c0_219, %c0_220] : memref<24x1x8xf32, #tpu.memory_space<vmem>>, vector<1x1x8xf32>
    %362 = vector.shape_cast %361 : vector<1x1x8xf32> to vector<1x8xf32>
    %363 = vector.broadcast %362 : vector<1x8xf32> to vector<64x8xf32>
    %364 = arith.addf %360, %363 : vector<64x8xf32>
    %c18 = arith.constant 18 : index
    %c0_221 = arith.constant 0 : index
    %c0_222 = arith.constant 0 : index
    %365 = vector.load %arg5[%c18, %c0_221, %c0_222] : memref<24x32x8xf32, #tpu.memory_space<vmem>>, vector<1x32x8xf32>
    %366 = vector.shape_cast %365 : vector<1x32x8xf32> to vector<32x8xf32>
    %cst_223 = arith.constant dense<0.000000e+00> : vector<64x8xf32>
    %367 = tpu.matmul %268, %366, %cst_223 {dimension_numbers = #tpu.dot_dimension_numbers<[1], [0], [0], [1], [0, 0, 1, 1], [], []>} : vector<64x32xf32>, vector<32x8xf32>, vector<64x8xf32> -> vector<64x8xf32>
    %c18_224 = arith.constant 18 : index
    %c0_225 = arith.constant 0 : index
    %c0_226 = arith.constant 0 : index
    %368 = vector.load %arg6[%c18_224, %c0_225, %c0_226] : memref<24x1x8xf32, #tpu.memory_space<vmem>>, vector<1x1x8xf32>
    %369 = vector.shape_cast %368 : vector<1x1x8xf32> to vector<1x8xf32>
    %370 = vector.broadcast %369 : vector<1x8xf32> to vector<64x8xf32>
    %371 = arith.addf %367, %370 : vector<64x8xf32>
    %c22 = arith.constant 22 : index
    %c0_227 = arith.constant 0 : index
    %c0_228 = arith.constant 0 : index
    %372 = vector.load %arg5[%c22, %c0_227, %c0_228] : memref<24x32x8xf32, #tpu.memory_space<vmem>>, vector<1x32x8xf32>
    %373 = vector.shape_cast %372 : vector<1x32x8xf32> to vector<32x8xf32>
    %cst_229 = arith.constant dense<0.000000e+00> : vector<64x8xf32>
    %374 = tpu.matmul %268, %373, %cst_229 {dimension_numbers = #tpu.dot_dimension_numbers<[1], [0], [0], [1], [0, 0, 1, 1], [], []>} : vector<64x32xf32>, vector<32x8xf32>, vector<64x8xf32> -> vector<64x8xf32>
    %c22_230 = arith.constant 22 : index
    %c0_231 = arith.constant 0 : index
    %c0_232 = arith.constant 0 : index
    %375 = vector.load %arg6[%c22_230, %c0_231, %c0_232] : memref<24x1x8xf32, #tpu.memory_space<vmem>>, vector<1x1x8xf32>
    %376 = vector.shape_cast %375 : vector<1x1x8xf32> to vector<1x8xf32>
    %377 = vector.broadcast %376 : vector<1x8xf32> to vector<64x8xf32>
    %378 = arith.addf %374, %377 : vector<64x8xf32>
    %379 = vector.shape_cast %364 : vector<64x8xf32> to vector<8x8x8xf32>
    %380 = vector.shape_cast %371 : vector<64x8xf32> to vector<8x8x8xf32>
    %381 = vector.shape_cast %378 : vector<64x8xf32> to vector<8x8x8xf32>
    "tpu.trace_start"() <{level = 10 : i32, message = "bqd,bkd->bqk"}> : () -> ()
    %cst_233 = arith.constant dense<0.000000e+00> : vector<8x8x8xf32>
    %382 = tpu.matmul %379, %380, %cst_233 {dimension_numbers = #tpu.dot_dimension_numbers<[2], [2], [1], [1], [0, 0, 0, 1, 1, 1], [0], [0]>} : vector<8x8x8xf32>, vector<8x8x8xf32>, vector<8x8x8xf32> -> vector<8x8x8xf32>
    "tpu.trace_stop"() : () -> ()
    %cst_234 = arith.constant 0.353553385 : f32
    %383 = vector.broadcast %cst_234 : f32 to vector<8x8x8xf32>
    %384 = arith.mulf %382, %383 : vector<8x8x8xf32>
    %385 = vector.broadcast %6 : vector<8x1x8xf32> to vector<8x8x8xf32>
    %386 = arith.addf %384, %385 : vector<8x8x8xf32>
    %cst_235 = arith.constant dense<0xFF800000> : vector<8x8xf32>
    %387 = vector.multi_reduction <maximumf>, %386, %cst_235 [2] : vector<8x8x8xf32> to vector<8x8xf32>
    %388 = vector.shape_cast %387 : vector<8x8xf32> to vector<8x8x1xf32>
    %389 = vector.broadcast %388 : vector<8x8x1xf32> to vector<8x8x8xf32>
    %390 = arith.subf %386, %389 : vector<8x8x8xf32>
    %391 = math.exp %390 : vector<8x8x8xf32>
    %cst_236 = arith.constant dense<0.000000e+00> : vector<8x8xf32>
    %392 = vector.multi_reduction <add>, %391, %cst_236 [2] : vector<8x8x8xf32> to vector<8x8xf32>
    %393 = vector.shape_cast %392 : vector<8x8xf32> to vector<8x8x1xf32>
    %394 = vector.broadcast %393 : vector<8x8x1xf32> to vector<8x8x8xf32>
    %395 = arith.divf %391, %394 : vector<8x8x8xf32>
    "tpu.trace_start"() <{level = 10 : i32, message = "bqk,bkd->bqd"}> : () -> ()
    %cst_237 = arith.constant dense<0.000000e+00> : vector<8x8x8xf32>
    %396 = tpu.matmul %395, %381, %cst_237 {dimension_numbers = #tpu.dot_dimension_numbers<[2], [1], [1], [2], [0, 0, 0, 1, 1, 2], [0], [0]>} : vector<8x8x8xf32>, vector<8x8x8xf32>, vector<8x8x8xf32> -> vector<8x8x8xf32>
    "tpu.trace_stop"() : () -> ()
    %397 = vector.shape_cast %396 : vector<8x8x8xf32> to vector<64x8xf32>
    %c6_238 = arith.constant 6 : index
    %c0_239 = arith.constant 0 : index
    %c0_240 = arith.constant 0 : index
    %398 = vector.load %arg7[%c6_238, %c0_239, %c0_240] : memref<8x8x32xf32, #tpu.memory_space<vmem>>, vector<1x8x32xf32>
    %399 = vector.shape_cast %398 : vector<1x8x32xf32> to vector<8x32xf32>
    %cst_241 = arith.constant dense<0.000000e+00> : vector<64x32xf32>
    %400 = tpu.matmul %397, %399, %cst_241 {dimension_numbers = #tpu.dot_dimension_numbers<[1], [0], [0], [1], [0, 0, 1, 1], [], []>} : vector<64x8xf32>, vector<8x32xf32>, vector<64x32xf32> -> vector<64x32xf32>
    %401 = arith.addf %357, %400 : vector<64x32xf32>
    %c15 = arith.constant 15 : index
    %c0_242 = arith.constant 0 : index
    %c0_243 = arith.constant 0 : index
    %402 = vector.load %arg5[%c15, %c0_242, %c0_243] : memref<24x32x8xf32, #tpu.memory_space<vmem>>, vector<1x32x8xf32>
    %403 = vector.shape_cast %402 : vector<1x32x8xf32> to vector<32x8xf32>
    %cst_244 = arith.constant dense<0.000000e+00> : vector<64x8xf32>
    %404 = tpu.matmul %268, %403, %cst_244 {dimension_numbers = #tpu.dot_dimension_numbers<[1], [0], [0], [1], [0, 0, 1, 1], [], []>} : vector<64x32xf32>, vector<32x8xf32>, vector<64x8xf32> -> vector<64x8xf32>
    %c15_245 = arith.constant 15 : index
    %c0_246 = arith.constant 0 : index
    %c0_247 = arith.constant 0 : index
    %405 = vector.load %arg6[%c15_245, %c0_246, %c0_247] : memref<24x1x8xf32, #tpu.memory_space<vmem>>, vector<1x1x8xf32>
    %406 = vector.shape_cast %405 : vector<1x1x8xf32> to vector<1x8xf32>
    %407 = vector.broadcast %406 : vector<1x8xf32> to vector<64x8xf32>
    %408 = arith.addf %404, %407 : vector<64x8xf32>
    %c19 = arith.constant 19 : index
    %c0_248 = arith.constant 0 : index
    %c0_249 = arith.constant 0 : index
    %409 = vector.load %arg5[%c19, %c0_248, %c0_249] : memref<24x32x8xf32, #tpu.memory_space<vmem>>, vector<1x32x8xf32>
    %410 = vector.shape_cast %409 : vector<1x32x8xf32> to vector<32x8xf32>
    %cst_250 = arith.constant dense<0.000000e+00> : vector<64x8xf32>
    %411 = tpu.matmul %268, %410, %cst_250 {dimension_numbers = #tpu.dot_dimension_numbers<[1], [0], [0], [1], [0, 0, 1, 1], [], []>} : vector<64x32xf32>, vector<32x8xf32>, vector<64x8xf32> -> vector<64x8xf32>
    %c19_251 = arith.constant 19 : index
    %c0_252 = arith.constant 0 : index
    %c0_253 = arith.constant 0 : index
    %412 = vector.load %arg6[%c19_251, %c0_252, %c0_253] : memref<24x1x8xf32, #tpu.memory_space<vmem>>, vector<1x1x8xf32>
    %413 = vector.shape_cast %412 : vector<1x1x8xf32> to vector<1x8xf32>
    %414 = vector.broadcast %413 : vector<1x8xf32> to vector<64x8xf32>
    %415 = arith.addf %411, %414 : vector<64x8xf32>
    %c23 = arith.constant 23 : index
    %c0_254 = arith.constant 0 : index
    %c0_255 = arith.constant 0 : index
    %416 = vector.load %arg5[%c23, %c0_254, %c0_255] : memref<24x32x8xf32, #tpu.memory_space<vmem>>, vector<1x32x8xf32>
    %417 = vector.shape_cast %416 : vector<1x32x8xf32> to vector<32x8xf32>
    %cst_256 = arith.constant dense<0.000000e+00> : vector<64x8xf32>
    %418 = tpu.matmul %268, %417, %cst_256 {dimension_numbers = #tpu.dot_dimension_numbers<[1], [0], [0], [1], [0, 0, 1, 1], [], []>} : vector<64x32xf32>, vector<32x8xf32>, vector<64x8xf32> -> vector<64x8xf32>
    %c23_257 = arith.constant 23 : index
    %c0_258 = arith.constant 0 : index
    %c0_259 = arith.constant 0 : index
    %419 = vector.load %arg6[%c23_257, %c0_258, %c0_259] : memref<24x1x8xf32, #tpu.memory_space<vmem>>, vector<1x1x8xf32>
    %420 = vector.shape_cast %419 : vector<1x1x8xf32> to vector<1x8xf32>
    %421 = vector.broadcast %420 : vector<1x8xf32> to vector<64x8xf32>
    %422 = arith.addf %418, %421 : vector<64x8xf32>
    %423 = vector.shape_cast %408 : vector<64x8xf32> to vector<8x8x8xf32>
    %424 = vector.shape_cast %415 : vector<64x8xf32> to vector<8x8x8xf32>
    %425 = vector.shape_cast %422 : vector<64x8xf32> to vector<8x8x8xf32>
    "tpu.trace_start"() <{level = 10 : i32, message = "bqd,bkd->bqk"}> : () -> ()
    %cst_260 = arith.constant dense<0.000000e+00> : vector<8x8x8xf32>
    %426 = tpu.matmul %423, %424, %cst_260 {dimension_numbers = #tpu.dot_dimension_numbers<[2], [2], [1], [1], [0, 0, 0, 1, 1, 1], [0], [0]>} : vector<8x8x8xf32>, vector<8x8x8xf32>, vector<8x8x8xf32> -> vector<8x8x8xf32>
    "tpu.trace_stop"() : () -> ()
    %cst_261 = arith.constant 0.353553385 : f32
    %427 = vector.broadcast %cst_261 : f32 to vector<8x8x8xf32>
    %428 = arith.mulf %426, %427 : vector<8x8x8xf32>
    %429 = vector.broadcast %6 : vector<8x1x8xf32> to vector<8x8x8xf32>
    %430 = arith.addf %428, %429 : vector<8x8x8xf32>
    %cst_262 = arith.constant dense<0xFF800000> : vector<8x8xf32>
    %431 = vector.multi_reduction <maximumf>, %430, %cst_262 [2] : vector<8x8x8xf32> to vector<8x8xf32>
    %432 = vector.shape_cast %431 : vector<8x8xf32> to vector<8x8x1xf32>
    %433 = vector.broadcast %432 : vector<8x8x1xf32> to vector<8x8x8xf32>
    %434 = arith.subf %430, %433 : vector<8x8x8xf32>
    %435 = math.exp %434 : vector<8x8x8xf32>
    %cst_263 = arith.constant dense<0.000000e+00> : vector<8x8xf32>
    %436 = vector.multi_reduction <add>, %435, %cst_263 [2] : vector<8x8x8xf32> to vector<8x8xf32>
    %437 = vector.shape_cast %436 : vector<8x8xf32> to vector<8x8x1xf32>
    %438 = vector.broadcast %437 : vector<8x8x1xf32> to vector<8x8x8xf32>
    %439 = arith.divf %435, %438 : vector<8x8x8xf32>
    "tpu.trace_start"() <{level = 10 : i32, message = "bqk,bkd->bqd"}> : () -> ()
    %cst_264 = arith.constant dense<0.000000e+00> : vector<8x8x8xf32>
    %440 = tpu.matmul %439, %425, %cst_264 {dimension_numbers = #tpu.dot_dimension_numbers<[2], [1], [1], [2], [0, 0, 0, 1, 1, 2], [0], [0]>} : vector<8x8x8xf32>, vector<8x8x8xf32>, vector<8x8x8xf32> -> vector<8x8x8xf32>
    "tpu.trace_stop"() : () -> ()
    %441 = vector.shape_cast %440 : vector<8x8x8xf32> to vector<64x8xf32>
    %c7_265 = arith.constant 7 : index
    %c0_266 = arith.constant 0 : index
    %c0_267 = arith.constant 0 : index
    %442 = vector.load %arg7[%c7_265, %c0_266, %c0_267] : memref<8x8x32xf32, #tpu.memory_space<vmem>>, vector<1x8x32xf32>
    %443 = vector.shape_cast %442 : vector<1x8x32xf32> to vector<8x32xf32>
    %cst_268 = arith.constant dense<0.000000e+00> : vector<64x32xf32>
    %444 = tpu.matmul %441, %443, %cst_268 {dimension_numbers = #tpu.dot_dimension_numbers<[1], [0], [0], [1], [0, 0, 1, 1], [], []>} : vector<64x8xf32>, vector<8x32xf32>, vector<64x32xf32> -> vector<64x32xf32>
    %445 = arith.addf %401, %444 : vector<64x32xf32>
    %c1_269 = arith.constant 1 : index
    %c0_270 = arith.constant 0 : index
    %c0_271 = arith.constant 0 : index
    %446 = vector.load %arg8[%c1_269, %c0_270, %c0_271] : memref<2x1x32xf32, #tpu.memory_space<vmem>>, vector<1x1x32xf32>
    %447 = vector.shape_cast %446 : vector<1x1x32xf32> to vector<1x32xf32>
    %448 = vector.broadcast %447 : vector<1x32xf32> to vector<64x32xf32>
    %449 = arith.addf %445, %448 : vector<64x32xf32>
    %450 = arith.addf %268, %449 : vector<64x32xf32>
    %c4_272 = arith.constant 4 : index
    %c0_273 = arith.constant 0 : index
    %c0_274 = arith.constant 0 : index
    %451 = vector.load %arg9[%c4_272, %c0_273, %c0_274] : memref<8x1x32xf32, #tpu.memory_space<vmem>>, vector<1x1x32xf32>
    %452 = vector.shape_cast %451 : vector<1x1x32xf32> to vector<1x32xf32>
    %c5_275 = arith.constant 5 : index
    %c0_276 = arith.constant 0 : index
    %c0_277 = arith.constant 0 : index
    %453 = vector.load %arg9[%c5_275, %c0_276, %c0_277] : memref<8x1x32xf32, #tpu.memory_space<vmem>>, vector<1x1x32xf32>
    %454 = vector.shape_cast %453 : vector<1x1x32xf32> to vector<1x32xf32>
    %cst_278 = arith.constant dense<0.000000e+00> : vector<64xf32>
    %455 = vector.multi_reduction <add>, %450, %cst_278 [1] : vector<64x32xf32> to vector<64xf32>
    %456 = vector.shape_cast %455 : vector<64xf32> to vector<64x1xf32>
    %cst_279 = arith.constant 3.200000e+01 : f32
    %457 = vector.broadcast %cst_279 : f32 to vector<64x1xf32>
    %458 = arith.divf %456, %457 : vector<64x1xf32>
    %459 = vector.broadcast %458 : vector<64x1xf32> to vector<64x32xf32>
    %460 = arith.subf %450, %459 : vector<64x32xf32>
    %461 = arith.mulf %460, %460 : vector<64x32xf32>
    %cst_280 = arith.constant dense<0.000000e+00> : vector<64xf32>
    %462 = vector.multi_reduction <add>, %461, %cst_280 [1] : vector<64x32xf32> to vector<64xf32>
    %463 = vector.shape_cast %462 : vector<64xf32> to vector<64x1xf32>
    %cst_281 = arith.constant 3.200000e+01 : f32
    %464 = vector.broadcast %cst_281 : f32 to vector<64x1xf32>
    %465 = arith.divf %463, %464 : vector<64x1xf32>
    %466 = vector.broadcast %458 : vector<64x1xf32> to vector<64x32xf32>
    %467 = arith.subf %450, %466 : vector<64x32xf32>
    %cst_282 = arith.constant 9.99999974E-6 : f32
    %468 = vector.broadcast %cst_282 : f32 to vector<64x1xf32>
    %469 = arith.addf %465, %468 : vector<64x1xf32>
    %470 = math.rsqrt %469 : vector<64x1xf32>
    %471 = vector.broadcast %470 : vector<64x1xf32> to vector<64x32xf32>
    %472 = arith.mulf %467, %471 : vector<64x32xf32>
    %473 = vector.broadcast %452 : vector<1x32xf32> to vector<64x32xf32>
    %474 = arith.mulf %472, %473 : vector<64x32xf32>
    %475 = vector.broadcast %454 : vector<1x32xf32> to vector<64x32xf32>
    %476 = arith.addf %474, %475 : vector<64x32xf32>
    %c1_283 = arith.constant 1 : index
    %c0_284 = arith.constant 0 : index
    %c0_285 = arith.constant 0 : index
    %477 = vector.load %arg10[%c1_283, %c0_284, %c0_285] : memref<2x32x64xf32, #tpu.memory_space<vmem>>, vector<1x32x64xf32>
    %478 = vector.shape_cast %477 : vector<1x32x64xf32> to vector<32x64xf32>
    %cst_286 = arith.constant dense<0.000000e+00> : vector<64x64xf32>
    %479 = tpu.matmul %476, %478, %cst_286 {dimension_numbers = #tpu.dot_dimension_numbers<[1], [0], [0], [1], [0, 0, 1, 1], [], []>} : vector<64x32xf32>, vector<32x64xf32>, vector<64x64xf32> -> vector<64x64xf32>
    %c1_287 = arith.constant 1 : index
    %c0_288 = arith.constant 0 : index
    %c0_289 = arith.constant 0 : index
    %480 = vector.load %arg11[%c1_287, %c0_288, %c0_289] : memref<2x1x64xf32, #tpu.memory_space<vmem>>, vector<1x1x64xf32>
    %481 = vector.shape_cast %480 : vector<1x1x64xf32> to vector<1x64xf32>
    %482 = vector.broadcast %481 : vector<1x64xf32> to vector<64x64xf32>
    %483 = arith.addf %479, %482 : vector<64x64xf32>
    %cst_290 = arith.constant 5.000000e-01 : f32
    %484 = vector.broadcast %cst_290 : f32 to vector<64x64xf32>
    %485 = arith.mulf %484, %483 : vector<64x64xf32>
    %cst_291 = arith.constant 4.471500e-02 : f32
    %486 = vector.broadcast %cst_291 : f32 to vector<64x64xf32>
    %487 = arith.mulf %486, %483 : vector<64x64xf32>
    %488 = arith.mulf %487, %483 : vector<64x64xf32>
    %489 = arith.mulf %488, %483 : vector<64x64xf32>
    %490 = arith.addf %483, %489 : vector<64x64xf32>
    %cst_292 = arith.constant 0.797884583 : f32
    %491 = vector.broadcast %cst_292 : f32 to vector<64x64xf32>
    %492 = arith.mulf %491, %490 : vector<64x64xf32>
    %493 = math.tanh %492 : vector<64x64xf32>
    %cst_293 = arith.constant 1.000000e+00 : f32
    %494 = vector.broadcast %cst_293 : f32 to vector<64x64xf32>
    %495 = arith.addf %494, %493 : vector<64x64xf32>
    %496 = arith.mulf %485, %495 : vector<64x64xf32>
    %c1_294 = arith.constant 1 : index
    %c0_295 = arith.constant 0 : index
    %c0_296 = arith.constant 0 : index
    %497 = vector.load %arg12[%c1_294, %c0_295, %c0_296] : memref<2x64x32xf32, #tpu.memory_space<vmem>>, vector<1x64x32xf32>
    %498 = vector.shape_cast %497 : vector<1x64x32xf32> to vector<64x32xf32>
    %cst_297 = arith.constant dense<0.000000e+00> : vector<64x32xf32>
    %499 = tpu.matmul %496, %498, %cst_297 {dimension_numbers = #tpu.dot_dimension_numbers<[1], [0], [0], [1], [0, 0, 1, 1], [], []>} : vector<64x64xf32>, vector<64x32xf32>, vector<64x32xf32> -> vector<64x32xf32>
    %c1_298 = arith.constant 1 : index
    %c0_299 = arith.constant 0 : index
    %c0_300 = arith.constant 0 : index
    %500 = vector.load %arg13[%c1_298, %c0_299, %c0_300] : memref<2x1x32xf32, #tpu.memory_space<vmem>>, vector<1x1x32xf32>
    %501 = vector.shape_cast %500 : vector<1x1x32xf32> to vector<1x32xf32>
    %502 = vector.broadcast %501 : vector<1x32xf32> to vector<64x32xf32>
    %503 = arith.addf %499, %502 : vector<64x32xf32>
    %504 = arith.addf %476, %503 : vector<64x32xf32>
    %c6_301 = arith.constant 6 : index
    %c0_302 = arith.constant 0 : index
    %c0_303 = arith.constant 0 : index
    %505 = vector.load %arg9[%c6_301, %c0_302, %c0_303] : memref<8x1x32xf32, #tpu.memory_space<vmem>>, vector<1x1x32xf32>
    %506 = vector.shape_cast %505 : vector<1x1x32xf32> to vector<1x32xf32>
    %c7_304 = arith.constant 7 : index
    %c0_305 = arith.constant 0 : index
    %c0_306 = arith.constant 0 : index
    %507 = vector.load %arg9[%c7_304, %c0_305, %c0_306] : memref<8x1x32xf32, #tpu.memory_space<vmem>>, vector<1x1x32xf32>
    %508 = vector.shape_cast %507 : vector<1x1x32xf32> to vector<1x32xf32>
    %cst_307 = arith.constant dense<0.000000e+00> : vector<64xf32>
    %509 = vector.multi_reduction <add>, %504, %cst_307 [1] : vector<64x32xf32> to vector<64xf32>
    %510 = vector.shape_cast %509 : vector<64xf32> to vector<64x1xf32>
    %cst_308 = arith.constant 3.200000e+01 : f32
    %511 = vector.broadcast %cst_308 : f32 to vector<64x1xf32>
    %512 = arith.divf %510, %511 : vector<64x1xf32>
    %513 = vector.broadcast %512 : vector<64x1xf32> to vector<64x32xf32>
    %514 = arith.subf %504, %513 : vector<64x32xf32>
    %515 = arith.mulf %514, %514 : vector<64x32xf32>
    %cst_309 = arith.constant dense<0.000000e+00> : vector<64xf32>
    %516 = vector.multi_reduction <add>, %515, %cst_309 [1] : vector<64x32xf32> to vector<64xf32>
    %517 = vector.shape_cast %516 : vector<64xf32> to vector<64x1xf32>
    %cst_310 = arith.constant 3.200000e+01 : f32
    %518 = vector.broadcast %cst_310 : f32 to vector<64x1xf32>
    %519 = arith.divf %517, %518 : vector<64x1xf32>
    %520 = vector.broadcast %512 : vector<64x1xf32> to vector<64x32xf32>
    %521 = arith.subf %504, %520 : vector<64x32xf32>
    %cst_311 = arith.constant 9.99999974E-6 : f32
    %522 = vector.broadcast %cst_311 : f32 to vector<64x1xf32>
    %523 = arith.addf %519, %522 : vector<64x1xf32>
    %524 = math.rsqrt %523 : vector<64x1xf32>
    %525 = vector.broadcast %524 : vector<64x1xf32> to vector<64x32xf32>
    %526 = arith.mulf %521, %525 : vector<64x32xf32>
    %527 = vector.broadcast %506 : vector<1x32xf32> to vector<64x32xf32>
    %528 = arith.mulf %526, %527 : vector<64x32xf32>
    %529 = vector.broadcast %508 : vector<1x32xf32> to vector<64x32xf32>
    %530 = arith.addf %528, %529 : vector<64x32xf32>
    %531 = vector.shape_cast %530 : vector<64x32xf32> to vector<8x8x32xf32>
    %532 = vector.extract_strided_slice %531 {offsets = [0, 0, 0], sizes = [8, 1, 32], strides = [1, 1, 1]} : vector<8x8x32xf32> to vector<8x1x32xf32>
    %533 = vector.shape_cast %532 : vector<8x1x32xf32> to vector<8x32xf32>
    %c0_312 = arith.constant 0 : index
    %c0_313 = arith.constant 0 : index
    %534 = vector.load %arg14[%c0_312, %c0_313] : memref<8x32xf32, #tpu.memory_space<vmem>>, vector<8x32xf32>
    tpu.vector_store %arg14[%c0_312, %c0_313], %533 {strides = array<i32>} : memref<8x32xf32, #tpu.memory_space<vmem>>, vector<8x32xf32>,
    return
  }
  func.func @transform_0(%arg0: i32) -> (i32, i32) {
    %c0_i32 = arith.constant 0 : i32
    %c0_i32_0 = arith.constant 0 : i32
    return %arg0, %c0_i32 : i32, i32
  }
  func.func @transform_1(%arg0: i32) -> (i32, i32) {
    %c0_i32 = arith.constant 0 : i32
    %c0_i32_0 = arith.constant 0 : i32
    return %arg0, %c0_i32 : i32, i32
  }
  func.func @transform_2(%arg0: i32) -> (i32, i32) {
    %c0_i32 = arith.constant 0 : i32
    %c0_i32_0 = arith.constant 0 : i32
    return %arg0, %c0_i32 : i32, i32
  }
  func.func @transform_3(%arg0: i32) -> (i32, i32) {
    %c0_i32 = arith.constant 0 : i32
    %c0_i32_0 = arith.constant 0 : i32
    %c0_i32_1 = arith.constant 0 : i32
    return %c0_i32, %c0_i32_0 : i32, i32
  }
  func.func @transform_4(%arg0: i32) -> (i32, i32, i32) {
    %c0_i32 = arith.constant 0 : i32
    %c0_i32_0 = arith.constant 0 : i32
    %c0_i32_1 = arith.constant 0 : i32
    %c0_i32_2 = arith.constant 0 : i32
    return %c0_i32, %c0_i32_0, %c0_i32_1 : i32, i32, i32
  }
  func.func @transform_5(%arg0: i32) -> (i32, i32, i32) {
    %c0_i32 = arith.constant 0 : i32
    %c0_i32_0 = arith.constant 0 : i32
    %c0_i32_1 = arith.constant 0 : i32
    %c0_i32_2 = arith.constant 0 : i32
    return %c0_i32, %c0_i32_0, %c0_i32_1 : i32, i32, i32
  }
  func.func @transform_6(%arg0: i32) -> (i32, i32, i32) {
    %c0_i32 = arith.constant 0 : i32
    %c0_i32_0 = arith.constant 0 : i32
    %c0_i32_1 = arith.constant 0 : i32
    %c0_i32_2 = arith.constant 0 : i32
    return %c0_i32, %c0_i32_0, %c0_i32_1 : i32, i32, i32
  }
  func.func @transform_7(%arg0: i32) -> (i32, i32, i32) {
    %c0_i32 = arith.constant 0 : i32
    %c0_i32_0 = arith.constant 0 : i32
    %c0_i32_1 = arith.constant 0 : i32
    %c0_i32_2 = arith.constant 0 : i32
    return %c0_i32, %c0_i32_0, %c0_i32_1 : i32, i32, i32
  }
  func.func @transform_8(%arg0: i32) -> (i32, i32, i32) {
    %c0_i32 = arith.constant 0 : i32
    %c0_i32_0 = arith.constant 0 : i32
    %c0_i32_1 = arith.constant 0 : i32
    %c0_i32_2 = arith.constant 0 : i32
    return %c0_i32, %c0_i32_0, %c0_i32_1 : i32, i32, i32
  }
  func.func @transform_9(%arg0: i32) -> (i32, i32, i32) {
    %c0_i32 = arith.constant 0 : i32
    %c0_i32_0 = arith.constant 0 : i32
    %c0_i32_1 = arith.constant 0 : i32
    %c0_i32_2 = arith.constant 0 : i32
    return %c0_i32, %c0_i32_0, %c0_i32_1 : i32, i32, i32
  }
  func.func @transform_10(%arg0: i32) -> (i32, i32, i32) {
    %c0_i32 = arith.constant 0 : i32
    %c0_i32_0 = arith.constant 0 : i32
    %c0_i32_1 = arith.constant 0 : i32
    %c0_i32_2 = arith.constant 0 : i32
    return %c0_i32, %c0_i32_0, %c0_i32_1 : i32, i32, i32
  }
  func.func @transform_11(%arg0: i32) -> (i32, i32, i32) {
    %c0_i32 = arith.constant 0 : i32
    %c0_i32_0 = arith.constant 0 : i32
    %c0_i32_1 = arith.constant 0 : i32
    %c0_i32_2 = arith.constant 0 : i32
    return %c0_i32, %c0_i32_0, %c0_i32_1 : i32, i32, i32
  }
  func.func @transform_12(%arg0: i32) -> (i32, i32, i32) {
    %c0_i32 = arith.constant 0 : i32
    %c0_i32_0 = arith.constant 0 : i32
    %c0_i32_1 = arith.constant 0 : i32
    %c0_i32_2 = arith.constant 0 : i32
    return %c0_i32, %c0_i32_0, %c0_i32_1 : i32, i32, i32
  }
  func.func @transform_13(%arg0: i32) -> (i32, i32) {
    %c0_i32 = arith.constant 0 : i32
    %c0_i32_0 = arith.constant 0 : i32
    return %arg0, %c0_i32 : i32, i32
  }
}

</mosaic_0001>

<llo_original>
// kernel: tpu_custom_call.1
$region0: #{tpu_custom_call.1}
  #allocation0 [shape = 'u32[]', space=smem, size = 0x4, offset = 0x4, fixed_abs, tag = 'smem constant byte address 0x4 - core index']
  #allocation1 [shape = 'u32[72,128]{1,0:T(1,128)}', space=vmem, size = 0x9000, scoped, tag = 'internal scratch']
  %s0 = inlined_call_operand.vmem [shape: f32[64,4], index: 0, kind: input, shape index: {}]
  %s1 = inlined_call_operand.vmem [shape: f32[64,32], index: 1, kind: input, shape index: {}]
  %s2 = inlined_call_operand.vmem [shape: f32[8,8], index: 2, kind: input, shape index: {}]
  %s3 = inlined_call_operand.vmem [shape: f32[4,32], index: 3, kind: input, shape index: {}]
  %s4 = inlined_call_operand.vmem [shape: f32[24,32,8], index: 4, kind: input, shape index: {}]
  %s5 = inlined_call_operand.vmem [shape: f32[24,1,8], index: 5, kind: input, shape index: {}]
  %s6 = inlined_call_operand.vmem [shape: f32[8,8,32], index: 6, kind: input, shape index: {}]
  %s7 = inlined_call_operand.vmem [shape: f32[2,1,32], index: 7, kind: input, shape index: {}]
  %s8 = inlined_call_operand.vmem [shape: f32[8,1,32], index: 8, kind: input, shape index: {}]
  %s9 = inlined_call_operand.vmem [shape: f32[2,32,64], index: 9, kind: input, shape index: {}]
  %s10 = inlined_call_operand.vmem [shape: f32[2,1,64], index: 10, kind: input, shape index: {}]
  %s11 = inlined_call_operand.vmem [shape: f32[2,64,32], index: 11, kind: input, shape index: {}]
  %s12 = inlined_call_operand.vmem [shape: f32[2,1,32], index: 12, kind: input, shape index: {}]
  %s13 = inlined_call_operand.hbm [shape: f32[8,32], index: 13, kind: output, shape index: {}]
  %s14 = sld [smem:[#allocation0]]
  $region62: #{tpu_custom_call.1} parent=0
    _
  %s16 = ssub.s32 1, %s14
  %s17 = scalar_select 0, %s16, %s14
  $region1: #{tpu_custom_call.1} parent=0
    #allocation2 [shape = 'u8[4096]{0}', space=vmem, size = 0x1000, scoped, tag = 'output window, operand 0, single buffered']
    #allocation3 [shape = 's32[1]{0}', space=sflag, size = 0x4, scoped, tag = 'scoped memory for tpu_custom_call.1']
    %18 = vsyncpa [#allocation3], 0
    // Predicated region
    $region2: #{tpu_custom_call.1} parent=1 // pred_check
      _
    $region3: #{tpu_custom_call.1} parent=1 // pred_check_branch
      %20 = sbr.rel (0) target = $region5
    $region4: #{tpu_custom_call.1} parent=1 // pred_region
      _
    $region5: #{tpu_custom_call.1} parent=1 // pred_fallthru
      _
    // Predicated region
    $region6: #{tpu_custom_call.1} parent=1 // pred_check
      _
    $region7: #{tpu_custom_call.1} parent=1 // pred_check_branch
      %22 = sbr.rel (0) target = $region9
    $region8: #{tpu_custom_call.1} parent=1 // pred_region
      _
    $region9: #{tpu_custom_call.1} parent=1 // pred_fallthru
      _
    // Predicated region
    $region10: #{tpu_custom_call.1} parent=1 // pred_check
      _
    $region11: #{tpu_custom_call.1} parent=1 // pred_check_branch
      %24 = sbr.rel (0) target = $region13
    $region12: #{tpu_custom_call.1} parent=1 // pred_region
      _
    $region13: #{tpu_custom_call.1} parent=1 // pred_fallthru
      _
    // Predicated region
    $region14: #{tpu_custom_call.1} parent=1 // pred_check
      _
    $region15: #{tpu_custom_call.1} parent=1 // pred_check_branch
      %26 = sbr.rel (0) target = $region17
    $region16: #{tpu_custom_call.1} parent=1 // pred_region
      _
    $region17: #{tpu_custom_call.1} parent=1 // pred_fallthru
      _
    // Predicated region
    $region18: #{tpu_custom_call.1} parent=1 // pred_check
      _
    $region19: #{tpu_custom_call.1} parent=1 // pred_check_branch
      %28 = sbr.rel (0) target = $region21
    $region20: #{tpu_custom_call.1} parent=1 // pred_region
      _
    $region21: #{tpu_custom_call.1} parent=1 // pred_fallthru
      _
    // Predicated region
    $region22: #{tpu_custom_call.1} parent=1 // pred_check
      _
    $region23: #{tpu_custom_call.1} parent=1 // pred_check_branch
      %30 = sbr.rel (0) target = $region25
    $region24: #{tpu_custom_call.1} parent=1 // pred_region
      _
    $region25: #{tpu_custom_call.1} parent=1 // pred_fallthru
      _
    // Predicated region
    $region26: #{tpu_custom_call.1} parent=1 // pred_check
      _
    $region27: #{tpu_custom_call.1} parent=1 // pred_check_branch
      %32 = sbr.rel (0) target = $region29
    $region28: #{tpu_custom_call.1} parent=1 // pred_region
      _
    $region29: #{tpu_custom_call.1} parent=1 // pred_fallthru
      _
    // Predicated region
    $region30: #{tpu_custom_call.1} parent=1 // pred_check
      _
    $region31: #{tpu_custom_call.1} parent=1 // pred_check_branch
      %34 = sbr.rel (0) target = $region33
    $region32: #{tpu_custom_call.1} parent=1 // pred_region
      _
    $region33: #{tpu_custom_call.1} parent=1 // pred_fallthru
      _
    // Predicated region
    $region34: #{tpu_custom_call.1} parent=1 // pred_check
      _
    $region35: #{tpu_custom_call.1} parent=1 // pred_check_branch
      %36 = sbr.rel (0) target = $region37
    $region36: #{tpu_custom_call.1} parent=1 // pred_region
      _
    $region37: #{tpu_custom_call.1} parent=1 // pred_fallthru
      _
    // Predicated region
    $region38: #{tpu_custom_call.1} parent=1 // pred_check
      _
    $region39: #{tpu_custom_call.1} parent=1 // pred_check_branch
      %38 = sbr.rel (0) target = $region41
    $region40: #{tpu_custom_call.1} parent=1 // pred_region
      _
    $region41: #{tpu_custom_call.1} parent=1 // pred_fallthru
      _
    // Predicated region
    $region42: #{tpu_custom_call.1} parent=1 // pred_check
      _
    $region43: #{tpu_custom_call.1} parent=1 // pred_check_branch
      %40 = sbr.rel (0) target = $region45
    $region44: #{tpu_custom_call.1} parent=1 // pred_region
      _
    $region45: #{tpu_custom_call.1} parent=1 // pred_fallthru
      _
    // Predicated region
    $region46: #{tpu_custom_call.1} parent=1 // pred_check
      _
    $region47: #{tpu_custom_call.1} parent=1 // pred_check_branch
      %42 = sbr.rel (0) target = $region49
    $region48: #{tpu_custom_call.1} parent=1 // pred_region
      _
    $region49: #{tpu_custom_call.1} parent=1 // pred_fallthru
      _
    // Predicated region
    $region50: #{tpu_custom_call.1} parent=1 // pred_check
      _
    $region51: #{tpu_custom_call.1} parent=1 // pred_check_branch
      %44 = sbr.rel (0) target = $region53
    $region52: #{tpu_custom_call.1} parent=1 // pred_region
      _
    $region53: #{tpu_custom_call.1} parent=1 // pred_fallthru
      _
    %v45 = vld [vmem:[%s0] sm:$0xff]
    %v46 = vld [vmem:[%s0 + $0x8] sm:$0xff]
    %v47 = vld [vmem:[%s0 + $0x10] sm:$0xff]
    %v48 = vld [vmem:[%s0 + $0x18] sm:$0xff]
    %v49 = vld [vmem:[%s0 + $0x20] sm:$0xff]
    %v50 = vld [vmem:[%s0 + $0x28] sm:$0xff]
    %v51 = vld [vmem:[%s0 + $0x30] sm:$0xff]
    %v52 = vld [vmem:[%s0 + $0x38] sm:$0xff]
    %v53 = vld [vmem:[%s3] sm:$0xf]
    %v54 = vld [vmem:[%s1] sm:$0xff]
    %v55 = vld [vmem:[%s1 + $0x8] sm:$0xff]
    %v56 = vld [vmem:[%s1 + $0x10] sm:$0xff]
    %v57 = vld [vmem:[%s1 + $0x18] sm:$0xff]
    %v58 = vld [vmem:[%s1 + $0x20] sm:$0xff]
    %v59 = vld [vmem:[%s1 + $0x28] sm:$0xff]
    %v60 = vld [vmem:[%s1 + $0x30] sm:$0xff]
    %v61 = vld [vmem:[%s1 + $0x38] sm:$0xff]
    %vm62 = vcmask 31744
    %v64 = vsel %vm62, %v45, 0
    %v67 = vsel %vm62, %v46, 0
    %v70 = vsel %vm62, %v47, 0
    %v73 = vsel %vm62, %v48, 0
    %v76 = vsel %vm62, %v49, 0
    %v79 = vsel %vm62, %v50, 0
    %v82 = vsel %vm62, %v51, 0
    %v85 = vsel %vm62, %v52, 0
    %vm87 = vcmask 1043456
    %v89 = vsel %vm87, %v53, 0
    %91 = vmatpush.msra.mxu0 0.0
    %92 = vmatpush.msra.mxu0 0.0
    %93 = vmatpush.msra.mxu0 0.0
    %94 = vmatpush.msra.mxu0 0.0
    %95 = vmatpush.msra.mxu0 0.0
    %96 = vmatpush.msra.mxu0 0.0
    %97 = vmatpush.msra.mxu0 0.0
    %98 = vmatpush.msra.mxu0 0.0
    %99 = vmatpush.msra.mxu0 0.0
    %100 = vmatpush.msra.mxu0 0.0
    %101 = vmatpush.msra.mxu0 0.0
    %102 = vmatpush.msra.mxu0 0.0
    %103 = vmatpush.msra.mxu0 0.0
    %104 = vmatpush.msra.mxu0 0.0
    %105 = vmatpush.msra.mxu0 0.0
    %106 = vmatpush.msra.mxu0 %v89
    %107 = vmatmul.f32.gmra.mxu0 %v64
    %v108 = vpop.f32.mrf.mxu0
    %v109 = vadd.f32 %v54, %v108
    %110 = vmatmul.f32.gmra.mxu0 %v67
    %v111 = vpop.f32.mrf.mxu0
    %v112 = vadd.f32 %v55, %v111
    %113 = vmatmul.f32.gmra.mxu0 %v70
    %v114 = vpop.f32.mrf.mxu0
    %v115 = vadd.f32 %v56, %v114
    %116 = vmatmul.f32.gmra.mxu0 %v73
    %v117 = vpop.f32.mrf.mxu0
    %v118 = vadd.f32 %v57, %v117
    %119 = vmatmul.f32.gmra.mxu0 %v76
    %v120 = vpop.f32.mrf.mxu0
    %v121 = vadd.f32 %v58, %v120
    %122 = vmatmul.f32.gmra.mxu0 %v79
    %v123 = vpop.f32.mrf.mxu0
    %v124 = vadd.f32 %v59, %v123
    %125 = vmatmul.f32.gmra.mxu0 %v82
    %v126 = vpop.f32.mrf.mxu0
    %v127 = vadd.f32 %v60, %v126
    %128 = vmatmul.f32.gmra.mxu0 %v85
    %v129 = vpop.f32.mrf.mxu0
    %v130 = vadd.f32 %v61, %v129
    %131 = vdwg.mxu0
    %v132 = vld [vmem:[%s2] sm:$0xff]
    %v134 = vrot.slane %v132, 1
    %v135 = vrot.slane %v132, 2
    %v136 = vrot.slane %v132, 3
    %v137 = vrot.slane %v132, 4
    %v138 = vrot.slane %v132, 5
    %v139 = vrot.slane %v132, 6
    %v140 = vrot.slane %v132, 7
    %v141 = vld [vmem:[%s4] sm:$0xff]
    %v142 = vld [vmem:[%s4 + $0x8] sm:$0xff]
    %v143 = vld [vmem:[%s4 + $0x10] sm:$0xff]
    %v144 = vld [vmem:[%s4 + $0x18] sm:$0xff]
    %v145 = vld [vmem:[%s5] sm:$0x1]
    %v147 = vperm.slane %v145, 0
    %vm149 = vcmask 261120
    %v151 = vsel %vm149, %v109, 0
    %v154 = vsel %vm149, %v112, 0
    %v157 = vsel %vm149, %v115, 0
    %v160 = vsel %vm149, %v118, 0
    %v163 = vsel %vm149, %v121, 0
    %v166 = vsel %vm149, %v124, 0
    %v169 = vsel %vm149, %v127, 0
    %v172 = vsel %vm149, %v130, 0
    %174 = vmatpush.msra.mxu0 0.0
    %175 = vmatpush.msra.mxu0 0.0
    %176 = vmatpush.msra.mxu0 0.0
    %177 = vmatpush.msra.mxu0 0.0
    %178 = vmatpush.msra.mxu0 0.0
    %179 = vmatpush.msra.mxu0 0.0
    %180 = vmatpush.msra.mxu0 0.0
    %181 = vmatpush.msra.mxu0 0.0
    %182 = vmatpush.msra.mxu0 0.0
    %183 = vmatpush.msra.mxu0 0.0
    %184 = vmatpush.msra.mxu0 0.0
    %185 = vmatpush.msra.mxu0 0.0
    %186 = vmatpush.msra.mxu0 %v144
    %187 = vmatpush.msra.mxu0 %v143
    %188 = vmatpush.msra.mxu0 %v142
    %189 = vmatpush.msra.mxu0 %v141
    %190 = vmatmul.f32.gmra.mxu0 %v151
    %v191 = vpop.f32.mrf.mxu0
    %v192 = vadd.f32 %v147, %v191
    %193 = vmatmul.f32.gmra.mxu0 %v154
    %v194 = vpop.f32.mrf.mxu0
    %v195 = vadd.f32 %v147, %v194
    %196 = vmatmul.f32.gmra.mxu0 %v157
    %v197 = vpop.f32.mrf.mxu0
    %v198 = vadd.f32 %v147, %v197
    %199 = vmatmul.f32.gmra.mxu0 %v160
    %v200 = vpop.f32.mrf.mxu0
    %v201 = vadd.f32 %v147, %v200
    %202 = vmatmul.f32.gmra.mxu0 %v163
    %v203 = vpop.f32.mrf.mxu0
    %v204 = vadd.f32 %v147, %v203
    %205 = vmatmul.f32.gmra.mxu0 %v166
    %v206 = vpop.f32.mrf.mxu0
    %v207 = vadd.f32 %v147, %v206
    %208 = vmatmul.f32.gmra.mxu0 %v169
    %v209 = vpop.f32.mrf.mxu0
    %v210 = vadd.f32 %v147, %v209
    %211 = vmatmul.f32.gmra.mxu0 %v172
    %v212 = vpop.f32.mrf.mxu0
    %v213 = vadd.f32 %v147, %v212
    %214 = vdwg.mxu0
    %s215 = scalar_lea.vmem %s4, 128
    %v216 = vld [vmem:[%s215] sm:$0xff]
    %v217 = vld [vmem:[%s215 + $0x8] sm:$0xff]
    %v218 = vld [vmem:[%s215 + $0x10] sm:$0xff]
    %v219 = vld [vmem:[%s215 + $0x18] sm:$0xff]
    %s220 = scalar_lea.vmem %s5, 4
    %v221 = vld [vmem:[%s220] sm:$0x1]
    %v223 = vperm.slane %v221, 0
    %225 = vmatpush.msra.mxu0 0.0
    %226 = vmatpush.msra.mxu0 0.0
    %227 = vmatpush.msra.mxu0 0.0
    %228 = vmatpush.msra.mxu0 0.0
    %229 = vmatpush.msra.mxu0 0.0
    %230 = vmatpush.msra.mxu0 0.0
    %231 = vmatpush.msra.mxu0 0.0
    %232 = vmatpush.msra.mxu0 0.0
    %233 = vmatpush.msra.mxu0 0.0
    %234 = vmatpush.msra.mxu0 0.0
    %235 = vmatpush.msra.mxu0 0.0
    %236 = vmatpush.msra.mxu0 0.0
    %237 = vmatpush.msra.mxu0 %v219
    %238 = vmatpush.msra.mxu0 %v218
    %239 = vmatpush.msra.mxu0 %v217
    %240 = vmatpush.msra.mxu0 %v216
    %241 = vmatmul.f32.gmra.mxu0 %v151
    %v242 = vpop.f32.mrf.mxu0
    %v243 = vadd.f32 %v223, %v242
    %244 = vmatmul.f32.gmra.mxu0 %v154
    %v245 = vpop.f32.mrf.mxu0
    %v246 = vadd.f32 %v223, %v245
    %247 = vmatmul.f32.gmra.mxu0 %v157
    %v248 = vpop.f32.mrf.mxu0
    %v249 = vadd.f32 %v223, %v248
    %250 = vmatmul.f32.gmra.mxu0 %v160
    %v251 = vpop.f32.mrf.mxu0
    %v252 = vadd.f32 %v223, %v251
    %253 = vmatmul.f32.gmra.mxu0 %v163
    %v254 = vpop.f32.mrf.mxu0
    %v255 = vadd.f32 %v223, %v254
    %256 = vmatmul.f32.gmra.mxu0 %v166
    %v257 = vpop.f32.mrf.mxu0
    %v258 = vadd.f32 %v223, %v257
    %259 = vmatmul.f32.gmra.mxu0 %v169
    %v260 = vpop.f32.mrf.mxu0
    %v261 = vadd.f32 %v223, %v260
    %262 = vmatmul.f32.gmra.mxu0 %v172
    %v263 = vpop.f32.mrf.mxu0
    %v264 = vadd.f32 %v223, %v263
    %265 = vdwg.mxu0
    %s266 = scalar_lea.vmem %s4, 256
    %v267 = vld [vmem:[%s266] sm:$0xff]
    %v268 = vld [vmem:[%s266 + $0x8] sm:$0xff]
    %v269 = vld [vmem:[%s266 + $0x10] sm:$0xff]
    %v270 = vld [vmem:[%s266 + $0x18] sm:$0xff]
    %s271 = scalar_lea.vmem %s5, 8
    %v272 = vld [vmem:[%s271] sm:$0x1]
    %v274 = vperm.slane %v272, 0
    %276 = vmatpush.msra.mxu0 0.0
    %277 = vmatpush.msra.mxu0 0.0
    %278 = vmatpush.msra.mxu0 0.0
    %279 = vmatpush.msra.mxu0 0.0
    %280 = vmatpush.msra.mxu0 0.0
    %281 = vmatpush.msra.mxu0 0.0
    %282 = vmatpush.msra.mxu0 0.0
    %283 = vmatpush.msra.mxu0 0.0
    %284 = vmatpush.msra.mxu0 0.0
    %285 = vmatpush.msra.mxu0 0.0
    %286 = vmatpush.msra.mxu0 0.0
    %287 = vmatpush.msra.mxu0 0.0
    %288 = vmatpush.msra.mxu0 %v270
    %289 = vmatpush.msra.mxu0 %v269
    %290 = vmatpush.msra.mxu0 %v268
    %291 = vmatpush.msra.mxu0 %v267
    %292 = vmatmul.f32.gmra.mxu0 %v151
    %v293 = vpop.f32.mrf.mxu0
    %v294 = vadd.f32 %v274, %v293
    %295 = vmatmul.f32.gmra.mxu0 %v154
    %v296 = vpop.f32.mrf.mxu0
    %v297 = vadd.f32 %v274, %v296
    %298 = vmatmul.f32.gmra.mxu0 %v157
    %v299 = vpop.f32.mrf.mxu0
    %v300 = vadd.f32 %v274, %v299
    %301 = vmatmul.f32.gmra.mxu0 %v160
    %v302 = vpop.f32.mrf.mxu0
    %v303 = vadd.f32 %v274, %v302
    %304 = vmatmul.f32.gmra.mxu0 %v163
    %v305 = vpop.f32.mrf.mxu0
    %v306 = vadd.f32 %v274, %v305
    %307 = vmatmul.f32.gmra.mxu0 %v166
    %v308 = vpop.f32.mrf.mxu0
    %v309 = vadd.f32 %v274, %v308
    %310 = vmatmul.f32.gmra.mxu0 %v169
    %v311 = vpop.f32.mrf.mxu0
    %v312 = vadd.f32 %v274, %v311
    %313 = vmatmul.f32.gmra.mxu0 %v172
    %v314 = vpop.f32.mrf.mxu0
    %v315 = vadd.f32 %v274, %v314
    %316 = vdwg.mxu0
    %vm317 = vcmask 64512
    %v319 = vsel %vm317, %v192, 0
    %v322 = vsel %vm317, %v243, 0
    %324 = vmatpush.xpose.msra.mxu0 0.0
    %325 = vmatpush.xpose.msra.mxu0 0.0
    %326 = vmatpush.xpose.msra.mxu0 0.0
    %327 = vmatpush.xpose.msra.mxu0 0.0
    %328 = vmatpush.xpose.msra.mxu0 0.0
    %329 = vmatpush.xpose.msra.mxu0 0.0
    %330 = vmatpush.xpose.msra.mxu0 0.0
    %331 = vmatpush.xpose.msra.mxu0 0.0
    %332 = vmatpush.xpose.msra.mxu0 0.0
    %333 = vmatpush.xpose.msra.mxu0 0.0
    %334 = vmatpush.xpose.msra.mxu0 0.0
    %335 = vmatpush.xpose.msra.mxu0 0.0
    %336 = vmatpush.xpose.msra.mxu0 0.0
    %337 = vmatpush.xpose.msra.mxu0 0.0
    %338 = vmatpush.xpose.msra.mxu0 0.0
    %339 = vmatpush.xpose.msra.mxu0 %v322
    %340 = vmatmul.f32.gmra.mxu0 %v319
    %v341 = vpop.f32.mrf.mxu0
    %v342 = vadd.f32 0.0, %v341
    %343 = vdwg.mxu0
    %v345 = vsel %vm317, %v195, 0
    %v348 = vsel %vm317, %v246, 0
    %350 = vmatpush.xpose.msra.mxu0 0.0
    %351 = vmatpush.xpose.msra.mxu0 0.0
    %352 = vmatpush.xpose.msra.mxu0 0.0
    %353 = vmatpush.xpose.msra.mxu0 0.0
    %354 = vmatpush.xpose.msra.mxu0 0.0
    %355 = vmatpush.xpose.msra.mxu0 0.0
    %356 = vmatpush.xpose.msra.mxu0 0.0
    %357 = vmatpush.xpose.msra.mxu0 0.0
    %358 = vmatpush.xpose.msra.mxu0 0.0
    %359 = vmatpush.xpose.msra.mxu0 0.0
    %360 = vmatpush.xpose.msra.mxu0 0.0
    %361 = vmatpush.xpose.msra.mxu0 0.0
    %362 = vmatpush.xpose.msra.mxu0 0.0
    %363 = vmatpush.xpose.msra.mxu0 0.0
    %364 = vmatpush.xpose.msra.mxu0 0.0
    %365 = vmatpush.xpose.msra.mxu0 %v348
    %366 = vmatmul.f32.gmra.mxu0 %v345
    %v367 = vpop.f32.mrf.mxu0
    %v368 = vadd.f32 0.0, %v367
    %369 = vdwg.mxu0
    %v371 = vsel %vm317, %v198, 0
    %v374 = vsel %vm317, %v249, 0
    %376 = vmatpush.xpose.msra.mxu0 0.0
    %377 = vmatpush.xpose.msra.mxu0 0.0
    %378 = vmatpush.xpose.msra.mxu0 0.0
    %379 = vmatpush.xpose.msra.mxu0 0.0
    %380 = vmatpush.xpose.msra.mxu0 0.0
    %381 = vmatpush.xpose.msra.mxu0 0.0
    %382 = vmatpush.xpose.msra.mxu0 0.0
    %383 = vmatpush.xpose.msra.mxu0 0.0
    %384 = vmatpush.xpose.msra.mxu0 0.0
    %385 = vmatpush.xpose.msra.mxu0 0.0
    %386 = vmatpush.xpose.msra.mxu0 0.0
    %387 = vmatpush.xpose.msra.mxu0 0.0
    %388 = vmatpush.xpose.msra.mxu0 0.0
    %389 = vmatpush.xpose.msra.mxu0 0.0
    %390 = vmatpush.xpose.msra.mxu0 0.0
    %391 = vmatpush.xpose.msra.mxu0 %v374
    %392 = vmatmul.f32.gmra.mxu0 %v371
    %v393 = vpop.f32.mrf.mxu0
    %v394 = vadd.f32 0.0, %v393
    %395 = vdwg.mxu0
    %v397 = vsel %vm317, %v201, 0
    %v400 = vsel %vm317, %v252, 0
    %402 = vmatpush.xpose.msra.mxu0 0.0
    %403 = vmatpush.xpose.msra.mxu0 0.0
    %404 = vmatpush.xpose.msra.mxu0 0.0
    %405 = vmatpush.xpose.msra.mxu0 0.0
    %406 = vmatpush.xpose.msra.mxu0 0.0
    %407 = vmatpush.xpose.msra.mxu0 0.0
    %408 = vmatpush.xpose.msra.mxu0 0.0
    %409 = vmatpush.xpose.msra.mxu0 0.0
    %410 = vmatpush.xpose.msra.mxu0 0.0
    %411 = vmatpush.xpose.msra.mxu0 0.0
    %412 = vmatpush.xpose.msra.mxu0 0.0
    %413 = vmatpush.xpose.msra.mxu0 0.0
    %414 = vmatpush.xpose.msra.mxu0 0.0
    %415 = vmatpush.xpose.msra.mxu0 0.0
    %416 = vmatpush.xpose.msra.mxu0 0.0
    %417 = vmatpush.xpose.msra.mxu0 %v400
    %418 = vmatmul.f32.gmra.mxu0 %v397
    %v419 = vpop.f32.mrf.mxu0
    %v420 = vadd.f32 0.0, %v419
    %421 = vdwg.mxu0
    %v423 = vsel %vm317, %v204, 0
    %v426 = vsel %vm317, %v255, 0
    %428 = vmatpush.xpose.msra.mxu0 0.0
    %429 = vmatpush.xpose.msra.mxu0 0.0
    %430 = vmatpush.xpose.msra.mxu0 0.0
    %431 = vmatpush.xpose.msra.mxu0 0.0
    %432 = vmatpush.xpose.msra.mxu0 0.0
    %433 = vmatpush.xpose.msra.mxu0 0.0
    %434 = vmatpush.xpose.msra.mxu0 0.0
    %435 = vmatpush.xpose.msra.mxu0 0.0
    %436 = vmatpush.xpose.msra.mxu0 0.0
    %437 = vmatpush.xpose.msra.mxu0 0.0
    %438 = vmatpush.xpose.msra.mxu0 0.0
    %439 = vmatpush.xpose.msra.mxu0 0.0
    %440 = vmatpush.xpose.msra.mxu0 0.0
    %441 = vmatpush.xpose.msra.mxu0 0.0
    %442 = vmatpush.xpose.msra.mxu0 0.0
    %443 = vmatpush.xpose.msra.mxu0 %v426
    %444 = vmatmul.f32.gmra.mxu0 %v423
    %v445 = vpop.f32.mrf.mxu0
    %v446 = vadd.f32 0.0, %v445
    %447 = vdwg.mxu0
    %v449 = vsel %vm317, %v207, 0
    %v452 = vsel %vm317, %v258, 0
    %454 = vmatpush.xpose.msra.mxu0 0.0
    %455 = vmatpush.xpose.msra.mxu0 0.0
    %456 = vmatpush.xpose.msra.mxu0 0.0
    %457 = vmatpush.xpose.msra.mxu0 0.0
    %458 = vmatpush.xpose.msra.mxu0 0.0
    %459 = vmatpush.xpose.msra.mxu0 0.0
    %460 = vmatpush.xpose.msra.mxu0 0.0
    %461 = vmatpush.xpose.msra.mxu0 0.0
    %462 = vmatpush.xpose.msra.mxu0 0.0
    %463 = vmatpush.xpose.msra.mxu0 0.0
    %464 = vmatpush.xpose.msra.mxu0 0.0
    %465 = vmatpush.xpose.msra.mxu0 0.0
    %466 = vmatpush.xpose.msra.mxu0 0.0
    %467 = vmatpush.xpose.msra.mxu0 0.0
    %468 = vmatpush.xpose.msra.mxu0 0.0
    %469 = vmatpush.xpose.msra.mxu0 %v452
    %470 = vmatmul.f32.gmra.mxu0 %v449
    %v471 = vpop.f32.mrf.mxu0
    %v472 = vadd.f32 0.0, %v471
    %473 = vdwg.mxu0
    %v475 = vsel %vm317, %v210, 0
    %v478 = vsel %vm317, %v261, 0
    %480 = vmatpush.xpose.msra.mxu0 0.0
    %481 = vmatpush.xpose.msra.mxu0 0.0
    %482 = vmatpush.xpose.msra.mxu0 0.0
    %483 = vmatpush.xpose.msra.mxu0 0.0
    %484 = vmatpush.xpose.msra.mxu0 0.0
    %485 = vmatpush.xpose.msra.mxu0 0.0
    %486 = vmatpush.xpose.msra.mxu0 0.0
    %487 = vmatpush.xpose.msra.mxu0 0.0
    %488 = vmatpush.xpose.msra.mxu0 0.0
    %489 = vmatpush.xpose.msra.mxu0 0.0
    %490 = vmatpush.xpose.msra.mxu0 0.0
    %491 = vmatpush.xpose.msra.mxu0 0.0
    %492 = vmatpush.xpose.msra.mxu0 0.0
    %493 = vmatpush.xpose.msra.mxu0 0.0
    %494 = vmatpush.xpose.msra.mxu0 0.0
    %495 = vmatpush.xpose.msra.mxu0 %v478
    %496 = vmatmul.f32.gmra.mxu0 %v475
    %v497 = vpop.f32.mrf.mxu0
    %v498 = vadd.f32 0.0, %v497
    %499 = vdwg.mxu0
    %v501 = vsel %vm317, %v213, 0
    %v504 = vsel %vm317, %v264, 0
    %506 = vmatpush.xpose.msra.mxu0 0.0
    %507 = vmatpush.xpose.msra.mxu0 0.0
    %508 = vmatpush.xpose.msra.mxu0 0.0
    %509 = vmatpush.xpose.msra.mxu0 0.0
    %510 = vmatpush.xpose.msra.mxu0 0.0
    %511 = vmatpush.xpose.msra.mxu0 0.0
    %512 = vmatpush.xpose.msra.mxu0 0.0
    %513 = vmatpush.xpose.msra.mxu0 0.0
    %514 = vmatpush.xpose.msra.mxu0 0.0
    %515 = vmatpush.xpose.msra.mxu0 0.0
    %516 = vmatpush.xpose.msra.mxu0 0.0
    %517 = vmatpush.xpose.msra.mxu0 0.0
    %518 = vmatpush.xpose.msra.mxu0 0.0
    %519 = vmatpush.xpose.msra.mxu0 0.0
    %520 = vmatpush.xpose.msra.mxu0 0.0
    %521 = vmatpush.xpose.msra.mxu0 %v504
    %522 = vmatmul.f32.gmra.mxu0 %v501
    %v523 = vpop.f32.mrf.mxu0
    %v524 = vadd.f32 0.0, %v523
    %525 = vdwg.mxu0
    %v526 = vmul.f32 %v342, 0.35355338
    %v527 = vmul.f32 %v368, 0.35355338
    %v528 = vmul.f32 %v394, 0.35355338
    %v529 = vmul.f32 %v420, 0.35355338
    %v530 = vmul.f32 %v446, 0.35355338
    %v531 = vmul.f32 %v472, 0.35355338
    %v532 = vmul.f32 %v498, 0.35355338
    %v533 = vmul.f32 %v524, 0.35355338
    %v534 = vperm.slane %v132, 0
    %v535 = vperm.slane %v134, 0
    %v536 = vperm.slane %v135, 0
    %v537 = vperm.slane %v136, 0
    %v538 = vperm.slane %v137, 0
    %v539 = vperm.slane %v138, 0
    %v540 = vperm.slane %v139, 0
    %v541 = vperm.slane %v140, 0
    %v550 = vadd.f32 %v526, %v534
    %v551 = vadd.f32 %v527, %v535
    %v552 = vadd.f32 %v528, %v536
    %v553 = vadd.f32 %v529, %v537
    %v554 = vadd.f32 %v530, %v538
    %v555 = vadd.f32 %v531, %v539
    %v556 = vadd.f32 %v532, %v540
    %v557 = vadd.f32 %v533, %v541
    %v558 = vsel %vm317, %v550, -inf
    %559 = vmax.xlane.f32.xlu0 %v558
    %v560 = vpop.xlane.xlu0 %559
    %v561 = vsel %vm317, %v551, -inf
    %562 = vmax.xlane.f32.xlu0 %v561
    %v563 = vpop.xlane.xlu0 %562
    %v564 = vsel %vm317, %v552, -inf
    %565 = vmax.xlane.f32.xlu0 %v564
    %v566 = vpop.xlane.xlu0 %565
    %v567 = vsel %vm317, %v553, -inf
    %568 = vmax.xlane.f32.xlu0 %v567
    %v569 = vpop.xlane.xlu0 %568
    %v570 = vsel %vm317, %v554, -inf
    %571 = vmax.xlane.f32.xlu0 %v570
    %v572 = vpop.xlane.xlu0 %571
    %v573 = vsel %vm317, %v555, -inf
    %574 = vmax.xlane.f32.xlu0 %v573
    %v575 = vpop.xlane.xlu0 %574
    %v576 = vsel %vm317, %v556, -inf
    %577 = vmax.xlane.f32.xlu0 %v576
    %v578 = vpop.xlane.xlu0 %577
    %v579 = vsel %vm317, %v557, -inf
    %580 = vmax.xlane.f32.xlu0 %v579
    %v581 = vpop.xlane.xlu0 %580
    %v582 = vsub.f32 %v550, %v560
    %v583 = vsub.f32 %v551, %v563
    %v584 = vsub.f32 %v552, %v566
    %v585 = vsub.f32 %v553, %v569
    %v586 = vsub.f32 %v554, %v572
    %v587 = vsub.f32 %v555, %v575
    %v588 = vsub.f32 %v556, %v578
    %v589 = vsub.f32 %v557, %v581
    %v590 = vmul.f32 %v582, 1.442695
    %v591 = vpow.pop %v590
    %v592 = vmul.f32 %v583, 1.442695
    %v593 = vpow.pop %v592
    %v594 = vmul.f32 %v584, 1.442695
    %v595 = vpow.pop %v594
    %v596 = vmul.f32 %v585, 1.442695
    %v597 = vpow.pop %v596
    %v598 = vmul.f32 %v586, 1.442695
    %v599 = vpow.pop %v598
    %v600 = vmul.f32 %v587, 1.442695
    %v601 = vpow.pop %v600
    %v602 = vmul.f32 %v588, 1.442695
    %v603 = vpow.pop %v602
    %v604 = vmul.f32 %v589, 1.442695
    %v605 = vpow.pop %v604
    %v606 = vsel %vm317, %v591, 0.0
    %607 = vadd.xlane.f32.xlu0 %v606
    %v608 = vpop.xlane.xlu0 %607
    %v609 = vsel %vm317, %v593, 0.0
    %610 = vadd.xlane.f32.xlu0 %v609
    %v611 = vpop.xlane.xlu0 %610
    %v612 = vsel %vm317, %v595, 0.0
    %613 = vadd.xlane.f32.xlu0 %v612
    %v614 = vpop.xlane.xlu0 %613
    %v615 = vsel %vm317, %v597, 0.0
    %616 = vadd.xlane.f32.xlu0 %v615
    %v617 = vpop.xlane.xlu0 %616
    %v618 = vsel %vm317, %v599, 0.0
    %619 = vadd.xlane.f32.xlu0 %v618
    %v620 = vpop.xlane.xlu0 %619
    %v621 = vsel %vm317, %v601, 0.0
    %622 = vadd.xlane.f32.xlu0 %v621
    %v623 = vpop.xlane.xlu0 %622
    %v624 = vsel %vm317, %v603, 0.0
    %625 = vadd.xlane.f32.xlu0 %v624
    %v626 = vpop.xlane.xlu0 %625
    %v627 = vsel %vm317, %v605, 0.0
    %628 = vadd.xlane.f32.xlu0 %v627
    %v629 = vpop.xlane.xlu0 %628
    %v630 = vrcp.pop %v608
    %v631 = vmul.f32 %v608, %v630
    %v632 = vsub.f32 1.0, %v631
    %v633 = vmul.f32 %v630, %v632
    %v634 = vadd.f32 %v630, %v633
    %vm635 = vweird.f32 %v608
    %vm636 = vweird.f32 %v630
    %vm637 = vmor %vm635, %vm636
    %v638 = vsel %vm637, %v630, %v634
    %v639 = vand.u32 2147483647, %v608
    %vm640 = vcmp.eq.f32.partialorder %v639, 8.507059e+37
    %v641 = vand.u32 %v608, 2147483648
    %v642 = vor.u32 1.1754944e-38, %v641
    %v643 = vsel %vm640, %v642, %v638
    %v644 = vmul.f32 %v591, %v643
    %v645 = vrcp.pop %v611
    %v646 = vmul.f32 %v611, %v645
    %v647 = vsub.f32 1.0, %v646
    %v648 = vmul.f32 %v645, %v647
    %v649 = vadd.f32 %v645, %v648
    %vm650 = vweird.f32 %v611
    %vm651 = vweird.f32 %v645
    %vm652 = vmor %vm650, %vm651
    %v653 = vsel %vm652, %v645, %v649
    %v654 = vand.u32 2147483647, %v611
    %vm655 = vcmp.eq.f32.partialorder %v654, 8.507059e+37
    %v656 = vand.u32 %v611, 2147483648
    %v657 = vor.u32 1.1754944e-38, %v656
    %v658 = vsel %vm655, %v657, %v653
    %v659 = vmul.f32 %v593, %v658
    %v660 = vrcp.pop %v614
    %v661 = vmul.f32 %v614, %v660
    %v662 = vsub.f32 1.0, %v661
    %v663 = vmul.f32 %v660, %v662
    %v664 = vadd.f32 %v660, %v663
    %vm665 = vweird.f32 %v614
    %vm666 = vweird.f32 %v660
    %vm667 = vmor %vm665, %vm666
    %v668 = vsel %vm667, %v660, %v664
    %v669 = vand.u32 2147483647, %v614
    %vm670 = vcmp.eq.f32.partialorder %v669, 8.507059e+37
    %v671 = vand.u32 %v614, 2147483648
    %v672 = vor.u32 1.1754944e-38, %v671
    %v673 = vsel %vm670, %v672, %v668
    %v674 = vmul.f32 %v595, %v673
    %v675 = vrcp.pop %v617
    %v676 = vmul.f32 %v617, %v675
    %v677 = vsub.f32 1.0, %v676
    %v678 = vmul.f32 %v675, %v677
    %v679 = vadd.f32 %v675, %v678
    %vm680 = vweird.f32 %v617
    %vm681 = vweird.f32 %v675
    %vm682 = vmor %vm680, %vm681
    %v683 = vsel %vm682, %v675, %v679
    %v684 = vand.u32 2147483647, %v617
    %vm685 = vcmp.eq.f32.partialorder %v684, 8.507059e+37
    %v686 = vand.u32 %v617, 2147483648
    %v687 = vor.u32 1.1754944e-38, %v686
    %v688 = vsel %vm685, %v687, %v683
    %v689 = vmul.f32 %v597, %v688
    %v690 = vrcp.pop %v620
    %v691 = vmul.f32 %v620, %v690
    %v692 = vsub.f32 1.0, %v691
    %v693 = vmul.f32 %v690, %v692
    %v694 = vadd.f32 %v690, %v693
    %vm695 = vweird.f32 %v620
    %vm696 = vweird.f32 %v690
    %vm697 = vmor %vm695, %vm696
    %v698 = vsel %vm697, %v690, %v694
    %v699 = vand.u32 2147483647, %v620
    %vm700 = vcmp.eq.f32.partialorder %v699, 8.507059e+37
    %v701 = vand.u32 %v620, 2147483648
    %v702 = vor.u32 1.1754944e-38, %v701
    %v703 = vsel %vm700, %v702, %v698
    %v704 = vmul.f32 %v599, %v703
    %v705 = vrcp.pop %v623
    %v706 = vmul.f32 %v623, %v705
    %v707 = vsub.f32 1.0, %v706
    %v708 = vmul.f32 %v705, %v707
    %v709 = vadd.f32 %v705, %v708
    %vm710 = vweird.f32 %v623
    %vm711 = vweird.f32 %v705
    %vm712 = vmor %vm710, %vm711
    %v713 = vsel %vm712, %v705, %v709
    %v714 = vand.u32 2147483647, %v623
    %vm715 = vcmp.eq.f32.partialorder %v714, 8.507059e+37
    %v716 = vand.u32 %v623, 2147483648
    %v717 = vor.u32 1.1754944e-38, %v716
    %v718 = vsel %vm715, %v717, %v713
    %v719 = vmul.f32 %v601, %v718
    %v720 = vrcp.pop %v626
    %v721 = vmul.f32 %v626, %v720
    %v722 = vsub.f32 1.0, %v721
    %v723 = vmul.f32 %v720, %v722
    %v724 = vadd.f32 %v720, %v723
    %vm725 = vweird.f32 %v626
    %vm726 = vweird.f32 %v720
    %vm727 = vmor %vm725, %vm726
    %v728 = vsel %vm727, %v720, %v724
    %v729 = vand.u32 2147483647, %v626
    %vm730 = vcmp.eq.f32.partialorder %v729, 8.507059e+37
    %v731 = vand.u32 %v626, 2147483648
    %v732 = vor.u32 1.1754944e-38, %v731
    %v733 = vsel %vm730, %v732, %v728
    %v734 = vmul.f32 %v603, %v733
    %v735 = vrcp.pop %v629
    %v736 = vmul.f32 %v629, %v735
    %v737 = vsub.f32 1.0, %v736
    %v738 = vmul.f32 %v735, %v737
    %v739 = vadd.f32 %v735, %v738
    %vm740 = vweird.f32 %v629
    %vm741 = vweird.f32 %v735
    %vm742 = vmor %vm740, %vm741
    %v743 = vsel %vm742, %v735, %v739
    %v744 = vand.u32 2147483647, %v629
    %vm745 = vcmp.eq.f32.partialorder %v744, 8.507059e+37
    %v746 = vand.u32 %v629, 2147483648
    %v747 = vor.u32 1.1754944e-38, %v746
    %v748 = vsel %vm745, %v747, %v743
    %v749 = vmul.f32 %v605, %v748
    %v751 = vsel %vm317, %v644, 0
    %753 = vmatpush.msra.mxu0 0.0
    %754 = vmatpush.msra.mxu0 0.0
    %755 = vmatpush.msra.mxu0 0.0
    %756 = vmatpush.msra.mxu0 0.0
    %757 = vmatpush.msra.mxu0 0.0
    %758 = vmatpush.msra.mxu0 0.0
    %759 = vmatpush.msra.mxu0 0.0
    %760 = vmatpush.msra.mxu0 0.0
    %761 = vmatpush.msra.mxu0 0.0
    %762 = vmatpush.msra.mxu0 0.0
    %763 = vmatpush.msra.mxu0 0.0
    %764 = vmatpush.msra.mxu0 0.0
    %765 = vmatpush.msra.mxu0 0.0
    %766 = vmatpush.msra.mxu0 0.0
    %767 = vmatpush.msra.mxu0 0.0
    %768 = vmatpush.msra.mxu0 %v294
    %769 = vmatmul.f32.gmra.mxu0 %v751
    %v770 = vpop.f32.mrf.mxu0
    %v771 = vadd.f32 0.0, %v770
    %772 = vdwg.mxu0
    %v774 = vsel %vm317, %v659, 0
    %776 = vmatpush.msra.mxu0 0.0
    %777 = vmatpush.msra.mxu0 0.0
    %778 = vmatpush.msra.mxu0 0.0
    %779 = vmatpush.msra.mxu0 0.0
    %780 = vmatpush.msra.mxu0 0.0
    %781 = vmatpush.msra.mxu0 0.0
    %782 = vmatpush.msra.mxu0 0.0
    %783 = vmatpush.msra.mxu0 0.0
    %784 = vmatpush.msra.mxu0 0.0
    %785 = vmatpush.msra.mxu0 0.0
    %786 = vmatpush.msra.mxu0 0.0
    %787 = vmatpush.msra.mxu0 0.0
    %788 = vmatpush.msra.mxu0 0.0
    %789 = vmatpush.msra.mxu0 0.0
    %790 = vmatpush.msra.mxu0 0.0
    %791 = vmatpush.msra.mxu0 %v297
    %792 = vmatmul.f32.gmra.mxu0 %v774
    %v793 = vpop.f32.mrf.mxu0
    %v794 = vadd.f32 0.0, %v793
    %795 = vdwg.mxu0
    %v797 = vsel %vm317, %v674, 0
    %799 = vmatpush.msra.mxu0 0.0
    %800 = vmatpush.msra.mxu0 0.0
    %801 = vmatpush.msra.mxu0 0.0
    %802 = vmatpush.msra.mxu0 0.0
    %803 = vmatpush.msra.mxu0 0.0
    %804 = vmatpush.msra.mxu0 0.0
    %805 = vmatpush.msra.mxu0 0.0
    %806 = vmatpush.msra.mxu0 0.0
    %807 = vmatpush.msra.mxu0 0.0
    %808 = vmatpush.msra.mxu0 0.0
    %809 = vmatpush.msra.mxu0 0.0
    %810 = vmatpush.msra.mxu0 0.0
    %811 = vmatpush.msra.mxu0 0.0
    %812 = vmatpush.msra.mxu0 0.0
    %813 = vmatpush.msra.mxu0 0.0
    %814 = vmatpush.msra.mxu0 %v300
    %815 = vmatmul.f32.gmra.mxu0 %v797
    %v816 = vpop.f32.mrf.mxu0
    %v817 = vadd.f32 0.0, %v816
    %818 = vdwg.mxu0
    %v820 = vsel %vm317, %v689, 0
    %822 = vmatpush.msra.mxu0 0.0
    %823 = vmatpush.msra.mxu0 0.0
    %824 = vmatpush.msra.mxu0 0.0
    %825 = vmatpush.msra.mxu0 0.0
    %826 = vmatpush.msra.mxu0 0.0
    %827 = vmatpush.msra.mxu0 0.0
    %828 = vmatpush.msra.mxu0 0.0
    %829 = vmatpush.msra.mxu0 0.0
    %830 = vmatpush.msra.mxu0 0.0
    %831 = vmatpush.msra.mxu0 0.0
    %832 = vmatpush.msra.mxu0 0.0
    %833 = vmatpush.msra.mxu0 0.0
    %834 = vmatpush.msra.mxu0 0.0
    %835 = vmatpush.msra.mxu0 0.0
    %836 = vmatpush.msra.mxu0 0.0
    %837 = vmatpush.msra.mxu0 %v303
    %838 = vmatmul.f32.gmra.mxu0 %v820
    %v839 = vpop.f32.mrf.mxu0
    %v840 = vadd.f32 0.0, %v839
    %841 = vdwg.mxu0
    %v843 = vsel %vm317, %v704, 0
    %845 = vmatpush.msra.mxu0 0.0
    %846 = vmatpush.msra.mxu0 0.0
    %847 = vmatpush.msra.mxu0 0.0
    %848 = vmatpush.msra.mxu0 0.0
    %849 = vmatpush.msra.mxu0 0.0
    %850 = vmatpush.msra.mxu0 0.0
    %851 = vmatpush.msra.mxu0 0.0
    %852 = vmatpush.msra.mxu0 0.0
    %853 = vmatpush.msra.mxu0 0.0
    %854 = vmatpush.msra.mxu0 0.0
    %855 = vmatpush.msra.mxu0 0.0
    %856 = vmatpush.msra.mxu0 0.0
    %857 = vmatpush.msra.mxu0 0.0
    %858 = vmatpush.msra.mxu0 0.0
    %859 = vmatpush.msra.mxu0 0.0
    %860 = vmatpush.msra.mxu0 %v306
    %861 = vmatmul.f32.gmra.mxu0 %v843
    %v862 = vpop.f32.mrf.mxu0
    %v863 = vadd.f32 0.0, %v862
    %864 = vdwg.mxu0
    %v866 = vsel %vm317, %v719, 0
    %868 = vmatpush.msra.mxu0 0.0
    %869 = vmatpush.msra.mxu0 0.0
    %870 = vmatpush.msra.mxu0 0.0
    %871 = vmatpush.msra.mxu0 0.0
    %872 = vmatpush.msra.mxu0 0.0
    %873 = vmatpush.msra.mxu0 0.0
    %874 = vmatpush.msra.mxu0 0.0
    %875 = vmatpush.msra.mxu0 0.0
    %876 = vmatpush.msra.mxu0 0.0
    %877 = vmatpush.msra.mxu0 0.0
    %878 = vmatpush.msra.mxu0 0.0
    %879 = vmatpush.msra.mxu0 0.0
    %880 = vmatpush.msra.mxu0 0.0
    %881 = vmatpush.msra.mxu0 0.0
    %882 = vmatpush.msra.mxu0 0.0
    %883 = vmatpush.msra.mxu0 %v309
    %884 = vmatmul.f32.gmra.mxu0 %v866
    %v885 = vpop.f32.mrf.mxu0
    %v886 = vadd.f32 0.0, %v885
    %887 = vdwg.mxu0
    %v889 = vsel %vm317, %v734, 0
    %891 = vmatpush.msra.mxu0 0.0
    %892 = vmatpush.msra.mxu0 0.0
    %893 = vmatpush.msra.mxu0 0.0
    %894 = vmatpush.msra.mxu0 0.0
    %895 = vmatpush.msra.mxu0 0.0
    %896 = vmatpush.msra.mxu0 0.0
    %897 = vmatpush.msra.mxu0 0.0
    %898 = vmatpush.msra.mxu0 0.0
    %899 = vmatpush.msra.mxu0 0.0
    %900 = vmatpush.msra.mxu0 0.0
    %901 = vmatpush.msra.mxu0 0.0
    %902 = vmatpush.msra.mxu0 0.0
    %903 = vmatpush.msra.mxu0 0.0
    %904 = vmatpush.msra.mxu0 0.0
    %905 = vmatpush.msra.mxu0 0.0
    %906 = vmatpush.msra.mxu0 %v312
    %907 = vmatmul.f32.gmra.mxu0 %v889
    %v908 = vpop.f32.mrf.mxu0
    %v909 = vadd.f32 0.0, %v908
    %910 = vdwg.mxu0
    %v912 = vsel %vm317, %v749, 0
    %914 = vmatpush.msra.mxu0 0.0
    %915 = vmatpush.msra.mxu0 0.0
    %916 = vmatpush.msra.mxu0 0.0
    %917 = vmatpush.msra.mxu0 0.0
    %918 = vmatpush.msra.mxu0 0.0
    %919 = vmatpush.msra.mxu0 0.0
    %920 = vmatpush.msra.mxu0 0.0
    %921 = vmatpush.msra.mxu0 0.0
    %922 = vmatpush.msra.mxu0 0.0
    %923 = vmatpush.msra.mxu0 0.0
    %924 = vmatpush.msra.mxu0 0.0
    %925 = vmatpush.msra.mxu0 0.0
    %926 = vmatpush.msra.mxu0 0.0
    %927 = vmatpush.msra.mxu0 0.0
    %928 = vmatpush.msra.mxu0 0.0
    %929 = vmatpush.msra.mxu0 %v315
    %930 = vmatmul.f32.gmra.mxu0 %v912
    %v931 = vpop.f32.mrf.mxu0
    %v932 = vadd.f32 0.0, %v931
    %933 = vdwg.mxu0
    %v934 = vld [vmem:[%s6] sm:$0xff]
    %s935 = scalar_lea.vmem %s4, 32
    %v936 = vld [vmem:[%s935] sm:$0xff]
    %v937 = vld [vmem:[%s935 + $0x8] sm:$0xff]
    %v938 = vld [vmem:[%s935 + $0x10] sm:$0xff]
    %v939 = vld [vmem:[%s935 + $0x18] sm:$0xff]
    %s940 = scalar_lea.vmem %s5, 1
    %v941 = vld [vmem:[%s940] sm:$0x1]
    %v943 = vperm.slane %v941, 0
    %945 = vmatpush.msra.mxu0 0.0
    %946 = vmatpush.msra.mxu0 0.0
    %947 = vmatpush.msra.mxu0 0.0
    %948 = vmatpush.msra.mxu0 0.0
    %949 = vmatpush.msra.mxu0 0.0
    %950 = vmatpush.msra.mxu0 0.0
    %951 = vmatpush.msra.mxu0 0.0
    %952 = vmatpush.msra.mxu0 0.0
    %953 = vmatpush.msra.mxu0 0.0
    %954 = vmatpush.msra.mxu0 0.0
    %955 = vmatpush.msra.mxu0 0.0
    %956 = vmatpush.msra.mxu0 0.0
    %957 = vmatpush.msra.mxu0 %v939
    %958 = vmatpush.msra.mxu0 %v938
    %959 = vmatpush.msra.mxu0 %v937
    %960 = vmatpush.msra.mxu0 %v936
    %961 = vmatmul.f32.gmra.mxu0 %v151
    %v962 = vpop.f32.mrf.mxu0
    %v963 = vadd.f32 %v943, %v962
    %964 = vmatmul.f32.gmra.mxu0 %v154
    %v965 = vpop.f32.mrf.mxu0
    %v966 = vadd.f32 %v943, %v965
    %967 = vmatmul.f32.gmra.mxu0 %v157
    %v968 = vpop.f32.mrf.mxu0
    %v969 = vadd.f32 %v943, %v968
    %970 = vmatmul.f32.gmra.mxu0 %v160
    %v971 = vpop.f32.mrf.mxu0
    %v972 = vadd.f32 %v943, %v971
    %973 = vmatmul.f32.gmra.mxu0 %v163
    %v974 = vpop.f32.mrf.mxu0
    %v975 = vadd.f32 %v943, %v974
    %976 = vmatmul.f32.gmra.mxu0 %v166
    %v977 = vpop.f32.mrf.mxu0
    %v978 = vadd.f32 %v943, %v977
    %979 = vmatmul.f32.gmra.mxu0 %v169
    %v980 = vpop.f32.mrf.mxu0
    %v981 = vadd.f32 %v943, %v980
    %982 = vmatmul.f32.gmra.mxu0 %v172
    %v983 = vpop.f32.mrf.mxu0
    %v984 = vadd.f32 %v943, %v983
    %985 = vdwg.mxu0
    %s986 = scalar_lea.vmem %s4, 160
    %v987 = vld [vmem:[%s986] sm:$0xff]
    %v988 = vld [vmem:[%s986 + $0x8] sm:$0xff]
    %v989 = vld [vmem:[%s986 + $0x10] sm:$0xff]
    %v990 = vld [vmem:[%s986 + $0x18] sm:$0xff]
    %s991 = scalar_lea.vmem %s5, 5
    %v992 = vld [vmem:[%s991] sm:$0x1]
    %v994 = vperm.slane %v992, 0
    %996 = vmatpush.msra.mxu0 0.0
    %997 = vmatpush.msra.mxu0 0.0
    %998 = vmatpush.msra.mxu0 0.0
    %999 = vmatpush.msra.mxu0 0.0
    %1000 = vmatpush.msra.mxu0 0.0
    %1001 = vmatpush.msra.mxu0 0.0
    %1002 = vmatpush.msra.mxu0 0.0
    %1003 = vmatpush.msra.mxu0 0.0
    %1004 = vmatpush.msra.mxu0 0.0
    %1005 = vmatpush.msra.mxu0 0.0
    %1006 = vmatpush.msra.mxu0 0.0
    %1007 = vmatpush.msra.mxu0 0.0
    %1008 = vmatpush.msra.mxu0 %v990
    %1009 = vmatpush.msra.mxu0 %v989
    %1010 = vmatpush.msra.mxu0 %v988
    %1011 = vmatpush.msra.mxu0 %v987
    %1012 = vmatmul.f32.gmra.mxu0 %v151
    %v1013 = vpop.f32.mrf.mxu0
    %v1014 = vadd.f32 %v994, %v1013
    %1015 = vmatmul.f32.gmra.mxu0 %v154
    %v1016 = vpop.f32.mrf.mxu0
    %v1017 = vadd.f32 %v994, %v1016
    %1018 = vmatmul.f32.gmra.mxu0 %v157
    %v1019 = vpop.f32.mrf.mxu0
    %v1020 = vadd.f32 %v994, %v1019
    %1021 = vmatmul.f32.gmra.mxu0 %v160
    %v1022 = vpop.f32.mrf.mxu0
    %v1023 = vadd.f32 %v994, %v1022
    %1024 = vmatmul.f32.gmra.mxu0 %v163
    %v1025 = vpop.f32.mrf.mxu0
    %v1026 = vadd.f32 %v994, %v1025
    %1027 = vmatmul.f32.gmra.mxu0 %v166
    %v1028 = vpop.f32.mrf.mxu0
    %v1029 = vadd.f32 %v994, %v1028
    %1030 = vmatmul.f32.gmra.mxu0 %v169
    %v1031 = vpop.f32.mrf.mxu0
    %v1032 = vadd.f32 %v994, %v1031
    %1033 = vmatmul.f32.gmra.mxu0 %v172
    %v1034 = vpop.f32.mrf.mxu0
    %v1035 = vadd.f32 %v994, %v1034
    %1036 = vdwg.mxu0
    %s1037 = scalar_lea.vmem %s4, 288
    %v1038 = vld [vmem:[%s1037] sm:$0xff]
    %v1039 = vld [vmem:[%s1037 + $0x8] sm:$0xff]
    %v1040 = vld [vmem:[%s1037 + $0x10] sm:$0xff]
    %v1041 = vld [vmem:[%s1037 + $0x18] sm:$0xff]
    %s1042 = scalar_lea.vmem %s5, 9
    %v1043 = vld [vmem:[%s1042] sm:$0x1]
    %v1045 = vperm.slane %v1043, 0
    %1047 = vmatpush.msra.mxu0 0.0
    %1048 = vmatpush.msra.mxu0 0.0
    %1049 = vmatpush.msra.mxu0 0.0
    %1050 = vmatpush.msra.mxu0 0.0
    %1051 = vmatpush.msra.mxu0 0.0
    %1052 = vmatpush.msra.mxu0 0.0
    %1053 = vmatpush.msra.mxu0 0.0
    %1054 = vmatpush.msra.mxu0 0.0
    %1055 = vmatpush.msra.mxu0 0.0
    %1056 = vmatpush.msra.mxu0 0.0
    %1057 = vmatpush.msra.mxu0 0.0
    %1058 = vmatpush.msra.mxu0 0.0
    %1059 = vmatpush.msra.mxu0 %v1041
    %1060 = vmatpush.msra.mxu0 %v1040
    %1061 = vmatpush.msra.mxu0 %v1039
    %1062 = vmatpush.msra.mxu0 %v1038
    %1063 = vmatmul.f32.gmra.mxu0 %v151
    %v1064 = vpop.f32.mrf.mxu0
    %v1065 = vadd.f32 %v1045, %v1064
    %1066 = vmatmul.f32.gmra.mxu0 %v154
    %v1067 = vpop.f32.mrf.mxu0
    %v1068 = vadd.f32 %v1045, %v1067
    %1069 = vmatmul.f32.gmra.mxu0 %v157
    %v1070 = vpop.f32.mrf.mxu0
    %v1071 = vadd.f32 %v1045, %v1070
    %1072 = vmatmul.f32.gmra.mxu0 %v160
    %v1073 = vpop.f32.mrf.mxu0
    %v1074 = vadd.f32 %v1045, %v1073
    %1075 = vmatmul.f32.gmra.mxu0 %v163
    %v1076 = vpop.f32.mrf.mxu0
    %v1077 = vadd.f32 %v1045, %v1076
    %1078 = vmatmul.f32.gmra.mxu0 %v166
    %v1079 = vpop.f32.mrf.mxu0
    %v1080 = vadd.f32 %v1045, %v1079
    %1081 = vmatmul.f32.gmra.mxu0 %v169
    %v1082 = vpop.f32.mrf.mxu0
    %v1083 = vadd.f32 %v1045, %v1082
    %1084 = vmatmul.f32.gmra.mxu0 %v172
    %v1085 = vpop.f32.mrf.mxu0
    %v1086 = vadd.f32 %v1045, %v1085
    %1087 = vdwg.mxu0
    %v1089 = vsel %vm317, %v963, 0
    %v1092 = vsel %vm317, %v1014, 0
    %1094 = vmatpush.xpose.msra.mxu0 0.0
    %1095 = vmatpush.xpose.msra.mxu0 0.0
    %1096 = vmatpush.xpose.msra.mxu0 0.0
    %1097 = vmatpush.xpose.msra.mxu0 0.0
    %1098 = vmatpush.xpose.msra.mxu0 0.0
    %1099 = vmatpush.xpose.msra.mxu0 0.0
    %1100 = vmatpush.xpose.msra.mxu0 0.0
    %1101 = vmatpush.xpose.msra.mxu0 0.0
    %1102 = vmatpush.xpose.msra.mxu0 0.0
    %1103 = vmatpush.xpose.msra.mxu0 0.0
    %1104 = vmatpush.xpose.msra.mxu0 0.0
    %1105 = vmatpush.xpose.msra.mxu0 0.0
    %1106 = vmatpush.xpose.msra.mxu0 0.0
    %1107 = vmatpush.xpose.msra.mxu0 0.0
    %1108 = vmatpush.xpose.msra.mxu0 0.0
    %1109 = vmatpush.xpose.msra.mxu0 %v1092
    %1110 = vmatmul.f32.gmra.mxu0 %v1089
    %v1111 = vpop.f32.mrf.mxu0
    %v1112 = vadd.f32 0.0, %v1111
    %1113 = vdwg.mxu0
    %v1115 = vsel %vm317, %v966, 0
    %v1118 = vsel %vm317, %v1017, 0
    %1120 = vmatpush.xpose.msra.mxu0 0.0
    %1121 = vmatpush.xpose.msra.mxu0 0.0
    %1122 = vmatpush.xpose.msra.mxu0 0.0
    %1123 = vmatpush.xpose.msra.mxu0 0.0
    %1124 = vmatpush.xpose.msra.mxu0 0.0
    %1125 = vmatpush.xpose.msra.mxu0 0.0
    %1126 = vmatpush.xpose.msra.mxu0 0.0
    %1127 = vmatpush.xpose.msra.mxu0 0.0
    %1128 = vmatpush.xpose.msra.mxu0 0.0
    %1129 = vmatpush.xpose.msra.mxu0 0.0
    %1130 = vmatpush.xpose.msra.mxu0 0.0
    %1131 = vmatpush.xpose.msra.mxu0 0.0
    %1132 = vmatpush.xpose.msra.mxu0 0.0
    %1133 = vmatpush.xpose.msra.mxu0 0.0
    %1134 = vmatpush.xpose.msra.mxu0 0.0
    %1135 = vmatpush.xpose.msra.mxu0 %v1118
    %1136 = vmatmul.f32.gmra.mxu0 %v1115
    %v1137 = vpop.f32.mrf.mxu0
    %v1138 = vadd.f32 0.0, %v1137
    %1139 = vdwg.mxu0
    %v1141 = vsel %vm317, %v969, 0
    %v1144 = vsel %vm317, %v1020, 0
    %1146 = vmatpush.xpose.msra.mxu0 0.0
    %1147 = vmatpush.xpose.msra.mxu0 0.0
    %1148 = vmatpush.xpose.msra.mxu0 0.0
    %1149 = vmatpush.xpose.msra.mxu0 0.0
    %1150 = vmatpush.xpose.msra.mxu0 0.0
    %1151 = vmatpush.xpose.msra.mxu0 0.0
    %1152 = vmatpush.xpose.msra.mxu0 0.0
    %1153 = vmatpush.xpose.msra.mxu0 0.0
    %1154 = vmatpush.xpose.msra.mxu0 0.0
    %1155 = vmatpush.xpose.msra.mxu0 0.0
    %1156 = vmatpush.xpose.msra.mxu0 0.0
    %1157 = vmatpush.xpose.msra.mxu0 0.0
    %1158 = vmatpush.xpose.msra.mxu0 0.0
    %1159 = vmatpush.xpose.msra.mxu0 0.0
    %1160 = vmatpush.xpose.msra.mxu0 0.0
    %1161 = vmatpush.xpose.msra.mxu0 %v1144
    %1162 = vmatmul.f32.gmra.mxu0 %v1141
    %v1163 = vpop.f32.mrf.mxu0
    %v1164 = vadd.f32 0.0, %v1163
    %1165 = vdwg.mxu0
    %v1167 = vsel %vm317, %v972, 0
    %v1170 = vsel %vm317, %v1023, 0
    %1172 = vmatpush.xpose.msra.mxu0 0.0
    %1173 = vmatpush.xpose.msra.mxu0 0.0
    %1174 = vmatpush.xpose.msra.mxu0 0.0
    %1175 = vmatpush.xpose.msra.mxu0 0.0
    %1176 = vmatpush.xpose.msra.mxu0 0.0
    %1177 = vmatpush.xpose.msra.mxu0 0.0
    %1178 = vmatpush.xpose.msra.mxu0 0.0
    %1179 = vmatpush.xpose.msra.mxu0 0.0
    %1180 = vmatpush.xpose.msra.mxu0 0.0
    %1181 = vmatpush.xpose.msra.mxu0 0.0
    %1182 = vmatpush.xpose.msra.mxu0 0.0
    %1183 = vmatpush.xpose.msra.mxu0 0.0
    %1184 = vmatpush.xpose.msra.mxu0 0.0
    %1185 = vmatpush.xpose.msra.mxu0 0.0
    %1186 = vmatpush.xpose.msra.mxu0 0.0
    %1187 = vmatpush.xpose.msra.mxu0 %v1170
    %1188 = vmatmul.f32.gmra.mxu0 %v1167
    %v1189 = vpop.f32.mrf.mxu0
    %v1190 = vadd.f32 0.0, %v1189
    %1191 = vdwg.mxu0
    %v1193 = vsel %vm317, %v975, 0
    %v1196 = vsel %vm317, %v1026, 0
    %1198 = vmatpush.xpose.msra.mxu0 0.0
    %1199 = vmatpush.xpose.msra.mxu0 0.0
    %1200 = vmatpush.xpose.msra.mxu0 0.0
    %1201 = vmatpush.xpose.msra.mxu0 0.0
    %1202 = vmatpush.xpose.msra.mxu0 0.0
    %1203 = vmatpush.xpose.msra.mxu0 0.0
    %1204 = vmatpush.xpose.msra.mxu0 0.0
    %1205 = vmatpush.xpose.msra.mxu0 0.0
    %1206 = vmatpush.xpose.msra.mxu0 0.0
    %1207 = vmatpush.xpose.msra.mxu0 0.0
    %1208 = vmatpush.xpose.msra.mxu0 0.0
    %1209 = vmatpush.xpose.msra.mxu0 0.0
    %1210 = vmatpush.xpose.msra.mxu0 0.0
    %1211 = vmatpush.xpose.msra.mxu0 0.0
    %1212 = vmatpush.xpose.msra.mxu0 0.0
    %1213 = vmatpush.xpose.msra.mxu0 %v1196
    %1214 = vmatmul.f32.gmra.mxu0 %v1193
    %v1215 = vpop.f32.mrf.mxu0
    %v1216 = vadd.f32 0.0, %v1215
    %1217 = vdwg.mxu0
    %v1219 = vsel %vm317, %v978, 0
    %v1222 = vsel %vm317, %v1029, 0
    %1224 = vmatpush.xpose.msra.mxu0 0.0
    %1225 = vmatpush.xpose.msra.mxu0 0.0
    %1226 = vmatpush.xpose.msra.mxu0 0.0
    %1227 = vmatpush.xpose.msra.mxu0 0.0
    %1228 = vmatpush.xpose.msra.mxu0 0.0
    %1229 = vmatpush.xpose.msra.mxu0 0.0
    %1230 = vmatpush.xpose.msra.mxu0 0.0
    %1231 = vmatpush.xpose.msra.mxu0 0.0
    %1232 = vmatpush.xpose.msra.mxu0 0.0
    %1233 = vmatpush.xpose.msra.mxu0 0.0
    %1234 = vmatpush.xpose.msra.mxu0 0.0
    %1235 = vmatpush.xpose.msra.mxu0 0.0
    %1236 = vmatpush.xpose.msra.mxu0 0.0
    %1237 = vmatpush.xpose.msra.mxu0 0.0
    %1238 = vmatpush.xpose.msra.mxu0 0.0
    %1239 = vmatpush.xpose.msra.mxu0 %v1222
    %1240 = vmatmul.f32.gmra.mxu0 %v1219
    %v1241 = vpop.f32.mrf.mxu0
    %v1242 = vadd.f32 0.0, %v1241
    %1243 = vdwg.mxu0
    %v1245 = vsel %vm317, %v981, 0
    %v1248 = vsel %vm317, %v1032, 0
    %1250 = vmatpush.xpose.msra.mxu0 0.0
    %1251 = vmatpush.xpose.msra.mxu0 0.0
    %1252 = vmatpush.xpose.msra.mxu0 0.0
    %1253 = vmatpush.xpose.msra.mxu0 0.0
    %1254 = vmatpush.xpose.msra.mxu0 0.0
    %1255 = vmatpush.xpose.msra.mxu0 0.0
    %1256 = vmatpush.xpose.msra.mxu0 0.0
    %1257 = vmatpush.xpose.msra.mxu0 0.0
    %1258 = vmatpush.xpose.msra.mxu0 0.0
    %1259 = vmatpush.xpose.msra.mxu0 0.0
    %1260 = vmatpush.xpose.msra.mxu0 0.0
    %1261 = vmatpush.xpose.msra.mxu0 0.0
    %1262 = vmatpush.xpose.msra.mxu0 0.0
    %1263 = vmatpush.xpose.msra.mxu0 0.0
    %1264 = vmatpush.xpose.msra.mxu0 0.0
    %1265 = vmatpush.xpose.msra.mxu0 %v1248
    %1266 = vmatmul.f32.gmra.mxu0 %v1245
    %v1267 = vpop.f32.mrf.mxu0
    %v1268 = vadd.f32 0.0, %v1267
    %1269 = vdwg.mxu0
    %v1271 = vsel %vm317, %v984, 0
    %v1274 = vsel %vm317, %v1035, 0
    %1276 = vmatpush.xpose.msra.mxu0 0.0
    %1277 = vmatpush.xpose.msra.mxu0 0.0
    %1278 = vmatpush.xpose.msra.mxu0 0.0
    %1279 = vmatpush.xpose.msra.mxu0 0.0
    %1280 = vmatpush.xpose.msra.mxu0 0.0
    %1281 = vmatpush.xpose.msra.mxu0 0.0
    %1282 = vmatpush.xpose.msra.mxu0 0.0
    %1283 = vmatpush.xpose.msra.mxu0 0.0
    %1284 = vmatpush.xpose.msra.mxu0 0.0
    %1285 = vmatpush.xpose.msra.mxu0 0.0
    %1286 = vmatpush.xpose.msra.mxu0 0.0
    %1287 = vmatpush.xpose.msra.mxu0 0.0
    %1288 = vmatpush.xpose.msra.mxu0 0.0
    %1289 = vmatpush.xpose.msra.mxu0 0.0
    %1290 = vmatpush.xpose.msra.mxu0 0.0
    %1291 = vmatpush.xpose.msra.mxu0 %v1274
    %1292 = vmatmul.f32.gmra.mxu0 %v1271
    %v1293 = vpop.f32.mrf.mxu0
    %v1294 = vadd.f32 0.0, %v1293
    %1295 = vdwg.mxu0
    %v1296 = vmul.f32 %v1112, 0.35355338
    %v1297 = vmul.f32 %v1138, 0.35355338
    %v1298 = vmul.f32 %v1164, 0.35355338
    %v1299 = vmul.f32 %v1190, 0.35355338
    %v1300 = vmul.f32 %v1216, 0.35355338
    %v1301 = vmul.f32 %v1242, 0.35355338
    %v1302 = vmul.f32 %v1268, 0.35355338
    %v1303 = vmul.f32 %v1294, 0.35355338
    %v1304 = vadd.f32 %v1296, %v534
    %v1305 = vadd.f32 %v1297, %v535
    %v1306 = vadd.f32 %v1298, %v536
    %v1307 = vadd.f32 %v1299, %v537
    %v1308 = vadd.f32 %v1300, %v538
    %v1309 = vadd.f32 %v1301, %v539
    %v1310 = vadd.f32 %v1302, %v540
    %v1311 = vadd.f32 %v1303, %v541
    %v1312 = vsel %vm317, %v1304, -inf
    %1313 = vmax.xlane.f32.xlu0 %v1312
    %v1314 = vpop.xlane.xlu0 %1313
    %v1315 = vsel %vm317, %v1305, -inf
    %1316 = vmax.xlane.f32.xlu0 %v1315
    %v1317 = vpop.xlane.xlu0 %1316
    %v1318 = vsel %vm317, %v1306, -inf
    %1319 = vmax.xlane.f32.xlu0 %v1318
    %v1320 = vpop.xlane.xlu0 %1319
    %v1321 = vsel %vm317, %v1307, -inf
    %1322 = vmax.xlane.f32.xlu0 %v1321
    %v1323 = vpop.xlane.xlu0 %1322
    %v1324 = vsel %vm317, %v1308, -inf
    %1325 = vmax.xlane.f32.xlu0 %v1324
    %v1326 = vpop.xlane.xlu0 %1325
    %v1327 = vsel %vm317, %v1309, -inf
    %1328 = vmax.xlane.f32.xlu0 %v1327
    %v1329 = vpop.xlane.xlu0 %1328
    %v1330 = vsel %vm317, %v1310, -inf
    %1331 = vmax.xlane.f32.xlu0 %v1330
    %v1332 = vpop.xlane.xlu0 %1331
    %v1333 = vsel %vm317, %v1311, -inf
    %1334 = vmax.xlane.f32.xlu0 %v1333
    %v1335 = vpop.xlane.xlu0 %1334
    %v1336 = vsub.f32 %v1304, %v1314
    %v1337 = vsub.f32 %v1305, %v1317
    %v1338 = vsub.f32 %v1306, %v1320
    %v1339 = vsub.f32 %v1307, %v1323
    %v1340 = vsub.f32 %v1308, %v1326
    %v1341 = vsub.f32 %v1309, %v1329
    %v1342 = vsub.f32 %v1310, %v1332
    %v1343 = vsub.f32 %v1311, %v1335
    %v1344 = vmul.f32 %v1336, 1.442695
    %v1345 = vpow.pop %v1344
    %v1346 = vmul.f32 %v1337, 1.442695
    %v1347 = vpow.pop %v1346
    %v1348 = vmul.f32 %v1338, 1.442695
    %v1349 = vpow.pop %v1348
    %v1350 = vmul.f32 %v1339, 1.442695
    %v1351 = vpow.pop %v1350
    %v1352 = vmul.f32 %v1340, 1.442695
    %v1353 = vpow.pop %v1352
    %v1354 = vmul.f32 %v1341, 1.442695
    %v1355 = vpow.pop %v1354
    %v1356 = vmul.f32 %v1342, 1.442695
    %v1357 = vpow.pop %v1356
    %v1358 = vmul.f32 %v1343, 1.442695
    %v1359 = vpow.pop %v1358
    %v1360 = vsel %vm317, %v1345, 0.0
    %1361 = vadd.xlane.f32.xlu0 %v1360
    %v1362 = vpop.xlane.xlu0 %1361
    %v1363 = vsel %vm317, %v1347, 0.0
    %1364 = vadd.xlane.f32.xlu0 %v1363
    %v1365 = vpop.xlane.xlu0 %1364
    %v1366 = vsel %vm317, %v1349, 0.0
    %1367 = vadd.xlane.f32.xlu0 %v1366
    %v1368 = vpop.xlane.xlu0 %1367
    %v1369 = vsel %vm317, %v1351, 0.0
    %1370 = vadd.xlane.f32.xlu0 %v1369
    %v1371 = vpop.xlane.xlu0 %1370
    %v1372 = vsel %vm317, %v1353, 0.0
    %1373 = vadd.xlane.f32.xlu0 %v1372
    %v1374 = vpop.xlane.xlu0 %1373
    %v1375 = vsel %vm317, %v1355, 0.0
    %1376 = vadd.xlane.f32.xlu0 %v1375
    %v1377 = vpop.xlane.xlu0 %1376
    %v1378 = vsel %vm317, %v1357, 0.0
    %1379 = vadd.xlane.f32.xlu0 %v1378
    %v1380 = vpop.xlane.xlu0 %1379
    %v1381 = vsel %vm317, %v1359, 0.0
    %1382 = vadd.xlane.f32.xlu0 %v1381
    %v1383 = vpop.xlane.xlu0 %1382
    %v1384 = vrcp.pop %v1362
    %v1385 = vmul.f32 %v1362, %v1384
    %v1386 = vsub.f32 1.0, %v1385
    %v1387 = vmul.f32 %v1384, %v1386
    %v1388 = vadd.f32 %v1384, %v1387
    %vm1389 = vweird.f32 %v1362
    %vm1390 = vweird.f32 %v1384
    %vm1391 = vmor %vm1389, %vm1390
    %v1392 = vsel %vm1391, %v1384, %v1388
    %v1393 = vand.u32 2147483647, %v1362
    %vm1394 = vcmp.eq.f32.partialorder %v1393, 8.507059e+37
    %v1395 = vand.u32 %v1362, 2147483648
    %v1396 = vor.u32 1.1754944e-38, %v1395
    %v1397 = vsel %vm1394, %v1396, %v1392
    %v1398 = vmul.f32 %v1345, %v1397
    %v1399 = vrcp.pop %v1365
    %v1400 = vmul.f32 %v1365, %v1399
    %v1401 = vsub.f32 1.0, %v1400
    %v1402 = vmul.f32 %v1399, %v1401
    %v1403 = vadd.f32 %v1399, %v1402
    %vm1404 = vweird.f32 %v1365
    %vm1405 = vweird.f32 %v1399
    %vm1406 = vmor %vm1404, %vm1405
    %v1407 = vsel %vm1406, %v1399, %v1403
    %v1408 = vand.u32 2147483647, %v1365
    %vm1409 = vcmp.eq.f32.partialorder %v1408, 8.507059e+37
    %v1410 = vand.u32 %v1365, 2147483648
    %v1411 = vor.u32 1.1754944e-38, %v1410
    %v1412 = vsel %vm1409, %v1411, %v1407
    %v1413 = vmul.f32 %v1347, %v1412
    %v1414 = vrcp.pop %v1368
    %v1415 = vmul.f32 %v1368, %v1414
    %v1416 = vsub.f32 1.0, %v1415
    %v1417 = vmul.f32 %v1414, %v1416
    %v1418 = vadd.f32 %v1414, %v1417
    %vm1419 = vweird.f32 %v1368
    %vm1420 = vweird.f32 %v1414
    %vm1421 = vmor %vm1419, %vm1420
    %v1422 = vsel %vm1421, %v1414, %v1418
    %v1423 = vand.u32 2147483647, %v1368
    %vm1424 = vcmp.eq.f32.partialorder %v1423, 8.507059e+37
    %v1425 = vand.u32 %v1368, 2147483648
    %v1426 = vor.u32 1.1754944e-38, %v1425
    %v1427 = vsel %vm1424, %v1426, %v1422
    %v1428 = vmul.f32 %v1349, %v1427
    %v1429 = vrcp.pop %v1371
    %v1430 = vmul.f32 %v1371, %v1429
    %v1431 = vsub.f32 1.0, %v1430
    %v1432 = vmul.f32 %v1429, %v1431
    %v1433 = vadd.f32 %v1429, %v1432
    %vm1434 = vweird.f32 %v1371
    %vm1435 = vweird.f32 %v1429
    %vm1436 = vmor %vm1434, %vm1435
    %v1437 = vsel %vm1436, %v1429, %v1433
    %v1438 = vand.u32 2147483647, %v1371
    %vm1439 = vcmp.eq.f32.partialorder %v1438, 8.507059e+37
    %v1440 = vand.u32 %v1371, 2147483648
    %v1441 = vor.u32 1.1754944e-38, %v1440
    %v1442 = vsel %vm1439, %v1441, %v1437
    %v1443 = vmul.f32 %v1351, %v1442
    %v1444 = vrcp.pop %v1374
    %v1445 = vmul.f32 %v1374, %v1444
    %v1446 = vsub.f32 1.0, %v1445
    %v1447 = vmul.f32 %v1444, %v1446
    %v1448 = vadd.f32 %v1444, %v1447
    %vm1449 = vweird.f32 %v1374
    %vm1450 = vweird.f32 %v1444
    %vm1451 = vmor %vm1449, %vm1450
    %v1452 = vsel %vm1451, %v1444, %v1448
    %v1453 = vand.u32 2147483647, %v1374
    %vm1454 = vcmp.eq.f32.partialorder %v1453, 8.507059e+37
    %v1455 = vand.u32 %v1374, 2147483648
    %v1456 = vor.u32 1.1754944e-38, %v1455
    %v1457 = vsel %vm1454, %v1456, %v1452
    %v1458 = vmul.f32 %v1353, %v1457
    %v1459 = vrcp.pop %v1377
    %v1460 = vmul.f32 %v1377, %v1459
    %v1461 = vsub.f32 1.0, %v1460
    %v1462 = vmul.f32 %v1459, %v1461
    %v1463 = vadd.f32 %v1459, %v1462
    %vm1464 = vweird.f32 %v1377
    %vm1465 = vweird.f32 %v1459
    %vm1466 = vmor %vm1464, %vm1465
    %v1467 = vsel %vm1466, %v1459, %v1463
    %v1468 = vand.u32 2147483647, %v1377
    %vm1469 = vcmp.eq.f32.partialorder %v1468, 8.507059e+37
    %v1470 = vand.u32 %v1377, 2147483648
    %v1471 = vor.u32 1.1754944e-38, %v1470
    %v1472 = vsel %vm1469, %v1471, %v1467
    %v1473 = vmul.f32 %v1355, %v1472
    %v1474 = vrcp.pop %v1380
    %v1475 = vmul.f32 %v1380, %v1474
    %v1476 = vsub.f32 1.0, %v1475
    %v1477 = vmul.f32 %v1474, %v1476
    %v1478 = vadd.f32 %v1474, %v1477
    %vm1479 = vweird.f32 %v1380
    %vm1480 = vweird.f32 %v1474
    %vm1481 = vmor %vm1479, %vm1480
    %v1482 = vsel %vm1481, %v1474, %v1478
    %v1483 = vand.u32 2147483647, %v1380
    %vm1484 = vcmp.eq.f32.partialorder %v1483, 8.507059e+37
    %v1485 = vand.u32 %v1380, 2147483648
    %v1486 = vor.u32 1.1754944e-38, %v1485
    %v1487 = vsel %vm1484, %v1486, %v1482
    %v1488 = vmul.f32 %v1357, %v1487
    %v1489 = vrcp.pop %v1383
    %v1490 = vmul.f32 %v1383, %v1489
    %v1491 = vsub.f32 1.0, %v1490
    %v1492 = vmul.f32 %v1489, %v1491
    %v1493 = vadd.f32 %v1489, %v1492
    %vm1494 = vweird.f32 %v1383
    %vm1495 = vweird.f32 %v1489
    %vm1496 = vmor %vm1494, %vm1495
    %v1497 = vsel %vm1496, %v1489, %v1493
    %v1498 = vand.u32 2147483647, %v1383
    %vm1499 = vcmp.eq.f32.partialorder %v1498, 8.507059e+37
    %v1500 = vand.u32 %v1383, 2147483648
    %v1501 = vor.u32 1.1754944e-38, %v1500
    %v1502 = vsel %vm1499, %v1501, %v1497
    %v1503 = vmul.f32 %v1359, %v1502
    %v1505 = vsel %vm317, %v1398, 0
    %1507 = vmatpush.msra.mxu0 0.0
    %1508 = vmatpush.msra.mxu0 0.0
    %1509 = vmatpush.msra.mxu0 0.0
    %1510 = vmatpush.msra.mxu0 0.0
    %1511 = vmatpush.msra.mxu0 0.0
    %1512 = vmatpush.msra.mxu0 0.0
    %1513 = vmatpush.msra.mxu0 0.0
    %1514 = vmatpush.msra.mxu0 0.0
    %1515 = vmatpush.msra.mxu0 0.0
    %1516 = vmatpush.msra.mxu0 0.0
    %1517 = vmatpush.msra.mxu0 0.0
    %1518 = vmatpush.msra.mxu0 0.0
    %1519 = vmatpush.msra.mxu0 0.0
    %1520 = vmatpush.msra.mxu0 0.0
    %1521 = vmatpush.msra.mxu0 0.0
    %1522 = vmatpush.msra.mxu0 %v1065
    %1523 = vmatmul.f32.gmra.mxu0 %v1505
    %v1524 = vpop.f32.mrf.mxu0
    %v1525 = vadd.f32 0.0, %v1524
    %1526 = vdwg.mxu0
    %v1528 = vsel %vm317, %v1413, 0
    %1530 = vmatpush.msra.mxu0 0.0
    %1531 = vmatpush.msra.mxu0 0.0
    %1532 = vmatpush.msra.mxu0 0.0
    %1533 = vmatpush.msra.mxu0 0.0
    %1534 = vmatpush.msra.mxu0 0.0
    %1535 = vmatpush.msra.mxu0 0.0
    %1536 = vmatpush.msra.mxu0 0.0
    %1537 = vmatpush.msra.mxu0 0.0
    %1538 = vmatpush.msra.mxu0 0.0
    %1539 = vmatpush.msra.mxu0 0.0
    %1540 = vmatpush.msra.mxu0 0.0
    %1541 = vmatpush.msra.mxu0 0.0
    %1542 = vmatpush.msra.mxu0 0.0
    %1543 = vmatpush.msra.mxu0 0.0
    %1544 = vmatpush.msra.mxu0 0.0
    %1545 = vmatpush.msra.mxu0 %v1068
    %1546 = vmatmul.f32.gmra.mxu0 %v1528
    %v1547 = vpop.f32.mrf.mxu0
    %v1548 = vadd.f32 0.0, %v1547
    %1549 = vdwg.mxu0
    %v1551 = vsel %vm317, %v1428, 0
    %1553 = vmatpush.msra.mxu0 0.0
    %1554 = vmatpush.msra.mxu0 0.0
    %1555 = vmatpush.msra.mxu0 0.0
    %1556 = vmatpush.msra.mxu0 0.0
    %1557 = vmatpush.msra.mxu0 0.0
    %1558 = vmatpush.msra.mxu0 0.0
    %1559 = vmatpush.msra.mxu0 0.0
    %1560 = vmatpush.msra.mxu0 0.0
    %1561 = vmatpush.msra.mxu0 0.0
    %1562 = vmatpush.msra.mxu0 0.0
    %1563 = vmatpush.msra.mxu0 0.0
    %1564 = vmatpush.msra.mxu0 0.0
    %1565 = vmatpush.msra.mxu0 0.0
    %1566 = vmatpush.msra.mxu0 0.0
    %1567 = vmatpush.msra.mxu0 0.0
    %1568 = vmatpush.msra.mxu0 %v1071
    %1569 = vmatmul.f32.gmra.mxu0 %v1551
    %v1570 = vpop.f32.mrf.mxu0
    %v1571 = vadd.f32 0.0, %v1570
    %1572 = vdwg.mxu0
    %v1574 = vsel %vm317, %v1443, 0
    %1576 = vmatpush.msra.mxu0 0.0
    %1577 = vmatpush.msra.mxu0 0.0
    %1578 = vmatpush.msra.mxu0 0.0
    %1579 = vmatpush.msra.mxu0 0.0
    %1580 = vmatpush.msra.mxu0 0.0
    %1581 = vmatpush.msra.mxu0 0.0
    %1582 = vmatpush.msra.mxu0 0.0
    %1583 = vmatpush.msra.mxu0 0.0
    %1584 = vmatpush.msra.mxu0 0.0
    %1585 = vmatpush.msra.mxu0 0.0
    %1586 = vmatpush.msra.mxu0 0.0
    %1587 = vmatpush.msra.mxu0 0.0
    %1588 = vmatpush.msra.mxu0 0.0
    %1589 = vmatpush.msra.mxu0 0.0
    %1590 = vmatpush.msra.mxu0 0.0
    %1591 = vmatpush.msra.mxu0 %v1074
    %1592 = vmatmul.f32.gmra.mxu0 %v1574
    %v1593 = vpop.f32.mrf.mxu0
    %v1594 = vadd.f32 0.0, %v1593
    %1595 = vdwg.mxu0
    %v1597 = vsel %vm317, %v1458, 0
    %1599 = vmatpush.msra.mxu0 0.0
    %1600 = vmatpush.msra.mxu0 0.0
    %1601 = vmatpush.msra.mxu0 0.0
    %1602 = vmatpush.msra.mxu0 0.0
    %1603 = vmatpush.msra.mxu0 0.0
    %1604 = vmatpush.msra.mxu0 0.0
    %1605 = vmatpush.msra.mxu0 0.0
    %1606 = vmatpush.msra.mxu0 0.0
    %1607 = vmatpush.msra.mxu0 0.0
    %1608 = vmatpush.msra.mxu0 0.0
    %1609 = vmatpush.msra.mxu0 0.0
    %1610 = vmatpush.msra.mxu0 0.0
    %1611 = vmatpush.msra.mxu0 0.0
    %1612 = vmatpush.msra.mxu0 0.0
    %1613 = vmatpush.msra.mxu0 0.0
    %1614 = vmatpush.msra.mxu0 %v1077
    %1615 = vmatmul.f32.gmra.mxu0 %v1597
    %v1616 = vpop.f32.mrf.mxu0
    %v1617 = vadd.f32 0.0, %v1616
    %1618 = vdwg.mxu0
    %v1620 = vsel %vm317, %v1473, 0
    %1622 = vmatpush.msra.mxu0 0.0
    %1623 = vmatpush.msra.mxu0 0.0
    %1624 = vmatpush.msra.mxu0 0.0
    %1625 = vmatpush.msra.mxu0 0.0
    %1626 = vmatpush.msra.mxu0 0.0
    %1627 = vmatpush.msra.mxu0 0.0
    %1628 = vmatpush.msra.mxu0 0.0
    %1629 = vmatpush.msra.mxu0 0.0
    %1630 = vmatpush.msra.mxu0 0.0
    %1631 = vmatpush.msra.mxu0 0.0
    %1632 = vmatpush.msra.mxu0 0.0
    %1633 = vmatpush.msra.mxu0 0.0
    %1634 = vmatpush.msra.mxu0 0.0
    %1635 = vmatpush.msra.mxu0 0.0
    %1636 = vmatpush.msra.mxu0 0.0
    %1637 = vmatpush.msra.mxu0 %v1080
    %1638 = vmatmul.f32.gmra.mxu0 %v1620
    %v1639 = vpop.f32.mrf.mxu0
    %v1640 = vadd.f32 0.0, %v1639
    %1641 = vdwg.mxu0
    %v1643 = vsel %vm317, %v1488, 0
    %1645 = vmatpush.msra.mxu0 0.0
    %1646 = vmatpush.msra.mxu0 0.0
    %1647 = vmatpush.msra.mxu0 0.0
    %1648 = vmatpush.msra.mxu0 0.0
    %1649 = vmatpush.msra.mxu0 0.0
    %1650 = vmatpush.msra.mxu0 0.0
    %1651 = vmatpush.msra.mxu0 0.0
    %1652 = vmatpush.msra.mxu0 0.0
    %1653 = vmatpush.msra.mxu0 0.0
    %1654 = vmatpush.msra.mxu0 0.0
    %1655 = vmatpush.msra.mxu0 0.0
    %1656 = vmatpush.msra.mxu0 0.0
    %1657 = vmatpush.msra.mxu0 0.0
    %1658 = vmatpush.msra.mxu0 0.0
    %1659 = vmatpush.msra.mxu0 0.0
    %1660 = vmatpush.msra.mxu0 %v1083
    %1661 = vmatmul.f32.gmra.mxu0 %v1643
    %v1662 = vpop.f32.mrf.mxu0
    %v1663 = vadd.f32 0.0, %v1662
    %1664 = vdwg.mxu0
    %v1666 = vsel %vm317, %v1503, 0
    %1668 = vmatpush.msra.mxu0 0.0
    %1669 = vmatpush.msra.mxu0 0.0
    %1670 = vmatpush.msra.mxu0 0.0
    %1671 = vmatpush.msra.mxu0 0.0
    %1672 = vmatpush.msra.mxu0 0.0
    %1673 = vmatpush.msra.mxu0 0.0
    %1674 = vmatpush.msra.mxu0 0.0
    %1675 = vmatpush.msra.mxu0 0.0
    %1676 = vmatpush.msra.mxu0 0.0
    %1677 = vmatpush.msra.mxu0 0.0
    %1678 = vmatpush.msra.mxu0 0.0
    %1679 = vmatpush.msra.mxu0 0.0
    %1680 = vmatpush.msra.mxu0 0.0
    %1681 = vmatpush.msra.mxu0 0.0
    %1682 = vmatpush.msra.mxu0 0.0
    %1683 = vmatpush.msra.mxu0 %v1086
    %1684 = vmatmul.f32.gmra.mxu0 %v1666
    %v1685 = vpop.f32.mrf.mxu0
    %v1686 = vadd.f32 0.0, %v1685
    %1687 = vdwg.mxu0
    %s1688 = scalar_lea.vmem %s6, 8
    %v1689 = vld [vmem:[%s1688] sm:$0xff]
    %v1691 = vsel %vm317, %v1525, 0
    %v1694 = vsel %vm317, %v1548, 0
    %v1697 = vsel %vm317, %v1571, 0
    %v1700 = vsel %vm317, %v1594, 0
    %v1703 = vsel %vm317, %v1617, 0
    %v1706 = vsel %vm317, %v1640, 0
    %v1709 = vsel %vm317, %v1663, 0
    %v1712 = vsel %vm317, %v1686, 0
    %1714 = vmatpush.msra.mxu0 0.0
    %1715 = vmatpush.msra.mxu0 0.0
    %1716 = vmatpush.msra.mxu0 0.0
    %1717 = vmatpush.msra.mxu0 0.0
    %1718 = vmatpush.msra.mxu0 0.0
    %1719 = vmatpush.msra.mxu0 0.0
    %1720 = vmatpush.msra.mxu0 0.0
    %1721 = vmatpush.msra.mxu0 0.0
    %1722 = vmatpush.msra.mxu0 0.0
    %1723 = vmatpush.msra.mxu0 0.0
    %1724 = vmatpush.msra.mxu0 0.0
    %1725 = vmatpush.msra.mxu0 0.0
    %1726 = vmatpush.msra.mxu0 0.0
    %1727 = vmatpush.msra.mxu0 0.0
    %1728 = vmatpush.msra.mxu0 0.0
    %1729 = vmatpush.msra.mxu0 %v1689
    %1730 = vmatmul.f32.gmra.mxu0 %v1691
    %v1731 = vpop.f32.mrf.mxu0
    %v1732 = vadd.f32 0.0, %v1731
    %1733 = vmatmul.f32.gmra.mxu0 %v1694
    %v1734 = vpop.f32.mrf.mxu0
    %v1735 = vadd.f32 0.0, %v1734
    %1736 = vmatmul.f32.gmra.mxu0 %v1697
    %v1737 = vpop.f32.mrf.mxu0
    %v1738 = vadd.f32 0.0, %v1737
    %1739 = vmatmul.f32.gmra.mxu0 %v1700
    %v1740 = vpop.f32.mrf.mxu0
    %v1741 = vadd.f32 0.0, %v1740
    %1742 = vmatmul.f32.gmra.mxu0 %v1703
    %v1743 = vpop.f32.mrf.mxu0
    %v1744 = vadd.f32 0.0, %v1743
    %1745 = vmatmul.f32.gmra.mxu0 %v1706
    %v1746 = vpop.f32.mrf.mxu0
    %v1747 = vadd.f32 0.0, %v1746
    %1748 = vmatmul.f32.gmra.mxu0 %v1709
    %v1749 = vpop.f32.mrf.mxu0
    %v1750 = vadd.f32 0.0, %v1749
    %1751 = vmatmul.f32.gmra.mxu0 %v1712
    %v1752 = vpop.f32.mrf.mxu0
    %v1753 = vadd.f32 0.0, %v1752
    %1754 = vdwg.mxu0
    %v1756 = vsel %vm317, %v771, 0
    %v1759 = vsel %vm317, %v794, 0
    %v1762 = vsel %vm317, %v817, 0
    %v1765 = vsel %vm317, %v840, 0
    %v1768 = vsel %vm317, %v863, 0
    %v1771 = vsel %vm317, %v886, 0
    %v1774 = vsel %vm317, %v909, 0
    %v1777 = vsel %vm317, %v932, 0
    %1779 = vmatpush.msra.mxu0 0.0
    %1780 = vmatpush.msra.mxu0 0.0
    %1781 = vmatpush.msra.mxu0 0.0
    %1782 = vmatpush.msra.mxu0 0.0
    %1783 = vmatpush.msra.mxu0 0.0
    %1784 = vmatpush.msra.mxu0 0.0
    %1785 = vmatpush.msra.mxu0 0.0
    %1786 = vmatpush.msra.mxu0 0.0
    %1787 = vmatpush.msra.mxu0 0.0
    %1788 = vmatpush.msra.mxu0 0.0
    %1789 = vmatpush.msra.mxu0 0.0
    %1790 = vmatpush.msra.mxu0 0.0
    %1791 = vmatpush.msra.mxu0 0.0
    %1792 = vmatpush.msra.mxu0 0.0
    %1793 = vmatpush.msra.mxu0 0.0
    %1794 = vmatpush.msra.mxu0 %v934
    %1795 = vmatmul.f32.gmra.mxu0 %v1756
    %v1796 = vpop.f32.mrf.mxu0
    %v1797 = vadd.f32 %v1732, %v1796
    %1798 = vmatmul.f32.gmra.mxu0 %v1759
    %v1799 = vpop.f32.mrf.mxu0
    %v1800 = vadd.f32 %v1735, %v1799
    %1801 = vmatmul.f32.gmra.mxu0 %v1762
    %v1802 = vpop.f32.mrf.mxu0
    %v1803 = vadd.f32 %v1738, %v1802
    %1804 = vmatmul.f32.gmra.mxu0 %v1765
    %v1805 = vpop.f32.mrf.mxu0
    %v1806 = vadd.f32 %v1741, %v1805
    %1807 = vmatmul.f32.gmra.mxu0 %v1768
    %v1808 = vpop.f32.mrf.mxu0
    %v1809 = vadd.f32 %v1744, %v1808
    %1810 = vmatmul.f32.gmra.mxu0 %v1771
    %v1811 = vpop.f32.mrf.mxu0
    %v1812 = vadd.f32 %v1747, %v1811
    %1813 = vmatmul.f32.gmra.mxu0 %v1774
    %v1814 = vpop.f32.mrf.mxu0
    %v1815 = vadd.f32 %v1750, %v1814
    %1816 = vmatmul.f32.gmra.mxu0 %v1777
    %v1817 = vpop.f32.mrf.mxu0
    %v1818 = vadd.f32 %v1753, %v1817
    %1819 = vdwg.mxu0
    %s1820 = scalar_lea.vmem %s4, 64
    %v1821 = vld [vmem:[%s1820] sm:$0xff]
    %v1822 = vld [vmem:[%s1820 + $0x8] sm:$0xff]
    %v1823 = vld [vmem:[%s1820 + $0x10] sm:$0xff]
    %v1824 = vld [vmem:[%s1820 + $0x18] sm:$0xff]
    %s1825 = scalar_lea.vmem %s5, 2
    %v1826 = vld [vmem:[%s1825] sm:$0x1]
    %v1828 = vperm.slane %v1826, 0
    %1830 = vmatpush.msra.mxu0 0.0
    %1831 = vmatpush.msra.mxu0 0.0
    %1832 = vmatpush.msra.mxu0 0.0
    %1833 = vmatpush.msra.mxu0 0.0
    %1834 = vmatpush.msra.mxu0 0.0
    %1835 = vmatpush.msra.mxu0 0.0
    %1836 = vmatpush.msra.mxu0 0.0
    %1837 = vmatpush.msra.mxu0 0.0
    %1838 = vmatpush.msra.mxu0 0.0
    %1839 = vmatpush.msra.mxu0 0.0
    %1840 = vmatpush.msra.mxu0 0.0
    %1841 = vmatpush.msra.mxu0 0.0
    %1842 = vmatpush.msra.mxu0 %v1824
    %1843 = vmatpush.msra.mxu0 %v1823
    %1844 = vmatpush.msra.mxu0 %v1822
    %1845 = vmatpush.msra.mxu0 %v1821
    %1846 = vmatmul.f32.gmra.mxu0 %v151
    %v1847 = vpop.f32.mrf.mxu0
    %v1848 = vadd.f32 %v1828, %v1847
    %1849 = vmatmul.f32.gmra.mxu0 %v154
    %v1850 = vpop.f32.mrf.mxu0
    %v1851 = vadd.f32 %v1828, %v1850
    %1852 = vmatmul.f32.gmra.mxu0 %v157
    %v1853 = vpop.f32.mrf.mxu0
    %v1854 = vadd.f32 %v1828, %v1853
    %1855 = vmatmul.f32.gmra.mxu0 %v160
    %v1856 = vpop.f32.mrf.mxu0
    %v1857 = vadd.f32 %v1828, %v1856
    %1858 = vmatmul.f32.gmra.mxu0 %v163
    %v1859 = vpop.f32.mrf.mxu0
    %v1860 = vadd.f32 %v1828, %v1859
    %1861 = vmatmul.f32.gmra.mxu0 %v166
    %v1862 = vpop.f32.mrf.mxu0
    %v1863 = vadd.f32 %v1828, %v1862
    %1864 = vmatmul.f32.gmra.mxu0 %v169
    %v1865 = vpop.f32.mrf.mxu0
    %v1866 = vadd.f32 %v1828, %v1865
    %1867 = vmatmul.f32.gmra.mxu0 %v172
    %v1868 = vpop.f32.mrf.mxu0
    %v1869 = vadd.f32 %v1828, %v1868
    %1870 = vdwg.mxu0
    %s1871 = scalar_lea.vmem %s4, 192
    %v1872 = vld [vmem:[%s1871] sm:$0xff]
    %v1873 = vld [vmem:[%s1871 + $0x8] sm:$0xff]
    %v1874 = vld [vmem:[%s1871 + $0x10] sm:$0xff]
    %v1875 = vld [vmem:[%s1871 + $0x18] sm:$0xff]
    %s1876 = scalar_lea.vmem %s5, 6
    %v1877 = vld [vmem:[%s1876] sm:$0x1]
    %v1879 = vperm.slane %v1877, 0
    %1881 = vmatpush.msra.mxu0 0.0
    %1882 = vmatpush.msra.mxu0 0.0
    %1883 = vmatpush.msra.mxu0 0.0
    %1884 = vmatpush.msra.mxu0 0.0
    %1885 = vmatpush.msra.mxu0 0.0
    %1886 = vmatpush.msra.mxu0 0.0
    %1887 = vmatpush.msra.mxu0 0.0
    %1888 = vmatpush.msra.mxu0 0.0
    %1889 = vmatpush.msra.mxu0 0.0
    %1890 = vmatpush.msra.mxu0 0.0
    %1891 = vmatpush.msra.mxu0 0.0
    %1892 = vmatpush.msra.mxu0 0.0
    %1893 = vmatpush.msra.mxu0 %v1875
    %1894 = vmatpush.msra.mxu0 %v1874
    %1895 = vmatpush.msra.mxu0 %v1873
    %1896 = vmatpush.msra.mxu0 %v1872
    %1897 = vmatmul.f32.gmra.mxu0 %v151
    %v1898 = vpop.f32.mrf.mxu0
    %v1899 = vadd.f32 %v1879, %v1898
    %1900 = vmatmul.f32.gmra.mxu0 %v154
    %v1901 = vpop.f32.mrf.mxu0
    %v1902 = vadd.f32 %v1879, %v1901
    %1903 = vmatmul.f32.gmra.mxu0 %v157
    %v1904 = vpop.f32.mrf.mxu0
    %v1905 = vadd.f32 %v1879, %v1904
    %1906 = vmatmul.f32.gmra.mxu0 %v160
    %v1907 = vpop.f32.mrf.mxu0
    %v1908 = vadd.f32 %v1879, %v1907
    %1909 = vmatmul.f32.gmra.mxu0 %v163
    %v1910 = vpop.f32.mrf.mxu0
    %v1911 = vadd.f32 %v1879, %v1910
    %1912 = vmatmul.f32.gmra.mxu0 %v166
    %v1913 = vpop.f32.mrf.mxu0
    %v1914 = vadd.f32 %v1879, %v1913
    %1915 = vmatmul.f32.gmra.mxu0 %v169
    %v1916 = vpop.f32.mrf.mxu0
    %v1917 = vadd.f32 %v1879, %v1916
    %1918 = vmatmul.f32.gmra.mxu0 %v172
    %v1919 = vpop.f32.mrf.mxu0
    %v1920 = vadd.f32 %v1879, %v1919
    %1921 = vdwg.mxu0
    %s1922 = scalar_lea.vmem %s4, 320
    %v1923 = vld [vmem:[%s1922] sm:$0xff]
    %v1924 = vld [vmem:[%s1922 + $0x8] sm:$0xff]
    %v1925 = vld [vmem:[%s1922 + $0x10] sm:$0xff]
    %v1926 = vld [vmem:[%s1922 + $0x18] sm:$0xff]
    %s1927 = scalar_lea.vmem %s5, 10
    %v1928 = vld [vmem:[%s1927] sm:$0x1]
    %v1930 = vperm.slane %v1928, 0
    %1932 = vmatpush.msra.mxu0 0.0
    %1933 = vmatpush.msra.mxu0 0.0
    %1934 = vmatpush.msra.mxu0 0.0
    %1935 = vmatpush.msra.mxu0 0.0
    %1936 = vmatpush.msra.mxu0 0.0
    %1937 = vmatpush.msra.mxu0 0.0
    %1938 = vmatpush.msra.mxu0 0.0
    %1939 = vmatpush.msra.mxu0 0.0
    %1940 = vmatpush.msra.mxu0 0.0
    %1941 = vmatpush.msra.mxu0 0.0
    %1942 = vmatpush.msra.mxu0 0.0
    %1943 = vmatpush.msra.mxu0 0.0
    %1944 = vmatpush.msra.mxu0 %v1926
    %1945 = vmatpush.msra.mxu0 %v1925
    %1946 = vmatpush.msra.mxu0 %v1924
    %1947 = vmatpush.msra.mxu0 %v1923
    %1948 = vmatmul.f32.gmra.mxu0 %v151
    %v1949 = vpop.f32.mrf.mxu0
    %v1950 = vadd.f32 %v1930, %v1949
    %1951 = vmatmul.f32.gmra.mxu0 %v154
    %v1952 = vpop.f32.mrf.mxu0
    %v1953 = vadd.f32 %v1930, %v1952
    %1954 = vmatmul.f32.gmra.mxu0 %v157
    %v1955 = vpop.f32.mrf.mxu0
    %v1956 = vadd.f32 %v1930, %v1955
    %1957 = vmatmul.f32.gmra.mxu0 %v160
    %v1958 = vpop.f32.mrf.mxu0
    %v1959 = vadd.f32 %v1930, %v1958
    %1960 = vmatmul.f32.gmra.mxu0 %v163
    %v1961 = vpop.f32.mrf.mxu0
    %v1962 = vadd.f32 %v1930, %v1961
    %1963 = vmatmul.f32.gmra.mxu0 %v166
    %v1964 = vpop.f32.mrf.mxu0
    %v1965 = vadd.f32 %v1930, %v1964
    %1966 = vmatmul.f32.gmra.mxu0 %v169
    %v1967 = vpop.f32.mrf.mxu0
    %v1968 = vadd.f32 %v1930, %v1967
    %1969 = vmatmul.f32.gmra.mxu0 %v172
    %v1970 = vpop.f32.mrf.mxu0
    %v1971 = vadd.f32 %v1930, %v1970
    %1972 = vdwg.mxu0
    %v1974 = vsel %vm317, %v1848, 0
    %v1977 = vsel %vm317, %v1899, 0
    %1979 = vmatpush.xpose.msra.mxu0 0.0
    %1980 = vmatpush.xpose.msra.mxu0 0.0
    %1981 = vmatpush.xpose.msra.mxu0 0.0
    %1982 = vmatpush.xpose.msra.mxu0 0.0
    %1983 = vmatpush.xpose.msra.mxu0 0.0
    %1984 = vmatpush.xpose.msra.mxu0 0.0
    %1985 = vmatpush.xpose.msra.mxu0 0.0
    %1986 = vmatpush.xpose.msra.mxu0 0.0
    %1987 = vmatpush.xpose.msra.mxu0 0.0
    %1988 = vmatpush.xpose.msra.mxu0 0.0
    %1989 = vmatpush.xpose.msra.mxu0 0.0
    %1990 = vmatpush.xpose.msra.mxu0 0.0
    %1991 = vmatpush.xpose.msra.mxu0 0.0
    %1992 = vmatpush.xpose.msra.mxu0 0.0
    %1993 = vmatpush.xpose.msra.mxu0 0.0
    %1994 = vmatpush.xpose.msra.mxu0 %v1977
    %1995 = vmatmul.f32.gmra.mxu0 %v1974
    %v1996 = vpop.f32.mrf.mxu0
    %v1997 = vadd.f32 0.0, %v1996
    %1998 = vdwg.mxu0
    %v2000 = vsel %vm317, %v1851, 0
    %v2003 = vsel %vm317, %v1902, 0
    %2005 = vmatpush.xpose.msra.mxu0 0.0
    %2006 = vmatpush.xpose.msra.mxu0 0.0
    %2007 = vmatpush.xpose.msra.mxu0 0.0
    %2008 = vmatpush.xpose.msra.mxu0 0.0
    %2009 = vmatpush.xpose.msra.mxu0 0.0
    %2010 = vmatpush.xpose.msra.mxu0 0.0
    %2011 = vmatpush.xpose.msra.mxu0 0.0
    %2012 = vmatpush.xpose.msra.mxu0 0.0
    %2013 = vmatpush.xpose.msra.mxu0 0.0
    %2014 = vmatpush.xpose.msra.mxu0 0.0
    %2015 = vmatpush.xpose.msra.mxu0 0.0
    %2016 = vmatpush.xpose.msra.mxu0 0.0
    %2017 = vmatpush.xpose.msra.mxu0 0.0
    %2018 = vmatpush.xpose.msra.mxu0 0.0
    %2019 = vmatpush.xpose.msra.mxu0 0.0
    %2020 = vmatpush.xpose.msra.mxu0 %v2003
    %2021 = vmatmul.f32.gmra.mxu0 %v2000
    %v2022 = vpop.f32.mrf.mxu0
    %v2023 = vadd.f32 0.0, %v2022
    %2024 = vdwg.mxu0
    %v2026 = vsel %vm317, %v1854, 0
    %v2029 = vsel %vm317, %v1905, 0
    %2031 = vmatpush.xpose.msra.mxu0 0.0
    %2032 = vmatpush.xpose.msra.mxu0 0.0
    %2033 = vmatpush.xpose.msra.mxu0 0.0
    %2034 = vmatpush.xpose.msra.mxu0 0.0
    %2035 = vmatpush.xpose.msra.mxu0 0.0
    %2036 = vmatpush.xpose.msra.mxu0 0.0
    %2037 = vmatpush.xpose.msra.mxu0 0.0
    %2038 = vmatpush.xpose.msra.mxu0 0.0
    %2039 = vmatpush.xpose.msra.mxu0 0.0
    %2040 = vmatpush.xpose.msra.mxu0 0.0
    %2041 = vmatpush.xpose.msra.mxu0 0.0
    %2042 = vmatpush.xpose.msra.mxu0 0.0
    %2043 = vmatpush.xpose.msra.mxu0 0.0
    %2044 = vmatpush.xpose.msra.mxu0 0.0
    %2045 = vmatpush.xpose.msra.mxu0 0.0
    %2046 = vmatpush.xpose.msra.mxu0 %v2029
    %2047 = vmatmul.f32.gmra.mxu0 %v2026
    %v2048 = vpop.f32.mrf.mxu0
    %v2049 = vadd.f32 0.0, %v2048
    %2050 = vdwg.mxu0
    %v2052 = vsel %vm317, %v1857, 0
    %v2055 = vsel %vm317, %v1908, 0
    %2057 = vmatpush.xpose.msra.mxu0 0.0
    %2058 = vmatpush.xpose.msra.mxu0 0.0
    %2059 = vmatpush.xpose.msra.mxu0 0.0
    %2060 = vmatpush.xpose.msra.mxu0 0.0
    %2061 = vmatpush.xpose.msra.mxu0 0.0
    %2062 = vmatpush.xpose.msra.mxu0 0.0
    %2063 = vmatpush.xpose.msra.mxu0 0.0
    %2064 = vmatpush.xpose.msra.mxu0 0.0
    %2065 = vmatpush.xpose.msra.mxu0 0.0
    %2066 = vmatpush.xpose.msra.mxu0 0.0
    %2067 = vmatpush.xpose.msra.mxu0 0.0
    %2068 = vmatpush.xpose.msra.mxu0 0.0
    %2069 = vmatpush.xpose.msra.mxu0 0.0
    %2070 = vmatpush.xpose.msra.mxu0 0.0
    %2071 = vmatpush.xpose.msra.mxu0 0.0
    %2072 = vmatpush.xpose.msra.mxu0 %v2055
    %2073 = vmatmul.f32.gmra.mxu0 %v2052
    %v2074 = vpop.f32.mrf.mxu0
    %v2075 = vadd.f32 0.0, %v2074
    %2076 = vdwg.mxu0
    %v2078 = vsel %vm317, %v1860, 0
    %v2081 = vsel %vm317, %v1911, 0
    %2083 = vmatpush.xpose.msra.mxu0 0.0
    %2084 = vmatpush.xpose.msra.mxu0 0.0
    %2085 = vmatpush.xpose.msra.mxu0 0.0
    %2086 = vmatpush.xpose.msra.mxu0 0.0
    %2087 = vmatpush.xpose.msra.mxu0 0.0
    %2088 = vmatpush.xpose.msra.mxu0 0.0
    %2089 = vmatpush.xpose.msra.mxu0 0.0
    %2090 = vmatpush.xpose.msra.mxu0 0.0
    %2091 = vmatpush.xpose.msra.mxu0 0.0
    %2092 = vmatpush.xpose.msra.mxu0 0.0
    %2093 = vmatpush.xpose.msra.mxu0 0.0
    %2094 = vmatpush.xpose.msra.mxu0 0.0
    %2095 = vmatpush.xpose.msra.mxu0 0.0
    %2096 = vmatpush.xpose.msra.mxu0 0.0
    %2097 = vmatpush.xpose.msra.mxu0 0.0
    %2098 = vmatpush.xpose.msra.mxu0 %v2081
    %2099 = vmatmul.f32.gmra.mxu0 %v2078
    %v2100 = vpop.f32.mrf.mxu0
    %v2101 = vadd.f32 0.0, %v2100
    %2102 = vdwg.mxu0
    %v2104 = vsel %vm317, %v1863, 0
    %v2107 = vsel %vm317, %v1914, 0
    %2109 = vmatpush.xpose.msra.mxu0 0.0
    %2110 = vmatpush.xpose.msra.mxu0 0.0
    %2111 = vmatpush.xpose.msra.mxu0 0.0
    %2112 = vmatpush.xpose.msra.mxu0 0.0
    %2113 = vmatpush.xpose.msra.mxu0 0.0
    %2114 = vmatpush.xpose.msra.mxu0 0.0
    %2115 = vmatpush.xpose.msra.mxu0 0.0
    %2116 = vmatpush.xpose.msra.mxu0 0.0
    %2117 = vmatpush.xpose.msra.mxu0 0.0
    %2118 = vmatpush.xpose.msra.mxu0 0.0
    %2119 = vmatpush.xpose.msra.mxu0 0.0
    %2120 = vmatpush.xpose.msra.mxu0 0.0
    %2121 = vmatpush.xpose.msra.mxu0 0.0
    %2122 = vmatpush.xpose.msra.mxu0 0.0
    %2123 = vmatpush.xpose.msra.mxu0 0.0
    %2124 = vmatpush.xpose.msra.mxu0 %v2107
    %2125 = vmatmul.f32.gmra.mxu0 %v2104
    %v2126 = vpop.f32.mrf.mxu0
    %v2127 = vadd.f32 0.0, %v2126
    %2128 = vdwg.mxu0
    %v2130 = vsel %vm317, %v1866, 0
    %v2133 = vsel %vm317, %v1917, 0
    %2135 = vmatpush.xpose.msra.mxu0 0.0
    %2136 = vmatpush.xpose.msra.mxu0 0.0
    %2137 = vmatpush.xpose.msra.mxu0 0.0
    %2138 = vmatpush.xpose.msra.mxu0 0.0
    %2139 = vmatpush.xpose.msra.mxu0 0.0
    %2140 = vmatpush.xpose.msra.mxu0 0.0
    %2141 = vmatpush.xpose.msra.mxu0 0.0
    %2142 = vmatpush.xpose.msra.mxu0 0.0
    %2143 = vmatpush.xpose.msra.mxu0 0.0
    %2144 = vmatpush.xpose.msra.mxu0 0.0
    %2145 = vmatpush.xpose.msra.mxu0 0.0
    %2146 = vmatpush.xpose.msra.mxu0 0.0
    %2147 = vmatpush.xpose.msra.mxu0 0.0
    %2148 = vmatpush.xpose.msra.mxu0 0.0
    %2149 = vmatpush.xpose.msra.mxu0 0.0
    %2150 = vmatpush.xpose.msra.mxu0 %v2133
    %2151 = vmatmul.f32.gmra.mxu0 %v2130
    %v2152 = vpop.f32.mrf.mxu0
    %v2153 = vadd.f32 0.0, %v2152
    %2154 = vdwg.mxu0
    %v2156 = vsel %vm317, %v1869, 0
    %v2159 = vsel %vm317, %v1920, 0
    %2161 = vmatpush.xpose.msra.mxu0 0.0
    %2162 = vmatpush.xpose.msra.mxu0 0.0
    %2163 = vmatpush.xpose.msra.mxu0 0.0
    %2164 = vmatpush.xpose.msra.mxu0 0.0
    %2165 = vmatpush.xpose.msra.mxu0 0.0
    %2166 = vmatpush.xpose.msra.mxu0 0.0
    %2167 = vmatpush.xpose.msra.mxu0 0.0
    %2168 = vmatpush.xpose.msra.mxu0 0.0
    %2169 = vmatpush.xpose.msra.mxu0 0.0
    %2170 = vmatpush.xpose.msra.mxu0 0.0
    %2171 = vmatpush.xpose.msra.mxu0 0.0
    %2172 = vmatpush.xpose.msra.mxu0 0.0
    %2173 = vmatpush.xpose.msra.mxu0 0.0
    %2174 = vmatpush.xpose.msra.mxu0 0.0
    %2175 = vmatpush.xpose.msra.mxu0 0.0
    %2176 = vmatpush.xpose.msra.mxu0 %v2159
    %2177 = vmatmul.f32.gmra.mxu0 %v2156
    %v2178 = vpop.f32.mrf.mxu0
    %v2179 = vadd.f32 0.0, %v2178
    %2180 = vdwg.mxu0
    %v2181 = vmul.f32 %v1997, 0.35355338
    %v2182 = vmul.f32 %v2023, 0.35355338
    %v2183 = vmul.f32 %v2049, 0.35355338
    %v2184 = vmul.f32 %v2075, 0.35355338
    %v2185 = vmul.f32 %v2101, 0.35355338
    %v2186 = vmul.f32 %v2127, 0.35355338
    %v2187 = vmul.f32 %v2153, 0.35355338
    %v2188 = vmul.f32 %v2179, 0.35355338
    %v2189 = vadd.f32 %v2181, %v534
    %v2190 = vadd.f32 %v2182, %v535
    %v2191 = vadd.f32 %v2183, %v536
    %v2192 = vadd.f32 %v2184, %v537
    %v2193 = vadd.f32 %v2185, %v538
    %v2194 = vadd.f32 %v2186, %v539
    %v2195 = vadd.f32 %v2187, %v540
    %v2196 = vadd.f32 %v2188, %v541
    %v2197 = vsel %vm317, %v2189, -inf
    %2198 = vmax.xlane.f32.xlu0 %v2197
    %v2199 = vpop.xlane.xlu0 %2198
    %v2200 = vsel %vm317, %v2190, -inf
    %2201 = vmax.xlane.f32.xlu0 %v2200
    %v2202 = vpop.xlane.xlu0 %2201
    %v2203 = vsel %vm317, %v2191, -inf
    %2204 = vmax.xlane.f32.xlu0 %v2203
    %v2205 = vpop.xlane.xlu0 %2204
    %v2206 = vsel %vm317, %v2192, -inf
    %2207 = vmax.xlane.f32.xlu0 %v2206
    %v2208 = vpop.xlane.xlu0 %2207
    %v2209 = vsel %vm317, %v2193, -inf
    %2210 = vmax.xlane.f32.xlu0 %v2209
    %v2211 = vpop.xlane.xlu0 %2210
    %v2212 = vsel %vm317, %v2194, -inf
    %2213 = vmax.xlane.f32.xlu0 %v2212
    %v2214 = vpop.xlane.xlu0 %2213
    %v2215 = vsel %vm317, %v2195, -inf
    %2216 = vmax.xlane.f32.xlu0 %v2215
    %v2217 = vpop.xlane.xlu0 %2216
    %v2218 = vsel %vm317, %v2196, -inf
    %2219 = vmax.xlane.f32.xlu0 %v2218
    %v2220 = vpop.xlane.xlu0 %2219
    %v2221 = vsub.f32 %v2189, %v2199
    %v2222 = vsub.f32 %v2190, %v2202
    %v2223 = vsub.f32 %v2191, %v2205
    %v2224 = vsub.f32 %v2192, %v2208
    %v2225 = vsub.f32 %v2193, %v2211
    %v2226 = vsub.f32 %v2194, %v2214
    %v2227 = vsub.f32 %v2195, %v2217
    %v2228 = vsub.f32 %v2196, %v2220
    %v2229 = vmul.f32 %v2221, 1.442695
    %v2230 = vpow.pop %v2229
    %v2231 = vmul.f32 %v2222, 1.442695
    %v2232 = vpow.pop %v2231
    %v2233 = vmul.f32 %v2223, 1.442695
    %v2234 = vpow.pop %v2233
    %v2235 = vmul.f32 %v2224, 1.442695
    %v2236 = vpow.pop %v2235
    %v2237 = vmul.f32 %v2225, 1.442695
    %v2238 = vpow.pop %v2237
    %v2239 = vmul.f32 %v2226, 1.442695
    %v2240 = vpow.pop %v2239
    %v2241 = vmul.f32 %v2227, 1.442695
    %v2242 = vpow.pop %v2241
    %v2243 = vmul.f32 %v2228, 1.442695
    %v2244 = vpow.pop %v2243
    %v2245 = vsel %vm317, %v2230, 0.0
    %2246 = vadd.xlane.f32.xlu0 %v2245
    %v2247 = vpop.xlane.xlu0 %2246
    %v2248 = vsel %vm317, %v2232, 0.0
    %2249 = vadd.xlane.f32.xlu0 %v2248
    %v2250 = vpop.xlane.xlu0 %2249
    %v2251 = vsel %vm317, %v2234, 0.0
    %2252 = vadd.xlane.f32.xlu0 %v2251
    %v2253 = vpop.xlane.xlu0 %2252
    %v2254 = vsel %vm317, %v2236, 0.0
    %2255 = vadd.xlane.f32.xlu0 %v2254
    %v2256 = vpop.xlane.xlu0 %2255
    %v2257 = vsel %vm317, %v2238, 0.0
    %2258 = vadd.xlane.f32.xlu0 %v2257
    %v2259 = vpop.xlane.xlu0 %2258
    %v2260 = vsel %vm317, %v2240, 0.0
    %2261 = vadd.xlane.f32.xlu0 %v2260
    %v2262 = vpop.xlane.xlu0 %2261
    %v2263 = vsel %vm317, %v2242, 0.0
    %2264 = vadd.xlane.f32.xlu0 %v2263
    %v2265 = vpop.xlane.xlu0 %2264
    %v2266 = vsel %vm317, %v2244, 0.0
    %2267 = vadd.xlane.f32.xlu0 %v2266
    %v2268 = vpop.xlane.xlu0 %2267
    %v2269 = vrcp.pop %v2247
    %v2270 = vmul.f32 %v2247, %v2269
    %v2271 = vsub.f32 1.0, %v2270
    %v2272 = vmul.f32 %v2269, %v2271
    %v2273 = vadd.f32 %v2269, %v2272
    %vm2274 = vweird.f32 %v2247
    %vm2275 = vweird.f32 %v2269
    %vm2276 = vmor %vm2274, %vm2275
    %v2277 = vsel %vm2276, %v2269, %v2273
    %v2278 = vand.u32 2147483647, %v2247
    %vm2279 = vcmp.eq.f32.partialorder %v2278, 8.507059e+37
    %v2280 = vand.u32 %v2247, 2147483648
    %v2281 = vor.u32 1.1754944e-38, %v2280
    %v2282 = vsel %vm2279, %v2281, %v2277
    %v2283 = vmul.f32 %v2230, %v2282
    %v2284 = vrcp.pop %v2250
    %v2285 = vmul.f32 %v2250, %v2284
    %v2286 = vsub.f32 1.0, %v2285
    %v2287 = vmul.f32 %v2284, %v2286
    %v2288 = vadd.f32 %v2284, %v2287
    %vm2289 = vweird.f32 %v2250
    %vm2290 = vweird.f32 %v2284
    %vm2291 = vmor %vm2289, %vm2290
    %v2292 = vsel %vm2291, %v2284, %v2288
    %v2293 = vand.u32 2147483647, %v2250
    %vm2294 = vcmp.eq.f32.partialorder %v2293, 8.507059e+37
    %v2295 = vand.u32 %v2250, 2147483648
    %v2296 = vor.u32 1.1754944e-38, %v2295
    %v2297 = vsel %vm2294, %v2296, %v2292
    %v2298 = vmul.f32 %v2232, %v2297
    %v2299 = vrcp.pop %v2253
    %v2300 = vmul.f32 %v2253, %v2299
    %v2301 = vsub.f32 1.0, %v2300
    %v2302 = vmul.f32 %v2299, %v2301
    %v2303 = vadd.f32 %v2299, %v2302
    %vm2304 = vweird.f32 %v2253
    %vm2305 = vweird.f32 %v2299
    %vm2306 = vmor %vm2304, %vm2305
    %v2307 = vsel %vm2306, %v2299, %v2303
    %v2308 = vand.u32 2147483647, %v2253
    %vm2309 = vcmp.eq.f32.partialorder %v2308, 8.507059e+37
    %v2310 = vand.u32 %v2253, 2147483648
    %v2311 = vor.u32 1.1754944e-38, %v2310
    %v2312 = vsel %vm2309, %v2311, %v2307
    %v2313 = vmul.f32 %v2234, %v2312
    %v2314 = vrcp.pop %v2256
    %v2315 = vmul.f32 %v2256, %v2314
    %v2316 = vsub.f32 1.0, %v2315
    %v2317 = vmul.f32 %v2314, %v2316
    %v2318 = vadd.f32 %v2314, %v2317
    %vm2319 = vweird.f32 %v2256
    %vm2320 = vweird.f32 %v2314
    %vm2321 = vmor %vm2319, %vm2320
    %v2322 = vsel %vm2321, %v2314, %v2318
    %v2323 = vand.u32 2147483647, %v2256
    %vm2324 = vcmp.eq.f32.partialorder %v2323, 8.507059e+37
    %v2325 = vand.u32 %v2256, 2147483648
    %v2326 = vor.u32 1.1754944e-38, %v2325
    %v2327 = vsel %vm2324, %v2326, %v2322
    %v2328 = vmul.f32 %v2236, %v2327
    %v2329 = vrcp.pop %v2259
    %v2330 = vmul.f32 %v2259, %v2329
    %v2331 = vsub.f32 1.0, %v2330
    %v2332 = vmul.f32 %v2329, %v2331
    %v2333 = vadd.f32 %v2329, %v2332
    %vm2334 = vweird.f32 %v2259
    %vm2335 = vweird.f32 %v2329
    %vm2336 = vmor %vm2334, %vm2335
    %v2337 = vsel %vm2336, %v2329, %v2333
    %v2338 = vand.u32 2147483647, %v2259
    %vm2339 = vcmp.eq.f32.partialorder %v2338, 8.507059e+37
    %v2340 = vand.u32 %v2259, 2147483648
    %v2341 = vor.u32 1.1754944e-38, %v2340
    %v2342 = vsel %vm2339, %v2341, %v2337
    %v2343 = vmul.f32 %v2238, %v2342
    %v2344 = vrcp.pop %v2262
    %v2345 = vmul.f32 %v2262, %v2344
    %v2346 = vsub.f32 1.0, %v2345
    %v2347 = vmul.f32 %v2344, %v2346
    %v2348 = vadd.f32 %v2344, %v2347
    %vm2349 = vweird.f32 %v2262
    %vm2350 = vweird.f32 %v2344
    %vm2351 = vmor %vm2349, %vm2350
    %v2352 = vsel %vm2351, %v2344, %v2348
    %v2353 = vand.u32 2147483647, %v2262
    %vm2354 = vcmp.eq.f32.partialorder %v2353, 8.507059e+37
    %v2355 = vand.u32 %v2262, 2147483648
    %v2356 = vor.u32 1.1754944e-38, %v2355
    %v2357 = vsel %vm2354, %v2356, %v2352
    %v2358 = vmul.f32 %v2240, %v2357
    %v2359 = vrcp.pop %v2265
    %v2360 = vmul.f32 %v2265, %v2359
    %v2361 = vsub.f32 1.0, %v2360
    %v2362 = vmul.f32 %v2359, %v2361
    %v2363 = vadd.f32 %v2359, %v2362
    %vm2364 = vweird.f32 %v2265
    %vm2365 = vweird.f32 %v2359
    %vm2366 = vmor %vm2364, %vm2365
    %v2367 = vsel %vm2366, %v2359, %v2363
    %v2368 = vand.u32 2147483647, %v2265
    %vm2369 = vcmp.eq.f32.partialorder %v2368, 8.507059e+37
    %v2370 = vand.u32 %v2265, 2147483648
    %v2371 = vor.u32 1.1754944e-38, %v2370
    %v2372 = vsel %vm2369, %v2371, %v2367
    %v2373 = vmul.f32 %v2242, %v2372
    %v2374 = vrcp.pop %v2268
    %v2375 = vmul.f32 %v2268, %v2374
    %v2376 = vsub.f32 1.0, %v2375
    %v2377 = vmul.f32 %v2374, %v2376
    %v2378 = vadd.f32 %v2374, %v2377
    %vm2379 = vweird.f32 %v2268
    %vm2380 = vweird.f32 %v2374
    %vm2381 = vmor %vm2379, %vm2380
    %v2382 = vsel %vm2381, %v2374, %v2378
    %v2383 = vand.u32 2147483647, %v2268
    %vm2384 = vcmp.eq.f32.partialorder %v2383, 8.507059e+37
    %v2385 = vand.u32 %v2268, 2147483648
    %v2386 = vor.u32 1.1754944e-38, %v2385
    %v2387 = vsel %vm2384, %v2386, %v2382
    %v2388 = vmul.f32 %v2244, %v2387
    %v2390 = vsel %vm317, %v2283, 0
    %2392 = vmatpush.msra.mxu0 0.0
    %2393 = vmatpush.msra.mxu0 0.0
    %2394 = vmatpush.msra.mxu0 0.0
    %2395 = vmatpush.msra.mxu0 0.0
    %2396 = vmatpush.msra.mxu0 0.0
    %2397 = vmatpush.msra.mxu0 0.0
    %2398 = vmatpush.msra.mxu0 0.0
    %2399 = vmatpush.msra.mxu0 0.0
    %2400 = vmatpush.msra.mxu0 0.0
    %2401 = vmatpush.msra.mxu0 0.0
    %2402 = vmatpush.msra.mxu0 0.0
    %2403 = vmatpush.msra.mxu0 0.0
    %2404 = vmatpush.msra.mxu0 0.0
    %2405 = vmatpush.msra.mxu0 0.0
    %2406 = vmatpush.msra.mxu0 0.0
    %2407 = vmatpush.msra.mxu0 %v1950
    %2408 = vmatmul.f32.gmra.mxu0 %v2390
    %v2409 = vpop.f32.mrf.mxu0
    %v2410 = vadd.f32 0.0, %v2409
    %2411 = vdwg.mxu0
    %v2413 = vsel %vm317, %v2298, 0
    %2415 = vmatpush.msra.mxu0 0.0
    %2416 = vmatpush.msra.mxu0 0.0
    %2417 = vmatpush.msra.mxu0 0.0
    %2418 = vmatpush.msra.mxu0 0.0
    %2419 = vmatpush.msra.mxu0 0.0
    %2420 = vmatpush.msra.mxu0 0.0
    %2421 = vmatpush.msra.mxu0 0.0
    %2422 = vmatpush.msra.mxu0 0.0
    %2423 = vmatpush.msra.mxu0 0.0
    %2424 = vmatpush.msra.mxu0 0.0
    %2425 = vmatpush.msra.mxu0 0.0
    %2426 = vmatpush.msra.mxu0 0.0
    %2427 = vmatpush.msra.mxu0 0.0
    %2428 = vmatpush.msra.mxu0 0.0
    %2429 = vmatpush.msra.mxu0 0.0
    %2430 = vmatpush.msra.mxu0 %v1953
    %2431 = vmatmul.f32.gmra.mxu0 %v2413
    %v2432 = vpop.f32.mrf.mxu0
    %v2433 = vadd.f32 0.0, %v2432
    %2434 = vdwg.mxu0
    %v2436 = vsel %vm317, %v2313, 0
    %2438 = vmatpush.msra.mxu0 0.0
    %2439 = vmatpush.msra.mxu0 0.0
    %2440 = vmatpush.msra.mxu0 0.0
    %2441 = vmatpush.msra.mxu0 0.0
    %2442 = vmatpush.msra.mxu0 0.0
    %2443 = vmatpush.msra.mxu0 0.0
    %2444 = vmatpush.msra.mxu0 0.0
    %2445 = vmatpush.msra.mxu0 0.0
    %2446 = vmatpush.msra.mxu0 0.0
    %2447 = vmatpush.msra.mxu0 0.0
    %2448 = vmatpush.msra.mxu0 0.0
    %2449 = vmatpush.msra.mxu0 0.0
    %2450 = vmatpush.msra.mxu0 0.0
    %2451 = vmatpush.msra.mxu0 0.0
    %2452 = vmatpush.msra.mxu0 0.0
    %2453 = vmatpush.msra.mxu0 %v1956
    %2454 = vmatmul.f32.gmra.mxu0 %v2436
    %v2455 = vpop.f32.mrf.mxu0
    %v2456 = vadd.f32 0.0, %v2455
    %2457 = vdwg.mxu0
    %v2459 = vsel %vm317, %v2328, 0
    %2461 = vmatpush.msra.mxu0 0.0
    %2462 = vmatpush.msra.mxu0 0.0
    %2463 = vmatpush.msra.mxu0 0.0
    %2464 = vmatpush.msra.mxu0 0.0
    %2465 = vmatpush.msra.mxu0 0.0
    %2466 = vmatpush.msra.mxu0 0.0
    %2467 = vmatpush.msra.mxu0 0.0
    %2468 = vmatpush.msra.mxu0 0.0
    %2469 = vmatpush.msra.mxu0 0.0
    %2470 = vmatpush.msra.mxu0 0.0
    %2471 = vmatpush.msra.mxu0 0.0
    %2472 = vmatpush.msra.mxu0 0.0
    %2473 = vmatpush.msra.mxu0 0.0
    %2474 = vmatpush.msra.mxu0 0.0
    %2475 = vmatpush.msra.mxu0 0.0
    %2476 = vmatpush.msra.mxu0 %v1959
    %2477 = vmatmul.f32.gmra.mxu0 %v2459
    %v2478 = vpop.f32.mrf.mxu0
    %v2479 = vadd.f32 0.0, %v2478
    %2480 = vdwg.mxu0
    %v2482 = vsel %vm317, %v2343, 0
    %2484 = vmatpush.msra.mxu0 0.0
    %2485 = vmatpush.msra.mxu0 0.0
    %2486 = vmatpush.msra.mxu0 0.0
    %2487 = vmatpush.msra.mxu0 0.0
    %2488 = vmatpush.msra.mxu0 0.0
    %2489 = vmatpush.msra.mxu0 0.0
    %2490 = vmatpush.msra.mxu0 0.0
    %2491 = vmatpush.msra.mxu0 0.0
    %2492 = vmatpush.msra.mxu0 0.0
    %2493 = vmatpush.msra.mxu0 0.0
    %2494 = vmatpush.msra.mxu0 0.0
    %2495 = vmatpush.msra.mxu0 0.0
    %2496 = vmatpush.msra.mxu0 0.0
    %2497 = vmatpush.msra.mxu0 0.0
    %2498 = vmatpush.msra.mxu0 0.0
    %2499 = vmatpush.msra.mxu0 %v1962
    %2500 = vmatmul.f32.gmra.mxu0 %v2482
    %v2501 = vpop.f32.mrf.mxu0
    %v2502 = vadd.f32 0.0, %v2501
    %2503 = vdwg.mxu0
    %v2505 = vsel %vm317, %v2358, 0
    %2507 = vmatpush.msra.mxu0 0.0
    %2508 = vmatpush.msra.mxu0 0.0
    %2509 = vmatpush.msra.mxu0 0.0
    %2510 = vmatpush.msra.mxu0 0.0
    %2511 = vmatpush.msra.mxu0 0.0
    %2512 = vmatpush.msra.mxu0 0.0
    %2513 = vmatpush.msra.mxu0 0.0
    %2514 = vmatpush.msra.mxu0 0.0
    %2515 = vmatpush.msra.mxu0 0.0
    %2516 = vmatpush.msra.mxu0 0.0
    %2517 = vmatpush.msra.mxu0 0.0
    %2518 = vmatpush.msra.mxu0 0.0
    %2519 = vmatpush.msra.mxu0 0.0
    %2520 = vmatpush.msra.mxu0 0.0
    %2521 = vmatpush.msra.mxu0 0.0
    %2522 = vmatpush.msra.mxu0 %v1965
    %2523 = vmatmul.f32.gmra.mxu0 %v2505
    %v2524 = vpop.f32.mrf.mxu0
    %v2525 = vadd.f32 0.0, %v2524
    %2526 = vdwg.mxu0
    %v2528 = vsel %vm317, %v2373, 0
    %2530 = vmatpush.msra.mxu0 0.0
    %2531 = vmatpush.msra.mxu0 0.0
    %2532 = vmatpush.msra.mxu0 0.0
    %2533 = vmatpush.msra.mxu0 0.0
    %2534 = vmatpush.msra.mxu0 0.0
    %2535 = vmatpush.msra.mxu0 0.0
    %2536 = vmatpush.msra.mxu0 0.0
    %2537 = vmatpush.msra.mxu0 0.0
    %2538 = vmatpush.msra.mxu0 0.0
    %2539 = vmatpush.msra.mxu0 0.0
    %2540 = vmatpush.msra.mxu0 0.0
    %2541 = vmatpush.msra.mxu0 0.0
    %2542 = vmatpush.msra.mxu0 0.0
    %2543 = vmatpush.msra.mxu0 0.0
    %2544 = vmatpush.msra.mxu0 0.0
    %2545 = vmatpush.msra.mxu0 %v1968
    %2546 = vmatmul.f32.gmra.mxu0 %v2528
    %v2547 = vpop.f32.mrf.mxu0
    %v2548 = vadd.f32 0.0, %v2547
    %2549 = vdwg.mxu0
    %v2551 = vsel %vm317, %v2388, 0
    %2553 = vmatpush.msra.mxu0 0.0
    %2554 = vmatpush.msra.mxu0 0.0
    %2555 = vmatpush.msra.mxu0 0.0
    %2556 = vmatpush.msra.mxu0 0.0
    %2557 = vmatpush.msra.mxu0 0.0
    %2558 = vmatpush.msra.mxu0 0.0
    %2559 = vmatpush.msra.mxu0 0.0
    %2560 = vmatpush.msra.mxu0 0.0
    %2561 = vmatpush.msra.mxu0 0.0
    %2562 = vmatpush.msra.mxu0 0.0
    %2563 = vmatpush.msra.mxu0 0.0
    %2564 = vmatpush.msra.mxu0 0.0
    %2565 = vmatpush.msra.mxu0 0.0
    %2566 = vmatpush.msra.mxu0 0.0
    %2567 = vmatpush.msra.mxu0 0.0
    %2568 = vmatpush.msra.mxu0 %v1971
    %2569 = vmatmul.f32.gmra.mxu0 %v2551
    %v2570 = vpop.f32.mrf.mxu0
    %v2571 = vadd.f32 0.0, %v2570
    %2572 = vdwg.mxu0
    %s2573 = scalar_lea.vmem %s6, 16
    %v2574 = vld [vmem:[%s2573] sm:$0xff]
    %v2576 = vsel %vm317, %v2410, 0
    %v2579 = vsel %vm317, %v2433, 0
    %v2582 = vsel %vm317, %v2456, 0
    %v2585 = vsel %vm317, %v2479, 0
    %v2588 = vsel %vm317, %v2502, 0
    %v2591 = vsel %vm317, %v2525, 0
    %v2594 = vsel %vm317, %v2548, 0
    %v2597 = vsel %vm317, %v2571, 0
    %2599 = vmatpush.msra.mxu0 0.0
    %2600 = vmatpush.msra.mxu0 0.0
    %2601 = vmatpush.msra.mxu0 0.0
    %2602 = vmatpush.msra.mxu0 0.0
    %2603 = vmatpush.msra.mxu0 0.0
    %2604 = vmatpush.msra.mxu0 0.0
    %2605 = vmatpush.msra.mxu0 0.0
    %2606 = vmatpush.msra.mxu0 0.0
    %2607 = vmatpush.msra.mxu0 0.0
    %2608 = vmatpush.msra.mxu0 0.0
    %2609 = vmatpush.msra.mxu0 0.0
    %2610 = vmatpush.msra.mxu0 0.0
    %2611 = vmatpush.msra.mxu0 0.0
    %2612 = vmatpush.msra.mxu0 0.0
    %2613 = vmatpush.msra.mxu0 0.0
    %2614 = vmatpush.msra.mxu0 %v2574
    %2615 = vmatmul.f32.gmra.mxu0 %v2576
    %v2616 = vpop.f32.mrf.mxu0
    %v2617 = vadd.f32 0.0, %v2616
    %2618 = vmatmul.f32.gmra.mxu0 %v2579
    %v2619 = vpop.f32.mrf.mxu0
    %v2620 = vadd.f32 0.0, %v2619
    %2621 = vmatmul.f32.gmra.mxu0 %v2582
    %v2622 = vpop.f32.mrf.mxu0
    %v2623 = vadd.f32 0.0, %v2622
    %2624 = vmatmul.f32.gmra.mxu0 %v2585
    %v2625 = vpop.f32.mrf.mxu0
    %v2626 = vadd.f32 0.0, %v2625
    %2627 = vmatmul.f32.gmra.mxu0 %v2588
    %v2628 = vpop.f32.mrf.mxu0
    %v2629 = vadd.f32 0.0, %v2628
    %2630 = vmatmul.f32.gmra.mxu0 %v2591
    %v2631 = vpop.f32.mrf.mxu0
    %v2632 = vadd.f32 0.0, %v2631
    %2633 = vmatmul.f32.gmra.mxu0 %v2594
    %v2634 = vpop.f32.mrf.mxu0
    %v2635 = vadd.f32 0.0, %v2634
    %2636 = vmatmul.f32.gmra.mxu0 %v2597
    %v2637 = vpop.f32.mrf.mxu0
    %v2638 = vadd.f32 0.0, %v2637
    %2639 = vdwg.mxu0
    %v2640 = vadd.f32 %v1797, %v2617
    %v2641 = vadd.f32 %v1800, %v2620
    %v2642 = vadd.f32 %v1803, %v2623
    %v2643 = vadd.f32 %v1806, %v2626
    %v2644 = vadd.f32 %v1809, %v2629
    %v2645 = vadd.f32 %v1812, %v2632
    %v2646 = vadd.f32 %v1815, %v2635
    %v2647 = vadd.f32 %v1818, %v2638
    %s2648 = scalar_lea.vmem %s4, 96
    %v2649 = vld [vmem:[%s2648] sm:$0xff]
    %v2650 = vld [vmem:[%s2648 + $0x8] sm:$0xff]
    %v2651 = vld [vmem:[%s2648 + $0x10] sm:$0xff]
    %v2652 = vld [vmem:[%s2648 + $0x18] sm:$0xff]
    %s2653 = scalar_lea.vmem %s5, 3
    %v2654 = vld [vmem:[%s2653] sm:$0x1]
    %v2656 = vperm.slane %v2654, 0
    %2658 = vmatpush.msra.mxu0 0.0
    %2659 = vmatpush.msra.mxu0 0.0
    %2660 = vmatpush.msra.mxu0 0.0
    %2661 = vmatpush.msra.mxu0 0.0
    %2662 = vmatpush.msra.mxu0 0.0
    %2663 = vmatpush.msra.mxu0 0.0
    %2664 = vmatpush.msra.mxu0 0.0
    %2665 = vmatpush.msra.mxu0 0.0
    %2666 = vmatpush.msra.mxu0 0.0
    %2667 = vmatpush.msra.mxu0 0.0
    %2668 = vmatpush.msra.mxu0 0.0
    %2669 = vmatpush.msra.mxu0 0.0
    %2670 = vmatpush.msra.mxu0 %v2652
    %2671 = vmatpush.msra.mxu0 %v2651
    %2672 = vmatpush.msra.mxu0 %v2650
    %2673 = vmatpush.msra.mxu0 %v2649
    %2674 = vmatmul.f32.gmra.mxu0 %v151
    %v2675 = vpop.f32.mrf.mxu0
    %v2676 = vadd.f32 %v2656, %v2675
    %2677 = vmatmul.f32.gmra.mxu0 %v154
    %v2678 = vpop.f32.mrf.mxu0
    %v2679 = vadd.f32 %v2656, %v2678
    %2680 = vmatmul.f32.gmra.mxu0 %v157
    %v2681 = vpop.f32.mrf.mxu0
    %v2682 = vadd.f32 %v2656, %v2681
    %2683 = vmatmul.f32.gmra.mxu0 %v160
    %v2684 = vpop.f32.mrf.mxu0
    %v2685 = vadd.f32 %v2656, %v2684
    %2686 = vmatmul.f32.gmra.mxu0 %v163
    %v2687 = vpop.f32.mrf.mxu0
    %v2688 = vadd.f32 %v2656, %v2687
    %2689 = vmatmul.f32.gmra.mxu0 %v166
    %v2690 = vpop.f32.mrf.mxu0
    %v2691 = vadd.f32 %v2656, %v2690
    %2692 = vmatmul.f32.gmra.mxu0 %v169
    %v2693 = vpop.f32.mrf.mxu0
    %v2694 = vadd.f32 %v2656, %v2693
    %2695 = vmatmul.f32.gmra.mxu0 %v172
    %v2696 = vpop.f32.mrf.mxu0
    %v2697 = vadd.f32 %v2656, %v2696
    %2698 = vdwg.mxu0
    %s2699 = scalar_lea.vmem %s4, 224
    %v2700 = vld [vmem:[%s2699] sm:$0xff]
    %v2701 = vld [vmem:[%s2699 + $0x8] sm:$0xff]
    %v2702 = vld [vmem:[%s2699 + $0x10] sm:$0xff]
    %v2703 = vld [vmem:[%s2699 + $0x18] sm:$0xff]
    %s2704 = scalar_lea.vmem %s5, 7
    %v2705 = vld [vmem:[%s2704] sm:$0x1]
    %v2707 = vperm.slane %v2705, 0
    %2709 = vmatpush.msra.mxu0 0.0
    %2710 = vmatpush.msra.mxu0 0.0
    %2711 = vmatpush.msra.mxu0 0.0
    %2712 = vmatpush.msra.mxu0 0.0
    %2713 = vmatpush.msra.mxu0 0.0
    %2714 = vmatpush.msra.mxu0 0.0
    %2715 = vmatpush.msra.mxu0 0.0
    %2716 = vmatpush.msra.mxu0 0.0
    %2717 = vmatpush.msra.mxu0 0.0
    %2718 = vmatpush.msra.mxu0 0.0
    %2719 = vmatpush.msra.mxu0 0.0
    %2720 = vmatpush.msra.mxu0 0.0
    %2721 = vmatpush.msra.mxu0 %v2703
    %2722 = vmatpush.msra.mxu0 %v2702
    %2723 = vmatpush.msra.mxu0 %v2701
    %2724 = vmatpush.msra.mxu0 %v2700
    %2725 = vmatmul.f32.gmra.mxu0 %v151
    %v2726 = vpop.f32.mrf.mxu0
    %v2727 = vadd.f32 %v2707, %v2726
    %2728 = vmatmul.f32.gmra.mxu0 %v154
    %v2729 = vpop.f32.mrf.mxu0
    %v2730 = vadd.f32 %v2707, %v2729
    %2731 = vmatmul.f32.gmra.mxu0 %v157
    %v2732 = vpop.f32.mrf.mxu0
    %v2733 = vadd.f32 %v2707, %v2732
    %2734 = vmatmul.f32.gmra.mxu0 %v160
    %v2735 = vpop.f32.mrf.mxu0
    %v2736 = vadd.f32 %v2707, %v2735
    %2737 = vmatmul.f32.gmra.mxu0 %v163
    %v2738 = vpop.f32.mrf.mxu0
    %v2739 = vadd.f32 %v2707, %v2738
    %2740 = vmatmul.f32.gmra.mxu0 %v166
    %v2741 = vpop.f32.mrf.mxu0
    %v2742 = vadd.f32 %v2707, %v2741
    %2743 = vmatmul.f32.gmra.mxu0 %v169
    %v2744 = vpop.f32.mrf.mxu0
    %v2745 = vadd.f32 %v2707, %v2744
    %2746 = vmatmul.f32.gmra.mxu0 %v172
    %v2747 = vpop.f32.mrf.mxu0
    %v2748 = vadd.f32 %v2707, %v2747
    %2749 = vdwg.mxu0
    %s2750 = scalar_lea.vmem %s4, 352
    %v2751 = vld [vmem:[%s2750] sm:$0xff]
    %v2752 = vld [vmem:[%s2750 + $0x8] sm:$0xff]
    %v2753 = vld [vmem:[%s2750 + $0x10] sm:$0xff]
    %v2754 = vld [vmem:[%s2750 + $0x18] sm:$0xff]
    %s2755 = scalar_lea.vmem %s5, 11
    %v2756 = vld [vmem:[%s2755] sm:$0x1]
    %v2758 = vperm.slane %v2756, 0
    %2760 = vmatpush.msra.mxu0 0.0
    %2761 = vmatpush.msra.mxu0 0.0
    %2762 = vmatpush.msra.mxu0 0.0
    %2763 = vmatpush.msra.mxu0 0.0
    %2764 = vmatpush.msra.mxu0 0.0
    %2765 = vmatpush.msra.mxu0 0.0
    %2766 = vmatpush.msra.mxu0 0.0
    %2767 = vmatpush.msra.mxu0 0.0
    %2768 = vmatpush.msra.mxu0 0.0
    %2769 = vmatpush.msra.mxu0 0.0
    %2770 = vmatpush.msra.mxu0 0.0
    %2771 = vmatpush.msra.mxu0 0.0
    %2772 = vmatpush.msra.mxu0 %v2754
    %2773 = vmatpush.msra.mxu0 %v2753
    %2774 = vmatpush.msra.mxu0 %v2752
    %2775 = vmatpush.msra.mxu0 %v2751
    %2776 = vmatmul.f32.gmra.mxu0 %v151
    %v2777 = vpop.f32.mrf.mxu0
    %v2778 = vadd.f32 %v2758, %v2777
    %2779 = vmatmul.f32.gmra.mxu0 %v154
    %v2780 = vpop.f32.mrf.mxu0
    %v2781 = vadd.f32 %v2758, %v2780
    %2782 = vmatmul.f32.gmra.mxu0 %v157
    %v2783 = vpop.f32.mrf.mxu0
    %v2784 = vadd.f32 %v2758, %v2783
    %2785 = vmatmul.f32.gmra.mxu0 %v160
    %v2786 = vpop.f32.mrf.mxu0
    %v2787 = vadd.f32 %v2758, %v2786
    %2788 = vmatmul.f32.gmra.mxu0 %v163
    %v2789 = vpop.f32.mrf.mxu0
    %v2790 = vadd.f32 %v2758, %v2789
    %2791 = vmatmul.f32.gmra.mxu0 %v166
    %v2792 = vpop.f32.mrf.mxu0
    %v2793 = vadd.f32 %v2758, %v2792
    %2794 = vmatmul.f32.gmra.mxu0 %v169
    %v2795 = vpop.f32.mrf.mxu0
    %v2796 = vadd.f32 %v2758, %v2795
    %2797 = vmatmul.f32.gmra.mxu0 %v172
    %v2798 = vpop.f32.mrf.mxu0
    %v2799 = vadd.f32 %v2758, %v2798
    %2800 = vdwg.mxu0
    %v2802 = vsel %vm317, %v2676, 0
    %v2805 = vsel %vm317, %v2727, 0
    %2807 = vmatpush.xpose.msra.mxu0 0.0
    %2808 = vmatpush.xpose.msra.mxu0 0.0
    %2809 = vmatpush.xpose.msra.mxu0 0.0
    %2810 = vmatpush.xpose.msra.mxu0 0.0
    %2811 = vmatpush.xpose.msra.mxu0 0.0
    %2812 = vmatpush.xpose.msra.mxu0 0.0
    %2813 = vmatpush.xpose.msra.mxu0 0.0
    %2814 = vmatpush.xpose.msra.mxu0 0.0
    %2815 = vmatpush.xpose.msra.mxu0 0.0
    %2816 = vmatpush.xpose.msra.mxu0 0.0
    %2817 = vmatpush.xpose.msra.mxu0 0.0
    %2818 = vmatpush.xpose.msra.mxu0 0.0
    %2819 = vmatpush.xpose.msra.mxu0 0.0
    %2820 = vmatpush.xpose.msra.mxu0 0.0
    %2821 = vmatpush.xpose.msra.mxu0 0.0
    %2822 = vmatpush.xpose.msra.mxu0 %v2805
    %2823 = vmatmul.f32.gmra.mxu0 %v2802
    %v2824 = vpop.f32.mrf.mxu0
    %v2825 = vadd.f32 0.0, %v2824
    %2826 = vdwg.mxu0
    %v2828 = vsel %vm317, %v2679, 0
    %v2831 = vsel %vm317, %v2730, 0
    %2833 = vmatpush.xpose.msra.mxu0 0.0
    %2834 = vmatpush.xpose.msra.mxu0 0.0
    %2835 = vmatpush.xpose.msra.mxu0 0.0
    %2836 = vmatpush.xpose.msra.mxu0 0.0
    %2837 = vmatpush.xpose.msra.mxu0 0.0
    %2838 = vmatpush.xpose.msra.mxu0 0.0
    %2839 = vmatpush.xpose.msra.mxu0 0.0
    %2840 = vmatpush.xpose.msra.mxu0 0.0
    %2841 = vmatpush.xpose.msra.mxu0 0.0
    %2842 = vmatpush.xpose.msra.mxu0 0.0
    %2843 = vmatpush.xpose.msra.mxu0 0.0
    %2844 = vmatpush.xpose.msra.mxu0 0.0
    %2845 = vmatpush.xpose.msra.mxu0 0.0
    %2846 = vmatpush.xpose.msra.mxu0 0.0
    %2847 = vmatpush.xpose.msra.mxu0 0.0
    %2848 = vmatpush.xpose.msra.mxu0 %v2831
    %2849 = vmatmul.f32.gmra.mxu0 %v2828
    %v2850 = vpop.f32.mrf.mxu0
    %v2851 = vadd.f32 0.0, %v2850
    %2852 = vdwg.mxu0
    %v2854 = vsel %vm317, %v2682, 0
    %v2857 = vsel %vm317, %v2733, 0
    %2859 = vmatpush.xpose.msra.mxu0 0.0
    %2860 = vmatpush.xpose.msra.mxu0 0.0
    %2861 = vmatpush.xpose.msra.mxu0 0.0
    %2862 = vmatpush.xpose.msra.mxu0 0.0
    %2863 = vmatpush.xpose.msra.mxu0 0.0
    %2864 = vmatpush.xpose.msra.mxu0 0.0
    %2865 = vmatpush.xpose.msra.mxu0 0.0
    %2866 = vmatpush.xpose.msra.mxu0 0.0
    %2867 = vmatpush.xpose.msra.mxu0 0.0
    %2868 = vmatpush.xpose.msra.mxu0 0.0
    %2869 = vmatpush.xpose.msra.mxu0 0.0
    %2870 = vmatpush.xpose.msra.mxu0 0.0
    %2871 = vmatpush.xpose.msra.mxu0 0.0
    %2872 = vmatpush.xpose.msra.mxu0 0.0
    %2873 = vmatpush.xpose.msra.mxu0 0.0
    %2874 = vmatpush.xpose.msra.mxu0 %v2857
    %2875 = vmatmul.f32.gmra.mxu0 %v2854
    %v2876 = vpop.f32.mrf.mxu0
    %v2877 = vadd.f32 0.0, %v2876
    %2878 = vdwg.mxu0
    %v2880 = vsel %vm317, %v2685, 0
    %v2883 = vsel %vm317, %v2736, 0
    %2885 = vmatpush.xpose.msra.mxu0 0.0
    %2886 = vmatpush.xpose.msra.mxu0 0.0
    %2887 = vmatpush.xpose.msra.mxu0 0.0
    %2888 = vmatpush.xpose.msra.mxu0 0.0
    %2889 = vmatpush.xpose.msra.mxu0 0.0
    %2890 = vmatpush.xpose.msra.mxu0 0.0
    %2891 = vmatpush.xpose.msra.mxu0 0.0
    %2892 = vmatpush.xpose.msra.mxu0 0.0
    %2893 = vmatpush.xpose.msra.mxu0 0.0
    %2894 = vmatpush.xpose.msra.mxu0 0.0
    %2895 = vmatpush.xpose.msra.mxu0 0.0
    %2896 = vmatpush.xpose.msra.mxu0 0.0
    %2897 = vmatpush.xpose.msra.mxu0 0.0
    %2898 = vmatpush.xpose.msra.mxu0 0.0
    %2899 = vmatpush.xpose.msra.mxu0 0.0
    %2900 = vmatpush.xpose.msra.mxu0 %v2883
    %2901 = vmatmul.f32.gmra.mxu0 %v2880
    %v2902 = vpop.f32.mrf.mxu0
    %v2903 = vadd.f32 0.0, %v2902
    %2904 = vdwg.mxu0
    %v2906 = vsel %vm317, %v2688, 0
    %v2909 = vsel %vm317, %v2739, 0
    %2911 = vmatpush.xpose.msra.mxu0 0.0
    %2912 = vmatpush.xpose.msra.mxu0 0.0
    %2913 = vmatpush.xpose.msra.mxu0 0.0
    %2914 = vmatpush.xpose.msra.mxu0 0.0
    %2915 = vmatpush.xpose.msra.mxu0 0.0
    %2916 = vmatpush.xpose.msra.mxu0 0.0
    %2917 = vmatpush.xpose.msra.mxu0 0.0
    %2918 = vmatpush.xpose.msra.mxu0 0.0
    %2919 = vmatpush.xpose.msra.mxu0 0.0
    %2920 = vmatpush.xpose.msra.mxu0 0.0
    %2921 = vmatpush.xpose.msra.mxu0 0.0
    %2922 = vmatpush.xpose.msra.mxu0 0.0
    %2923 = vmatpush.xpose.msra.mxu0 0.0
    %2924 = vmatpush.xpose.msra.mxu0 0.0
    %2925 = vmatpush.xpose.msra.mxu0 0.0
    %2926 = vmatpush.xpose.msra.mxu0 %v2909
    %2927 = vmatmul.f32.gmra.mxu0 %v2906
    %v2928 = vpop.f32.mrf.mxu0
    %v2929 = vadd.f32 0.0, %v2928
    %2930 = vdwg.mxu0
    %v2932 = vsel %vm317, %v2691, 0
    %v2935 = vsel %vm317, %v2742, 0
    %2937 = vmatpush.xpose.msra.mxu0 0.0
    %2938 = vmatpush.xpose.msra.mxu0 0.0
    %2939 = vmatpush.xpose.msra.mxu0 0.0
    %2940 = vmatpush.xpose.msra.mxu0 0.0
    %2941 = vmatpush.xpose.msra.mxu0 0.0
    %2942 = vmatpush.xpose.msra.mxu0 0.0
    %2943 = vmatpush.xpose.msra.mxu0 0.0
    %2944 = vmatpush.xpose.msra.mxu0 0.0
    %2945 = vmatpush.xpose.msra.mxu0 0.0
    %2946 = vmatpush.xpose.msra.mxu0 0.0
    %2947 = vmatpush.xpose.msra.mxu0 0.0
    %2948 = vmatpush.xpose.msra.mxu0 0.0
    %2949 = vmatpush.xpose.msra.mxu0 0.0
    %2950 = vmatpush.xpose.msra.mxu0 0.0
    %2951 = vmatpush.xpose.msra.mxu0 0.0
    %2952 = vmatpush.xpose.msra.mxu0 %v2935
    %2953 = vmatmul.f32.gmra.mxu0 %v2932
    %v2954 = vpop.f32.mrf.mxu0
    %v2955 = vadd.f32 0.0, %v2954
    %2956 = vdwg.mxu0
    %v2958 = vsel %vm317, %v2694, 0
    %v2961 = vsel %vm317, %v2745, 0
    %2963 = vmatpush.xpose.msra.mxu0 0.0
    %2964 = vmatpush.xpose.msra.mxu0 0.0
    %2965 = vmatpush.xpose.msra.mxu0 0.0
    %2966 = vmatpush.xpose.msra.mxu0 0.0
    %2967 = vmatpush.xpose.msra.mxu0 0.0
    %2968 = vmatpush.xpose.msra.mxu0 0.0
    %2969 = vmatpush.xpose.msra.mxu0 0.0
    %2970 = vmatpush.xpose.msra.mxu0 0.0
    %2971 = vmatpush.xpose.msra.mxu0 0.0
    %2972 = vmatpush.xpose.msra.mxu0 0.0
    %2973 = vmatpush.xpose.msra.mxu0 0.0
    %2974 = vmatpush.xpose.msra.mxu0 0.0
    %2975 = vmatpush.xpose.msra.mxu0 0.0
    %2976 = vmatpush.xpose.msra.mxu0 0.0
    %2977 = vmatpush.xpose.msra.mxu0 0.0
    %2978 = vmatpush.xpose.msra.mxu0 %v2961
    %2979 = vmatmul.f32.gmra.mxu0 %v2958
    %v2980 = vpop.f32.mrf.mxu0
    %v2981 = vadd.f32 0.0, %v2980
    %2982 = vdwg.mxu0
    %v2984 = vsel %vm317, %v2697, 0
    %v2987 = vsel %vm317, %v2748, 0
    %2989 = vmatpush.xpose.msra.mxu0 0.0
    %2990 = vmatpush.xpose.msra.mxu0 0.0
    %2991 = vmatpush.xpose.msra.mxu0 0.0
    %2992 = vmatpush.xpose.msra.mxu0 0.0
    %2993 = vmatpush.xpose.msra.mxu0 0.0
    %2994 = vmatpush.xpose.msra.mxu0 0.0
    %2995 = vmatpush.xpose.msra.mxu0 0.0
    %2996 = vmatpush.xpose.msra.mxu0 0.0
    %2997 = vmatpush.xpose.msra.mxu0 0.0
    %2998 = vmatpush.xpose.msra.mxu0 0.0
    %2999 = vmatpush.xpose.msra.mxu0 0.0
    %3000 = vmatpush.xpose.msra.mxu0 0.0
    %3001 = vmatpush.xpose.msra.mxu0 0.0
    %3002 = vmatpush.xpose.msra.mxu0 0.0
    %3003 = vmatpush.xpose.msra.mxu0 0.0
    %3004 = vmatpush.xpose.msra.mxu0 %v2987
    %3005 = vmatmul.f32.gmra.mxu0 %v2984
    %v3006 = vpop.f32.mrf.mxu0
    %v3007 = vadd.f32 0.0, %v3006
    %3008 = vdwg.mxu0
    %v3009 = vmul.f32 %v2825, 0.35355338
    %v3010 = vmul.f32 %v2851, 0.35355338
    %v3011 = vmul.f32 %v2877, 0.35355338
    %v3012 = vmul.f32 %v2903, 0.35355338
    %v3013 = vmul.f32 %v2929, 0.35355338
    %v3014 = vmul.f32 %v2955, 0.35355338
    %v3015 = vmul.f32 %v2981, 0.35355338
    %v3016 = vmul.f32 %v3007, 0.35355338
    %v3017 = vadd.f32 %v3009, %v534
    %v3018 = vadd.f32 %v3010, %v535
    %v3019 = vadd.f32 %v3011, %v536
    %v3020 = vadd.f32 %v3012, %v537
    %v3021 = vadd.f32 %v3013, %v538
    %v3022 = vadd.f32 %v3014, %v539
    %v3023 = vadd.f32 %v3015, %v540
    %v3024 = vadd.f32 %v3016, %v541
    %v3025 = vsel %vm317, %v3017, -inf
    %3026 = vmax.xlane.f32.xlu0 %v3025
    %v3027 = vpop.xlane.xlu0 %3026
    %v3028 = vsel %vm317, %v3018, -inf
    %3029 = vmax.xlane.f32.xlu0 %v3028
    %v3030 = vpop.xlane.xlu0 %3029
    %v3031 = vsel %vm317, %v3019, -inf
    %3032 = vmax.xlane.f32.xlu0 %v3031
    %v3033 = vpop.xlane.xlu0 %3032
    %v3034 = vsel %vm317, %v3020, -inf
    %3035 = vmax.xlane.f32.xlu0 %v3034
    %v3036 = vpop.xlane.xlu0 %3035
    %v3037 = vsel %vm317, %v3021, -inf
    %3038 = vmax.xlane.f32.xlu0 %v3037
    %v3039 = vpop.xlane.xlu0 %3038
    %v3040 = vsel %vm317, %v3022, -inf
    %3041 = vmax.xlane.f32.xlu0 %v3040
    %v3042 = vpop.xlane.xlu0 %3041
    %v3043 = vsel %vm317, %v3023, -inf
    %3044 = vmax.xlane.f32.xlu0 %v3043
    %v3045 = vpop.xlane.xlu0 %3044
    %v3046 = vsel %vm317, %v3024, -inf
    %3047 = vmax.xlane.f32.xlu0 %v3046
    %v3048 = vpop.xlane.xlu0 %3047
    %v3049 = vsub.f32 %v3017, %v3027
    %v3050 = vsub.f32 %v3018, %v3030
    %v3051 = vsub.f32 %v3019, %v3033
    %v3052 = vsub.f32 %v3020, %v3036
    %v3053 = vsub.f32 %v3021, %v3039
    %v3054 = vsub.f32 %v3022, %v3042
    %v3055 = vsub.f32 %v3023, %v3045
    %v3056 = vsub.f32 %v3024, %v3048
    %v3057 = vmul.f32 %v3049, 1.442695
    %v3058 = vpow.pop %v3057
    %v3059 = vmul.f32 %v3050, 1.442695
    %v3060 = vpow.pop %v3059
    %v3061 = vmul.f32 %v3051, 1.442695
    %v3062 = vpow.pop %v3061
    %v3063 = vmul.f32 %v3052, 1.442695
    %v3064 = vpow.pop %v3063
    %v3065 = vmul.f32 %v3053, 1.442695
    %v3066 = vpow.pop %v3065
    %v3067 = vmul.f32 %v3054, 1.442695
    %v3068 = vpow.pop %v3067
    %v3069 = vmul.f32 %v3055, 1.442695
    %v3070 = vpow.pop %v3069
    %v3071 = vmul.f32 %v3056, 1.442695
    %v3072 = vpow.pop %v3071
    %v3073 = vsel %vm317, %v3058, 0.0
    %3074 = vadd.xlane.f32.xlu0 %v3073
    %v3075 = vpop.xlane.xlu0 %3074
    %v3076 = vsel %vm317, %v3060, 0.0
    %3077 = vadd.xlane.f32.xlu0 %v3076
    %v3078 = vpop.xlane.xlu0 %3077
    %v3079 = vsel %vm317, %v3062, 0.0
    %3080 = vadd.xlane.f32.xlu0 %v3079
    %v3081 = vpop.xlane.xlu0 %3080
    %v3082 = vsel %vm317, %v3064, 0.0
    %3083 = vadd.xlane.f32.xlu0 %v3082
    %v3084 = vpop.xlane.xlu0 %3083
    %v3085 = vsel %vm317, %v3066, 0.0
    %3086 = vadd.xlane.f32.xlu0 %v3085
    %v3087 = vpop.xlane.xlu0 %3086
    %v3088 = vsel %vm317, %v3068, 0.0
    %3089 = vadd.xlane.f32.xlu0 %v3088
    %v3090 = vpop.xlane.xlu0 %3089
    %v3091 = vsel %vm317, %v3070, 0.0
    %3092 = vadd.xlane.f32.xlu0 %v3091
    %v3093 = vpop.xlane.xlu0 %3092
    %v3094 = vsel %vm317, %v3072, 0.0
    %3095 = vadd.xlane.f32.xlu0 %v3094
    %v3096 = vpop.xlane.xlu0 %3095
    %v3097 = vrcp.pop %v3075
    %v3098 = vmul.f32 %v3075, %v3097
    %v3099 = vsub.f32 1.0, %v3098
    %v3100 = vmul.f32 %v3097, %v3099
    %v3101 = vadd.f32 %v3097, %v3100
    %vm3102 = vweird.f32 %v3075
    %vm3103 = vweird.f32 %v3097
    %vm3104 = vmor %vm3102, %vm3103
    %v3105 = vsel %vm3104, %v3097, %v3101
    %v3106 = vand.u32 2147483647, %v3075
    %vm3107 = vcmp.eq.f32.partialorder %v3106, 8.507059e+37
    %v3108 = vand.u32 %v3075, 2147483648
    %v3109 = vor.u32 1.1754944e-38, %v3108
    %v3110 = vsel %vm3107, %v3109, %v3105
    %v3111 = vmul.f32 %v3058, %v3110
    %v3112 = vrcp.pop %v3078
    %v3113 = vmul.f32 %v3078, %v3112
    %v3114 = vsub.f32 1.0, %v3113
    %v3115 = vmul.f32 %v3112, %v3114
    %v3116 = vadd.f32 %v3112, %v3115
    %vm3117 = vweird.f32 %v3078
    %vm3118 = vweird.f32 %v3112
    %vm3119 = vmor %vm3117, %vm3118
    %v3120 = vsel %vm3119, %v3112, %v3116
    %v3121 = vand.u32 2147483647, %v3078
    %vm3122 = vcmp.eq.f32.partialorder %v3121, 8.507059e+37
    %v3123 = vand.u32 %v3078, 2147483648
    %v3124 = vor.u32 1.1754944e-38, %v3123
    %v3125 = vsel %vm3122, %v3124, %v3120
    %v3126 = vmul.f32 %v3060, %v3125
    %v3127 = vrcp.pop %v3081
    %v3128 = vmul.f32 %v3081, %v3127
    %v3129 = vsub.f32 1.0, %v3128
    %v3130 = vmul.f32 %v3127, %v3129
    %v3131 = vadd.f32 %v3127, %v3130
    %vm3132 = vweird.f32 %v3081
    %vm3133 = vweird.f32 %v3127
    %vm3134 = vmor %vm3132, %vm3133
    %v3135 = vsel %vm3134, %v3127, %v3131
    %v3136 = vand.u32 2147483647, %v3081
    %vm3137 = vcmp.eq.f32.partialorder %v3136, 8.507059e+37
    %v3138 = vand.u32 %v3081, 2147483648
    %v3139 = vor.u32 1.1754944e-38, %v3138
    %v3140 = vsel %vm3137, %v3139, %v3135
    %v3141 = vmul.f32 %v3062, %v3140
    %v3142 = vrcp.pop %v3084
    %v3143 = vmul.f32 %v3084, %v3142
    %v3144 = vsub.f32 1.0, %v3143
    %v3145 = vmul.f32 %v3142, %v3144
    %v3146 = vadd.f32 %v3142, %v3145
    %vm3147 = vweird.f32 %v3084
    %vm3148 = vweird.f32 %v3142
    %vm3149 = vmor %vm3147, %vm3148
    %v3150 = vsel %vm3149, %v3142, %v3146
    %v3151 = vand.u32 2147483647, %v3084
    %vm3152 = vcmp.eq.f32.partialorder %v3151, 8.507059e+37
    %v3153 = vand.u32 %v3084, 2147483648
    %v3154 = vor.u32 1.1754944e-38, %v3153
    %v3155 = vsel %vm3152, %v3154, %v3150
    %v3156 = vmul.f32 %v3064, %v3155
    %v3157 = vrcp.pop %v3087
    %v3158 = vmul.f32 %v3087, %v3157
    %v3159 = vsub.f32 1.0, %v3158
    %v3160 = vmul.f32 %v3157, %v3159
    %v3161 = vadd.f32 %v3157, %v3160
    %vm3162 = vweird.f32 %v3087
    %vm3163 = vweird.f32 %v3157
    %vm3164 = vmor %vm3162, %vm3163
    %v3165 = vsel %vm3164, %v3157, %v3161
    %v3166 = vand.u32 2147483647, %v3087
    %vm3167 = vcmp.eq.f32.partialorder %v3166, 8.507059e+37
    %v3168 = vand.u32 %v3087, 2147483648
    %v3169 = vor.u32 1.1754944e-38, %v3168
    %v3170 = vsel %vm3167, %v3169, %v3165
    %v3171 = vmul.f32 %v3066, %v3170
    %v3172 = vrcp.pop %v3090
    %v3173 = vmul.f32 %v3090, %v3172
    %v3174 = vsub.f32 1.0, %v3173
    %v3175 = vmul.f32 %v3172, %v3174
    %v3176 = vadd.f32 %v3172, %v3175
    %vm3177 = vweird.f32 %v3090
    %vm3178 = vweird.f32 %v3172
    %vm3179 = vmor %vm3177, %vm3178
    %v3180 = vsel %vm3179, %v3172, %v3176
    %v3181 = vand.u32 2147483647, %v3090
    %vm3182 = vcmp.eq.f32.partialorder %v3181, 8.507059e+37
    %v3183 = vand.u32 %v3090, 2147483648
    %v3184 = vor.u32 1.1754944e-38, %v3183
    %v3185 = vsel %vm3182, %v3184, %v3180
    %v3186 = vmul.f32 %v3068, %v3185
    %v3187 = vrcp.pop %v3093
    %v3188 = vmul.f32 %v3093, %v3187
    %v3189 = vsub.f32 1.0, %v3188
    %v3190 = vmul.f32 %v3187, %v3189
    %v3191 = vadd.f32 %v3187, %v3190
    %vm3192 = vweird.f32 %v3093
    %vm3193 = vweird.f32 %v3187
    %vm3194 = vmor %vm3192, %vm3193
    %v3195 = vsel %vm3194, %v3187, %v3191
    %v3196 = vand.u32 2147483647, %v3093
    %vm3197 = vcmp.eq.f32.partialorder %v3196, 8.507059e+37
    %v3198 = vand.u32 %v3093, 2147483648
    %v3199 = vor.u32 1.1754944e-38, %v3198
    %v3200 = vsel %vm3197, %v3199, %v3195
    %v3201 = vmul.f32 %v3070, %v3200
    %v3202 = vrcp.pop %v3096
    %v3203 = vmul.f32 %v3096, %v3202
    %v3204 = vsub.f32 1.0, %v3203
    %v3205 = vmul.f32 %v3202, %v3204
    %v3206 = vadd.f32 %v3202, %v3205
    %vm3207 = vweird.f32 %v3096
    %vm3208 = vweird.f32 %v3202
    %vm3209 = vmor %vm3207, %vm3208
    %v3210 = vsel %vm3209, %v3202, %v3206
    %v3211 = vand.u32 2147483647, %v3096
    %vm3212 = vcmp.eq.f32.partialorder %v3211, 8.507059e+37
    %v3213 = vand.u32 %v3096, 2147483648
    %v3214 = vor.u32 1.1754944e-38, %v3213
    %v3215 = vsel %vm3212, %v3214, %v3210
    %v3216 = vmul.f32 %v3072, %v3215
    %v3218 = vsel %vm317, %v3111, 0
    %3220 = vmatpush.msra.mxu0 0.0
    %3221 = vmatpush.msra.mxu0 0.0
    %3222 = vmatpush.msra.mxu0 0.0
    %3223 = vmatpush.msra.mxu0 0.0
    %3224 = vmatpush.msra.mxu0 0.0
    %3225 = vmatpush.msra.mxu0 0.0
    %3226 = vmatpush.msra.mxu0 0.0
    %3227 = vmatpush.msra.mxu0 0.0
    %3228 = vmatpush.msra.mxu0 0.0
    %3229 = vmatpush.msra.mxu0 0.0
    %3230 = vmatpush.msra.mxu0 0.0
    %3231 = vmatpush.msra.mxu0 0.0
    %3232 = vmatpush.msra.mxu0 0.0
    %3233 = vmatpush.msra.mxu0 0.0
    %3234 = vmatpush.msra.mxu0 0.0
    %3235 = vmatpush.msra.mxu0 %v2778
    %3236 = vmatmul.f32.gmra.mxu0 %v3218
    %v3237 = vpop.f32.mrf.mxu0
    %v3238 = vadd.f32 0.0, %v3237
    %3239 = vdwg.mxu0
    %v3241 = vsel %vm317, %v3126, 0
    %3243 = vmatpush.msra.mxu0 0.0
    %3244 = vmatpush.msra.mxu0 0.0
    %3245 = vmatpush.msra.mxu0 0.0
    %3246 = vmatpush.msra.mxu0 0.0
    %3247 = vmatpush.msra.mxu0 0.0
    %3248 = vmatpush.msra.mxu0 0.0
    %3249 = vmatpush.msra.mxu0 0.0
    %3250 = vmatpush.msra.mxu0 0.0
    %3251 = vmatpush.msra.mxu0 0.0
    %3252 = vmatpush.msra.mxu0 0.0
    %3253 = vmatpush.msra.mxu0 0.0
    %3254 = vmatpush.msra.mxu0 0.0
    %3255 = vmatpush.msra.mxu0 0.0
    %3256 = vmatpush.msra.mxu0 0.0
    %3257 = vmatpush.msra.mxu0 0.0
    %3258 = vmatpush.msra.mxu0 %v2781
    %3259 = vmatmul.f32.gmra.mxu0 %v3241
    %v3260 = vpop.f32.mrf.mxu0
    %v3261 = vadd.f32 0.0, %v3260
    %3262 = vdwg.mxu0
    %v3264 = vsel %vm317, %v3141, 0
    %3266 = vmatpush.msra.mxu0 0.0
    %3267 = vmatpush.msra.mxu0 0.0
    %3268 = vmatpush.msra.mxu0 0.0
    %3269 = vmatpush.msra.mxu0 0.0
    %3270 = vmatpush.msra.mxu0 0.0
    %3271 = vmatpush.msra.mxu0 0.0
    %3272 = vmatpush.msra.mxu0 0.0
    %3273 = vmatpush.msra.mxu0 0.0
    %3274 = vmatpush.msra.mxu0 0.0
    %3275 = vmatpush.msra.mxu0 0.0
    %3276 = vmatpush.msra.mxu0 0.0
    %3277 = vmatpush.msra.mxu0 0.0
    %3278 = vmatpush.msra.mxu0 0.0
    %3279 = vmatpush.msra.mxu0 0.0
    %3280 = vmatpush.msra.mxu0 0.0
    %3281 = vmatpush.msra.mxu0 %v2784
    %3282 = vmatmul.f32.gmra.mxu0 %v3264
    %v3283 = vpop.f32.mrf.mxu0
    %v3284 = vadd.f32 0.0, %v3283
    %3285 = vdwg.mxu0
    %v3287 = vsel %vm317, %v3156, 0
    %3289 = vmatpush.msra.mxu0 0.0
    %3290 = vmatpush.msra.mxu0 0.0
    %3291 = vmatpush.msra.mxu0 0.0
    %3292 = vmatpush.msra.mxu0 0.0
    %3293 = vmatpush.msra.mxu0 0.0
    %3294 = vmatpush.msra.mxu0 0.0
    %3295 = vmatpush.msra.mxu0 0.0
    %3296 = vmatpush.msra.mxu0 0.0
    %3297 = vmatpush.msra.mxu0 0.0
    %3298 = vmatpush.msra.mxu0 0.0
    %3299 = vmatpush.msra.mxu0 0.0
    %3300 = vmatpush.msra.mxu0 0.0
    %3301 = vmatpush.msra.mxu0 0.0
    %3302 = vmatpush.msra.mxu0 0.0
    %3303 = vmatpush.msra.mxu0 0.0
    %3304 = vmatpush.msra.mxu0 %v2787
    %3305 = vmatmul.f32.gmra.mxu0 %v3287
    %v3306 = vpop.f32.mrf.mxu0
    %v3307 = vadd.f32 0.0, %v3306
    %3308 = vdwg.mxu0
    %v3310 = vsel %vm317, %v3171, 0
    %3312 = vmatpush.msra.mxu0 0.0
    %3313 = vmatpush.msra.mxu0 0.0
    %3314 = vmatpush.msra.mxu0 0.0
    %3315 = vmatpush.msra.mxu0 0.0
    %3316 = vmatpush.msra.mxu0 0.0
    %3317 = vmatpush.msra.mxu0 0.0
    %3318 = vmatpush.msra.mxu0 0.0
    %3319 = vmatpush.msra.mxu0 0.0
    %3320 = vmatpush.msra.mxu0 0.0
    %3321 = vmatpush.msra.mxu0 0.0
    %3322 = vmatpush.msra.mxu0 0.0
    %3323 = vmatpush.msra.mxu0 0.0
    %3324 = vmatpush.msra.mxu0 0.0
    %3325 = vmatpush.msra.mxu0 0.0
    %3326 = vmatpush.msra.mxu0 0.0
    %3327 = vmatpush.msra.mxu0 %v2790
    %3328 = vmatmul.f32.gmra.mxu0 %v3310
    %v3329 = vpop.f32.mrf.mxu0
    %v3330 = vadd.f32 0.0, %v3329
    %3331 = vdwg.mxu0
    %v3333 = vsel %vm317, %v3186, 0
    %3335 = vmatpush.msra.mxu0 0.0
    %3336 = vmatpush.msra.mxu0 0.0
    %3337 = vmatpush.msra.mxu0 0.0
    %3338 = vmatpush.msra.mxu0 0.0
    %3339 = vmatpush.msra.mxu0 0.0
    %3340 = vmatpush.msra.mxu0 0.0
    %3341 = vmatpush.msra.mxu0 0.0
    %3342 = vmatpush.msra.mxu0 0.0
    %3343 = vmatpush.msra.mxu0 0.0
    %3344 = vmatpush.msra.mxu0 0.0
    %3345 = vmatpush.msra.mxu0 0.0
    %3346 = vmatpush.msra.mxu0 0.0
    %3347 = vmatpush.msra.mxu0 0.0
    %3348 = vmatpush.msra.mxu0 0.0
    %3349 = vmatpush.msra.mxu0 0.0
    %3350 = vmatpush.msra.mxu0 %v2793
    %3351 = vmatmul.f32.gmra.mxu0 %v3333
    %v3352 = vpop.f32.mrf.mxu0
    %v3353 = vadd.f32 0.0, %v3352
    %3354 = vdwg.mxu0
    %v3356 = vsel %vm317, %v3201, 0
    %3358 = vmatpush.msra.mxu0 0.0
    %3359 = vmatpush.msra.mxu0 0.0
    %3360 = vmatpush.msra.mxu0 0.0
    %3361 = vmatpush.msra.mxu0 0.0
    %3362 = vmatpush.msra.mxu0 0.0
    %3363 = vmatpush.msra.mxu0 0.0
    %3364 = vmatpush.msra.mxu0 0.0
    %3365 = vmatpush.msra.mxu0 0.0
    %3366 = vmatpush.msra.mxu0 0.0
    %3367 = vmatpush.msra.mxu0 0.0
    %3368 = vmatpush.msra.mxu0 0.0
    %3369 = vmatpush.msra.mxu0 0.0
    %3370 = vmatpush.msra.mxu0 0.0
    %3371 = vmatpush.msra.mxu0 0.0
    %3372 = vmatpush.msra.mxu0 0.0
    %3373 = vmatpush.msra.mxu0 %v2796
    %3374 = vmatmul.f32.gmra.mxu0 %v3356
    %v3375 = vpop.f32.mrf.mxu0
    %v3376 = vadd.f32 0.0, %v3375
    %3377 = vdwg.mxu0
    %v3379 = vsel %vm317, %v3216, 0
    %3381 = vmatpush.msra.mxu0 0.0
    %3382 = vmatpush.msra.mxu0 0.0
    %3383 = vmatpush.msra.mxu0 0.0
    %3384 = vmatpush.msra.mxu0 0.0
    %3385 = vmatpush.msra.mxu0 0.0
    %3386 = vmatpush.msra.mxu0 0.0
    %3387 = vmatpush.msra.mxu0 0.0
    %3388 = vmatpush.msra.mxu0 0.0
    %3389 = vmatpush.msra.mxu0 0.0
    %3390 = vmatpush.msra.mxu0 0.0
    %3391 = vmatpush.msra.mxu0 0.0
    %3392 = vmatpush.msra.mxu0 0.0
    %3393 = vmatpush.msra.mxu0 0.0
    %3394 = vmatpush.msra.mxu0 0.0
    %3395 = vmatpush.msra.mxu0 0.0
    %3396 = vmatpush.msra.mxu0 %v2799
    %3397 = vmatmul.f32.gmra.mxu0 %v3379
    %v3398 = vpop.f32.mrf.mxu0
    %v3399 = vadd.f32 0.0, %v3398
    %3400 = vdwg.mxu0
    %s3401 = scalar_lea.vmem %s6, 24
    %v3402 = vld [vmem:[%s3401] sm:$0xff]
    %v3404 = vsel %vm317, %v3238, 0
    %v3407 = vsel %vm317, %v3261, 0
    %v3410 = vsel %vm317, %v3284, 0
    %v3413 = vsel %vm317, %v3307, 0
    %v3416 = vsel %vm317, %v3330, 0
    %v3419 = vsel %vm317, %v3353, 0
    %v3422 = vsel %vm317, %v3376, 0
    %v3425 = vsel %vm317, %v3399, 0
    %3427 = vmatpush.msra.mxu0 0.0
    %3428 = vmatpush.msra.mxu0 0.0
    %3429 = vmatpush.msra.mxu0 0.0
    %3430 = vmatpush.msra.mxu0 0.0
    %3431 = vmatpush.msra.mxu0 0.0
    %3432 = vmatpush.msra.mxu0 0.0
    %3433 = vmatpush.msra.mxu0 0.0
    %3434 = vmatpush.msra.mxu0 0.0
    %3435 = vmatpush.msra.mxu0 0.0
    %3436 = vmatpush.msra.mxu0 0.0
    %3437 = vmatpush.msra.mxu0 0.0
    %3438 = vmatpush.msra.mxu0 0.0
    %3439 = vmatpush.msra.mxu0 0.0
    %3440 = vmatpush.msra.mxu0 0.0
    %3441 = vmatpush.msra.mxu0 0.0
    %3442 = vmatpush.msra.mxu0 %v3402
    %3443 = vmatmul.f32.gmra.mxu0 %v3404
    %v3444 = vpop.f32.mrf.mxu0
    %v3445 = vadd.f32 0.0, %v3444
    %3446 = vmatmul.f32.gmra.mxu0 %v3407
    %v3447 = vpop.f32.mrf.mxu0
    %v3448 = vadd.f32 0.0, %v3447
    %3449 = vmatmul.f32.gmra.mxu0 %v3410
    %v3450 = vpop.f32.mrf.mxu0
    %v3451 = vadd.f32 0.0, %v3450
    %3452 = vmatmul.f32.gmra.mxu0 %v3413
    %v3453 = vpop.f32.mrf.mxu0
    %v3454 = vadd.f32 0.0, %v3453
    %3455 = vmatmul.f32.gmra.mxu0 %v3416
    %v3456 = vpop.f32.mrf.mxu0
    %v3457 = vadd.f32 0.0, %v3456
    %3458 = vmatmul.f32.gmra.mxu0 %v3419
    %v3459 = vpop.f32.mrf.mxu0
    %v3460 = vadd.f32 0.0, %v3459
    %3461 = vmatmul.f32.gmra.mxu0 %v3422
    %v3462 = vpop.f32.mrf.mxu0
    %v3463 = vadd.f32 0.0, %v3462
    %3464 = vmatmul.f32.gmra.mxu0 %v3425
    %v3465 = vpop.f32.mrf.mxu0
    %v3466 = vadd.f32 0.0, %v3465
    %3467 = vdwg.mxu0
    %v3468 = vadd.f32 %v2640, %v3445
    %v3469 = vadd.f32 %v2641, %v3448
    %v3470 = vadd.f32 %v2642, %v3451
    %v3471 = vadd.f32 %v2643, %v3454
    %v3472 = vadd.f32 %v2644, %v3457
    %v3473 = vadd.f32 %v2645, %v3460
    %v3474 = vadd.f32 %v2646, %v3463
    %v3475 = vadd.f32 %v2647, %v3466
    %v3476 = vld [vmem:[%s7] sm:$0x1]
    %v3478 = vperm.slane %v3476, 0
    %v3480 = vadd.f32 %v3468, %v3478
    %v3481 = vadd.f32 %v3469, %v3478
    %v3482 = vadd.f32 %v3470, %v3478
    %v3483 = vadd.f32 %v3471, %v3478
    %v3484 = vadd.f32 %v3472, %v3478
    %v3485 = vadd.f32 %v3473, %v3478
    %v3486 = vadd.f32 %v3474, %v3478
    %v3487 = vadd.f32 %v3475, %v3478
    %v3488 = vadd.f32 %v109, %v3480
    %v3489 = vadd.f32 %v112, %v3481
    %v3490 = vadd.f32 %v115, %v3482
    %v3491 = vadd.f32 %v118, %v3483
    %v3492 = vadd.f32 %v121, %v3484
    %v3493 = vadd.f32 %v124, %v3485
    %v3494 = vadd.f32 %v127, %v3486
    %v3495 = vadd.f32 %v130, %v3487
    %v3496 = vld [vmem:[%s8] sm:$0x1]
    %s3497 = scalar_lea.vmem %s8, 1
    %v3498 = vld [vmem:[%s3497] sm:$0x1]
    %v3499 = vsel %vm149, %v3488, 0.0
    %3500 = vadd.xlane.f32.xlu0 %v3499
    %v3501 = vpop.xlane.xlu0 %3500
    %v3502 = vsel %vm149, %v3489, 0.0
    %3503 = vadd.xlane.f32.xlu0 %v3502
    %v3504 = vpop.xlane.xlu0 %3503
    %v3505 = vsel %vm149, %v3490, 0.0
    %3506 = vadd.xlane.f32.xlu0 %v3505
    %v3507 = vpop.xlane.xlu0 %3506
    %v3508 = vsel %vm149, %v3491, 0.0
    %3509 = vadd.xlane.f32.xlu0 %v3508
    %v3510 = vpop.xlane.xlu0 %3509
    %v3511 = vsel %vm149, %v3492, 0.0
    %3512 = vadd.xlane.f32.xlu0 %v3511
    %v3513 = vpop.xlane.xlu0 %3512
    %v3514 = vsel %vm149, %v3493, 0.0
    %3515 = vadd.xlane.f32.xlu0 %v3514
    %v3516 = vpop.xlane.xlu0 %3515
    %v3517 = vsel %vm149, %v3494, 0.0
    %3518 = vadd.xlane.f32.xlu0 %v3517
    %v3519 = vpop.xlane.xlu0 %3518
    %v3520 = vsel %vm149, %v3495, 0.0
    %3521 = vadd.xlane.f32.xlu0 %v3520
    %v3522 = vpop.xlane.xlu0 %3521
    %v3523 = vrcp.pop 32.0
    %v3524 = vmul.f32 32.0, %v3523
    %v3525 = vsub.f32 1.0, %v3524
    %v3526 = vmul.f32 %v3523, %v3525
    %v3527 = vadd.f32 %v3523, %v3526
    %vm3528 = vweird.f32 %v3523
    %v3529 = vsel %vm3528, %v3523, %v3527
    %v3530 = vmul.f32 %v3501, %v3529
    %v3531 = vmul.f32 %v3504, %v3529
    %v3532 = vmul.f32 %v3507, %v3529
    %v3533 = vmul.f32 %v3510, %v3529
    %v3534 = vmul.f32 %v3513, %v3529
    %v3535 = vmul.f32 %v3516, %v3529
    %v3536 = vmul.f32 %v3519, %v3529
    %v3537 = vmul.f32 %v3522, %v3529
    %v3538 = vsub.f32 %v3488, %v3530
    %v3539 = vsub.f32 %v3489, %v3531
    %v3540 = vsub.f32 %v3490, %v3532
    %v3541 = vsub.f32 %v3491, %v3533
    %v3542 = vsub.f32 %v3492, %v3534
    %v3543 = vsub.f32 %v3493, %v3535
    %v3544 = vsub.f32 %v3494, %v3536
    %v3545 = vsub.f32 %v3495, %v3537
    %v3546 = vmul.f32 %v3538, %v3538
    %v3547 = vmul.f32 %v3539, %v3539
    %v3548 = vmul.f32 %v3540, %v3540
    %v3549 = vmul.f32 %v3541, %v3541
    %v3550 = vmul.f32 %v3542, %v3542
    %v3551 = vmul.f32 %v3543, %v3543
    %v3552 = vmul.f32 %v3544, %v3544
    %v3553 = vmul.f32 %v3545, %v3545
    %v3554 = vsel %vm149, %v3546, 0.0
    %3555 = vadd.xlane.f32.xlu0 %v3554
    %v3556 = vpop.xlane.xlu0 %3555
    %v3557 = vsel %vm149, %v3547, 0.0
    %3558 = vadd.xlane.f32.xlu0 %v3557
    %v3559 = vpop.xlane.xlu0 %3558
    %v3560 = vsel %vm149, %v3548, 0.0
    %3561 = vadd.xlane.f32.xlu0 %v3560
    %v3562 = vpop.xlane.xlu0 %3561
    %v3563 = vsel %vm149, %v3549, 0.0
    %3564 = vadd.xlane.f32.xlu0 %v3563
    %v3565 = vpop.xlane.xlu0 %3564
    %v3566 = vsel %vm149, %v3550, 0.0
    %3567 = vadd.xlane.f32.xlu0 %v3566
    %v3568 = vpop.xlane.xlu0 %3567
    %v3569 = vsel %vm149, %v3551, 0.0
    %3570 = vadd.xlane.f32.xlu0 %v3569
    %v3571 = vpop.xlane.xlu0 %3570
    %v3572 = vsel %vm149, %v3552, 0.0
    %3573 = vadd.xlane.f32.xlu0 %v3572
    %v3574 = vpop.xlane.xlu0 %3573
    %v3575 = vsel %vm149, %v3553, 0.0
    %3576 = vadd.xlane.f32.xlu0 %v3575
    %v3577 = vpop.xlane.xlu0 %3576
    %v3578 = vmul.f32 %v3556, %v3529
    %v3579 = vmul.f32 %v3559, %v3529
    %v3580 = vmul.f32 %v3562, %v3529
    %v3581 = vmul.f32 %v3565, %v3529
    %v3582 = vmul.f32 %v3568, %v3529
    %v3583 = vmul.f32 %v3571, %v3529
    %v3584 = vmul.f32 %v3574, %v3529
    %v3585 = vmul.f32 %v3577, %v3529
    %v3586 = vadd.f32 %v3578, 1e-05
    %v3587 = vadd.f32 %v3579, 1e-05
    %v3588 = vadd.f32 %v3580, 1e-05
    %v3589 = vadd.f32 %v3581, 1e-05
    %v3590 = vadd.f32 %v3582, 1e-05
    %v3591 = vadd.f32 %v3583, 1e-05
    %v3592 = vadd.f32 %v3584, 1e-05
    %v3593 = vadd.f32 %v3585, 1e-05
    %v3594 = vrsqrt.pop %v3586
    %v3595 = vmul.f32 %v3594, %v3586
    %v3596 = vmul.f32 %v3595, %v3594
    %v3597 = vmul.f32 0.5, %v3596
    %v3598 = vsub.f32 1.5, %v3597
    %v3599 = vmul.f32 %v3594, %v3598
    %vm3600 = vweird.f32 %v3586
    %vm3601 = vweird.f32 %v3594
    %vm3602 = vmor %vm3600, %vm3601
    %v3603 = vsel %vm3602, %v3594, %v3599
    %v3604 = vrsqrt.pop %v3587
    %v3605 = vmul.f32 %v3604, %v3587
    %v3606 = vmul.f32 %v3605, %v3604
    %v3607 = vmul.f32 0.5, %v3606
    %v3608 = vsub.f32 1.5, %v3607
    %v3609 = vmul.f32 %v3604, %v3608
    %vm3610 = vweird.f32 %v3587
    %vm3611 = vweird.f32 %v3604
    %vm3612 = vmor %vm3610, %vm3611
    %v3613 = vsel %vm3612, %v3604, %v3609
    %v3614 = vrsqrt.pop %v3588
    %v3615 = vmul.f32 %v3614, %v3588
    %v3616 = vmul.f32 %v3615, %v3614
    %v3617 = vmul.f32 0.5, %v3616
    %v3618 = vsub.f32 1.5, %v3617
    %v3619 = vmul.f32 %v3614, %v3618
    %vm3620 = vweird.f32 %v3588
    %vm3621 = vweird.f32 %v3614
    %vm3622 = vmor %vm3620, %vm3621
    %v3623 = vsel %vm3622, %v3614, %v3619
    %v3624 = vrsqrt.pop %v3589
    %v3625 = vmul.f32 %v3624, %v3589
    %v3626 = vmul.f32 %v3625, %v3624
    %v3627 = vmul.f32 0.5, %v3626
    %v3628 = vsub.f32 1.5, %v3627
    %v3629 = vmul.f32 %v3624, %v3628
    %vm3630 = vweird.f32 %v3589
    %vm3631 = vweird.f32 %v3624
    %vm3632 = vmor %vm3630, %vm3631
    %v3633 = vsel %vm3632, %v3624, %v3629
    %v3634 = vrsqrt.pop %v3590
    %v3635 = vmul.f32 %v3634, %v3590
    %v3636 = vmul.f32 %v3635, %v3634
    %v3637 = vmul.f32 0.5, %v3636
    %v3638 = vsub.f32 1.5, %v3637
    %v3639 = vmul.f32 %v3634, %v3638
    %vm3640 = vweird.f32 %v3590
    %vm3641 = vweird.f32 %v3634
    %vm3642 = vmor %vm3640, %vm3641
    %v3643 = vsel %vm3642, %v3634, %v3639
    %v3644 = vrsqrt.pop %v3591
    %v3645 = vmul.f32 %v3644, %v3591
    %v3646 = vmul.f32 %v3645, %v3644
    %v3647 = vmul.f32 0.5, %v3646
    %v3648 = vsub.f32 1.5, %v3647
    %v3649 = vmul.f32 %v3644, %v3648
    %vm3650 = vweird.f32 %v3591
    %vm3651 = vweird.f32 %v3644
    %vm3652 = vmor %vm3650, %vm3651
    %v3653 = vsel %vm3652, %v3644, %v3649
    %v3654 = vrsqrt.pop %v3592
    %v3655 = vmul.f32 %v3654, %v3592
    %v3656 = vmul.f32 %v3655, %v3654
    %v3657 = vmul.f32 0.5, %v3656
    %v3658 = vsub.f32 1.5, %v3657
    %v3659 = vmul.f32 %v3654, %v3658
    %vm3660 = vweird.f32 %v3592
    %vm3661 = vweird.f32 %v3654
    %vm3662 = vmor %vm3660, %vm3661
    %v3663 = vsel %vm3662, %v3654, %v3659
    %v3664 = vrsqrt.pop %v3593
    %v3665 = vmul.f32 %v3664, %v3593
    %v3666 = vmul.f32 %v3665, %v3664
    %v3667 = vmul.f32 0.5, %v3666
    %v3668 = vsub.f32 1.5, %v3667
    %v3669 = vmul.f32 %v3664, %v3668
    %vm3670 = vweird.f32 %v3593
    %vm3671 = vweird.f32 %v3664
    %vm3672 = vmor %vm3670, %vm3671
    %v3673 = vsel %vm3672, %v3664, %v3669
    %v3674 = vmul.f32 %v3538, %v3603
    %v3675 = vmul.f32 %v3539, %v3613
    %v3676 = vmul.f32 %v3540, %v3623
    %v3677 = vmul.f32 %v3541, %v3633
    %v3678 = vmul.f32 %v3542, %v3643
    %v3679 = vmul.f32 %v3543, %v3653
    %v3680 = vmul.f32 %v3544, %v3663
    %v3681 = vmul.f32 %v3545, %v3673
    %v3683 = vperm.slane %v3496, 0
    %v3685 = vmul.f32 %v3674, %v3683
    %v3686 = vmul.f32 %v3675, %v3683
    %v3687 = vmul.f32 %v3676, %v3683
    %v3688 = vmul.f32 %v3677, %v3683
    %v3689 = vmul.f32 %v3678, %v3683
    %v3690 = vmul.f32 %v3679, %v3683
    %v3691 = vmul.f32 %v3680, %v3683
    %v3692 = vmul.f32 %v3681, %v3683
    %v3694 = vperm.slane %v3498, 0
    %v3696 = vadd.f32 %v3685, %v3694
    %v3697 = vadd.f32 %v3686, %v3694
    %v3698 = vadd.f32 %v3687, %v3694
    %v3699 = vadd.f32 %v3688, %v3694
    %v3700 = vadd.f32 %v3689, %v3694
    %v3701 = vadd.f32 %v3690, %v3694
    %v3702 = vadd.f32 %v3691, %v3694
    %v3703 = vadd.f32 %v3692, %v3694
    %v3704 = vld [vmem:[%s9] sm:$0xff]
    %v3705 = vld [vmem:[%s9 + $0x8] sm:$0xff]
    %v3706 = vld [vmem:[%s9 + $0x10] sm:$0xff]
    %v3707 = vld [vmem:[%s9 + $0x18] sm:$0xff]
    %v3708 = vld [vmem:[%s10] sm:$0x1]
    %v3710 = vperm.slane %v3708, 0
    %v3713 = vsel %vm149, %v3696, 0
    %v3716 = vsel %vm149, %v3697, 0
    %v3719 = vsel %vm149, %v3698, 0
    %v3722 = vsel %vm149, %v3699, 0
    %v3725 = vsel %vm149, %v3700, 0
    %v3728 = vsel %vm149, %v3701, 0
    %v3731 = vsel %vm149, %v3702, 0
    %v3734 = vsel %vm149, %v3703, 0
    %3736 = vmatpush.msra.mxu0 0.0
    %3737 = vmatpush.msra.mxu0 0.0
    %3738 = vmatpush.msra.mxu0 0.0
    %3739 = vmatpush.msra.mxu0 0.0
    %3740 = vmatpush.msra.mxu0 0.0
    %3741 = vmatpush.msra.mxu0 0.0
    %3742 = vmatpush.msra.mxu0 0.0
    %3743 = vmatpush.msra.mxu0 0.0
    %3744 = vmatpush.msra.mxu0 0.0
    %3745 = vmatpush.msra.mxu0 0.0
    %3746 = vmatpush.msra.mxu0 0.0
    %3747 = vmatpush.msra.mxu0 0.0
    %3748 = vmatpush.msra.mxu0 %v3707
    %3749 = vmatpush.msra.mxu0 %v3706
    %3750 = vmatpush.msra.mxu0 %v3705
    %3751 = vmatpush.msra.mxu0 %v3704
    %3752 = vmatmul.f32.gmra.mxu0 %v3713
    %v3753 = vpop.f32.mrf.mxu0
    %v3754 = vadd.f32 %v3710, %v3753
    %3755 = vmatmul.f32.gmra.mxu0 %v3716
    %v3756 = vpop.f32.mrf.mxu0
    %v3757 = vadd.f32 %v3710, %v3756
    %3758 = vmatmul.f32.gmra.mxu0 %v3719
    %v3759 = vpop.f32.mrf.mxu0
    %v3760 = vadd.f32 %v3710, %v3759
    %3761 = vmatmul.f32.gmra.mxu0 %v3722
    %v3762 = vpop.f32.mrf.mxu0
    %v3763 = vadd.f32 %v3710, %v3762
    %3764 = vmatmul.f32.gmra.mxu0 %v3725
    %v3765 = vpop.f32.mrf.mxu0
    %v3766 = vadd.f32 %v3710, %v3765
    %3767 = vmatmul.f32.gmra.mxu0 %v3728
    %v3768 = vpop.f32.mrf.mxu0
    %v3769 = vadd.f32 %v3710, %v3768
    %3770 = vmatmul.f32.gmra.mxu0 %v3731
    %v3771 = vpop.f32.mrf.mxu0
    %v3772 = vadd.f32 %v3710, %v3771
    %3773 = vmatmul.f32.gmra.mxu0 %v3734
    %v3774 = vpop.f32.mrf.mxu0
    %v3775 = vadd.f32 %v3710, %v3774
    %3776 = vdwg.mxu0
    %v3777 = vmul.f32 %v3754, 0.5
    %v3778 = vmul.f32 %v3757, 0.5
    %v3779 = vmul.f32 %v3760, 0.5
    %v3780 = vmul.f32 %v3763, 0.5
    %v3781 = vmul.f32 %v3766, 0.5
    %v3782 = vmul.f32 %v3769, 0.5
    %v3783 = vmul.f32 %v3772, 0.5
    %v3784 = vmul.f32 %v3775, 0.5
    %v3785 = vmul.f32 %v3754, 0.044715
    %v3786 = vmul.f32 %v3757, 0.044715
    %v3787 = vmul.f32 %v3760, 0.044715
    %v3788 = vmul.f32 %v3763, 0.044715
    %v3789 = vmul.f32 %v3766, 0.044715
    %v3790 = vmul.f32 %v3769, 0.044715
    %v3791 = vmul.f32 %v3772, 0.044715
    %v3792 = vmul.f32 %v3775, 0.044715
    %v3793 = vmul.f32 %v3785, %v3754
    %v3794 = vmul.f32 %v3786, %v3757
    %v3795 = vmul.f32 %v3787, %v3760
    %v3796 = vmul.f32 %v3788, %v3763
    %v3797 = vmul.f32 %v3789, %v3766
    %v3798 = vmul.f32 %v3790, %v3769
    %v3799 = vmul.f32 %v3791, %v3772
    %v3800 = vmul.f32 %v3792, %v3775
    %v3801 = vmul.f32 %v3793, %v3754
    %v3802 = vmul.f32 %v3794, %v3757
    %v3803 = vmul.f32 %v3795, %v3760
    %v3804 = vmul.f32 %v3796, %v3763
    %v3805 = vmul.f32 %v3797, %v3766
    %v3806 = vmul.f32 %v3798, %v3769
    %v3807 = vmul.f32 %v3799, %v3772
    %v3808 = vmul.f32 %v3800, %v3775
    %v3809 = vadd.f32 %v3754, %v3801
    %v3810 = vadd.f32 %v3757, %v3802
    %v3811 = vadd.f32 %v3760, %v3803
    %v3812 = vadd.f32 %v3763, %v3804
    %v3813 = vadd.f32 %v3766, %v3805
    %v3814 = vadd.f32 %v3769, %v3806
    %v3815 = vadd.f32 %v3772, %v3807
    %v3816 = vadd.f32 %v3775, %v3808
    %v3817 = vmul.f32 %v3809, 0.7978846
    %v3818 = vmul.f32 %v3810, 0.7978846
    %v3819 = vmul.f32 %v3811, 0.7978846
    %v3820 = vmul.f32 %v3812, 0.7978846
    %v3821 = vmul.f32 %v3813, 0.7978846
    %v3822 = vmul.f32 %v3814, 0.7978846
    %v3823 = vmul.f32 %v3815, 0.7978846
    %v3824 = vmul.f32 %v3816, 0.7978846
    %v3825 = vtanh.pop %v3817
    %v3826 = vtanh.pop %v3818
    %v3827 = vtanh.pop %v3819
    %v3828 = vtanh.pop %v3820
    %v3829 = vtanh.pop %v3821
    %v3830 = vtanh.pop %v3822
    %v3831 = vtanh.pop %v3823
    %v3832 = vtanh.pop %v3824
    %v3833 = vadd.f32 %v3825, 1.0
    %v3834 = vadd.f32 %v3826, 1.0
    %v3835 = vadd.f32 %v3827, 1.0
    %v3836 = vadd.f32 %v3828, 1.0
    %v3837 = vadd.f32 %v3829, 1.0
    %v3838 = vadd.f32 %v3830, 1.0
    %v3839 = vadd.f32 %v3831, 1.0
    %v3840 = vadd.f32 %v3832, 1.0
    %v3841 = vmul.f32 %v3777, %v3833
    %v3842 = vmul.f32 %v3778, %v3834
    %v3843 = vmul.f32 %v3779, %v3835
    %v3844 = vmul.f32 %v3780, %v3836
    %v3845 = vmul.f32 %v3781, %v3837
    %v3846 = vmul.f32 %v3782, %v3838
    %v3847 = vmul.f32 %v3783, %v3839
    %v3848 = vmul.f32 %v3784, %v3840
    %v3849 = vld [vmem:[%s11] sm:$0xff]
    %v3850 = vld [vmem:[%s11 + $0x8] sm:$0xff]
    %v3851 = vld [vmem:[%s11 + $0x10] sm:$0xff]
    %v3852 = vld [vmem:[%s11 + $0x18] sm:$0xff]
    %v3853 = vld [vmem:[%s11 + $0x20] sm:$0xff]
    %v3854 = vld [vmem:[%s11 + $0x28] sm:$0xff]
    %v3855 = vld [vmem:[%s11 + $0x30] sm:$0xff]
    %v3856 = vld [vmem:[%s11 + $0x38] sm:$0xff]
    %v3857 = vld [vmem:[%s12] sm:$0x1]
    %v3859 = vperm.slane %v3857, 0
    %vm3861 = vcmask 523264
    %v3863 = vsel %vm3861, %v3841, 0
    %v3866 = vsel %vm3861, %v3842, 0
    %v3869 = vsel %vm3861, %v3843, 0
    %v3872 = vsel %vm3861, %v3844, 0
    %v3875 = vsel %vm3861, %v3845, 0
    %v3878 = vsel %vm3861, %v3846, 0
    %v3881 = vsel %vm3861, %v3847, 0
    %v3884 = vsel %vm3861, %v3848, 0
    %3886 = vmatpush.msra.mxu0 0.0
    %3887 = vmatpush.msra.mxu0 0.0
    %3888 = vmatpush.msra.mxu0 0.0
    %3889 = vmatpush.msra.mxu0 0.0
    %3890 = vmatpush.msra.mxu0 0.0
    %3891 = vmatpush.msra.mxu0 0.0
    %3892 = vmatpush.msra.mxu0 0.0
    %3893 = vmatpush.msra.mxu0 0.0
    %3894 = vmatpush.msra.mxu0 %v3856
    %3895 = vmatpush.msra.mxu0 %v3855
    %3896 = vmatpush.msra.mxu0 %v3854
    %3897 = vmatpush.msra.mxu0 %v3853
    %3898 = vmatpush.msra.mxu0 %v3852
    %3899 = vmatpush.msra.mxu0 %v3851
    %3900 = vmatpush.msra.mxu0 %v3850
    %3901 = vmatpush.msra.mxu0 %v3849
    %3902 = vmatmul.f32.gmra.mxu0 %v3863
    %v3903 = vpop.f32.mrf.mxu0
    %v3904 = vadd.f32 %v3859, %v3903
    %3905 = vmatmul.f32.gmra.mxu0 %v3866
    %v3906 = vpop.f32.mrf.mxu0
    %v3907 = vadd.f32 %v3859, %v3906
    %3908 = vmatmul.f32.gmra.mxu0 %v3869
    %v3909 = vpop.f32.mrf.mxu0
    %v3910 = vadd.f32 %v3859, %v3909
    %3911 = vmatmul.f32.gmra.mxu0 %v3872
    %v3912 = vpop.f32.mrf.mxu0
    %v3913 = vadd.f32 %v3859, %v3912
    %3914 = vmatmul.f32.gmra.mxu0 %v3875
    %v3915 = vpop.f32.mrf.mxu0
    %v3916 = vadd.f32 %v3859, %v3915
    %3917 = vmatmul.f32.gmra.mxu0 %v3878
    %v3918 = vpop.f32.mrf.mxu0
    %v3919 = vadd.f32 %v3859, %v3918
    %3920 = vmatmul.f32.gmra.mxu0 %v3881
    %v3921 = vpop.f32.mrf.mxu0
    %v3922 = vadd.f32 %v3859, %v3921
    %3923 = vmatmul.f32.gmra.mxu0 %v3884
    %v3924 = vpop.f32.mrf.mxu0
    %v3925 = vadd.f32 %v3859, %v3924
    %3926 = vdwg.mxu0
    %v3927 = vadd.f32 %v3696, %v3904
    %v3928 = vadd.f32 %v3697, %v3907
    %v3929 = vadd.f32 %v3698, %v3910
    %v3930 = vadd.f32 %v3699, %v3913
    %v3931 = vadd.f32 %v3700, %v3916
    %v3932 = vadd.f32 %v3701, %v3919
    %v3933 = vadd.f32 %v3702, %v3922
    %v3934 = vadd.f32 %v3703, %v3925
    %s3935 = scalar_lea.vmem %s8, 2
    %v3936 = vld [vmem:[%s3935] sm:$0x1]
    %s3937 = scalar_lea.vmem %s8, 3
    %v3938 = vld [vmem:[%s3937] sm:$0x1]
    %v3939 = vsel %vm149, %v3927, 0.0
    %3940 = vadd.xlane.f32.xlu0 %v3939
    %v3941 = vpop.xlane.xlu0 %3940
    %v3942 = vsel %vm149, %v3928, 0.0
    %3943 = vadd.xlane.f32.xlu0 %v3942
    %v3944 = vpop.xlane.xlu0 %3943
    %v3945 = vsel %vm149, %v3929, 0.0
    %3946 = vadd.xlane.f32.xlu0 %v3945
    %v3947 = vpop.xlane.xlu0 %3946
    %v3948 = vsel %vm149, %v3930, 0.0
    %3949 = vadd.xlane.f32.xlu0 %v3948
    %v3950 = vpop.xlane.xlu0 %3949
    %v3951 = vsel %vm149, %v3931, 0.0
    %3952 = vadd.xlane.f32.xlu0 %v3951
    %v3953 = vpop.xlane.xlu0 %3952
    %v3954 = vsel %vm149, %v3932, 0.0
    %3955 = vadd.xlane.f32.xlu0 %v3954
    %v3956 = vpop.xlane.xlu0 %3955
    %v3957 = vsel %vm149, %v3933, 0.0
    %3958 = vadd.xlane.f32.xlu0 %v3957
    %v3959 = vpop.xlane.xlu0 %3958
    %v3960 = vsel %vm149, %v3934, 0.0
    %3961 = vadd.xlane.f32.xlu0 %v3960
    %v3962 = vpop.xlane.xlu0 %3961
    %v3963 = vmul.f32 %v3941, %v3529
    %v3964 = vmul.f32 %v3944, %v3529
    %v3965 = vmul.f32 %v3947, %v3529
    %v3966 = vmul.f32 %v3950, %v3529
    %v3967 = vmul.f32 %v3953, %v3529
    %v3968 = vmul.f32 %v3956, %v3529
    %v3969 = vmul.f32 %v3959, %v3529
    %v3970 = vmul.f32 %v3962, %v3529
    %v3971 = vsub.f32 %v3927, %v3963
    %v3972 = vsub.f32 %v3928, %v3964
    %v3973 = vsub.f32 %v3929, %v3965
    %v3974 = vsub.f32 %v3930, %v3966
    %v3975 = vsub.f32 %v3931, %v3967
    %v3976 = vsub.f32 %v3932, %v3968
    %v3977 = vsub.f32 %v3933, %v3969
    %v3978 = vsub.f32 %v3934, %v3970
    %v3979 = vmul.f32 %v3971, %v3971
    %v3980 = vmul.f32 %v3972, %v3972
    %v3981 = vmul.f32 %v3973, %v3973
    %v3982 = vmul.f32 %v3974, %v3974
    %v3983 = vmul.f32 %v3975, %v3975
    %v3984 = vmul.f32 %v3976, %v3976
    %v3985 = vmul.f32 %v3977, %v3977
    %v3986 = vmul.f32 %v3978, %v3978
    %v3987 = vsel %vm149, %v3979, 0.0
    %3988 = vadd.xlane.f32.xlu0 %v3987
    %v3989 = vpop.xlane.xlu0 %3988
    %v3990 = vsel %vm149, %v3980, 0.0
    %3991 = vadd.xlane.f32.xlu0 %v3990
    %v3992 = vpop.xlane.xlu0 %3991
    %v3993 = vsel %vm149, %v3981, 0.0
    %3994 = vadd.xlane.f32.xlu0 %v3993
    %v3995 = vpop.xlane.xlu0 %3994
    %v3996 = vsel %vm149, %v3982, 0.0
    %3997 = vadd.xlane.f32.xlu0 %v3996
    %v3998 = vpop.xlane.xlu0 %3997
    %v3999 = vsel %vm149, %v3983, 0.0
    %4000 = vadd.xlane.f32.xlu0 %v3999
    %v4001 = vpop.xlane.xlu0 %4000
    %v4002 = vsel %vm149, %v3984, 0.0
    %4003 = vadd.xlane.f32.xlu0 %v4002
    %v4004 = vpop.xlane.xlu0 %4003
    %v4005 = vsel %vm149, %v3985, 0.0
    %4006 = vadd.xlane.f32.xlu0 %v4005
    %v4007 = vpop.xlane.xlu0 %4006
    %v4008 = vsel %vm149, %v3986, 0.0
    %4009 = vadd.xlane.f32.xlu0 %v4008
    %v4010 = vpop.xlane.xlu0 %4009
    %v4011 = vmul.f32 %v3989, %v3529
    %v4012 = vmul.f32 %v3992, %v3529
    %v4013 = vmul.f32 %v3995, %v3529
    %v4014 = vmul.f32 %v3998, %v3529
    %v4015 = vmul.f32 %v4001, %v3529
    %v4016 = vmul.f32 %v4004, %v3529
    %v4017 = vmul.f32 %v4007, %v3529
    %v4018 = vmul.f32 %v4010, %v3529
    %v4019 = vadd.f32 %v4011, 1e-05
    %v4020 = vadd.f32 %v4012, 1e-05
    %v4021 = vadd.f32 %v4013, 1e-05
    %v4022 = vadd.f32 %v4014, 1e-05
    %v4023 = vadd.f32 %v4015, 1e-05
    %v4024 = vadd.f32 %v4016, 1e-05
    %v4025 = vadd.f32 %v4017, 1e-05
    %v4026 = vadd.f32 %v4018, 1e-05
    %v4027 = vrsqrt.pop %v4019
    %v4028 = vmul.f32 %v4027, %v4019
    %v4029 = vmul.f32 %v4028, %v4027
    %v4030 = vmul.f32 0.5, %v4029
    %v4031 = vsub.f32 1.5, %v4030
    %v4032 = vmul.f32 %v4027, %v4031
    %vm4033 = vweird.f32 %v4019
    %vm4034 = vweird.f32 %v4027
    %vm4035 = vmor %vm4033, %vm4034
    %v4036 = vsel %vm4035, %v4027, %v4032
    %v4037 = vrsqrt.pop %v4020
    %v4038 = vmul.f32 %v4037, %v4020
    %v4039 = vmul.f32 %v4038, %v4037
    %v4040 = vmul.f32 0.5, %v4039
    %v4041 = vsub.f32 1.5, %v4040
    %v4042 = vmul.f32 %v4037, %v4041
    %vm4043 = vweird.f32 %v4020
    %vm4044 = vweird.f32 %v4037
    %vm4045 = vmor %vm4043, %vm4044
    %v4046 = vsel %vm4045, %v4037, %v4042
    %v4047 = vrsqrt.pop %v4021
    %v4048 = vmul.f32 %v4047, %v4021
    %v4049 = vmul.f32 %v4048, %v4047
    %v4050 = vmul.f32 0.5, %v4049
    %v4051 = vsub.f32 1.5, %v4050
    %v4052 = vmul.f32 %v4047, %v4051
    %vm4053 = vweird.f32 %v4021
    %vm4054 = vweird.f32 %v4047
    %vm4055 = vmor %vm4053, %vm4054
    %v4056 = vsel %vm4055, %v4047, %v4052
    %v4057 = vrsqrt.pop %v4022
    %v4058 = vmul.f32 %v4057, %v4022
    %v4059 = vmul.f32 %v4058, %v4057
    %v4060 = vmul.f32 0.5, %v4059
    %v4061 = vsub.f32 1.5, %v4060
    %v4062 = vmul.f32 %v4057, %v4061
    %vm4063 = vweird.f32 %v4022
    %vm4064 = vweird.f32 %v4057
    %vm4065 = vmor %vm4063, %vm4064
    %v4066 = vsel %vm4065, %v4057, %v4062
    %v4067 = vrsqrt.pop %v4023
    %v4068 = vmul.f32 %v4067, %v4023
    %v4069 = vmul.f32 %v4068, %v4067
    %v4070 = vmul.f32 0.5, %v4069
    %v4071 = vsub.f32 1.5, %v4070
    %v4072 = vmul.f32 %v4067, %v4071
    %vm4073 = vweird.f32 %v4023
    %vm4074 = vweird.f32 %v4067
    %vm4075 = vmor %vm4073, %vm4074
    %v4076 = vsel %vm4075, %v4067, %v4072
    %v4077 = vrsqrt.pop %v4024
    %v4078 = vmul.f32 %v4077, %v4024
    %v4079 = vmul.f32 %v4078, %v4077
    %v4080 = vmul.f32 0.5, %v4079
    %v4081 = vsub.f32 1.5, %v4080
    %v4082 = vmul.f32 %v4077, %v4081
    %vm4083 = vweird.f32 %v4024
    %vm4084 = vweird.f32 %v4077
    %vm4085 = vmor %vm4083, %vm4084
    %v4086 = vsel %vm4085, %v4077, %v4082
    %v4087 = vrsqrt.pop %v4025
    %v4088 = vmul.f32 %v4087, %v4025
    %v4089 = vmul.f32 %v4088, %v4087
    %v4090 = vmul.f32 0.5, %v4089
    %v4091 = vsub.f32 1.5, %v4090
    %v4092 = vmul.f32 %v4087, %v4091
    %vm4093 = vweird.f32 %v4025
    %vm4094 = vweird.f32 %v4087
    %vm4095 = vmor %vm4093, %vm4094
    %v4096 = vsel %vm4095, %v4087, %v4092
    %v4097 = vrsqrt.pop %v4026
    %v4098 = vmul.f32 %v4097, %v4026
    %v4099 = vmul.f32 %v4098, %v4097
    %v4100 = vmul.f32 0.5, %v4099
    %v4101 = vsub.f32 1.5, %v4100
    %v4102 = vmul.f32 %v4097, %v4101
    %vm4103 = vweird.f32 %v4026
    %vm4104 = vweird.f32 %v4097
    %vm4105 = vmor %vm4103, %vm4104
    %v4106 = vsel %vm4105, %v4097, %v4102
    %v4107 = vmul.f32 %v3971, %v4036
    %v4108 = vmul.f32 %v3972, %v4046
    %v4109 = vmul.f32 %v3973, %v4056
    %v4110 = vmul.f32 %v3974, %v4066
    %v4111 = vmul.f32 %v3975, %v4076
    %v4112 = vmul.f32 %v3976, %v4086
    %v4113 = vmul.f32 %v3977, %v4096
    %v4114 = vmul.f32 %v3978, %v4106
    %v4116 = vperm.slane %v3936, 0
    %v4118 = vmul.f32 %v4107, %v4116
    %v4119 = vmul.f32 %v4108, %v4116
    %v4120 = vmul.f32 %v4109, %v4116
    %v4121 = vmul.f32 %v4110, %v4116
    %v4122 = vmul.f32 %v4111, %v4116
    %v4123 = vmul.f32 %v4112, %v4116
    %v4124 = vmul.f32 %v4113, %v4116
    %v4125 = vmul.f32 %v4114, %v4116
    %v4127 = vperm.slane %v3938, 0
    %v4129 = vadd.f32 %v4118, %v4127
    %v4130 = vadd.f32 %v4119, %v4127
    %v4131 = vadd.f32 %v4120, %v4127
    %v4132 = vadd.f32 %v4121, %v4127
    %v4133 = vadd.f32 %v4122, %v4127
    %v4134 = vadd.f32 %v4123, %v4127
    %v4135 = vadd.f32 %v4124, %v4127
    %v4136 = vadd.f32 %v4125, %v4127
    %s4137 = scalar_lea.vmem %s4, 384
    %v4138 = vld [vmem:[%s4137] sm:$0xff]
    %v4139 = vld [vmem:[%s4137 + $0x8] sm:$0xff]
    %v4140 = vld [vmem:[%s4137 + $0x10] sm:$0xff]
    %v4141 = vld [vmem:[%s4137 + $0x18] sm:$0xff]
    %s4142 = scalar_lea.vmem %s5, 12
    %v4143 = vld [vmem:[%s4142] sm:$0x1]
    %v4145 = vperm.slane %v4143, 0
    %v4148 = vsel %vm149, %v4129, 0
    %v4151 = vsel %vm149, %v4130, 0
    %v4154 = vsel %vm149, %v4131, 0
    %v4157 = vsel %vm149, %v4132, 0
    %v4160 = vsel %vm149, %v4133, 0
    %v4163 = vsel %vm149, %v4134, 0
    %v4166 = vsel %vm149, %v4135, 0
    %v4169 = vsel %vm149, %v4136, 0
    %4171 = vmatpush.msra.mxu0 0.0
    %4172 = vmatpush.msra.mxu0 0.0
    %4173 = vmatpush.msra.mxu0 0.0
    %4174 = vmatpush.msra.mxu0 0.0
    %4175 = vmatpush.msra.mxu0 0.0
    %4176 = vmatpush.msra.mxu0 0.0
    %4177 = vmatpush.msra.mxu0 0.0
    %4178 = vmatpush.msra.mxu0 0.0
    %4179 = vmatpush.msra.mxu0 0.0
    %4180 = vmatpush.msra.mxu0 0.0
    %4181 = vmatpush.msra.mxu0 0.0
    %4182 = vmatpush.msra.mxu0 0.0
    %4183 = vmatpush.msra.mxu0 %v4141
    %4184 = vmatpush.msra.mxu0 %v4140
    %4185 = vmatpush.msra.mxu0 %v4139
    %4186 = vmatpush.msra.mxu0 %v4138
    %4187 = vmatmul.f32.gmra.mxu0 %v4148
    %v4188 = vpop.f32.mrf.mxu0
    %v4189 = vadd.f32 %v4145, %v4188
    %4190 = vmatmul.f32.gmra.mxu0 %v4151
    %v4191 = vpop.f32.mrf.mxu0
    %v4192 = vadd.f32 %v4145, %v4191
    %4193 = vmatmul.f32.gmra.mxu0 %v4154
    %v4194 = vpop.f32.mrf.mxu0
    %v4195 = vadd.f32 %v4145, %v4194
    %4196 = vmatmul.f32.gmra.mxu0 %v4157
    %v4197 = vpop.f32.mrf.mxu0
    %v4198 = vadd.f32 %v4145, %v4197
    %4199 = vmatmul.f32.gmra.mxu0 %v4160
    %v4200 = vpop.f32.mrf.mxu0
    %v4201 = vadd.f32 %v4145, %v4200
    %4202 = vmatmul.f32.gmra.mxu0 %v4163
    %v4203 = vpop.f32.mrf.mxu0
    %v4204 = vadd.f32 %v4145, %v4203
    %4205 = vmatmul.f32.gmra.mxu0 %v4166
    %v4206 = vpop.f32.mrf.mxu0
    %v4207 = vadd.f32 %v4145, %v4206
    %4208 = vmatmul.f32.gmra.mxu0 %v4169
    %v4209 = vpop.f32.mrf.mxu0
    %v4210 = vadd.f32 %v4145, %v4209
    %4211 = vdwg.mxu0
    %s4212 = scalar_lea.vmem %s4, 512
    %v4213 = vld [vmem:[%s4212] sm:$0xff]
    %v4214 = vld [vmem:[%s4212 + $0x8] sm:$0xff]
    %v4215 = vld [vmem:[%s4212 + $0x10] sm:$0xff]
    %v4216 = vld [vmem:[%s4212 + $0x18] sm:$0xff]
    %s4217 = scalar_lea.vmem %s5, 16
    %v4218 = vld [vmem:[%s4217] sm:$0x1]
    %v4220 = vperm.slane %v4218, 0
    %4222 = vmatpush.msra.mxu0 0.0
    %4223 = vmatpush.msra.mxu0 0.0
    %4224 = vmatpush.msra.mxu0 0.0
    %4225 = vmatpush.msra.mxu0 0.0
    %4226 = vmatpush.msra.mxu0 0.0
    %4227 = vmatpush.msra.mxu0 0.0
    %4228 = vmatpush.msra.mxu0 0.0
    %4229 = vmatpush.msra.mxu0 0.0
    %4230 = vmatpush.msra.mxu0 0.0
    %4231 = vmatpush.msra.mxu0 0.0
    %4232 = vmatpush.msra.mxu0 0.0
    %4233 = vmatpush.msra.mxu0 0.0
    %4234 = vmatpush.msra.mxu0 %v4216
    %4235 = vmatpush.msra.mxu0 %v4215
    %4236 = vmatpush.msra.mxu0 %v4214
    %4237 = vmatpush.msra.mxu0 %v4213
    %4238 = vmatmul.f32.gmra.mxu0 %v4148
    %v4239 = vpop.f32.mrf.mxu0
    %v4240 = vadd.f32 %v4220, %v4239
    %4241 = vmatmul.f32.gmra.mxu0 %v4151
    %v4242 = vpop.f32.mrf.mxu0
    %v4243 = vadd.f32 %v4220, %v4242
    %4244 = vmatmul.f32.gmra.mxu0 %v4154
    %v4245 = vpop.f32.mrf.mxu0
    %v4246 = vadd.f32 %v4220, %v4245
    %4247 = vmatmul.f32.gmra.mxu0 %v4157
    %v4248 = vpop.f32.mrf.mxu0
    %v4249 = vadd.f32 %v4220, %v4248
    %4250 = vmatmul.f32.gmra.mxu0 %v4160
    %v4251 = vpop.f32.mrf.mxu0
    %v4252 = vadd.f32 %v4220, %v4251
    %4253 = vmatmul.f32.gmra.mxu0 %v4163
    %v4254 = vpop.f32.mrf.mxu0
    %v4255 = vadd.f32 %v4220, %v4254
    %4256 = vmatmul.f32.gmra.mxu0 %v4166
    %v4257 = vpop.f32.mrf.mxu0
    %v4258 = vadd.f32 %v4220, %v4257
    %4259 = vmatmul.f32.gmra.mxu0 %v4169
    %v4260 = vpop.f32.mrf.mxu0
    %v4261 = vadd.f32 %v4220, %v4260
    %4262 = vdwg.mxu0
    %s4263 = scalar_lea.vmem %s4, 640
    %v4264 = vld [vmem:[%s4263] sm:$0xff]
    %v4265 = vld [vmem:[%s4263 + $0x8] sm:$0xff]
    %v4266 = vld [vmem:[%s4263 + $0x10] sm:$0xff]
    %v4267 = vld [vmem:[%s4263 + $0x18] sm:$0xff]
    %s4268 = scalar_lea.vmem %s5, 20
    %v4269 = vld [vmem:[%s4268] sm:$0x1]
    %v4271 = vperm.slane %v4269, 0
    %4273 = vmatpush.msra.mxu0 0.0
    %4274 = vmatpush.msra.mxu0 0.0
    %4275 = vmatpush.msra.mxu0 0.0
    %4276 = vmatpush.msra.mxu0 0.0
    %4277 = vmatpush.msra.mxu0 0.0
    %4278 = vmatpush.msra.mxu0 0.0
    %4279 = vmatpush.msra.mxu0 0.0
    %4280 = vmatpush.msra.mxu0 0.0
    %4281 = vmatpush.msra.mxu0 0.0
    %4282 = vmatpush.msra.mxu0 0.0
    %4283 = vmatpush.msra.mxu0 0.0
    %4284 = vmatpush.msra.mxu0 0.0
    %4285 = vmatpush.msra.mxu0 %v4267
    %4286 = vmatpush.msra.mxu0 %v4266
    %4287 = vmatpush.msra.mxu0 %v4265
    %4288 = vmatpush.msra.mxu0 %v4264
    %4289 = vmatmul.f32.gmra.mxu0 %v4148
    %v4290 = vpop.f32.mrf.mxu0
    %v4291 = vadd.f32 %v4271, %v4290
    %4292 = vmatmul.f32.gmra.mxu0 %v4151
    %v4293 = vpop.f32.mrf.mxu0
    %v4294 = vadd.f32 %v4271, %v4293
    %4295 = vmatmul.f32.gmra.mxu0 %v4154
    %v4296 = vpop.f32.mrf.mxu0
    %v4297 = vadd.f32 %v4271, %v4296
    %4298 = vmatmul.f32.gmra.mxu0 %v4157
    %v4299 = vpop.f32.mrf.mxu0
    %v4300 = vadd.f32 %v4271, %v4299
    %4301 = vmatmul.f32.gmra.mxu0 %v4160
    %v4302 = vpop.f32.mrf.mxu0
    %v4303 = vadd.f32 %v4271, %v4302
    %4304 = vmatmul.f32.gmra.mxu0 %v4163
    %v4305 = vpop.f32.mrf.mxu0
    %v4306 = vadd.f32 %v4271, %v4305
    %4307 = vmatmul.f32.gmra.mxu0 %v4166
    %v4308 = vpop.f32.mrf.mxu0
    %v4309 = vadd.f32 %v4271, %v4308
    %4310 = vmatmul.f32.gmra.mxu0 %v4169
    %v4311 = vpop.f32.mrf.mxu0
    %v4312 = vadd.f32 %v4271, %v4311
    %4313 = vdwg.mxu0
    %v4315 = vsel %vm317, %v4189, 0
    %v4318 = vsel %vm317, %v4240, 0
    %4320 = vmatpush.xpose.msra.mxu0 0.0
    %4321 = vmatpush.xpose.msra.mxu0 0.0
    %4322 = vmatpush.xpose.msra.mxu0 0.0
    %4323 = vmatpush.xpose.msra.mxu0 0.0
    %4324 = vmatpush.xpose.msra.mxu0 0.0
    %4325 = vmatpush.xpose.msra.mxu0 0.0
    %4326 = vmatpush.xpose.msra.mxu0 0.0
    %4327 = vmatpush.xpose.msra.mxu0 0.0
    %4328 = vmatpush.xpose.msra.mxu0 0.0
    %4329 = vmatpush.xpose.msra.mxu0 0.0
    %4330 = vmatpush.xpose.msra.mxu0 0.0
    %4331 = vmatpush.xpose.msra.mxu0 0.0
    %4332 = vmatpush.xpose.msra.mxu0 0.0
    %4333 = vmatpush.xpose.msra.mxu0 0.0
    %4334 = vmatpush.xpose.msra.mxu0 0.0
    %4335 = vmatpush.xpose.msra.mxu0 %v4318
    %4336 = vmatmul.f32.gmra.mxu0 %v4315
    %v4337 = vpop.f32.mrf.mxu0
    %v4338 = vadd.f32 0.0, %v4337
    %4339 = vdwg.mxu0
    %v4341 = vsel %vm317, %v4192, 0
    %v4344 = vsel %vm317, %v4243, 0
    %4346 = vmatpush.xpose.msra.mxu0 0.0
    %4347 = vmatpush.xpose.msra.mxu0 0.0
    %4348 = vmatpush.xpose.msra.mxu0 0.0
    %4349 = vmatpush.xpose.msra.mxu0 0.0
    %4350 = vmatpush.xpose.msra.mxu0 0.0
    %4351 = vmatpush.xpose.msra.mxu0 0.0
    %4352 = vmatpush.xpose.msra.mxu0 0.0
    %4353 = vmatpush.xpose.msra.mxu0 0.0
    %4354 = vmatpush.xpose.msra.mxu0 0.0
    %4355 = vmatpush.xpose.msra.mxu0 0.0
    %4356 = vmatpush.xpose.msra.mxu0 0.0
    %4357 = vmatpush.xpose.msra.mxu0 0.0
    %4358 = vmatpush.xpose.msra.mxu0 0.0
    %4359 = vmatpush.xpose.msra.mxu0 0.0
    %4360 = vmatpush.xpose.msra.mxu0 0.0
    %4361 = vmatpush.xpose.msra.mxu0 %v4344
    %4362 = vmatmul.f32.gmra.mxu0 %v4341
    %v4363 = vpop.f32.mrf.mxu0
    %v4364 = vadd.f32 0.0, %v4363
    %4365 = vdwg.mxu0
    %v4367 = vsel %vm317, %v4195, 0
    %v4370 = vsel %vm317, %v4246, 0
    %4372 = vmatpush.xpose.msra.mxu0 0.0
    %4373 = vmatpush.xpose.msra.mxu0 0.0
    %4374 = vmatpush.xpose.msra.mxu0 0.0
    %4375 = vmatpush.xpose.msra.mxu0 0.0
    %4376 = vmatpush.xpose.msra.mxu0 0.0
    %4377 = vmatpush.xpose.msra.mxu0 0.0
    %4378 = vmatpush.xpose.msra.mxu0 0.0
    %4379 = vmatpush.xpose.msra.mxu0 0.0
    %4380 = vmatpush.xpose.msra.mxu0 0.0
    %4381 = vmatpush.xpose.msra.mxu0 0.0
    %4382 = vmatpush.xpose.msra.mxu0 0.0
    %4383 = vmatpush.xpose.msra.mxu0 0.0
    %4384 = vmatpush.xpose.msra.mxu0 0.0
    %4385 = vmatpush.xpose.msra.mxu0 0.0
    %4386 = vmatpush.xpose.msra.mxu0 0.0
    %4387 = vmatpush.xpose.msra.mxu0 %v4370
    %4388 = vmatmul.f32.gmra.mxu0 %v4367
    %v4389 = vpop.f32.mrf.mxu0
    %v4390 = vadd.f32 0.0, %v4389
    %4391 = vdwg.mxu0
    %v4393 = vsel %vm317, %v4198, 0
    %v4396 = vsel %vm317, %v4249, 0
    %4398 = vmatpush.xpose.msra.mxu0 0.0
    %4399 = vmatpush.xpose.msra.mxu0 0.0
    %4400 = vmatpush.xpose.msra.mxu0 0.0
    %4401 = vmatpush.xpose.msra.mxu0 0.0
    %4402 = vmatpush.xpose.msra.mxu0 0.0
    %4403 = vmatpush.xpose.msra.mxu0 0.0
    %4404 = vmatpush.xpose.msra.mxu0 0.0
    %4405 = vmatpush.xpose.msra.mxu0 0.0
    %4406 = vmatpush.xpose.msra.mxu0 0.0
    %4407 = vmatpush.xpose.msra.mxu0 0.0
    %4408 = vmatpush.xpose.msra.mxu0 0.0
    %4409 = vmatpush.xpose.msra.mxu0 0.0
    %4410 = vmatpush.xpose.msra.mxu0 0.0
    %4411 = vmatpush.xpose.msra.mxu0 0.0
    %4412 = vmatpush.xpose.msra.mxu0 0.0
    %4413 = vmatpush.xpose.msra.mxu0 %v4396
    %4414 = vmatmul.f32.gmra.mxu0 %v4393
    %v4415 = vpop.f32.mrf.mxu0
    %v4416 = vadd.f32 0.0, %v4415
    %4417 = vdwg.mxu0
    %v4419 = vsel %vm317, %v4201, 0
    %v4422 = vsel %vm317, %v4252, 0
    %4424 = vmatpush.xpose.msra.mxu0 0.0
    %4425 = vmatpush.xpose.msra.mxu0 0.0
    %4426 = vmatpush.xpose.msra.mxu0 0.0
    %4427 = vmatpush.xpose.msra.mxu0 0.0
    %4428 = vmatpush.xpose.msra.mxu0 0.0
    %4429 = vmatpush.xpose.msra.mxu0 0.0
    %4430 = vmatpush.xpose.msra.mxu0 0.0
    %4431 = vmatpush.xpose.msra.mxu0 0.0
    %4432 = vmatpush.xpose.msra.mxu0 0.0
    %4433 = vmatpush.xpose.msra.mxu0 0.0
    %4434 = vmatpush.xpose.msra.mxu0 0.0
    %4435 = vmatpush.xpose.msra.mxu0 0.0
    %4436 = vmatpush.xpose.msra.mxu0 0.0
    %4437 = vmatpush.xpose.msra.mxu0 0.0
    %4438 = vmatpush.xpose.msra.mxu0 0.0
    %4439 = vmatpush.xpose.msra.mxu0 %v4422
    %4440 = vmatmul.f32.gmra.mxu0 %v4419
    %v4441 = vpop.f32.mrf.mxu0
    %v4442 = vadd.f32 0.0, %v4441
    %4443 = vdwg.mxu0
    %v4445 = vsel %vm317, %v4204, 0
    %v4448 = vsel %vm317, %v4255, 0
    %4450 = vmatpush.xpose.msra.mxu0 0.0
    %4451 = vmatpush.xpose.msra.mxu0 0.0
    %4452 = vmatpush.xpose.msra.mxu0 0.0
    %4453 = vmatpush.xpose.msra.mxu0 0.0
    %4454 = vmatpush.xpose.msra.mxu0 0.0
    %4455 = vmatpush.xpose.msra.mxu0 0.0
    %4456 = vmatpush.xpose.msra.mxu0 0.0
    %4457 = vmatpush.xpose.msra.mxu0 0.0
    %4458 = vmatpush.xpose.msra.mxu0 0.0
    %4459 = vmatpush.xpose.msra.mxu0 0.0
    %4460 = vmatpush.xpose.msra.mxu0 0.0
    %4461 = vmatpush.xpose.msra.mxu0 0.0
    %4462 = vmatpush.xpose.msra.mxu0 0.0
    %4463 = vmatpush.xpose.msra.mxu0 0.0
    %4464 = vmatpush.xpose.msra.mxu0 0.0
    %4465 = vmatpush.xpose.msra.mxu0 %v4448
    %4466 = vmatmul.f32.gmra.mxu0 %v4445
    %v4467 = vpop.f32.mrf.mxu0
    %v4468 = vadd.f32 0.0, %v4467
    %4469 = vdwg.mxu0
    %v4471 = vsel %vm317, %v4207, 0
    %v4474 = vsel %vm317, %v4258, 0
    %4476 = vmatpush.xpose.msra.mxu0 0.0
    %4477 = vmatpush.xpose.msra.mxu0 0.0
    %4478 = vmatpush.xpose.msra.mxu0 0.0
    %4479 = vmatpush.xpose.msra.mxu0 0.0
    %4480 = vmatpush.xpose.msra.mxu0 0.0
    %4481 = vmatpush.xpose.msra.mxu0 0.0
    %4482 = vmatpush.xpose.msra.mxu0 0.0
    %4483 = vmatpush.xpose.msra.mxu0 0.0
    %4484 = vmatpush.xpose.msra.mxu0 0.0
    %4485 = vmatpush.xpose.msra.mxu0 0.0
    %4486 = vmatpush.xpose.msra.mxu0 0.0
    %4487 = vmatpush.xpose.msra.mxu0 0.0
    %4488 = vmatpush.xpose.msra.mxu0 0.0
    %4489 = vmatpush.xpose.msra.mxu0 0.0
    %4490 = vmatpush.xpose.msra.mxu0 0.0
    %4491 = vmatpush.xpose.msra.mxu0 %v4474
    %4492 = vmatmul.f32.gmra.mxu0 %v4471
    %v4493 = vpop.f32.mrf.mxu0
    %v4494 = vadd.f32 0.0, %v4493
    %4495 = vdwg.mxu0
    %v4497 = vsel %vm317, %v4210, 0
    %v4500 = vsel %vm317, %v4261, 0
    %4502 = vmatpush.xpose.msra.mxu0 0.0
    %4503 = vmatpush.xpose.msra.mxu0 0.0
    %4504 = vmatpush.xpose.msra.mxu0 0.0
    %4505 = vmatpush.xpose.msra.mxu0 0.0
    %4506 = vmatpush.xpose.msra.mxu0 0.0
    %4507 = vmatpush.xpose.msra.mxu0 0.0
    %4508 = vmatpush.xpose.msra.mxu0 0.0
    %4509 = vmatpush.xpose.msra.mxu0 0.0
    %4510 = vmatpush.xpose.msra.mxu0 0.0
    %4511 = vmatpush.xpose.msra.mxu0 0.0
    %4512 = vmatpush.xpose.msra.mxu0 0.0
    %4513 = vmatpush.xpose.msra.mxu0 0.0
    %4514 = vmatpush.xpose.msra.mxu0 0.0
    %4515 = vmatpush.xpose.msra.mxu0 0.0
    %4516 = vmatpush.xpose.msra.mxu0 0.0
    %4517 = vmatpush.xpose.msra.mxu0 %v4500
    %4518 = vmatmul.f32.gmra.mxu0 %v4497
    %v4519 = vpop.f32.mrf.mxu0
    %v4520 = vadd.f32 0.0, %v4519
    %4521 = vdwg.mxu0
    %v4522 = vmul.f32 %v4338, 0.35355338
    %v4523 = vmul.f32 %v4364, 0.35355338
    %v4524 = vmul.f32 %v4390, 0.35355338
    %v4525 = vmul.f32 %v4416, 0.35355338
    %v4526 = vmul.f32 %v4442, 0.35355338
    %v4527 = vmul.f32 %v4468, 0.35355338
    %v4528 = vmul.f32 %v4494, 0.35355338
    %v4529 = vmul.f32 %v4520, 0.35355338
    %v4530 = vadd.f32 %v4522, %v534
    %v4531 = vadd.f32 %v4523, %v535
    %v4532 = vadd.f32 %v4524, %v536
    %v4533 = vadd.f32 %v4525, %v537
    %v4534 = vadd.f32 %v4526, %v538
    %v4535 = vadd.f32 %v4527, %v539
    %v4536 = vadd.f32 %v4528, %v540
    %v4537 = vadd.f32 %v4529, %v541
    %v4538 = vsel %vm317, %v4530, -inf
    %4539 = vmax.xlane.f32.xlu0 %v4538
    %v4540 = vpop.xlane.xlu0 %4539
    %v4541 = vsel %vm317, %v4531, -inf
    %4542 = vmax.xlane.f32.xlu0 %v4541
    %v4543 = vpop.xlane.xlu0 %4542
    %v4544 = vsel %vm317, %v4532, -inf
    %4545 = vmax.xlane.f32.xlu0 %v4544
    %v4546 = vpop.xlane.xlu0 %4545
    %v4547 = vsel %vm317, %v4533, -inf
    %4548 = vmax.xlane.f32.xlu0 %v4547
    %v4549 = vpop.xlane.xlu0 %4548
    %v4550 = vsel %vm317, %v4534, -inf
    %4551 = vmax.xlane.f32.xlu0 %v4550
    %v4552 = vpop.xlane.xlu0 %4551
    %v4553 = vsel %vm317, %v4535, -inf
    %4554 = vmax.xlane.f32.xlu0 %v4553
    %v4555 = vpop.xlane.xlu0 %4554
    %v4556 = vsel %vm317, %v4536, -inf
    %4557 = vmax.xlane.f32.xlu0 %v4556
    %v4558 = vpop.xlane.xlu0 %4557
    %v4559 = vsel %vm317, %v4537, -inf
    %4560 = vmax.xlane.f32.xlu0 %v4559
    %v4561 = vpop.xlane.xlu0 %4560
    %v4562 = vsub.f32 %v4530, %v4540
    %v4563 = vsub.f32 %v4531, %v4543
    %v4564 = vsub.f32 %v4532, %v4546
    %v4565 = vsub.f32 %v4533, %v4549
    %v4566 = vsub.f32 %v4534, %v4552
    %v4567 = vsub.f32 %v4535, %v4555
    %v4568 = vsub.f32 %v4536, %v4558
    %v4569 = vsub.f32 %v4537, %v4561
    %v4570 = vmul.f32 %v4562, 1.442695
    %v4571 = vpow.pop %v4570
    %v4572 = vmul.f32 %v4563, 1.442695
    %v4573 = vpow.pop %v4572
    %v4574 = vmul.f32 %v4564, 1.442695
    %v4575 = vpow.pop %v4574
    %v4576 = vmul.f32 %v4565, 1.442695
    %v4577 = vpow.pop %v4576
    %v4578 = vmul.f32 %v4566, 1.442695
    %v4579 = vpow.pop %v4578
    %v4580 = vmul.f32 %v4567, 1.442695
    %v4581 = vpow.pop %v4580
    %v4582 = vmul.f32 %v4568, 1.442695
    %v4583 = vpow.pop %v4582
    %v4584 = vmul.f32 %v4569, 1.442695
    %v4585 = vpow.pop %v4584
    %v4586 = vsel %vm317, %v4571, 0.0
    %4587 = vadd.xlane.f32.xlu0 %v4586
    %v4588 = vpop.xlane.xlu0 %4587
    %v4589 = vsel %vm317, %v4573, 0.0
    %4590 = vadd.xlane.f32.xlu0 %v4589
    %v4591 = vpop.xlane.xlu0 %4590
    %v4592 = vsel %vm317, %v4575, 0.0
    %4593 = vadd.xlane.f32.xlu0 %v4592
    %v4594 = vpop.xlane.xlu0 %4593
    %v4595 = vsel %vm317, %v4577, 0.0
    %4596 = vadd.xlane.f32.xlu0 %v4595
    %v4597 = vpop.xlane.xlu0 %4596
    %v4598 = vsel %vm317, %v4579, 0.0
    %4599 = vadd.xlane.f32.xlu0 %v4598
    %v4600 = vpop.xlane.xlu0 %4599
    %v4601 = vsel %vm317, %v4581, 0.0
    %4602 = vadd.xlane.f32.xlu0 %v4601
    %v4603 = vpop.xlane.xlu0 %4602
    %v4604 = vsel %vm317, %v4583, 0.0
    %4605 = vadd.xlane.f32.xlu0 %v4604
    %v4606 = vpop.xlane.xlu0 %4605
    %v4607 = vsel %vm317, %v4585, 0.0
    %4608 = vadd.xlane.f32.xlu0 %v4607
    %v4609 = vpop.xlane.xlu0 %4608
    %v4610 = vrcp.pop %v4588
    %v4611 = vmul.f32 %v4588, %v4610
    %v4612 = vsub.f32 1.0, %v4611
    %v4613 = vmul.f32 %v4610, %v4612
    %v4614 = vadd.f32 %v4610, %v4613
    %vm4615 = vweird.f32 %v4588
    %vm4616 = vweird.f32 %v4610
    %vm4617 = vmor %vm4615, %vm4616
    %v4618 = vsel %vm4617, %v4610, %v4614
    %v4619 = vand.u32 2147483647, %v4588
    %vm4620 = vcmp.eq.f32.partialorder %v4619, 8.507059e+37
    %v4621 = vand.u32 %v4588, 2147483648
    %v4622 = vor.u32 1.1754944e-38, %v4621
    %v4623 = vsel %vm4620, %v4622, %v4618
    %v4624 = vmul.f32 %v4571, %v4623
    %v4625 = vrcp.pop %v4591
    %v4626 = vmul.f32 %v4591, %v4625
    %v4627 = vsub.f32 1.0, %v4626
    %v4628 = vmul.f32 %v4625, %v4627
    %v4629 = vadd.f32 %v4625, %v4628
    %vm4630 = vweird.f32 %v4591
    %vm4631 = vweird.f32 %v4625
    %vm4632 = vmor %vm4630, %vm4631
    %v4633 = vsel %vm4632, %v4625, %v4629
    %v4634 = vand.u32 2147483647, %v4591
    %vm4635 = vcmp.eq.f32.partialorder %v4634, 8.507059e+37
    %v4636 = vand.u32 %v4591, 2147483648
    %v4637 = vor.u32 1.1754944e-38, %v4636
    %v4638 = vsel %vm4635, %v4637, %v4633
    %v4639 = vmul.f32 %v4573, %v4638
    %v4640 = vrcp.pop %v4594
    %v4641 = vmul.f32 %v4594, %v4640
    %v4642 = vsub.f32 1.0, %v4641
    %v4643 = vmul.f32 %v4640, %v4642
    %v4644 = vadd.f32 %v4640, %v4643
    %vm4645 = vweird.f32 %v4594
    %vm4646 = vweird.f32 %v4640
    %vm4647 = vmor %vm4645, %vm4646
    %v4648 = vsel %vm4647, %v4640, %v4644
    %v4649 = vand.u32 2147483647, %v4594
    %vm4650 = vcmp.eq.f32.partialorder %v4649, 8.507059e+37
    %v4651 = vand.u32 %v4594, 2147483648
    %v4652 = vor.u32 1.1754944e-38, %v4651
    %v4653 = vsel %vm4650, %v4652, %v4648
    %v4654 = vmul.f32 %v4575, %v4653
    %v4655 = vrcp.pop %v4597
    %v4656 = vmul.f32 %v4597, %v4655
    %v4657 = vsub.f32 1.0, %v4656
    %v4658 = vmul.f32 %v4655, %v4657
    %v4659 = vadd.f32 %v4655, %v4658
    %vm4660 = vweird.f32 %v4597
    %vm4661 = vweird.f32 %v4655
    %vm4662 = vmor %vm4660, %vm4661
    %v4663 = vsel %vm4662, %v4655, %v4659
    %v4664 = vand.u32 2147483647, %v4597
    %vm4665 = vcmp.eq.f32.partialorder %v4664, 8.507059e+37
    %v4666 = vand.u32 %v4597, 2147483648
    %v4667 = vor.u32 1.1754944e-38, %v4666
    %v4668 = vsel %vm4665, %v4667, %v4663
    %v4669 = vmul.f32 %v4577, %v4668
    %v4670 = vrcp.pop %v4600
    %v4671 = vmul.f32 %v4600, %v4670
    %v4672 = vsub.f32 1.0, %v4671
    %v4673 = vmul.f32 %v4670, %v4672
    %v4674 = vadd.f32 %v4670, %v4673
    %vm4675 = vweird.f32 %v4600
    %vm4676 = vweird.f32 %v4670
    %vm4677 = vmor %vm4675, %vm4676
    %v4678 = vsel %vm4677, %v4670, %v4674
    %v4679 = vand.u32 2147483647, %v4600
    %vm4680 = vcmp.eq.f32.partialorder %v4679, 8.507059e+37
    %v4681 = vand.u32 %v4600, 2147483648
    %v4682 = vor.u32 1.1754944e-38, %v4681
    %v4683 = vsel %vm4680, %v4682, %v4678
    %v4684 = vmul.f32 %v4579, %v4683
    %v4685 = vrcp.pop %v4603
    %v4686 = vmul.f32 %v4603, %v4685
    %v4687 = vsub.f32 1.0, %v4686
    %v4688 = vmul.f32 %v4685, %v4687
    %v4689 = vadd.f32 %v4685, %v4688
    %vm4690 = vweird.f32 %v4603
    %vm4691 = vweird.f32 %v4685
    %vm4692 = vmor %vm4690, %vm4691
    %v4693 = vsel %vm4692, %v4685, %v4689
    %v4694 = vand.u32 2147483647, %v4603
    %vm4695 = vcmp.eq.f32.partialorder %v4694, 8.507059e+37
    %v4696 = vand.u32 %v4603, 2147483648
    %v4697 = vor.u32 1.1754944e-38, %v4696
    %v4698 = vsel %vm4695, %v4697, %v4693
    %v4699 = vmul.f32 %v4581, %v4698
    %v4700 = vrcp.pop %v4606
    %v4701 = vmul.f32 %v4606, %v4700
    %v4702 = vsub.f32 1.0, %v4701
    %v4703 = vmul.f32 %v4700, %v4702
    %v4704 = vadd.f32 %v4700, %v4703
    %vm4705 = vweird.f32 %v4606
    %vm4706 = vweird.f32 %v4700
    %vm4707 = vmor %vm4705, %vm4706
    %v4708 = vsel %vm4707, %v4700, %v4704
    %v4709 = vand.u32 2147483647, %v4606
    %vm4710 = vcmp.eq.f32.partialorder %v4709, 8.507059e+37
    %v4711 = vand.u32 %v4606, 2147483648
    %v4712 = vor.u32 1.1754944e-38, %v4711
    %v4713 = vsel %vm4710, %v4712, %v4708
    %v4714 = vmul.f32 %v4583, %v4713
    %v4715 = vrcp.pop %v4609
    %v4716 = vmul.f32 %v4609, %v4715
    %v4717 = vsub.f32 1.0, %v4716
    %v4718 = vmul.f32 %v4715, %v4717
    %v4719 = vadd.f32 %v4715, %v4718
    %vm4720 = vweird.f32 %v4609
    %vm4721 = vweird.f32 %v4715
    %vm4722 = vmor %vm4720, %vm4721
    %v4723 = vsel %vm4722, %v4715, %v4719
    %v4724 = vand.u32 2147483647, %v4609
    %vm4725 = vcmp.eq.f32.partialorder %v4724, 8.507059e+37
    %v4726 = vand.u32 %v4609, 2147483648
    %v4727 = vor.u32 1.1754944e-38, %v4726
    %v4728 = vsel %vm4725, %v4727, %v4723
    %v4729 = vmul.f32 %v4585, %v4728
    %v4731 = vsel %vm317, %v4624, 0
    %4733 = vmatpush.msra.mxu0 0.0
    %4734 = vmatpush.msra.mxu0 0.0
    %4735 = vmatpush.msra.mxu0 0.0
    %4736 = vmatpush.msra.mxu0 0.0
    %4737 = vmatpush.msra.mxu0 0.0
    %4738 = vmatpush.msra.mxu0 0.0
    %4739 = vmatpush.msra.mxu0 0.0
    %4740 = vmatpush.msra.mxu0 0.0
    %4741 = vmatpush.msra.mxu0 0.0
    %4742 = vmatpush.msra.mxu0 0.0
    %4743 = vmatpush.msra.mxu0 0.0
    %4744 = vmatpush.msra.mxu0 0.0
    %4745 = vmatpush.msra.mxu0 0.0
    %4746 = vmatpush.msra.mxu0 0.0
    %4747 = vmatpush.msra.mxu0 0.0
    %4748 = vmatpush.msra.mxu0 %v4291
    %4749 = vmatmul.f32.gmra.mxu0 %v4731
    %v4750 = vpop.f32.mrf.mxu0
    %v4751 = vadd.f32 0.0, %v4750
    %4752 = vdwg.mxu0
    %v4754 = vsel %vm317, %v4639, 0
    %4756 = vmatpush.msra.mxu0 0.0
    %4757 = vmatpush.msra.mxu0 0.0
    %4758 = vmatpush.msra.mxu0 0.0
    %4759 = vmatpush.msra.mxu0 0.0
    %4760 = vmatpush.msra.mxu0 0.0
    %4761 = vmatpush.msra.mxu0 0.0
    %4762 = vmatpush.msra.mxu0 0.0
    %4763 = vmatpush.msra.mxu0 0.0
    %4764 = vmatpush.msra.mxu0 0.0
    %4765 = vmatpush.msra.mxu0 0.0
    %4766 = vmatpush.msra.mxu0 0.0
    %4767 = vmatpush.msra.mxu0 0.0
    %4768 = vmatpush.msra.mxu0 0.0
    %4769 = vmatpush.msra.mxu0 0.0
    %4770 = vmatpush.msra.mxu0 0.0
    %4771 = vmatpush.msra.mxu0 %v4294
    %4772 = vmatmul.f32.gmra.mxu0 %v4754
    %v4773 = vpop.f32.mrf.mxu0
    %v4774 = vadd.f32 0.0, %v4773
    %4775 = vdwg.mxu0
    %v4777 = vsel %vm317, %v4654, 0
    %4779 = vmatpush.msra.mxu0 0.0
    %4780 = vmatpush.msra.mxu0 0.0
    %4781 = vmatpush.msra.mxu0 0.0
    %4782 = vmatpush.msra.mxu0 0.0
    %4783 = vmatpush.msra.mxu0 0.0
    %4784 = vmatpush.msra.mxu0 0.0
    %4785 = vmatpush.msra.mxu0 0.0
    %4786 = vmatpush.msra.mxu0 0.0
    %4787 = vmatpush.msra.mxu0 0.0
    %4788 = vmatpush.msra.mxu0 0.0
    %4789 = vmatpush.msra.mxu0 0.0
    %4790 = vmatpush.msra.mxu0 0.0
    %4791 = vmatpush.msra.mxu0 0.0
    %4792 = vmatpush.msra.mxu0 0.0
    %4793 = vmatpush.msra.mxu0 0.0
    %4794 = vmatpush.msra.mxu0 %v4297
    %4795 = vmatmul.f32.gmra.mxu0 %v4777
    %v4796 = vpop.f32.mrf.mxu0
    %v4797 = vadd.f32 0.0, %v4796
    %4798 = vdwg.mxu0
    %v4800 = vsel %vm317, %v4669, 0
    %4802 = vmatpush.msra.mxu0 0.0
    %4803 = vmatpush.msra.mxu0 0.0
    %4804 = vmatpush.msra.mxu0 0.0
    %4805 = vmatpush.msra.mxu0 0.0
    %4806 = vmatpush.msra.mxu0 0.0
    %4807 = vmatpush.msra.mxu0 0.0
    %4808 = vmatpush.msra.mxu0 0.0
    %4809 = vmatpush.msra.mxu0 0.0
    %4810 = vmatpush.msra.mxu0 0.0
    %4811 = vmatpush.msra.mxu0 0.0
    %4812 = vmatpush.msra.mxu0 0.0
    %4813 = vmatpush.msra.mxu0 0.0
    %4814 = vmatpush.msra.mxu0 0.0
    %4815 = vmatpush.msra.mxu0 0.0
    %4816 = vmatpush.msra.mxu0 0.0
    %4817 = vmatpush.msra.mxu0 %v4300
    %4818 = vmatmul.f32.gmra.mxu0 %v4800
    %v4819 = vpop.f32.mrf.mxu0
    %v4820 = vadd.f32 0.0, %v4819
    %4821 = vdwg.mxu0
    %v4823 = vsel %vm317, %v4684, 0
    %4825 = vmatpush.msra.mxu0 0.0
    %4826 = vmatpush.msra.mxu0 0.0
    %4827 = vmatpush.msra.mxu0 0.0
    %4828 = vmatpush.msra.mxu0 0.0
    %4829 = vmatpush.msra.mxu0 0.0
    %4830 = vmatpush.msra.mxu0 0.0
    %4831 = vmatpush.msra.mxu0 0.0
    %4832 = vmatpush.msra.mxu0 0.0
    %4833 = vmatpush.msra.mxu0 0.0
    %4834 = vmatpush.msra.mxu0 0.0
    %4835 = vmatpush.msra.mxu0 0.0
    %4836 = vmatpush.msra.mxu0 0.0
    %4837 = vmatpush.msra.mxu0 0.0
    %4838 = vmatpush.msra.mxu0 0.0
    %4839 = vmatpush.msra.mxu0 0.0
    %4840 = vmatpush.msra.mxu0 %v4303
    %4841 = vmatmul.f32.gmra.mxu0 %v4823
    %v4842 = vpop.f32.mrf.mxu0
    %v4843 = vadd.f32 0.0, %v4842
    %4844 = vdwg.mxu0
    %v4846 = vsel %vm317, %v4699, 0
    %4848 = vmatpush.msra.mxu0 0.0
    %4849 = vmatpush.msra.mxu0 0.0
    %4850 = vmatpush.msra.mxu0 0.0
    %4851 = vmatpush.msra.mxu0 0.0
    %4852 = vmatpush.msra.mxu0 0.0
    %4853 = vmatpush.msra.mxu0 0.0
    %4854 = vmatpush.msra.mxu0 0.0
    %4855 = vmatpush.msra.mxu0 0.0
    %4856 = vmatpush.msra.mxu0 0.0
    %4857 = vmatpush.msra.mxu0 0.0
    %4858 = vmatpush.msra.mxu0 0.0
    %4859 = vmatpush.msra.mxu0 0.0
    %4860 = vmatpush.msra.mxu0 0.0
    %4861 = vmatpush.msra.mxu0 0.0
    %4862 = vmatpush.msra.mxu0 0.0
    %4863 = vmatpush.msra.mxu0 %v4306
    %4864 = vmatmul.f32.gmra.mxu0 %v4846
    %v4865 = vpop.f32.mrf.mxu0
    %v4866 = vadd.f32 0.0, %v4865
    %4867 = vdwg.mxu0
    %v4869 = vsel %vm317, %v4714, 0
    %4871 = vmatpush.msra.mxu0 0.0
    %4872 = vmatpush.msra.mxu0 0.0
    %4873 = vmatpush.msra.mxu0 0.0
    %4874 = vmatpush.msra.mxu0 0.0
    %4875 = vmatpush.msra.mxu0 0.0
    %4876 = vmatpush.msra.mxu0 0.0
    %4877 = vmatpush.msra.mxu0 0.0
    %4878 = vmatpush.msra.mxu0 0.0
    %4879 = vmatpush.msra.mxu0 0.0
    %4880 = vmatpush.msra.mxu0 0.0
    %4881 = vmatpush.msra.mxu0 0.0
    %4882 = vmatpush.msra.mxu0 0.0
    %4883 = vmatpush.msra.mxu0 0.0
    %4884 = vmatpush.msra.mxu0 0.0
    %4885 = vmatpush.msra.mxu0 0.0
    %4886 = vmatpush.msra.mxu0 %v4309
    %4887 = vmatmul.f32.gmra.mxu0 %v4869
    %v4888 = vpop.f32.mrf.mxu0
    %v4889 = vadd.f32 0.0, %v4888
    %4890 = vdwg.mxu0
    %v4892 = vsel %vm317, %v4729, 0
    %4894 = vmatpush.msra.mxu0 0.0
    %4895 = vmatpush.msra.mxu0 0.0
    %4896 = vmatpush.msra.mxu0 0.0
    %4897 = vmatpush.msra.mxu0 0.0
    %4898 = vmatpush.msra.mxu0 0.0
    %4899 = vmatpush.msra.mxu0 0.0
    %4900 = vmatpush.msra.mxu0 0.0
    %4901 = vmatpush.msra.mxu0 0.0
    %4902 = vmatpush.msra.mxu0 0.0
    %4903 = vmatpush.msra.mxu0 0.0
    %4904 = vmatpush.msra.mxu0 0.0
    %4905 = vmatpush.msra.mxu0 0.0
    %4906 = vmatpush.msra.mxu0 0.0
    %4907 = vmatpush.msra.mxu0 0.0
    %4908 = vmatpush.msra.mxu0 0.0
    %4909 = vmatpush.msra.mxu0 %v4312
    %4910 = vmatmul.f32.gmra.mxu0 %v4892
    %v4911 = vpop.f32.mrf.mxu0
    %v4912 = vadd.f32 0.0, %v4911
    %4913 = vdwg.mxu0
    %s4914 = scalar_lea.vmem %s6, 32
    %v4915 = vld [vmem:[%s4914] sm:$0xff]
    %s4916 = scalar_lea.vmem %s4, 416
    %v4917 = vld [vmem:[%s4916] sm:$0xff]
    %v4918 = vld [vmem:[%s4916 + $0x8] sm:$0xff]
    %v4919 = vld [vmem:[%s4916 + $0x10] sm:$0xff]
    %v4920 = vld [vmem:[%s4916 + $0x18] sm:$0xff]
    %s4921 = scalar_lea.vmem %s5, 13
    %v4922 = vld [vmem:[%s4921] sm:$0x1]
    %v4924 = vperm.slane %v4922, 0
    %4926 = vmatpush.msra.mxu0 0.0
    %4927 = vmatpush.msra.mxu0 0.0
    %4928 = vmatpush.msra.mxu0 0.0
    %4929 = vmatpush.msra.mxu0 0.0
    %4930 = vmatpush.msra.mxu0 0.0
    %4931 = vmatpush.msra.mxu0 0.0
    %4932 = vmatpush.msra.mxu0 0.0
    %4933 = vmatpush.msra.mxu0 0.0
    %4934 = vmatpush.msra.mxu0 0.0
    %4935 = vmatpush.msra.mxu0 0.0
    %4936 = vmatpush.msra.mxu0 0.0
    %4937 = vmatpush.msra.mxu0 0.0
    %4938 = vmatpush.msra.mxu0 %v4920
    %4939 = vmatpush.msra.mxu0 %v4919
    %4940 = vmatpush.msra.mxu0 %v4918
    %4941 = vmatpush.msra.mxu0 %v4917
    %4942 = vmatmul.f32.gmra.mxu0 %v4148
    %v4943 = vpop.f32.mrf.mxu0
    %v4944 = vadd.f32 %v4924, %v4943
    %4945 = vmatmul.f32.gmra.mxu0 %v4151
    %v4946 = vpop.f32.mrf.mxu0
    %v4947 = vadd.f32 %v4924, %v4946
    %4948 = vmatmul.f32.gmra.mxu0 %v4154
    %v4949 = vpop.f32.mrf.mxu0
    %v4950 = vadd.f32 %v4924, %v4949
    %4951 = vmatmul.f32.gmra.mxu0 %v4157
    %v4952 = vpop.f32.mrf.mxu0
    %v4953 = vadd.f32 %v4924, %v4952
    %4954 = vmatmul.f32.gmra.mxu0 %v4160
    %v4955 = vpop.f32.mrf.mxu0
    %v4956 = vadd.f32 %v4924, %v4955
    %4957 = vmatmul.f32.gmra.mxu0 %v4163
    %v4958 = vpop.f32.mrf.mxu0
    %v4959 = vadd.f32 %v4924, %v4958
    %4960 = vmatmul.f32.gmra.mxu0 %v4166
    %v4961 = vpop.f32.mrf.mxu0
    %v4962 = vadd.f32 %v4924, %v4961
    %4963 = vmatmul.f32.gmra.mxu0 %v4169
    %v4964 = vpop.f32.mrf.mxu0
    %v4965 = vadd.f32 %v4924, %v4964
    %4966 = vdwg.mxu0
    %s4967 = scalar_lea.vmem %s4, 544
    %v4968 = vld [vmem:[%s4967] sm:$0xff]
    %v4969 = vld [vmem:[%s4967 + $0x8] sm:$0xff]
    %v4970 = vld [vmem:[%s4967 + $0x10] sm:$0xff]
    %v4971 = vld [vmem:[%s4967 + $0x18] sm:$0xff]
    %s4972 = scalar_lea.vmem %s5, 17
    %v4973 = vld [vmem:[%s4972] sm:$0x1]
    %v4975 = vperm.slane %v4973, 0
    %4977 = vmatpush.msra.mxu0 0.0
    %4978 = vmatpush.msra.mxu0 0.0
    %4979 = vmatpush.msra.mxu0 0.0
    %4980 = vmatpush.msra.mxu0 0.0
    %4981 = vmatpush.msra.mxu0 0.0
    %4982 = vmatpush.msra.mxu0 0.0
    %4983 = vmatpush.msra.mxu0 0.0
    %4984 = vmatpush.msra.mxu0 0.0
    %4985 = vmatpush.msra.mxu0 0.0
    %4986 = vmatpush.msra.mxu0 0.0
    %4987 = vmatpush.msra.mxu0 0.0
    %4988 = vmatpush.msra.mxu0 0.0
    %4989 = vmatpush.msra.mxu0 %v4971
    %4990 = vmatpush.msra.mxu0 %v4970
    %4991 = vmatpush.msra.mxu0 %v4969
    %4992 = vmatpush.msra.mxu0 %v4968
    %4993 = vmatmul.f32.gmra.mxu0 %v4148
    %v4994 = vpop.f32.mrf.mxu0
    %v4995 = vadd.f32 %v4975, %v4994
    %4996 = vmatmul.f32.gmra.mxu0 %v4151
    %v4997 = vpop.f32.mrf.mxu0
    %v4998 = vadd.f32 %v4975, %v4997
    %4999 = vmatmul.f32.gmra.mxu0 %v4154
    %v5000 = vpop.f32.mrf.mxu0
    %v5001 = vadd.f32 %v4975, %v5000
    %5002 = vmatmul.f32.gmra.mxu0 %v4157
    %v5003 = vpop.f32.mrf.mxu0
    %v5004 = vadd.f32 %v4975, %v5003
    %5005 = vmatmul.f32.gmra.mxu0 %v4160
    %v5006 = vpop.f32.mrf.mxu0
    %v5007 = vadd.f32 %v4975, %v5006
    %5008 = vmatmul.f32.gmra.mxu0 %v4163
    %v5009 = vpop.f32.mrf.mxu0
    %v5010 = vadd.f32 %v4975, %v5009
    %5011 = vmatmul.f32.gmra.mxu0 %v4166
    %v5012 = vpop.f32.mrf.mxu0
    %v5013 = vadd.f32 %v4975, %v5012
    %5014 = vmatmul.f32.gmra.mxu0 %v4169
    %v5015 = vpop.f32.mrf.mxu0
    %v5016 = vadd.f32 %v4975, %v5015
    %5017 = vdwg.mxu0
    %s5018 = scalar_lea.vmem %s4, 672
    %v5019 = vld [vmem:[%s5018] sm:$0xff]
    %v5020 = vld [vmem:[%s5018 + $0x8] sm:$0xff]
    %v5021 = vld [vmem:[%s5018 + $0x10] sm:$0xff]
    %v5022 = vld [vmem:[%s5018 + $0x18] sm:$0xff]
    %s5023 = scalar_lea.vmem %s5, 21
    %v5024 = vld [vmem:[%s5023] sm:$0x1]
    %v5026 = vperm.slane %v5024, 0
    %5028 = vmatpush.msra.mxu0 0.0
    %5029 = vmatpush.msra.mxu0 0.0
    %5030 = vmatpush.msra.mxu0 0.0
    %5031 = vmatpush.msra.mxu0 0.0
    %5032 = vmatpush.msra.mxu0 0.0
    %5033 = vmatpush.msra.mxu0 0.0
    %5034 = vmatpush.msra.mxu0 0.0
    %5035 = vmatpush.msra.mxu0 0.0
    %5036 = vmatpush.msra.mxu0 0.0
    %5037 = vmatpush.msra.mxu0 0.0
    %5038 = vmatpush.msra.mxu0 0.0
    %5039 = vmatpush.msra.mxu0 0.0
    %5040 = vmatpush.msra.mxu0 %v5022
    %5041 = vmatpush.msra.mxu0 %v5021
    %5042 = vmatpush.msra.mxu0 %v5020
    %5043 = vmatpush.msra.mxu0 %v5019
    %5044 = vmatmul.f32.gmra.mxu0 %v4148
    %v5045 = vpop.f32.mrf.mxu0
    %v5046 = vadd.f32 %v5026, %v5045
    %5047 = vmatmul.f32.gmra.mxu0 %v4151
    %v5048 = vpop.f32.mrf.mxu0
    %v5049 = vadd.f32 %v5026, %v5048
    %5050 = vmatmul.f32.gmra.mxu0 %v4154
    %v5051 = vpop.f32.mrf.mxu0
    %v5052 = vadd.f32 %v5026, %v5051
    %5053 = vmatmul.f32.gmra.mxu0 %v4157
    %v5054 = vpop.f32.mrf.mxu0
    %v5055 = vadd.f32 %v5026, %v5054
    %5056 = vmatmul.f32.gmra.mxu0 %v4160
    %v5057 = vpop.f32.mrf.mxu0
    %v5058 = vadd.f32 %v5026, %v5057
    %5059 = vmatmul.f32.gmra.mxu0 %v4163
    %v5060 = vpop.f32.mrf.mxu0
    %v5061 = vadd.f32 %v5026, %v5060
    %5062 = vmatmul.f32.gmra.mxu0 %v4166
    %v5063 = vpop.f32.mrf.mxu0
    %v5064 = vadd.f32 %v5026, %v5063
    %5065 = vmatmul.f32.gmra.mxu0 %v4169
    %v5066 = vpop.f32.mrf.mxu0
    %v5067 = vadd.f32 %v5026, %v5066
    %5068 = vdwg.mxu0
    %v5070 = vsel %vm317, %v4944, 0
    %v5073 = vsel %vm317, %v4995, 0
    %5075 = vmatpush.xpose.msra.mxu0 0.0
    %5076 = vmatpush.xpose.msra.mxu0 0.0
    %5077 = vmatpush.xpose.msra.mxu0 0.0
    %5078 = vmatpush.xpose.msra.mxu0 0.0
    %5079 = vmatpush.xpose.msra.mxu0 0.0
    %5080 = vmatpush.xpose.msra.mxu0 0.0
    %5081 = vmatpush.xpose.msra.mxu0 0.0
    %5082 = vmatpush.xpose.msra.mxu0 0.0
    %5083 = vmatpush.xpose.msra.mxu0 0.0
    %5084 = vmatpush.xpose.msra.mxu0 0.0
    %5085 = vmatpush.xpose.msra.mxu0 0.0
    %5086 = vmatpush.xpose.msra.mxu0 0.0
    %5087 = vmatpush.xpose.msra.mxu0 0.0
    %5088 = vmatpush.xpose.msra.mxu0 0.0
    %5089 = vmatpush.xpose.msra.mxu0 0.0
    %5090 = vmatpush.xpose.msra.mxu0 %v5073
    %5091 = vmatmul.f32.gmra.mxu0 %v5070
    %v5092 = vpop.f32.mrf.mxu0
    %v5093 = vadd.f32 0.0, %v5092
    %5094 = vdwg.mxu0
    %v5096 = vsel %vm317, %v4947, 0
    %v5099 = vsel %vm317, %v4998, 0
    %5101 = vmatpush.xpose.msra.mxu0 0.0
    %5102 = vmatpush.xpose.msra.mxu0 0.0
    %5103 = vmatpush.xpose.msra.mxu0 0.0
    %5104 = vmatpush.xpose.msra.mxu0 0.0
    %5105 = vmatpush.xpose.msra.mxu0 0.0
    %5106 = vmatpush.xpose.msra.mxu0 0.0
    %5107 = vmatpush.xpose.msra.mxu0 0.0
    %5108 = vmatpush.xpose.msra.mxu0 0.0
    %5109 = vmatpush.xpose.msra.mxu0 0.0
    %5110 = vmatpush.xpose.msra.mxu0 0.0
    %5111 = vmatpush.xpose.msra.mxu0 0.0
    %5112 = vmatpush.xpose.msra.mxu0 0.0
    %5113 = vmatpush.xpose.msra.mxu0 0.0
    %5114 = vmatpush.xpose.msra.mxu0 0.0
    %5115 = vmatpush.xpose.msra.mxu0 0.0
    %5116 = vmatpush.xpose.msra.mxu0 %v5099
    %5117 = vmatmul.f32.gmra.mxu0 %v5096
    %v5118 = vpop.f32.mrf.mxu0
    %v5119 = vadd.f32 0.0, %v5118
    %5120 = vdwg.mxu0
    %v5122 = vsel %vm317, %v4950, 0
    %v5125 = vsel %vm317, %v5001, 0
    %5127 = vmatpush.xpose.msra.mxu0 0.0
    %5128 = vmatpush.xpose.msra.mxu0 0.0
    %5129 = vmatpush.xpose.msra.mxu0 0.0
    %5130 = vmatpush.xpose.msra.mxu0 0.0
    %5131 = vmatpush.xpose.msra.mxu0 0.0
    %5132 = vmatpush.xpose.msra.mxu0 0.0
    %5133 = vmatpush.xpose.msra.mxu0 0.0
    %5134 = vmatpush.xpose.msra.mxu0 0.0
    %5135 = vmatpush.xpose.msra.mxu0 0.0
    %5136 = vmatpush.xpose.msra.mxu0 0.0
    %5137 = vmatpush.xpose.msra.mxu0 0.0
    %5138 = vmatpush.xpose.msra.mxu0 0.0
    %5139 = vmatpush.xpose.msra.mxu0 0.0
    %5140 = vmatpush.xpose.msra.mxu0 0.0
    %5141 = vmatpush.xpose.msra.mxu0 0.0
    %5142 = vmatpush.xpose.msra.mxu0 %v5125
    %5143 = vmatmul.f32.gmra.mxu0 %v5122
    %v5144 = vpop.f32.mrf.mxu0
    %v5145 = vadd.f32 0.0, %v5144
    %5146 = vdwg.mxu0
    %v5148 = vsel %vm317, %v4953, 0
    %v5151 = vsel %vm317, %v5004, 0
    %5153 = vmatpush.xpose.msra.mxu0 0.0
    %5154 = vmatpush.xpose.msra.mxu0 0.0
    %5155 = vmatpush.xpose.msra.mxu0 0.0
    %5156 = vmatpush.xpose.msra.mxu0 0.0
    %5157 = vmatpush.xpose.msra.mxu0 0.0
    %5158 = vmatpush.xpose.msra.mxu0 0.0
    %5159 = vmatpush.xpose.msra.mxu0 0.0
    %5160 = vmatpush.xpose.msra.mxu0 0.0
    %5161 = vmatpush.xpose.msra.mxu0 0.0
    %5162 = vmatpush.xpose.msra.mxu0 0.0
    %5163 = vmatpush.xpose.msra.mxu0 0.0
    %5164 = vmatpush.xpose.msra.mxu0 0.0
    %5165 = vmatpush.xpose.msra.mxu0 0.0
    %5166 = vmatpush.xpose.msra.mxu0 0.0
    %5167 = vmatpush.xpose.msra.mxu0 0.0
    %5168 = vmatpush.xpose.msra.mxu0 %v5151
    %5169 = vmatmul.f32.gmra.mxu0 %v5148
    %v5170 = vpop.f32.mrf.mxu0
    %v5171 = vadd.f32 0.0, %v5170
    %5172 = vdwg.mxu0
    %v5174 = vsel %vm317, %v4956, 0
    %v5177 = vsel %vm317, %v5007, 0
    %5179 = vmatpush.xpose.msra.mxu0 0.0
    %5180 = vmatpush.xpose.msra.mxu0 0.0
    %5181 = vmatpush.xpose.msra.mxu0 0.0
    %5182 = vmatpush.xpose.msra.mxu0 0.0
    %5183 = vmatpush.xpose.msra.mxu0 0.0
    %5184 = vmatpush.xpose.msra.mxu0 0.0
    %5185 = vmatpush.xpose.msra.mxu0 0.0
    %5186 = vmatpush.xpose.msra.mxu0 0.0
    %5187 = vmatpush.xpose.msra.mxu0 0.0
    %5188 = vmatpush.xpose.msra.mxu0 0.0
    %5189 = vmatpush.xpose.msra.mxu0 0.0
    %5190 = vmatpush.xpose.msra.mxu0 0.0
    %5191 = vmatpush.xpose.msra.mxu0 0.0
    %5192 = vmatpush.xpose.msra.mxu0 0.0
    %5193 = vmatpush.xpose.msra.mxu0 0.0
    %5194 = vmatpush.xpose.msra.mxu0 %v5177
    %5195 = vmatmul.f32.gmra.mxu0 %v5174
    %v5196 = vpop.f32.mrf.mxu0
    %v5197 = vadd.f32 0.0, %v5196
    %5198 = vdwg.mxu0
    %v5200 = vsel %vm317, %v4959, 0
    %v5203 = vsel %vm317, %v5010, 0
    %5205 = vmatpush.xpose.msra.mxu0 0.0
    %5206 = vmatpush.xpose.msra.mxu0 0.0
    %5207 = vmatpush.xpose.msra.mxu0 0.0
    %5208 = vmatpush.xpose.msra.mxu0 0.0
    %5209 = vmatpush.xpose.msra.mxu0 0.0
    %5210 = vmatpush.xpose.msra.mxu0 0.0
    %5211 = vmatpush.xpose.msra.mxu0 0.0
    %5212 = vmatpush.xpose.msra.mxu0 0.0
    %5213 = vmatpush.xpose.msra.mxu0 0.0
    %5214 = vmatpush.xpose.msra.mxu0 0.0
    %5215 = vmatpush.xpose.msra.mxu0 0.0
    %5216 = vmatpush.xpose.msra.mxu0 0.0
    %5217 = vmatpush.xpose.msra.mxu0 0.0
    %5218 = vmatpush.xpose.msra.mxu0 0.0
    %5219 = vmatpush.xpose.msra.mxu0 0.0
    %5220 = vmatpush.xpose.msra.mxu0 %v5203
    %5221 = vmatmul.f32.gmra.mxu0 %v5200
    %v5222 = vpop.f32.mrf.mxu0
    %v5223 = vadd.f32 0.0, %v5222
    %5224 = vdwg.mxu0
    %v5226 = vsel %vm317, %v4962, 0
    %v5229 = vsel %vm317, %v5013, 0
    %5231 = vmatpush.xpose.msra.mxu0 0.0
    %5232 = vmatpush.xpose.msra.mxu0 0.0
    %5233 = vmatpush.xpose.msra.mxu0 0.0
    %5234 = vmatpush.xpose.msra.mxu0 0.0
    %5235 = vmatpush.xpose.msra.mxu0 0.0
    %5236 = vmatpush.xpose.msra.mxu0 0.0
    %5237 = vmatpush.xpose.msra.mxu0 0.0
    %5238 = vmatpush.xpose.msra.mxu0 0.0
    %5239 = vmatpush.xpose.msra.mxu0 0.0
    %5240 = vmatpush.xpose.msra.mxu0 0.0
    %5241 = vmatpush.xpose.msra.mxu0 0.0
    %5242 = vmatpush.xpose.msra.mxu0 0.0
    %5243 = vmatpush.xpose.msra.mxu0 0.0
    %5244 = vmatpush.xpose.msra.mxu0 0.0
    %5245 = vmatpush.xpose.msra.mxu0 0.0
    %5246 = vmatpush.xpose.msra.mxu0 %v5229
    %5247 = vmatmul.f32.gmra.mxu0 %v5226
    %v5248 = vpop.f32.mrf.mxu0
    %v5249 = vadd.f32 0.0, %v5248
    %5250 = vdwg.mxu0
    %v5252 = vsel %vm317, %v4965, 0
    %v5255 = vsel %vm317, %v5016, 0
    %5257 = vmatpush.xpose.msra.mxu0 0.0
    %5258 = vmatpush.xpose.msra.mxu0 0.0
    %5259 = vmatpush.xpose.msra.mxu0 0.0
    %5260 = vmatpush.xpose.msra.mxu0 0.0
    %5261 = vmatpush.xpose.msra.mxu0 0.0
    %5262 = vmatpush.xpose.msra.mxu0 0.0
    %5263 = vmatpush.xpose.msra.mxu0 0.0
    %5264 = vmatpush.xpose.msra.mxu0 0.0
    %5265 = vmatpush.xpose.msra.mxu0 0.0
    %5266 = vmatpush.xpose.msra.mxu0 0.0
    %5267 = vmatpush.xpose.msra.mxu0 0.0
    %5268 = vmatpush.xpose.msra.mxu0 0.0
    %5269 = vmatpush.xpose.msra.mxu0 0.0
    %5270 = vmatpush.xpose.msra.mxu0 0.0
    %5271 = vmatpush.xpose.msra.mxu0 0.0
    %5272 = vmatpush.xpose.msra.mxu0 %v5255
    %5273 = vmatmul.f32.gmra.mxu0 %v5252
    %v5274 = vpop.f32.mrf.mxu0
    %v5275 = vadd.f32 0.0, %v5274
    %5276 = vdwg.mxu0
    %v5277 = vmul.f32 %v5093, 0.35355338
    %v5278 = vmul.f32 %v5119, 0.35355338
    %v5279 = vmul.f32 %v5145, 0.35355338
    %v5280 = vmul.f32 %v5171, 0.35355338
    %v5281 = vmul.f32 %v5197, 0.35355338
    %v5282 = vmul.f32 %v5223, 0.35355338
    %v5283 = vmul.f32 %v5249, 0.35355338
    %v5284 = vmul.f32 %v5275, 0.35355338
    %v5285 = vadd.f32 %v5277, %v534
    %v5286 = vadd.f32 %v5278, %v535
    %v5287 = vadd.f32 %v5279, %v536
    %v5288 = vadd.f32 %v5280, %v537
    %v5289 = vadd.f32 %v5281, %v538
    %v5290 = vadd.f32 %v5282, %v539
    %v5291 = vadd.f32 %v5283, %v540
    %v5292 = vadd.f32 %v5284, %v541
    %v5293 = vsel %vm317, %v5285, -inf
    %5294 = vmax.xlane.f32.xlu0 %v5293
    %v5295 = vpop.xlane.xlu0 %5294
    %v5296 = vsel %vm317, %v5286, -inf
    %5297 = vmax.xlane.f32.xlu0 %v5296
    %v5298 = vpop.xlane.xlu0 %5297
    %v5299 = vsel %vm317, %v5287, -inf
    %5300 = vmax.xlane.f32.xlu0 %v5299
    %v5301 = vpop.xlane.xlu0 %5300
    %v5302 = vsel %vm317, %v5288, -inf
    %5303 = vmax.xlane.f32.xlu0 %v5302
    %v5304 = vpop.xlane.xlu0 %5303
    %v5305 = vsel %vm317, %v5289, -inf
    %5306 = vmax.xlane.f32.xlu0 %v5305
    %v5307 = vpop.xlane.xlu0 %5306
    %v5308 = vsel %vm317, %v5290, -inf
    %5309 = vmax.xlane.f32.xlu0 %v5308
    %v5310 = vpop.xlane.xlu0 %5309
    %v5311 = vsel %vm317, %v5291, -inf
    %5312 = vmax.xlane.f32.xlu0 %v5311
    %v5313 = vpop.xlane.xlu0 %5312
    %v5314 = vsel %vm317, %v5292, -inf
    %5315 = vmax.xlane.f32.xlu0 %v5314
    %v5316 = vpop.xlane.xlu0 %5315
    %v5317 = vsub.f32 %v5285, %v5295
    %v5318 = vsub.f32 %v5286, %v5298
    %v5319 = vsub.f32 %v5287, %v5301
    %v5320 = vsub.f32 %v5288, %v5304
    %v5321 = vsub.f32 %v5289, %v5307
    %v5322 = vsub.f32 %v5290, %v5310
    %v5323 = vsub.f32 %v5291, %v5313
    %v5324 = vsub.f32 %v5292, %v5316
    %v5325 = vmul.f32 %v5317, 1.442695
    %v5326 = vpow.pop %v5325
    %v5327 = vmul.f32 %v5318, 1.442695
    %v5328 = vpow.pop %v5327
    %v5329 = vmul.f32 %v5319, 1.442695
    %v5330 = vpow.pop %v5329
    %v5331 = vmul.f32 %v5320, 1.442695
    %v5332 = vpow.pop %v5331
    %v5333 = vmul.f32 %v5321, 1.442695
    %v5334 = vpow.pop %v5333
    %v5335 = vmul.f32 %v5322, 1.442695
    %v5336 = vpow.pop %v5335
    %v5337 = vmul.f32 %v5323, 1.442695
    %v5338 = vpow.pop %v5337
    %v5339 = vmul.f32 %v5324, 1.442695
    %v5340 = vpow.pop %v5339
    %v5341 = vsel %vm317, %v5326, 0.0
    %5342 = vadd.xlane.f32.xlu0 %v5341
    %v5343 = vpop.xlane.xlu0 %5342
    %v5344 = vsel %vm317, %v5328, 0.0
    %5345 = vadd.xlane.f32.xlu0 %v5344
    %v5346 = vpop.xlane.xlu0 %5345
    %v5347 = vsel %vm317, %v5330, 0.0
    %5348 = vadd.xlane.f32.xlu0 %v5347
    %v5349 = vpop.xlane.xlu0 %5348
    %v5350 = vsel %vm317, %v5332, 0.0
    %5351 = vadd.xlane.f32.xlu0 %v5350
    %v5352 = vpop.xlane.xlu0 %5351
    %v5353 = vsel %vm317, %v5334, 0.0
    %5354 = vadd.xlane.f32.xlu0 %v5353
    %v5355 = vpop.xlane.xlu0 %5354
    %v5356 = vsel %vm317, %v5336, 0.0
    %5357 = vadd.xlane.f32.xlu0 %v5356
    %v5358 = vpop.xlane.xlu0 %5357
    %v5359 = vsel %vm317, %v5338, 0.0
    %5360 = vadd.xlane.f32.xlu0 %v5359
    %v5361 = vpop.xlane.xlu0 %5360
    %v5362 = vsel %vm317, %v5340, 0.0
    %5363 = vadd.xlane.f32.xlu0 %v5362
    %v5364 = vpop.xlane.xlu0 %5363
    %v5365 = vrcp.pop %v5343
    %v5366 = vmul.f32 %v5343, %v5365
    %v5367 = vsub.f32 1.0, %v5366
    %v5368 = vmul.f32 %v5365, %v5367
    %v5369 = vadd.f32 %v5365, %v5368
    %vm5370 = vweird.f32 %v5343
    %vm5371 = vweird.f32 %v5365
    %vm5372 = vmor %vm5370, %vm5371
    %v5373 = vsel %vm5372, %v5365, %v5369
    %v5374 = vand.u32 2147483647, %v5343
    %vm5375 = vcmp.eq.f32.partialorder %v5374, 8.507059e+37
    %v5376 = vand.u32 %v5343, 2147483648
    %v5377 = vor.u32 1.1754944e-38, %v5376
    %v5378 = vsel %vm5375, %v5377, %v5373
    %v5379 = vmul.f32 %v5326, %v5378
    %v5380 = vrcp.pop %v5346
    %v5381 = vmul.f32 %v5346, %v5380
    %v5382 = vsub.f32 1.0, %v5381
    %v5383 = vmul.f32 %v5380, %v5382
    %v5384 = vadd.f32 %v5380, %v5383
    %vm5385 = vweird.f32 %v5346
    %vm5386 = vweird.f32 %v5380
    %vm5387 = vmor %vm5385, %vm5386
    %v5388 = vsel %vm5387, %v5380, %v5384
    %v5389 = vand.u32 2147483647, %v5346
    %vm5390 = vcmp.eq.f32.partialorder %v5389, 8.507059e+37
    %v5391 = vand.u32 %v5346, 2147483648
    %v5392 = vor.u32 1.1754944e-38, %v5391
    %v5393 = vsel %vm5390, %v5392, %v5388
    %v5394 = vmul.f32 %v5328, %v5393
    %v5395 = vrcp.pop %v5349
    %v5396 = vmul.f32 %v5349, %v5395
    %v5397 = vsub.f32 1.0, %v5396
    %v5398 = vmul.f32 %v5395, %v5397
    %v5399 = vadd.f32 %v5395, %v5398
    %vm5400 = vweird.f32 %v5349
    %vm5401 = vweird.f32 %v5395
    %vm5402 = vmor %vm5400, %vm5401
    %v5403 = vsel %vm5402, %v5395, %v5399
    %v5404 = vand.u32 2147483647, %v5349
    %vm5405 = vcmp.eq.f32.partialorder %v5404, 8.507059e+37
    %v5406 = vand.u32 %v5349, 2147483648
    %v5407 = vor.u32 1.1754944e-38, %v5406
    %v5408 = vsel %vm5405, %v5407, %v5403
    %v5409 = vmul.f32 %v5330, %v5408
    %v5410 = vrcp.pop %v5352
    %v5411 = vmul.f32 %v5352, %v5410
    %v5412 = vsub.f32 1.0, %v5411
    %v5413 = vmul.f32 %v5410, %v5412
    %v5414 = vadd.f32 %v5410, %v5413
    %vm5415 = vweird.f32 %v5352
    %vm5416 = vweird.f32 %v5410
    %vm5417 = vmor %vm5415, %vm5416
    %v5418 = vsel %vm5417, %v5410, %v5414
    %v5419 = vand.u32 2147483647, %v5352
    %vm5420 = vcmp.eq.f32.partialorder %v5419, 8.507059e+37
    %v5421 = vand.u32 %v5352, 2147483648
    %v5422 = vor.u32 1.1754944e-38, %v5421
    %v5423 = vsel %vm5420, %v5422, %v5418
    %v5424 = vmul.f32 %v5332, %v5423
    %v5425 = vrcp.pop %v5355
    %v5426 = vmul.f32 %v5355, %v5425
    %v5427 = vsub.f32 1.0, %v5426
    %v5428 = vmul.f32 %v5425, %v5427
    %v5429 = vadd.f32 %v5425, %v5428
    %vm5430 = vweird.f32 %v5355
    %vm5431 = vweird.f32 %v5425
    %vm5432 = vmor %vm5430, %vm5431
    %v5433 = vsel %vm5432, %v5425, %v5429
    %v5434 = vand.u32 2147483647, %v5355
    %vm5435 = vcmp.eq.f32.partialorder %v5434, 8.507059e+37
    %v5436 = vand.u32 %v5355, 2147483648
    %v5437 = vor.u32 1.1754944e-38, %v5436
    %v5438 = vsel %vm5435, %v5437, %v5433
    %v5439 = vmul.f32 %v5334, %v5438
    %v5440 = vrcp.pop %v5358
    %v5441 = vmul.f32 %v5358, %v5440
    %v5442 = vsub.f32 1.0, %v5441
    %v5443 = vmul.f32 %v5440, %v5442
    %v5444 = vadd.f32 %v5440, %v5443
    %vm5445 = vweird.f32 %v5358
    %vm5446 = vweird.f32 %v5440
    %vm5447 = vmor %vm5445, %vm5446
    %v5448 = vsel %vm5447, %v5440, %v5444
    %v5449 = vand.u32 2147483647, %v5358
    %vm5450 = vcmp.eq.f32.partialorder %v5449, 8.507059e+37
    %v5451 = vand.u32 %v5358, 2147483648
    %v5452 = vor.u32 1.1754944e-38, %v5451
    %v5453 = vsel %vm5450, %v5452, %v5448
    %v5454 = vmul.f32 %v5336, %v5453
    %v5455 = vrcp.pop %v5361
    %v5456 = vmul.f32 %v5361, %v5455
    %v5457 = vsub.f32 1.0, %v5456
    %v5458 = vmul.f32 %v5455, %v5457
    %v5459 = vadd.f32 %v5455, %v5458
    %vm5460 = vweird.f32 %v5361
    %vm5461 = vweird.f32 %v5455
    %vm5462 = vmor %vm5460, %vm5461
    %v5463 = vsel %vm5462, %v5455, %v5459
    %v5464 = vand.u32 2147483647, %v5361
    %vm5465 = vcmp.eq.f32.partialorder %v5464, 8.507059e+37
    %v5466 = vand.u32 %v5361, 2147483648
    %v5467 = vor.u32 1.1754944e-38, %v5466
    %v5468 = vsel %vm5465, %v5467, %v5463
    %v5469 = vmul.f32 %v5338, %v5468
    %v5470 = vrcp.pop %v5364
    %v5471 = vmul.f32 %v5364, %v5470
    %v5472 = vsub.f32 1.0, %v5471
    %v5473 = vmul.f32 %v5470, %v5472
    %v5474 = vadd.f32 %v5470, %v5473
    %vm5475 = vweird.f32 %v5364
    %vm5476 = vweird.f32 %v5470
    %vm5477 = vmor %vm5475, %vm5476
    %v5478 = vsel %vm5477, %v5470, %v5474
    %v5479 = vand.u32 2147483647, %v5364
    %vm5480 = vcmp.eq.f32.partialorder %v5479, 8.507059e+37
    %v5481 = vand.u32 %v5364, 2147483648
    %v5482 = vor.u32 1.1754944e-38, %v5481
    %v5483 = vsel %vm5480, %v5482, %v5478
    %v5484 = vmul.f32 %v5340, %v5483
    %v5486 = vsel %vm317, %v5379, 0
    %5488 = vmatpush.msra.mxu0 0.0
    %5489 = vmatpush.msra.mxu0 0.0
    %5490 = vmatpush.msra.mxu0 0.0
    %5491 = vmatpush.msra.mxu0 0.0
    %5492 = vmatpush.msra.mxu0 0.0
    %5493 = vmatpush.msra.mxu0 0.0
    %5494 = vmatpush.msra.mxu0 0.0
    %5495 = vmatpush.msra.mxu0 0.0
    %5496 = vmatpush.msra.mxu0 0.0
    %5497 = vmatpush.msra.mxu0 0.0
    %5498 = vmatpush.msra.mxu0 0.0
    %5499 = vmatpush.msra.mxu0 0.0
    %5500 = vmatpush.msra.mxu0 0.0
    %5501 = vmatpush.msra.mxu0 0.0
    %5502 = vmatpush.msra.mxu0 0.0
    %5503 = vmatpush.msra.mxu0 %v5046
    %5504 = vmatmul.f32.gmra.mxu0 %v5486
    %v5505 = vpop.f32.mrf.mxu0
    %v5506 = vadd.f32 0.0, %v5505
    %5507 = vdwg.mxu0
    %v5509 = vsel %vm317, %v5394, 0
    %5511 = vmatpush.msra.mxu0 0.0
    %5512 = vmatpush.msra.mxu0 0.0
    %5513 = vmatpush.msra.mxu0 0.0
    %5514 = vmatpush.msra.mxu0 0.0
    %5515 = vmatpush.msra.mxu0 0.0
    %5516 = vmatpush.msra.mxu0 0.0
    %5517 = vmatpush.msra.mxu0 0.0
    %5518 = vmatpush.msra.mxu0 0.0
    %5519 = vmatpush.msra.mxu0 0.0
    %5520 = vmatpush.msra.mxu0 0.0
    %5521 = vmatpush.msra.mxu0 0.0
    %5522 = vmatpush.msra.mxu0 0.0
    %5523 = vmatpush.msra.mxu0 0.0
    %5524 = vmatpush.msra.mxu0 0.0
    %5525 = vmatpush.msra.mxu0 0.0
    %5526 = vmatpush.msra.mxu0 %v5049
    %5527 = vmatmul.f32.gmra.mxu0 %v5509
    %v5528 = vpop.f32.mrf.mxu0
    %v5529 = vadd.f32 0.0, %v5528
    %5530 = vdwg.mxu0
    %v5532 = vsel %vm317, %v5409, 0
    %5534 = vmatpush.msra.mxu0 0.0
    %5535 = vmatpush.msra.mxu0 0.0
    %5536 = vmatpush.msra.mxu0 0.0
    %5537 = vmatpush.msra.mxu0 0.0
    %5538 = vmatpush.msra.mxu0 0.0
    %5539 = vmatpush.msra.mxu0 0.0
    %5540 = vmatpush.msra.mxu0 0.0
    %5541 = vmatpush.msra.mxu0 0.0
    %5542 = vmatpush.msra.mxu0 0.0
    %5543 = vmatpush.msra.mxu0 0.0
    %5544 = vmatpush.msra.mxu0 0.0
    %5545 = vmatpush.msra.mxu0 0.0
    %5546 = vmatpush.msra.mxu0 0.0
    %5547 = vmatpush.msra.mxu0 0.0
    %5548 = vmatpush.msra.mxu0 0.0
    %5549 = vmatpush.msra.mxu0 %v5052
    %5550 = vmatmul.f32.gmra.mxu0 %v5532
    %v5551 = vpop.f32.mrf.mxu0
    %v5552 = vadd.f32 0.0, %v5551
    %5553 = vdwg.mxu0
    %v5555 = vsel %vm317, %v5424, 0
    %5557 = vmatpush.msra.mxu0 0.0
    %5558 = vmatpush.msra.mxu0 0.0
    %5559 = vmatpush.msra.mxu0 0.0
    %5560 = vmatpush.msra.mxu0 0.0
    %5561 = vmatpush.msra.mxu0 0.0
    %5562 = vmatpush.msra.mxu0 0.0
    %5563 = vmatpush.msra.mxu0 0.0
    %5564 = vmatpush.msra.mxu0 0.0
    %5565 = vmatpush.msra.mxu0 0.0
    %5566 = vmatpush.msra.mxu0 0.0
    %5567 = vmatpush.msra.mxu0 0.0
    %5568 = vmatpush.msra.mxu0 0.0
    %5569 = vmatpush.msra.mxu0 0.0
    %5570 = vmatpush.msra.mxu0 0.0
    %5571 = vmatpush.msra.mxu0 0.0
    %5572 = vmatpush.msra.mxu0 %v5055
    %5573 = vmatmul.f32.gmra.mxu0 %v5555
    %v5574 = vpop.f32.mrf.mxu0
    %v5575 = vadd.f32 0.0, %v5574
    %5576 = vdwg.mxu0
    %v5578 = vsel %vm317, %v5439, 0
    %5580 = vmatpush.msra.mxu0 0.0
    %5581 = vmatpush.msra.mxu0 0.0
    %5582 = vmatpush.msra.mxu0 0.0
    %5583 = vmatpush.msra.mxu0 0.0
    %5584 = vmatpush.msra.mxu0 0.0
    %5585 = vmatpush.msra.mxu0 0.0
    %5586 = vmatpush.msra.mxu0 0.0
    %5587 = vmatpush.msra.mxu0 0.0
    %5588 = vmatpush.msra.mxu0 0.0
    %5589 = vmatpush.msra.mxu0 0.0
    %5590 = vmatpush.msra.mxu0 0.0
    %5591 = vmatpush.msra.mxu0 0.0
    %5592 = vmatpush.msra.mxu0 0.0
    %5593 = vmatpush.msra.mxu0 0.0
    %5594 = vmatpush.msra.mxu0 0.0
    %5595 = vmatpush.msra.mxu0 %v5058
    %5596 = vmatmul.f32.gmra.mxu0 %v5578
    %v5597 = vpop.f32.mrf.mxu0
    %v5598 = vadd.f32 0.0, %v5597
    %5599 = vdwg.mxu0
    %v5601 = vsel %vm317, %v5454, 0
    %5603 = vmatpush.msra.mxu0 0.0
    %5604 = vmatpush.msra.mxu0 0.0
    %5605 = vmatpush.msra.mxu0 0.0
    %5606 = vmatpush.msra.mxu0 0.0
    %5607 = vmatpush.msra.mxu0 0.0
    %5608 = vmatpush.msra.mxu0 0.0
    %5609 = vmatpush.msra.mxu0 0.0
    %5610 = vmatpush.msra.mxu0 0.0
    %5611 = vmatpush.msra.mxu0 0.0
    %5612 = vmatpush.msra.mxu0 0.0
    %5613 = vmatpush.msra.mxu0 0.0
    %5614 = vmatpush.msra.mxu0 0.0
    %5615 = vmatpush.msra.mxu0 0.0
    %5616 = vmatpush.msra.mxu0 0.0
    %5617 = vmatpush.msra.mxu0 0.0
    %5618 = vmatpush.msra.mxu0 %v5061
    %5619 = vmatmul.f32.gmra.mxu0 %v5601
    %v5620 = vpop.f32.mrf.mxu0
    %v5621 = vadd.f32 0.0, %v5620
    %5622 = vdwg.mxu0
    %v5624 = vsel %vm317, %v5469, 0
    %5626 = vmatpush.msra.mxu0 0.0
    %5627 = vmatpush.msra.mxu0 0.0
    %5628 = vmatpush.msra.mxu0 0.0
    %5629 = vmatpush.msra.mxu0 0.0
    %5630 = vmatpush.msra.mxu0 0.0
    %5631 = vmatpush.msra.mxu0 0.0
    %5632 = vmatpush.msra.mxu0 0.0
    %5633 = vmatpush.msra.mxu0 0.0
    %5634 = vmatpush.msra.mxu0 0.0
    %5635 = vmatpush.msra.mxu0 0.0
    %5636 = vmatpush.msra.mxu0 0.0
    %5637 = vmatpush.msra.mxu0 0.0
    %5638 = vmatpush.msra.mxu0 0.0
    %5639 = vmatpush.msra.mxu0 0.0
    %5640 = vmatpush.msra.mxu0 0.0
    %5641 = vmatpush.msra.mxu0 %v5064
    %5642 = vmatmul.f32.gmra.mxu0 %v5624
    %v5643 = vpop.f32.mrf.mxu0
    %v5644 = vadd.f32 0.0, %v5643
    %5645 = vdwg.mxu0
    %v5647 = vsel %vm317, %v5484, 0
    %5649 = vmatpush.msra.mxu0 0.0
    %5650 = vmatpush.msra.mxu0 0.0
    %5651 = vmatpush.msra.mxu0 0.0
    %5652 = vmatpush.msra.mxu0 0.0
    %5653 = vmatpush.msra.mxu0 0.0
    %5654 = vmatpush.msra.mxu0 0.0
    %5655 = vmatpush.msra.mxu0 0.0
    %5656 = vmatpush.msra.mxu0 0.0
    %5657 = vmatpush.msra.mxu0 0.0
    %5658 = vmatpush.msra.mxu0 0.0
    %5659 = vmatpush.msra.mxu0 0.0
    %5660 = vmatpush.msra.mxu0 0.0
    %5661 = vmatpush.msra.mxu0 0.0
    %5662 = vmatpush.msra.mxu0 0.0
    %5663 = vmatpush.msra.mxu0 0.0
    %5664 = vmatpush.msra.mxu0 %v5067
    %5665 = vmatmul.f32.gmra.mxu0 %v5647
    %v5666 = vpop.f32.mrf.mxu0
    %v5667 = vadd.f32 0.0, %v5666
    %5668 = vdwg.mxu0
    %s5669 = scalar_lea.vmem %s6, 40
    %v5670 = vld [vmem:[%s5669] sm:$0xff]
    %v5672 = vsel %vm317, %v5506, 0
    %v5675 = vsel %vm317, %v5529, 0
    %v5678 = vsel %vm317, %v5552, 0
    %v5681 = vsel %vm317, %v5575, 0
    %v5684 = vsel %vm317, %v5598, 0
    %v5687 = vsel %vm317, %v5621, 0
    %v5690 = vsel %vm317, %v5644, 0
    %v5693 = vsel %vm317, %v5667, 0
    %5695 = vmatpush.msra.mxu0 0.0
    %5696 = vmatpush.msra.mxu0 0.0
    %5697 = vmatpush.msra.mxu0 0.0
    %5698 = vmatpush.msra.mxu0 0.0
    %5699 = vmatpush.msra.mxu0 0.0
    %5700 = vmatpush.msra.mxu0 0.0
    %5701 = vmatpush.msra.mxu0 0.0
    %5702 = vmatpush.msra.mxu0 0.0
    %5703 = vmatpush.msra.mxu0 0.0
    %5704 = vmatpush.msra.mxu0 0.0
    %5705 = vmatpush.msra.mxu0 0.0
    %5706 = vmatpush.msra.mxu0 0.0
    %5707 = vmatpush.msra.mxu0 0.0
    %5708 = vmatpush.msra.mxu0 0.0
    %5709 = vmatpush.msra.mxu0 0.0
    %5710 = vmatpush.msra.mxu0 %v5670
    %5711 = vmatmul.f32.gmra.mxu0 %v5672
    %v5712 = vpop.f32.mrf.mxu0
    %v5713 = vadd.f32 0.0, %v5712
    %5714 = vmatmul.f32.gmra.mxu0 %v5675
    %v5715 = vpop.f32.mrf.mxu0
    %v5716 = vadd.f32 0.0, %v5715
    %5717 = vmatmul.f32.gmra.mxu0 %v5678
    %v5718 = vpop.f32.mrf.mxu0
    %v5719 = vadd.f32 0.0, %v5718
    %5720 = vmatmul.f32.gmra.mxu0 %v5681
    %v5721 = vpop.f32.mrf.mxu0
    %v5722 = vadd.f32 0.0, %v5721
    %5723 = vmatmul.f32.gmra.mxu0 %v5684
    %v5724 = vpop.f32.mrf.mxu0
    %v5725 = vadd.f32 0.0, %v5724
    %5726 = vmatmul.f32.gmra.mxu0 %v5687
    %v5727 = vpop.f32.mrf.mxu0
    %v5728 = vadd.f32 0.0, %v5727
    %5729 = vmatmul.f32.gmra.mxu0 %v5690
    %v5730 = vpop.f32.mrf.mxu0
    %v5731 = vadd.f32 0.0, %v5730
    %5732 = vmatmul.f32.gmra.mxu0 %v5693
    %v5733 = vpop.f32.mrf.mxu0
    %v5734 = vadd.f32 0.0, %v5733
    %5735 = vdwg.mxu0
    %v5737 = vsel %vm317, %v4751, 0
    %v5740 = vsel %vm317, %v4774, 0
    %v5743 = vsel %vm317, %v4797, 0
    %v5746 = vsel %vm317, %v4820, 0
    %v5749 = vsel %vm317, %v4843, 0
    %v5752 = vsel %vm317, %v4866, 0
    %v5755 = vsel %vm317, %v4889, 0
    %v5758 = vsel %vm317, %v4912, 0
    %5760 = vmatpush.msra.mxu0 0.0
    %5761 = vmatpush.msra.mxu0 0.0
    %5762 = vmatpush.msra.mxu0 0.0
    %5763 = vmatpush.msra.mxu0 0.0
    %5764 = vmatpush.msra.mxu0 0.0
    %5765 = vmatpush.msra.mxu0 0.0
    %5766 = vmatpush.msra.mxu0 0.0
    %5767 = vmatpush.msra.mxu0 0.0
    %5768 = vmatpush.msra.mxu0 0.0
    %5769 = vmatpush.msra.mxu0 0.0
    %5770 = vmatpush.msra.mxu0 0.0
    %5771 = vmatpush.msra.mxu0 0.0
    %5772 = vmatpush.msra.mxu0 0.0
    %5773 = vmatpush.msra.mxu0 0.0
    %5774 = vmatpush.msra.mxu0 0.0
    %5775 = vmatpush.msra.mxu0 %v4915
    %5776 = vmatmul.f32.gmra.mxu0 %v5737
    %v5777 = vpop.f32.mrf.mxu0
    %v5778 = vadd.f32 %v5713, %v5777
    %5779 = vmatmul.f32.gmra.mxu0 %v5740
    %v5780 = vpop.f32.mrf.mxu0
    %v5781 = vadd.f32 %v5716, %v5780
    %5782 = vmatmul.f32.gmra.mxu0 %v5743
    %v5783 = vpop.f32.mrf.mxu0
    %v5784 = vadd.f32 %v5719, %v5783
    %5785 = vmatmul.f32.gmra.mxu0 %v5746
    %v5786 = vpop.f32.mrf.mxu0
    %v5787 = vadd.f32 %v5722, %v5786
    %5788 = vmatmul.f32.gmra.mxu0 %v5749
    %v5789 = vpop.f32.mrf.mxu0
    %v5790 = vadd.f32 %v5725, %v5789
    %5791 = vmatmul.f32.gmra.mxu0 %v5752
    %v5792 = vpop.f32.mrf.mxu0
    %v5793 = vadd.f32 %v5728, %v5792
    %5794 = vmatmul.f32.gmra.mxu0 %v5755
    %v5795 = vpop.f32.mrf.mxu0
    %v5796 = vadd.f32 %v5731, %v5795
    %5797 = vmatmul.f32.gmra.mxu0 %v5758
    %v5798 = vpop.f32.mrf.mxu0
    %v5799 = vadd.f32 %v5734, %v5798
    %5800 = vdwg.mxu0
    %s5801 = scalar_lea.vmem %s4, 448
    %v5802 = vld [vmem:[%s5801] sm:$0xff]
    %v5803 = vld [vmem:[%s5801 + $0x8] sm:$0xff]
    %v5804 = vld [vmem:[%s5801 + $0x10] sm:$0xff]
    %v5805 = vld [vmem:[%s5801 + $0x18] sm:$0xff]
    %s5806 = scalar_lea.vmem %s5, 14
    %v5807 = vld [vmem:[%s5806] sm:$0x1]
    %v5809 = vperm.slane %v5807, 0
    %5811 = vmatpush.msra.mxu0 0.0
    %5812 = vmatpush.msra.mxu0 0.0
    %5813 = vmatpush.msra.mxu0 0.0
    %5814 = vmatpush.msra.mxu0 0.0
    %5815 = vmatpush.msra.mxu0 0.0
    %5816 = vmatpush.msra.mxu0 0.0
    %5817 = vmatpush.msra.mxu0 0.0
    %5818 = vmatpush.msra.mxu0 0.0
    %5819 = vmatpush.msra.mxu0 0.0
    %5820 = vmatpush.msra.mxu0 0.0
    %5821 = vmatpush.msra.mxu0 0.0
    %5822 = vmatpush.msra.mxu0 0.0
    %5823 = vmatpush.msra.mxu0 %v5805
    %5824 = vmatpush.msra.mxu0 %v5804
    %5825 = vmatpush.msra.mxu0 %v5803
    %5826 = vmatpush.msra.mxu0 %v5802
    %5827 = vmatmul.f32.gmra.mxu0 %v4148
    %v5828 = vpop.f32.mrf.mxu0
    %v5829 = vadd.f32 %v5809, %v5828
    %5830 = vmatmul.f32.gmra.mxu0 %v4151
    %v5831 = vpop.f32.mrf.mxu0
    %v5832 = vadd.f32 %v5809, %v5831
    %5833 = vmatmul.f32.gmra.mxu0 %v4154
    %v5834 = vpop.f32.mrf.mxu0
    %v5835 = vadd.f32 %v5809, %v5834
    %5836 = vmatmul.f32.gmra.mxu0 %v4157
    %v5837 = vpop.f32.mrf.mxu0
    %v5838 = vadd.f32 %v5809, %v5837
    %5839 = vmatmul.f32.gmra.mxu0 %v4160
    %v5840 = vpop.f32.mrf.mxu0
    %v5841 = vadd.f32 %v5809, %v5840
    %5842 = vmatmul.f32.gmra.mxu0 %v4163
    %v5843 = vpop.f32.mrf.mxu0
    %v5844 = vadd.f32 %v5809, %v5843
    %5845 = vmatmul.f32.gmra.mxu0 %v4166
    %v5846 = vpop.f32.mrf.mxu0
    %v5847 = vadd.f32 %v5809, %v5846
    %5848 = vmatmul.f32.gmra.mxu0 %v4169
    %v5849 = vpop.f32.mrf.mxu0
    %v5850 = vadd.f32 %v5809, %v5849
    %5851 = vdwg.mxu0
    %s5852 = scalar_lea.vmem %s4, 576
    %v5853 = vld [vmem:[%s5852] sm:$0xff]
    %v5854 = vld [vmem:[%s5852 + $0x8] sm:$0xff]
    %v5855 = vld [vmem:[%s5852 + $0x10] sm:$0xff]
    %v5856 = vld [vmem:[%s5852 + $0x18] sm:$0xff]
    %s5857 = scalar_lea.vmem %s5, 18
    %v5858 = vld [vmem:[%s5857] sm:$0x1]
    %v5860 = vperm.slane %v5858, 0
    %5862 = vmatpush.msra.mxu0 0.0
    %5863 = vmatpush.msra.mxu0 0.0
    %5864 = vmatpush.msra.mxu0 0.0
    %5865 = vmatpush.msra.mxu0 0.0
    %5866 = vmatpush.msra.mxu0 0.0
    %5867 = vmatpush.msra.mxu0 0.0
    %5868 = vmatpush.msra.mxu0 0.0
    %5869 = vmatpush.msra.mxu0 0.0
    %5870 = vmatpush.msra.mxu0 0.0
    %5871 = vmatpush.msra.mxu0 0.0
    %5872 = vmatpush.msra.mxu0 0.0
    %5873 = vmatpush.msra.mxu0 0.0
    %5874 = vmatpush.msra.mxu0 %v5856
    %5875 = vmatpush.msra.mxu0 %v5855
    %5876 = vmatpush.msra.mxu0 %v5854
    %5877 = vmatpush.msra.mxu0 %v5853
    %5878 = vmatmul.f32.gmra.mxu0 %v4148
    %v5879 = vpop.f32.mrf.mxu0
    %v5880 = vadd.f32 %v5860, %v5879
    %5881 = vmatmul.f32.gmra.mxu0 %v4151
    %v5882 = vpop.f32.mrf.mxu0
    %v5883 = vadd.f32 %v5860, %v5882
    %5884 = vmatmul.f32.gmra.mxu0 %v4154
    %v5885 = vpop.f32.mrf.mxu0
    %v5886 = vadd.f32 %v5860, %v5885
    %5887 = vmatmul.f32.gmra.mxu0 %v4157
    %v5888 = vpop.f32.mrf.mxu0
    %v5889 = vadd.f32 %v5860, %v5888
    %5890 = vmatmul.f32.gmra.mxu0 %v4160
    %v5891 = vpop.f32.mrf.mxu0
    %v5892 = vadd.f32 %v5860, %v5891
    %5893 = vmatmul.f32.gmra.mxu0 %v4163
    %v5894 = vpop.f32.mrf.mxu0
    %v5895 = vadd.f32 %v5860, %v5894
    %5896 = vmatmul.f32.gmra.mxu0 %v4166
    %v5897 = vpop.f32.mrf.mxu0
    %v5898 = vadd.f32 %v5860, %v5897
    %5899 = vmatmul.f32.gmra.mxu0 %v4169
    %v5900 = vpop.f32.mrf.mxu0
    %v5901 = vadd.f32 %v5860, %v5900
    %5902 = vdwg.mxu0
    %s5903 = scalar_lea.vmem %s4, 704
    %v5904 = vld [vmem:[%s5903] sm:$0xff]
    %v5905 = vld [vmem:[%s5903 + $0x8] sm:$0xff]
    %v5906 = vld [vmem:[%s5903 + $0x10] sm:$0xff]
    %v5907 = vld [vmem:[%s5903 + $0x18] sm:$0xff]
    %s5908 = scalar_lea.vmem %s5, 22
    %v5909 = vld [vmem:[%s5908] sm:$0x1]
    %v5911 = vperm.slane %v5909, 0
    %5913 = vmatpush.msra.mxu0 0.0
    %5914 = vmatpush.msra.mxu0 0.0
    %5915 = vmatpush.msra.mxu0 0.0
    %5916 = vmatpush.msra.mxu0 0.0
    %5917 = vmatpush.msra.mxu0 0.0
    %5918 = vmatpush.msra.mxu0 0.0
    %5919 = vmatpush.msra.mxu0 0.0
    %5920 = vmatpush.msra.mxu0 0.0
    %5921 = vmatpush.msra.mxu0 0.0
    %5922 = vmatpush.msra.mxu0 0.0
    %5923 = vmatpush.msra.mxu0 0.0
    %5924 = vmatpush.msra.mxu0 0.0
    %5925 = vmatpush.msra.mxu0 %v5907
    %5926 = vmatpush.msra.mxu0 %v5906
    %5927 = vmatpush.msra.mxu0 %v5905
    %5928 = vmatpush.msra.mxu0 %v5904
    %5929 = vmatmul.f32.gmra.mxu0 %v4148
    %v5930 = vpop.f32.mrf.mxu0
    %v5931 = vadd.f32 %v5911, %v5930
    %5932 = vmatmul.f32.gmra.mxu0 %v4151
    %v5933 = vpop.f32.mrf.mxu0
    %v5934 = vadd.f32 %v5911, %v5933
    %5935 = vmatmul.f32.gmra.mxu0 %v4154
    %v5936 = vpop.f32.mrf.mxu0
    %v5937 = vadd.f32 %v5911, %v5936
    %5938 = vmatmul.f32.gmra.mxu0 %v4157
    %v5939 = vpop.f32.mrf.mxu0
    %v5940 = vadd.f32 %v5911, %v5939
    %5941 = vmatmul.f32.gmra.mxu0 %v4160
    %v5942 = vpop.f32.mrf.mxu0
    %v5943 = vadd.f32 %v5911, %v5942
    %5944 = vmatmul.f32.gmra.mxu0 %v4163
    %v5945 = vpop.f32.mrf.mxu0
    %v5946 = vadd.f32 %v5911, %v5945
    %5947 = vmatmul.f32.gmra.mxu0 %v4166
    %v5948 = vpop.f32.mrf.mxu0
    %v5949 = vadd.f32 %v5911, %v5948
    %5950 = vmatmul.f32.gmra.mxu0 %v4169
    %v5951 = vpop.f32.mrf.mxu0
    %v5952 = vadd.f32 %v5911, %v5951
    %5953 = vdwg.mxu0
    %v5955 = vsel %vm317, %v5829, 0
    %v5958 = vsel %vm317, %v5880, 0
    %5960 = vmatpush.xpose.msra.mxu0 0.0
    %5961 = vmatpush.xpose.msra.mxu0 0.0
    %5962 = vmatpush.xpose.msra.mxu0 0.0
    %5963 = vmatpush.xpose.msra.mxu0 0.0
    %5964 = vmatpush.xpose.msra.mxu0 0.0
    %5965 = vmatpush.xpose.msra.mxu0 0.0
    %5966 = vmatpush.xpose.msra.mxu0 0.0
    %5967 = vmatpush.xpose.msra.mxu0 0.0
    %5968 = vmatpush.xpose.msra.mxu0 0.0
    %5969 = vmatpush.xpose.msra.mxu0 0.0
    %5970 = vmatpush.xpose.msra.mxu0 0.0
    %5971 = vmatpush.xpose.msra.mxu0 0.0
    %5972 = vmatpush.xpose.msra.mxu0 0.0
    %5973 = vmatpush.xpose.msra.mxu0 0.0
    %5974 = vmatpush.xpose.msra.mxu0 0.0
    %5975 = vmatpush.xpose.msra.mxu0 %v5958
    %5976 = vmatmul.f32.gmra.mxu0 %v5955
    %v5977 = vpop.f32.mrf.mxu0
    %v5978 = vadd.f32 0.0, %v5977
    %5979 = vdwg.mxu0
    %v5981 = vsel %vm317, %v5832, 0
    %v5984 = vsel %vm317, %v5883, 0
    %5986 = vmatpush.xpose.msra.mxu0 0.0
    %5987 = vmatpush.xpose.msra.mxu0 0.0
    %5988 = vmatpush.xpose.msra.mxu0 0.0
    %5989 = vmatpush.xpose.msra.mxu0 0.0
    %5990 = vmatpush.xpose.msra.mxu0 0.0
    %5991 = vmatpush.xpose.msra.mxu0 0.0
    %5992 = vmatpush.xpose.msra.mxu0 0.0
    %5993 = vmatpush.xpose.msra.mxu0 0.0
    %5994 = vmatpush.xpose.msra.mxu0 0.0
    %5995 = vmatpush.xpose.msra.mxu0 0.0
    %5996 = vmatpush.xpose.msra.mxu0 0.0
    %5997 = vmatpush.xpose.msra.mxu0 0.0
    %5998 = vmatpush.xpose.msra.mxu0 0.0
    %5999 = vmatpush.xpose.msra.mxu0 0.0
    %6000 = vmatpush.xpose.msra.mxu0 0.0
    %6001 = vmatpush.xpose.msra.mxu0 %v5984
    %6002 = vmatmul.f32.gmra.mxu0 %v5981
    %v6003 = vpop.f32.mrf.mxu0
    %v6004 = vadd.f32 0.0, %v6003
    %6005 = vdwg.mxu0
    %v6007 = vsel %vm317, %v5835, 0
    %v6010 = vsel %vm317, %v5886, 0
    %6012 = vmatpush.xpose.msra.mxu0 0.0
    %6013 = vmatpush.xpose.msra.mxu0 0.0
    %6014 = vmatpush.xpose.msra.mxu0 0.0
    %6015 = vmatpush.xpose.msra.mxu0 0.0
    %6016 = vmatpush.xpose.msra.mxu0 0.0
    %6017 = vmatpush.xpose.msra.mxu0 0.0
    %6018 = vmatpush.xpose.msra.mxu0 0.0
    %6019 = vmatpush.xpose.msra.mxu0 0.0
    %6020 = vmatpush.xpose.msra.mxu0 0.0
    %6021 = vmatpush.xpose.msra.mxu0 0.0
    %6022 = vmatpush.xpose.msra.mxu0 0.0
    %6023 = vmatpush.xpose.msra.mxu0 0.0
    %6024 = vmatpush.xpose.msra.mxu0 0.0
    %6025 = vmatpush.xpose.msra.mxu0 0.0
    %6026 = vmatpush.xpose.msra.mxu0 0.0
    %6027 = vmatpush.xpose.msra.mxu0 %v6010
    %6028 = vmatmul.f32.gmra.mxu0 %v6007
    %v6029 = vpop.f32.mrf.mxu0
    %v6030 = vadd.f32 0.0, %v6029
    %6031 = vdwg.mxu0
    %v6033 = vsel %vm317, %v5838, 0
    %v6036 = vsel %vm317, %v5889, 0
    %6038 = vmatpush.xpose.msra.mxu0 0.0
    %6039 = vmatpush.xpose.msra.mxu0 0.0
    %6040 = vmatpush.xpose.msra.mxu0 0.0
    %6041 = vmatpush.xpose.msra.mxu0 0.0
    %6042 = vmatpush.xpose.msra.mxu0 0.0
    %6043 = vmatpush.xpose.msra.mxu0 0.0
    %6044 = vmatpush.xpose.msra.mxu0 0.0
    %6045 = vmatpush.xpose.msra.mxu0 0.0
    %6046 = vmatpush.xpose.msra.mxu0 0.0
    %6047 = vmatpush.xpose.msra.mxu0 0.0
    %6048 = vmatpush.xpose.msra.mxu0 0.0
    %6049 = vmatpush.xpose.msra.mxu0 0.0
    %6050 = vmatpush.xpose.msra.mxu0 0.0
    %6051 = vmatpush.xpose.msra.mxu0 0.0
    %6052 = vmatpush.xpose.msra.mxu0 0.0
    %6053 = vmatpush.xpose.msra.mxu0 %v6036
    %6054 = vmatmul.f32.gmra.mxu0 %v6033
    %v6055 = vpop.f32.mrf.mxu0
    %v6056 = vadd.f32 0.0, %v6055
    %6057 = vdwg.mxu0
    %v6059 = vsel %vm317, %v5841, 0
    %v6062 = vsel %vm317, %v5892, 0
    %6064 = vmatpush.xpose.msra.mxu0 0.0
    %6065 = vmatpush.xpose.msra.mxu0 0.0
    %6066 = vmatpush.xpose.msra.mxu0 0.0
    %6067 = vmatpush.xpose.msra.mxu0 0.0
    %6068 = vmatpush.xpose.msra.mxu0 0.0
    %6069 = vmatpush.xpose.msra.mxu0 0.0
    %6070 = vmatpush.xpose.msra.mxu0 0.0
    %6071 = vmatpush.xpose.msra.mxu0 0.0
    %6072 = vmatpush.xpose.msra.mxu0 0.0
    %6073 = vmatpush.xpose.msra.mxu0 0.0
    %6074 = vmatpush.xpose.msra.mxu0 0.0
    %6075 = vmatpush.xpose.msra.mxu0 0.0
    %6076 = vmatpush.xpose.msra.mxu0 0.0
    %6077 = vmatpush.xpose.msra.mxu0 0.0
    %6078 = vmatpush.xpose.msra.mxu0 0.0
    %6079 = vmatpush.xpose.msra.mxu0 %v6062
    %6080 = vmatmul.f32.gmra.mxu0 %v6059
    %v6081 = vpop.f32.mrf.mxu0
    %v6082 = vadd.f32 0.0, %v6081
    %6083 = vdwg.mxu0
    %v6085 = vsel %vm317, %v5844, 0
    %v6088 = vsel %vm317, %v5895, 0
    %6090 = vmatpush.xpose.msra.mxu0 0.0
    %6091 = vmatpush.xpose.msra.mxu0 0.0
    %6092 = vmatpush.xpose.msra.mxu0 0.0
    %6093 = vmatpush.xpose.msra.mxu0 0.0
    %6094 = vmatpush.xpose.msra.mxu0 0.0
    %6095 = vmatpush.xpose.msra.mxu0 0.0
    %6096 = vmatpush.xpose.msra.mxu0 0.0
    %6097 = vmatpush.xpose.msra.mxu0 0.0
    %6098 = vmatpush.xpose.msra.mxu0 0.0
    %6099 = vmatpush.xpose.msra.mxu0 0.0
    %6100 = vmatpush.xpose.msra.mxu0 0.0
    %6101 = vmatpush.xpose.msra.mxu0 0.0
    %6102 = vmatpush.xpose.msra.mxu0 0.0
    %6103 = vmatpush.xpose.msra.mxu0 0.0
    %6104 = vmatpush.xpose.msra.mxu0 0.0
    %6105 = vmatpush.xpose.msra.mxu0 %v6088
    %6106 = vmatmul.f32.gmra.mxu0 %v6085
    %v6107 = vpop.f32.mrf.mxu0
    %v6108 = vadd.f32 0.0, %v6107
    %6109 = vdwg.mxu0
    %v6111 = vsel %vm317, %v5847, 0
    %v6114 = vsel %vm317, %v5898, 0
    %6116 = vmatpush.xpose.msra.mxu0 0.0
    %6117 = vmatpush.xpose.msra.mxu0 0.0
    %6118 = vmatpush.xpose.msra.mxu0 0.0
    %6119 = vmatpush.xpose.msra.mxu0 0.0
    %6120 = vmatpush.xpose.msra.mxu0 0.0
    %6121 = vmatpush.xpose.msra.mxu0 0.0
    %6122 = vmatpush.xpose.msra.mxu0 0.0
    %6123 = vmatpush.xpose.msra.mxu0 0.0
    %6124 = vmatpush.xpose.msra.mxu0 0.0
    %6125 = vmatpush.xpose.msra.mxu0 0.0
    %6126 = vmatpush.xpose.msra.mxu0 0.0
    %6127 = vmatpush.xpose.msra.mxu0 0.0
    %6128 = vmatpush.xpose.msra.mxu0 0.0
    %6129 = vmatpush.xpose.msra.mxu0 0.0
    %6130 = vmatpush.xpose.msra.mxu0 0.0
    %6131 = vmatpush.xpose.msra.mxu0 %v6114
    %6132 = vmatmul.f32.gmra.mxu0 %v6111
    %v6133 = vpop.f32.mrf.mxu0
    %v6134 = vadd.f32 0.0, %v6133
    %6135 = vdwg.mxu0
    %v6137 = vsel %vm317, %v5850, 0
    %v6140 = vsel %vm317, %v5901, 0
    %6142 = vmatpush.xpose.msra.mxu0 0.0
    %6143 = vmatpush.xpose.msra.mxu0 0.0
    %6144 = vmatpush.xpose.msra.mxu0 0.0
    %6145 = vmatpush.xpose.msra.mxu0 0.0
    %6146 = vmatpush.xpose.msra.mxu0 0.0
    %6147 = vmatpush.xpose.msra.mxu0 0.0
    %6148 = vmatpush.xpose.msra.mxu0 0.0
    %6149 = vmatpush.xpose.msra.mxu0 0.0
    %6150 = vmatpush.xpose.msra.mxu0 0.0
    %6151 = vmatpush.xpose.msra.mxu0 0.0
    %6152 = vmatpush.xpose.msra.mxu0 0.0
    %6153 = vmatpush.xpose.msra.mxu0 0.0
    %6154 = vmatpush.xpose.msra.mxu0 0.0
    %6155 = vmatpush.xpose.msra.mxu0 0.0
    %6156 = vmatpush.xpose.msra.mxu0 0.0
    %6157 = vmatpush.xpose.msra.mxu0 %v6140
    %6158 = vmatmul.f32.gmra.mxu0 %v6137
    %v6159 = vpop.f32.mrf.mxu0
    %v6160 = vadd.f32 0.0, %v6159
    %6161 = vdwg.mxu0
    %v6162 = vmul.f32 %v5978, 0.35355338
    %v6163 = vmul.f32 %v6004, 0.35355338
    %v6164 = vmul.f32 %v6030, 0.35355338
    %v6165 = vmul.f32 %v6056, 0.35355338
    %v6166 = vmul.f32 %v6082, 0.35355338
    %v6167 = vmul.f32 %v6108, 0.35355338
    %v6168 = vmul.f32 %v6134, 0.35355338
    %v6169 = vmul.f32 %v6160, 0.35355338
    %v6170 = vadd.f32 %v6162, %v534
    %v6171 = vadd.f32 %v6163, %v535
    %v6172 = vadd.f32 %v6164, %v536
    %v6173 = vadd.f32 %v6165, %v537
    %v6174 = vadd.f32 %v6166, %v538
    %v6175 = vadd.f32 %v6167, %v539
    %v6176 = vadd.f32 %v6168, %v540
    %v6177 = vadd.f32 %v6169, %v541
    %v6178 = vsel %vm317, %v6170, -inf
    %6179 = vmax.xlane.f32.xlu0 %v6178
    %v6180 = vpop.xlane.xlu0 %6179
    %v6181 = vsel %vm317, %v6171, -inf
    %6182 = vmax.xlane.f32.xlu0 %v6181
    %v6183 = vpop.xlane.xlu0 %6182
    %v6184 = vsel %vm317, %v6172, -inf
    %6185 = vmax.xlane.f32.xlu0 %v6184
    %v6186 = vpop.xlane.xlu0 %6185
    %v6187 = vsel %vm317, %v6173, -inf
    %6188 = vmax.xlane.f32.xlu0 %v6187
    %v6189 = vpop.xlane.xlu0 %6188
    %v6190 = vsel %vm317, %v6174, -inf
    %6191 = vmax.xlane.f32.xlu0 %v6190
    %v6192 = vpop.xlane.xlu0 %6191
    %v6193 = vsel %vm317, %v6175, -inf
    %6194 = vmax.xlane.f32.xlu0 %v6193
    %v6195 = vpop.xlane.xlu0 %6194
    %v6196 = vsel %vm317, %v6176, -inf
    %6197 = vmax.xlane.f32.xlu0 %v6196
    %v6198 = vpop.xlane.xlu0 %6197
    %v6199 = vsel %vm317, %v6177, -inf
    %6200 = vmax.xlane.f32.xlu0 %v6199
    %v6201 = vpop.xlane.xlu0 %6200
    %v6202 = vsub.f32 %v6170, %v6180
    %v6203 = vsub.f32 %v6171, %v6183
    %v6204 = vsub.f32 %v6172, %v6186
    %v6205 = vsub.f32 %v6173, %v6189
    %v6206 = vsub.f32 %v6174, %v6192
    %v6207 = vsub.f32 %v6175, %v6195
    %v6208 = vsub.f32 %v6176, %v6198
    %v6209 = vsub.f32 %v6177, %v6201
    %v6210 = vmul.f32 %v6202, 1.442695
    %v6211 = vpow.pop %v6210
    %v6212 = vmul.f32 %v6203, 1.442695
    %v6213 = vpow.pop %v6212
    %v6214 = vmul.f32 %v6204, 1.442695
    %v6215 = vpow.pop %v6214
    %v6216 = vmul.f32 %v6205, 1.442695
    %v6217 = vpow.pop %v6216
    %v6218 = vmul.f32 %v6206, 1.442695
    %v6219 = vpow.pop %v6218
    %v6220 = vmul.f32 %v6207, 1.442695
    %v6221 = vpow.pop %v6220
    %v6222 = vmul.f32 %v6208, 1.442695
    %v6223 = vpow.pop %v6222
    %v6224 = vmul.f32 %v6209, 1.442695
    %v6225 = vpow.pop %v6224
    %v6226 = vsel %vm317, %v6211, 0.0
    %6227 = vadd.xlane.f32.xlu0 %v6226
    %v6228 = vpop.xlane.xlu0 %6227
    %v6229 = vsel %vm317, %v6213, 0.0
    %6230 = vadd.xlane.f32.xlu0 %v6229
    %v6231 = vpop.xlane.xlu0 %6230
    %v6232 = vsel %vm317, %v6215, 0.0
    %6233 = vadd.xlane.f32.xlu0 %v6232
    %v6234 = vpop.xlane.xlu0 %6233
    %v6235 = vsel %vm317, %v6217, 0.0
    %6236 = vadd.xlane.f32.xlu0 %v6235
    %v6237 = vpop.xlane.xlu0 %6236
    %v6238 = vsel %vm317, %v6219, 0.0
    %6239 = vadd.xlane.f32.xlu0 %v6238
    %v6240 = vpop.xlane.xlu0 %6239
    %v6241 = vsel %vm317, %v6221, 0.0
    %6242 = vadd.xlane.f32.xlu0 %v6241
    %v6243 = vpop.xlane.xlu0 %6242
    %v6244 = vsel %vm317, %v6223, 0.0
    %6245 = vadd.xlane.f32.xlu0 %v6244
    %v6246 = vpop.xlane.xlu0 %6245
    %v6247 = vsel %vm317, %v6225, 0.0
    %6248 = vadd.xlane.f32.xlu0 %v6247
    %v6249 = vpop.xlane.xlu0 %6248
    %v6250 = vrcp.pop %v6228
    %v6251 = vmul.f32 %v6228, %v6250
    %v6252 = vsub.f32 1.0, %v6251
    %v6253 = vmul.f32 %v6250, %v6252
    %v6254 = vadd.f32 %v6250, %v6253
    %vm6255 = vweird.f32 %v6228
    %vm6256 = vweird.f32 %v6250
    %vm6257 = vmor %vm6255, %vm6256
    %v6258 = vsel %vm6257, %v6250, %v6254
    %v6259 = vand.u32 2147483647, %v6228
    %vm6260 = vcmp.eq.f32.partialorder %v6259, 8.507059e+37
    %v6261 = vand.u32 %v6228, 2147483648
    %v6262 = vor.u32 1.1754944e-38, %v6261
    %v6263 = vsel %vm6260, %v6262, %v6258
    %v6264 = vmul.f32 %v6211, %v6263
    %v6265 = vrcp.pop %v6231
    %v6266 = vmul.f32 %v6231, %v6265
    %v6267 = vsub.f32 1.0, %v6266
    %v6268 = vmul.f32 %v6265, %v6267
    %v6269 = vadd.f32 %v6265, %v6268
    %vm6270 = vweird.f32 %v6231
    %vm6271 = vweird.f32 %v6265
    %vm6272 = vmor %vm6270, %vm6271
    %v6273 = vsel %vm6272, %v6265, %v6269
    %v6274 = vand.u32 2147483647, %v6231
    %vm6275 = vcmp.eq.f32.partialorder %v6274, 8.507059e+37
    %v6276 = vand.u32 %v6231, 2147483648
    %v6277 = vor.u32 1.1754944e-38, %v6276
    %v6278 = vsel %vm6275, %v6277, %v6273
    %v6279 = vmul.f32 %v6213, %v6278
    %v6280 = vrcp.pop %v6234
    %v6281 = vmul.f32 %v6234, %v6280
    %v6282 = vsub.f32 1.0, %v6281
    %v6283 = vmul.f32 %v6280, %v6282
    %v6284 = vadd.f32 %v6280, %v6283
    %vm6285 = vweird.f32 %v6234
    %vm6286 = vweird.f32 %v6280
    %vm6287 = vmor %vm6285, %vm6286
    %v6288 = vsel %vm6287, %v6280, %v6284
    %v6289 = vand.u32 2147483647, %v6234
    %vm6290 = vcmp.eq.f32.partialorder %v6289, 8.507059e+37
    %v6291 = vand.u32 %v6234, 2147483648
    %v6292 = vor.u32 1.1754944e-38, %v6291
    %v6293 = vsel %vm6290, %v6292, %v6288
    %v6294 = vmul.f32 %v6215, %v6293
    %v6295 = vrcp.pop %v6237
    %v6296 = vmul.f32 %v6237, %v6295
    %v6297 = vsub.f32 1.0, %v6296
    %v6298 = vmul.f32 %v6295, %v6297
    %v6299 = vadd.f32 %v6295, %v6298
    %vm6300 = vweird.f32 %v6237
    %vm6301 = vweird.f32 %v6295
    %vm6302 = vmor %vm6300, %vm6301
    %v6303 = vsel %vm6302, %v6295, %v6299
    %v6304 = vand.u32 2147483647, %v6237
    %vm6305 = vcmp.eq.f32.partialorder %v6304, 8.507059e+37
    %v6306 = vand.u32 %v6237, 2147483648
    %v6307 = vor.u32 1.1754944e-38, %v6306
    %v6308 = vsel %vm6305, %v6307, %v6303
    %v6309 = vmul.f32 %v6217, %v6308
    %v6310 = vrcp.pop %v6240
    %v6311 = vmul.f32 %v6240, %v6310
    %v6312 = vsub.f32 1.0, %v6311
    %v6313 = vmul.f32 %v6310, %v6312
    %v6314 = vadd.f32 %v6310, %v6313
    %vm6315 = vweird.f32 %v6240
    %vm6316 = vweird.f32 %v6310
    %vm6317 = vmor %vm6315, %vm6316
    %v6318 = vsel %vm6317, %v6310, %v6314
    %v6319 = vand.u32 2147483647, %v6240
    %vm6320 = vcmp.eq.f32.partialorder %v6319, 8.507059e+37
    %v6321 = vand.u32 %v6240, 2147483648
    %v6322 = vor.u32 1.1754944e-38, %v6321
    %v6323 = vsel %vm6320, %v6322, %v6318
    %v6324 = vmul.f32 %v6219, %v6323
    %v6325 = vrcp.pop %v6243
    %v6326 = vmul.f32 %v6243, %v6325
    %v6327 = vsub.f32 1.0, %v6326
    %v6328 = vmul.f32 %v6325, %v6327
    %v6329 = vadd.f32 %v6325, %v6328
    %vm6330 = vweird.f32 %v6243
    %vm6331 = vweird.f32 %v6325
    %vm6332 = vmor %vm6330, %vm6331
    %v6333 = vsel %vm6332, %v6325, %v6329
    %v6334 = vand.u32 2147483647, %v6243
    %vm6335 = vcmp.eq.f32.partialorder %v6334, 8.507059e+37
    %v6336 = vand.u32 %v6243, 2147483648
    %v6337 = vor.u32 1.1754944e-38, %v6336
    %v6338 = vsel %vm6335, %v6337, %v6333
    %v6339 = vmul.f32 %v6221, %v6338
    %v6340 = vrcp.pop %v6246
    %v6341 = vmul.f32 %v6246, %v6340
    %v6342 = vsub.f32 1.0, %v6341
    %v6343 = vmul.f32 %v6340, %v6342
    %v6344 = vadd.f32 %v6340, %v6343
    %vm6345 = vweird.f32 %v6246
    %vm6346 = vweird.f32 %v6340
    %vm6347 = vmor %vm6345, %vm6346
    %v6348 = vsel %vm6347, %v6340, %v6344
    %v6349 = vand.u32 2147483647, %v6246
    %vm6350 = vcmp.eq.f32.partialorder %v6349, 8.507059e+37
    %v6351 = vand.u32 %v6246, 2147483648
    %v6352 = vor.u32 1.1754944e-38, %v6351
    %v6353 = vsel %vm6350, %v6352, %v6348
    %v6354 = vmul.f32 %v6223, %v6353
    %v6355 = vrcp.pop %v6249
    %v6356 = vmul.f32 %v6249, %v6355
    %v6357 = vsub.f32 1.0, %v6356
    %v6358 = vmul.f32 %v6355, %v6357
    %v6359 = vadd.f32 %v6355, %v6358
    %vm6360 = vweird.f32 %v6249
    %vm6361 = vweird.f32 %v6355
    %vm6362 = vmor %vm6360, %vm6361
    %v6363 = vsel %vm6362, %v6355, %v6359
    %v6364 = vand.u32 2147483647, %v6249
    %vm6365 = vcmp.eq.f32.partialorder %v6364, 8.507059e+37
    %v6366 = vand.u32 %v6249, 2147483648
    %v6367 = vor.u32 1.1754944e-38, %v6366
    %v6368 = vsel %vm6365, %v6367, %v6363
    %v6369 = vmul.f32 %v6225, %v6368
    %v6371 = vsel %vm317, %v6264, 0
    %6373 = vmatpush.msra.mxu0 0.0
    %6374 = vmatpush.msra.mxu0 0.0
    %6375 = vmatpush.msra.mxu0 0.0
    %6376 = vmatpush.msra.mxu0 0.0
    %6377 = vmatpush.msra.mxu0 0.0
    %6378 = vmatpush.msra.mxu0 0.0
    %6379 = vmatpush.msra.mxu0 0.0
    %6380 = vmatpush.msra.mxu0 0.0
    %6381 = vmatpush.msra.mxu0 0.0
    %6382 = vmatpush.msra.mxu0 0.0
    %6383 = vmatpush.msra.mxu0 0.0
    %6384 = vmatpush.msra.mxu0 0.0
    %6385 = vmatpush.msra.mxu0 0.0
    %6386 = vmatpush.msra.mxu0 0.0
    %6387 = vmatpush.msra.mxu0 0.0
    %6388 = vmatpush.msra.mxu0 %v5931
    %6389 = vmatmul.f32.gmra.mxu0 %v6371
    %v6390 = vpop.f32.mrf.mxu0
    %v6391 = vadd.f32 0.0, %v6390
    %6392 = vdwg.mxu0
    %v6394 = vsel %vm317, %v6279, 0
    %6396 = vmatpush.msra.mxu0 0.0
    %6397 = vmatpush.msra.mxu0 0.0
    %6398 = vmatpush.msra.mxu0 0.0
    %6399 = vmatpush.msra.mxu0 0.0
    %6400 = vmatpush.msra.mxu0 0.0
    %6401 = vmatpush.msra.mxu0 0.0
    %6402 = vmatpush.msra.mxu0 0.0
    %6403 = vmatpush.msra.mxu0 0.0
    %6404 = vmatpush.msra.mxu0 0.0
    %6405 = vmatpush.msra.mxu0 0.0
    %6406 = vmatpush.msra.mxu0 0.0
    %6407 = vmatpush.msra.mxu0 0.0
    %6408 = vmatpush.msra.mxu0 0.0
    %6409 = vmatpush.msra.mxu0 0.0
    %6410 = vmatpush.msra.mxu0 0.0
    %6411 = vmatpush.msra.mxu0 %v5934
    %6412 = vmatmul.f32.gmra.mxu0 %v6394
    %v6413 = vpop.f32.mrf.mxu0
    %v6414 = vadd.f32 0.0, %v6413
    %6415 = vdwg.mxu0
    %v6417 = vsel %vm317, %v6294, 0
    %6419 = vmatpush.msra.mxu0 0.0
    %6420 = vmatpush.msra.mxu0 0.0
    %6421 = vmatpush.msra.mxu0 0.0
    %6422 = vmatpush.msra.mxu0 0.0
    %6423 = vmatpush.msra.mxu0 0.0
    %6424 = vmatpush.msra.mxu0 0.0
    %6425 = vmatpush.msra.mxu0 0.0
    %6426 = vmatpush.msra.mxu0 0.0
    %6427 = vmatpush.msra.mxu0 0.0
    %6428 = vmatpush.msra.mxu0 0.0
    %6429 = vmatpush.msra.mxu0 0.0
    %6430 = vmatpush.msra.mxu0 0.0
    %6431 = vmatpush.msra.mxu0 0.0
    %6432 = vmatpush.msra.mxu0 0.0
    %6433 = vmatpush.msra.mxu0 0.0
    %6434 = vmatpush.msra.mxu0 %v5937
    %6435 = vmatmul.f32.gmra.mxu0 %v6417
    %v6436 = vpop.f32.mrf.mxu0
    %v6437 = vadd.f32 0.0, %v6436
    %6438 = vdwg.mxu0
    %v6440 = vsel %vm317, %v6309, 0
    %6442 = vmatpush.msra.mxu0 0.0
    %6443 = vmatpush.msra.mxu0 0.0
    %6444 = vmatpush.msra.mxu0 0.0
    %6445 = vmatpush.msra.mxu0 0.0
    %6446 = vmatpush.msra.mxu0 0.0
    %6447 = vmatpush.msra.mxu0 0.0
    %6448 = vmatpush.msra.mxu0 0.0
    %6449 = vmatpush.msra.mxu0 0.0
    %6450 = vmatpush.msra.mxu0 0.0
    %6451 = vmatpush.msra.mxu0 0.0
    %6452 = vmatpush.msra.mxu0 0.0
    %6453 = vmatpush.msra.mxu0 0.0
    %6454 = vmatpush.msra.mxu0 0.0
    %6455 = vmatpush.msra.mxu0 0.0
    %6456 = vmatpush.msra.mxu0 0.0
    %6457 = vmatpush.msra.mxu0 %v5940
    %6458 = vmatmul.f32.gmra.mxu0 %v6440
    %v6459 = vpop.f32.mrf.mxu0
    %v6460 = vadd.f32 0.0, %v6459
    %6461 = vdwg.mxu0
    %v6463 = vsel %vm317, %v6324, 0
    %6465 = vmatpush.msra.mxu0 0.0
    %6466 = vmatpush.msra.mxu0 0.0
    %6467 = vmatpush.msra.mxu0 0.0
    %6468 = vmatpush.msra.mxu0 0.0
    %6469 = vmatpush.msra.mxu0 0.0
    %6470 = vmatpush.msra.mxu0 0.0
    %6471 = vmatpush.msra.mxu0 0.0
    %6472 = vmatpush.msra.mxu0 0.0
    %6473 = vmatpush.msra.mxu0 0.0
    %6474 = vmatpush.msra.mxu0 0.0
    %6475 = vmatpush.msra.mxu0 0.0
    %6476 = vmatpush.msra.mxu0 0.0
    %6477 = vmatpush.msra.mxu0 0.0
    %6478 = vmatpush.msra.mxu0 0.0
    %6479 = vmatpush.msra.mxu0 0.0
    %6480 = vmatpush.msra.mxu0 %v5943
    %6481 = vmatmul.f32.gmra.mxu0 %v6463
    %v6482 = vpop.f32.mrf.mxu0
    %v6483 = vadd.f32 0.0, %v6482
    %6484 = vdwg.mxu0
    %v6486 = vsel %vm317, %v6339, 0
    %6488 = vmatpush.msra.mxu0 0.0
    %6489 = vmatpush.msra.mxu0 0.0
    %6490 = vmatpush.msra.mxu0 0.0
    %6491 = vmatpush.msra.mxu0 0.0
    %6492 = vmatpush.msra.mxu0 0.0
    %6493 = vmatpush.msra.mxu0 0.0
    %6494 = vmatpush.msra.mxu0 0.0
    %6495 = vmatpush.msra.mxu0 0.0
    %6496 = vmatpush.msra.mxu0 0.0
    %6497 = vmatpush.msra.mxu0 0.0
    %6498 = vmatpush.msra.mxu0 0.0
    %6499 = vmatpush.msra.mxu0 0.0
    %6500 = vmatpush.msra.mxu0 0.0
    %6501 = vmatpush.msra.mxu0 0.0
    %6502 = vmatpush.msra.mxu0 0.0
    %6503 = vmatpush.msra.mxu0 %v5946
    %6504 = vmatmul.f32.gmra.mxu0 %v6486
    %v6505 = vpop.f32.mrf.mxu0
    %v6506 = vadd.f32 0.0, %v6505
    %6507 = vdwg.mxu0
    %v6509 = vsel %vm317, %v6354, 0
    %6511 = vmatpush.msra.mxu0 0.0
    %6512 = vmatpush.msra.mxu0 0.0
    %6513 = vmatpush.msra.mxu0 0.0
    %6514 = vmatpush.msra.mxu0 0.0
    %6515 = vmatpush.msra.mxu0 0.0
    %6516 = vmatpush.msra.mxu0 0.0
    %6517 = vmatpush.msra.mxu0 0.0
    %6518 = vmatpush.msra.mxu0 0.0
    %6519 = vmatpush.msra.mxu0 0.0
    %6520 = vmatpush.msra.mxu0 0.0
    %6521 = vmatpush.msra.mxu0 0.0
    %6522 = vmatpush.msra.mxu0 0.0
    %6523 = vmatpush.msra.mxu0 0.0
    %6524 = vmatpush.msra.mxu0 0.0
    %6525 = vmatpush.msra.mxu0 0.0
    %6526 = vmatpush.msra.mxu0 %v5949
    %6527 = vmatmul.f32.gmra.mxu0 %v6509
    %v6528 = vpop.f32.mrf.mxu0
    %v6529 = vadd.f32 0.0, %v6528
    %6530 = vdwg.mxu0
    %v6532 = vsel %vm317, %v6369, 0
    %6534 = vmatpush.msra.mxu0 0.0
    %6535 = vmatpush.msra.mxu0 0.0
    %6536 = vmatpush.msra.mxu0 0.0
    %6537 = vmatpush.msra.mxu0 0.0
    %6538 = vmatpush.msra.mxu0 0.0
    %6539 = vmatpush.msra.mxu0 0.0
    %6540 = vmatpush.msra.mxu0 0.0
    %6541 = vmatpush.msra.mxu0 0.0
    %6542 = vmatpush.msra.mxu0 0.0
    %6543 = vmatpush.msra.mxu0 0.0
    %6544 = vmatpush.msra.mxu0 0.0
    %6545 = vmatpush.msra.mxu0 0.0
    %6546 = vmatpush.msra.mxu0 0.0
    %6547 = vmatpush.msra.mxu0 0.0
    %6548 = vmatpush.msra.mxu0 0.0
    %6549 = vmatpush.msra.mxu0 %v5952
    %6550 = vmatmul.f32.gmra.mxu0 %v6532
    %v6551 = vpop.f32.mrf.mxu0
    %v6552 = vadd.f32 0.0, %v6551
    %6553 = vdwg.mxu0
    %s6554 = scalar_lea.vmem %s6, 48
    %v6555 = vld [vmem:[%s6554] sm:$0xff]
    %v6557 = vsel %vm317, %v6391, 0
    %v6560 = vsel %vm317, %v6414, 0
    %v6563 = vsel %vm317, %v6437, 0
    %v6566 = vsel %vm317, %v6460, 0
    %v6569 = vsel %vm317, %v6483, 0
    %v6572 = vsel %vm317, %v6506, 0
    %v6575 = vsel %vm317, %v6529, 0
    %v6578 = vsel %vm317, %v6552, 0
    %6580 = vmatpush.msra.mxu0 0.0
    %6581 = vmatpush.msra.mxu0 0.0
    %6582 = vmatpush.msra.mxu0 0.0
    %6583 = vmatpush.msra.mxu0 0.0
    %6584 = vmatpush.msra.mxu0 0.0
    %6585 = vmatpush.msra.mxu0 0.0
    %6586 = vmatpush.msra.mxu0 0.0
    %6587 = vmatpush.msra.mxu0 0.0
    %6588 = vmatpush.msra.mxu0 0.0
    %6589 = vmatpush.msra.mxu0 0.0
    %6590 = vmatpush.msra.mxu0 0.0
    %6591 = vmatpush.msra.mxu0 0.0
    %6592 = vmatpush.msra.mxu0 0.0
    %6593 = vmatpush.msra.mxu0 0.0
    %6594 = vmatpush.msra.mxu0 0.0
    %6595 = vmatpush.msra.mxu0 %v6555
    %6596 = vmatmul.f32.gmra.mxu0 %v6557
    %v6597 = vpop.f32.mrf.mxu0
    %v6598 = vadd.f32 0.0, %v6597
    %6599 = vmatmul.f32.gmra.mxu0 %v6560
    %v6600 = vpop.f32.mrf.mxu0
    %v6601 = vadd.f32 0.0, %v6600
    %6602 = vmatmul.f32.gmra.mxu0 %v6563
    %v6603 = vpop.f32.mrf.mxu0
    %v6604 = vadd.f32 0.0, %v6603
    %6605 = vmatmul.f32.gmra.mxu0 %v6566
    %v6606 = vpop.f32.mrf.mxu0
    %v6607 = vadd.f32 0.0, %v6606
    %6608 = vmatmul.f32.gmra.mxu0 %v6569
    %v6609 = vpop.f32.mrf.mxu0
    %v6610 = vadd.f32 0.0, %v6609
    %6611 = vmatmul.f32.gmra.mxu0 %v6572
    %v6612 = vpop.f32.mrf.mxu0
    %v6613 = vadd.f32 0.0, %v6612
    %6614 = vmatmul.f32.gmra.mxu0 %v6575
    %v6615 = vpop.f32.mrf.mxu0
    %v6616 = vadd.f32 0.0, %v6615
    %6617 = vmatmul.f32.gmra.mxu0 %v6578
    %v6618 = vpop.f32.mrf.mxu0
    %v6619 = vadd.f32 0.0, %v6618
    %6620 = vdwg.mxu0
    %v6621 = vadd.f32 %v5778, %v6598
    %v6622 = vadd.f32 %v5781, %v6601
    %v6623 = vadd.f32 %v5784, %v6604
    %v6624 = vadd.f32 %v5787, %v6607
    %v6625 = vadd.f32 %v5790, %v6610
    %v6626 = vadd.f32 %v5793, %v6613
    %v6627 = vadd.f32 %v5796, %v6616
    %v6628 = vadd.f32 %v5799, %v6619
    %s6629 = scalar_lea.vmem %s4, 480
    %v6630 = vld [vmem:[%s6629] sm:$0xff]
    %v6631 = vld [vmem:[%s6629 + $0x8] sm:$0xff]
    %v6632 = vld [vmem:[%s6629 + $0x10] sm:$0xff]
    %v6633 = vld [vmem:[%s6629 + $0x18] sm:$0xff]
    %s6634 = scalar_lea.vmem %s5, 15
    %v6635 = vld [vmem:[%s6634] sm:$0x1]
    %v6637 = vperm.slane %v6635, 0
    %6639 = vmatpush.msra.mxu0 0.0
    %6640 = vmatpush.msra.mxu0 0.0
    %6641 = vmatpush.msra.mxu0 0.0
    %6642 = vmatpush.msra.mxu0 0.0
    %6643 = vmatpush.msra.mxu0 0.0
    %6644 = vmatpush.msra.mxu0 0.0
    %6645 = vmatpush.msra.mxu0 0.0
    %6646 = vmatpush.msra.mxu0 0.0
    %6647 = vmatpush.msra.mxu0 0.0
    %6648 = vmatpush.msra.mxu0 0.0
    %6649 = vmatpush.msra.mxu0 0.0
    %6650 = vmatpush.msra.mxu0 0.0
    %6651 = vmatpush.msra.mxu0 %v6633
    %6652 = vmatpush.msra.mxu0 %v6632
    %6653 = vmatpush.msra.mxu0 %v6631
    %6654 = vmatpush.msra.mxu0 %v6630
    %6655 = vmatmul.f32.gmra.mxu0 %v4148
    %v6656 = vpop.f32.mrf.mxu0
    %v6657 = vadd.f32 %v6637, %v6656
    %6658 = vmatmul.f32.gmra.mxu0 %v4151
    %v6659 = vpop.f32.mrf.mxu0
    %v6660 = vadd.f32 %v6637, %v6659
    %6661 = vmatmul.f32.gmra.mxu0 %v4154
    %v6662 = vpop.f32.mrf.mxu0
    %v6663 = vadd.f32 %v6637, %v6662
    %6664 = vmatmul.f32.gmra.mxu0 %v4157
    %v6665 = vpop.f32.mrf.mxu0
    %v6666 = vadd.f32 %v6637, %v6665
    %6667 = vmatmul.f32.gmra.mxu0 %v4160
    %v6668 = vpop.f32.mrf.mxu0
    %v6669 = vadd.f32 %v6637, %v6668
    %6670 = vmatmul.f32.gmra.mxu0 %v4163
    %v6671 = vpop.f32.mrf.mxu0
    %v6672 = vadd.f32 %v6637, %v6671
    %6673 = vmatmul.f32.gmra.mxu0 %v4166
    %v6674 = vpop.f32.mrf.mxu0
    %v6675 = vadd.f32 %v6637, %v6674
    %6676 = vmatmul.f32.gmra.mxu0 %v4169
    %v6677 = vpop.f32.mrf.mxu0
    %v6678 = vadd.f32 %v6637, %v6677
    %6679 = vdwg.mxu0
    %s6680 = scalar_lea.vmem %s4, 608
    %v6681 = vld [vmem:[%s6680] sm:$0xff]
    %v6682 = vld [vmem:[%s6680 + $0x8] sm:$0xff]
    %v6683 = vld [vmem:[%s6680 + $0x10] sm:$0xff]
    %v6684 = vld [vmem:[%s6680 + $0x18] sm:$0xff]
    %s6685 = scalar_lea.vmem %s5, 19
    %v6686 = vld [vmem:[%s6685] sm:$0x1]
    %v6688 = vperm.slane %v6686, 0
    %6690 = vmatpush.msra.mxu0 0.0
    %6691 = vmatpush.msra.mxu0 0.0
    %6692 = vmatpush.msra.mxu0 0.0
    %6693 = vmatpush.msra.mxu0 0.0
    %6694 = vmatpush.msra.mxu0 0.0
    %6695 = vmatpush.msra.mxu0 0.0
    %6696 = vmatpush.msra.mxu0 0.0
    %6697 = vmatpush.msra.mxu0 0.0
    %6698 = vmatpush.msra.mxu0 0.0
    %6699 = vmatpush.msra.mxu0 0.0
    %6700 = vmatpush.msra.mxu0 0.0
    %6701 = vmatpush.msra.mxu0 0.0
    %6702 = vmatpush.msra.mxu0 %v6684
    %6703 = vmatpush.msra.mxu0 %v6683
    %6704 = vmatpush.msra.mxu0 %v6682
    %6705 = vmatpush.msra.mxu0 %v6681
    %6706 = vmatmul.f32.gmra.mxu0 %v4148
    %v6707 = vpop.f32.mrf.mxu0
    %v6708 = vadd.f32 %v6688, %v6707
    %6709 = vmatmul.f32.gmra.mxu0 %v4151
    %v6710 = vpop.f32.mrf.mxu0
    %v6711 = vadd.f32 %v6688, %v6710
    %6712 = vmatmul.f32.gmra.mxu0 %v4154
    %v6713 = vpop.f32.mrf.mxu0
    %v6714 = vadd.f32 %v6688, %v6713
    %6715 = vmatmul.f32.gmra.mxu0 %v4157
    %v6716 = vpop.f32.mrf.mxu0
    %v6717 = vadd.f32 %v6688, %v6716
    %6718 = vmatmul.f32.gmra.mxu0 %v4160
    %v6719 = vpop.f32.mrf.mxu0
    %v6720 = vadd.f32 %v6688, %v6719
    %6721 = vmatmul.f32.gmra.mxu0 %v4163
    %v6722 = vpop.f32.mrf.mxu0
    %v6723 = vadd.f32 %v6688, %v6722
    %6724 = vmatmul.f32.gmra.mxu0 %v4166
    %v6725 = vpop.f32.mrf.mxu0
    %v6726 = vadd.f32 %v6688, %v6725
    %6727 = vmatmul.f32.gmra.mxu0 %v4169
    %v6728 = vpop.f32.mrf.mxu0
    %v6729 = vadd.f32 %v6688, %v6728
    %6730 = vdwg.mxu0
    %s6731 = scalar_lea.vmem %s4, 736
    %v6732 = vld [vmem:[%s6731] sm:$0xff]
    %v6733 = vld [vmem:[%s6731 + $0x8] sm:$0xff]
    %v6734 = vld [vmem:[%s6731 + $0x10] sm:$0xff]
    %v6735 = vld [vmem:[%s6731 + $0x18] sm:$0xff]
    %s6736 = scalar_lea.vmem %s5, 23
    %v6737 = vld [vmem:[%s6736] sm:$0x1]
    %v6739 = vperm.slane %v6737, 0
    %6741 = vmatpush.msra.mxu0 0.0
    %6742 = vmatpush.msra.mxu0 0.0
    %6743 = vmatpush.msra.mxu0 0.0
    %6744 = vmatpush.msra.mxu0 0.0
    %6745 = vmatpush.msra.mxu0 0.0
    %6746 = vmatpush.msra.mxu0 0.0
    %6747 = vmatpush.msra.mxu0 0.0
    %6748 = vmatpush.msra.mxu0 0.0
    %6749 = vmatpush.msra.mxu0 0.0
    %6750 = vmatpush.msra.mxu0 0.0
    %6751 = vmatpush.msra.mxu0 0.0
    %6752 = vmatpush.msra.mxu0 0.0
    %6753 = vmatpush.msra.mxu0 %v6735
    %6754 = vmatpush.msra.mxu0 %v6734
    %6755 = vmatpush.msra.mxu0 %v6733
    %6756 = vmatpush.msra.mxu0 %v6732
    %6757 = vmatmul.f32.gmra.mxu0 %v4148
    %v6758 = vpop.f32.mrf.mxu0
    %v6759 = vadd.f32 %v6739, %v6758
    %6760 = vmatmul.f32.gmra.mxu0 %v4151
    %v6761 = vpop.f32.mrf.mxu0
    %v6762 = vadd.f32 %v6739, %v6761
    %6763 = vmatmul.f32.gmra.mxu0 %v4154
    %v6764 = vpop.f32.mrf.mxu0
    %v6765 = vadd.f32 %v6739, %v6764
    %6766 = vmatmul.f32.gmra.mxu0 %v4157
    %v6767 = vpop.f32.mrf.mxu0
    %v6768 = vadd.f32 %v6739, %v6767
    %6769 = vmatmul.f32.gmra.mxu0 %v4160
    %v6770 = vpop.f32.mrf.mxu0
    %v6771 = vadd.f32 %v6739, %v6770
    %6772 = vmatmul.f32.gmra.mxu0 %v4163
    %v6773 = vpop.f32.mrf.mxu0
    %v6774 = vadd.f32 %v6739, %v6773
    %6775 = vmatmul.f32.gmra.mxu0 %v4166
    %v6776 = vpop.f32.mrf.mxu0
    %v6777 = vadd.f32 %v6739, %v6776
    %6778 = vmatmul.f32.gmra.mxu0 %v4169
    %v6779 = vpop.f32.mrf.mxu0
    %v6780 = vadd.f32 %v6739, %v6779
    %6781 = vdwg.mxu0
    %v6783 = vsel %vm317, %v6657, 0
    %v6786 = vsel %vm317, %v6708, 0
    %6788 = vmatpush.xpose.msra.mxu0 0.0
    %6789 = vmatpush.xpose.msra.mxu0 0.0
    %6790 = vmatpush.xpose.msra.mxu0 0.0
    %6791 = vmatpush.xpose.msra.mxu0 0.0
    %6792 = vmatpush.xpose.msra.mxu0 0.0
    %6793 = vmatpush.xpose.msra.mxu0 0.0
    %6794 = vmatpush.xpose.msra.mxu0 0.0
    %6795 = vmatpush.xpose.msra.mxu0 0.0
    %6796 = vmatpush.xpose.msra.mxu0 0.0
    %6797 = vmatpush.xpose.msra.mxu0 0.0
    %6798 = vmatpush.xpose.msra.mxu0 0.0
    %6799 = vmatpush.xpose.msra.mxu0 0.0
    %6800 = vmatpush.xpose.msra.mxu0 0.0
    %6801 = vmatpush.xpose.msra.mxu0 0.0
    %6802 = vmatpush.xpose.msra.mxu0 0.0
    %6803 = vmatpush.xpose.msra.mxu0 %v6786
    %6804 = vmatmul.f32.gmra.mxu0 %v6783
    %v6805 = vpop.f32.mrf.mxu0
    %v6806 = vadd.f32 0.0, %v6805
    %6807 = vdwg.mxu0
    %v6809 = vsel %vm317, %v6660, 0
    %v6812 = vsel %vm317, %v6711, 0
    %6814 = vmatpush.xpose.msra.mxu0 0.0
    %6815 = vmatpush.xpose.msra.mxu0 0.0
    %6816 = vmatpush.xpose.msra.mxu0 0.0
    %6817 = vmatpush.xpose.msra.mxu0 0.0
    %6818 = vmatpush.xpose.msra.mxu0 0.0
    %6819 = vmatpush.xpose.msra.mxu0 0.0
    %6820 = vmatpush.xpose.msra.mxu0 0.0
    %6821 = vmatpush.xpose.msra.mxu0 0.0
    %6822 = vmatpush.xpose.msra.mxu0 0.0
    %6823 = vmatpush.xpose.msra.mxu0 0.0
    %6824 = vmatpush.xpose.msra.mxu0 0.0
    %6825 = vmatpush.xpose.msra.mxu0 0.0
    %6826 = vmatpush.xpose.msra.mxu0 0.0
    %6827 = vmatpush.xpose.msra.mxu0 0.0
    %6828 = vmatpush.xpose.msra.mxu0 0.0
    %6829 = vmatpush.xpose.msra.mxu0 %v6812
    %6830 = vmatmul.f32.gmra.mxu0 %v6809
    %v6831 = vpop.f32.mrf.mxu0
    %v6832 = vadd.f32 0.0, %v6831
    %6833 = vdwg.mxu0
    %v6835 = vsel %vm317, %v6663, 0
    %v6838 = vsel %vm317, %v6714, 0
    %6840 = vmatpush.xpose.msra.mxu0 0.0
    %6841 = vmatpush.xpose.msra.mxu0 0.0
    %6842 = vmatpush.xpose.msra.mxu0 0.0
    %6843 = vmatpush.xpose.msra.mxu0 0.0
    %6844 = vmatpush.xpose.msra.mxu0 0.0
    %6845 = vmatpush.xpose.msra.mxu0 0.0
    %6846 = vmatpush.xpose.msra.mxu0 0.0
    %6847 = vmatpush.xpose.msra.mxu0 0.0
    %6848 = vmatpush.xpose.msra.mxu0 0.0
    %6849 = vmatpush.xpose.msra.mxu0 0.0
    %6850 = vmatpush.xpose.msra.mxu0 0.0
    %6851 = vmatpush.xpose.msra.mxu0 0.0
    %6852 = vmatpush.xpose.msra.mxu0 0.0
    %6853 = vmatpush.xpose.msra.mxu0 0.0
    %6854 = vmatpush.xpose.msra.mxu0 0.0
    %6855 = vmatpush.xpose.msra.mxu0 %v6838
    %6856 = vmatmul.f32.gmra.mxu0 %v6835
    %v6857 = vpop.f32.mrf.mxu0
    %v6858 = vadd.f32 0.0, %v6857
    %6859 = vdwg.mxu0
    %v6861 = vsel %vm317, %v6666, 0
    %v6864 = vsel %vm317, %v6717, 0
    %6866 = vmatpush.xpose.msra.mxu0 0.0
    %6867 = vmatpush.xpose.msra.mxu0 0.0
    %6868 = vmatpush.xpose.msra.mxu0 0.0
    %6869 = vmatpush.xpose.msra.mxu0 0.0
    %6870 = vmatpush.xpose.msra.mxu0 0.0
    %6871 = vmatpush.xpose.msra.mxu0 0.0
    %6872 = vmatpush.xpose.msra.mxu0 0.0
    %6873 = vmatpush.xpose.msra.mxu0 0.0
    %6874 = vmatpush.xpose.msra.mxu0 0.0
    %6875 = vmatpush.xpose.msra.mxu0 0.0
    %6876 = vmatpush.xpose.msra.mxu0 0.0
    %6877 = vmatpush.xpose.msra.mxu0 0.0
    %6878 = vmatpush.xpose.msra.mxu0 0.0
    %6879 = vmatpush.xpose.msra.mxu0 0.0
    %6880 = vmatpush.xpose.msra.mxu0 0.0
    %6881 = vmatpush.xpose.msra.mxu0 %v6864
    %6882 = vmatmul.f32.gmra.mxu0 %v6861
    %v6883 = vpop.f32.mrf.mxu0
    %v6884 = vadd.f32 0.0, %v6883
    %6885 = vdwg.mxu0
    %v6887 = vsel %vm317, %v6669, 0
    %v6890 = vsel %vm317, %v6720, 0
    %6892 = vmatpush.xpose.msra.mxu0 0.0
    %6893 = vmatpush.xpose.msra.mxu0 0.0
    %6894 = vmatpush.xpose.msra.mxu0 0.0
    %6895 = vmatpush.xpose.msra.mxu0 0.0
    %6896 = vmatpush.xpose.msra.mxu0 0.0
    %6897 = vmatpush.xpose.msra.mxu0 0.0
    %6898 = vmatpush.xpose.msra.mxu0 0.0
    %6899 = vmatpush.xpose.msra.mxu0 0.0
    %6900 = vmatpush.xpose.msra.mxu0 0.0
    %6901 = vmatpush.xpose.msra.mxu0 0.0
    %6902 = vmatpush.xpose.msra.mxu0 0.0
    %6903 = vmatpush.xpose.msra.mxu0 0.0
    %6904 = vmatpush.xpose.msra.mxu0 0.0
    %6905 = vmatpush.xpose.msra.mxu0 0.0
    %6906 = vmatpush.xpose.msra.mxu0 0.0
    %6907 = vmatpush.xpose.msra.mxu0 %v6890
    %6908 = vmatmul.f32.gmra.mxu0 %v6887
    %v6909 = vpop.f32.mrf.mxu0
    %v6910 = vadd.f32 0.0, %v6909
    %6911 = vdwg.mxu0
    %v6913 = vsel %vm317, %v6672, 0
    %v6916 = vsel %vm317, %v6723, 0
    %6918 = vmatpush.xpose.msra.mxu0 0.0
    %6919 = vmatpush.xpose.msra.mxu0 0.0
    %6920 = vmatpush.xpose.msra.mxu0 0.0
    %6921 = vmatpush.xpose.msra.mxu0 0.0
    %6922 = vmatpush.xpose.msra.mxu0 0.0
    %6923 = vmatpush.xpose.msra.mxu0 0.0
    %6924 = vmatpush.xpose.msra.mxu0 0.0
    %6925 = vmatpush.xpose.msra.mxu0 0.0
    %6926 = vmatpush.xpose.msra.mxu0 0.0
    %6927 = vmatpush.xpose.msra.mxu0 0.0
    %6928 = vmatpush.xpose.msra.mxu0 0.0
    %6929 = vmatpush.xpose.msra.mxu0 0.0
    %6930 = vmatpush.xpose.msra.mxu0 0.0
    %6931 = vmatpush.xpose.msra.mxu0 0.0
    %6932 = vmatpush.xpose.msra.mxu0 0.0
    %6933 = vmatpush.xpose.msra.mxu0 %v6916
    %6934 = vmatmul.f32.gmra.mxu0 %v6913
    %v6935 = vpop.f32.mrf.mxu0
    %v6936 = vadd.f32 0.0, %v6935
    %6937 = vdwg.mxu0
    %v6939 = vsel %vm317, %v6675, 0
    %v6942 = vsel %vm317, %v6726, 0
    %6944 = vmatpush.xpose.msra.mxu0 0.0
    %6945 = vmatpush.xpose.msra.mxu0 0.0
    %6946 = vmatpush.xpose.msra.mxu0 0.0
    %6947 = vmatpush.xpose.msra.mxu0 0.0
    %6948 = vmatpush.xpose.msra.mxu0 0.0
    %6949 = vmatpush.xpose.msra.mxu0 0.0
    %6950 = vmatpush.xpose.msra.mxu0 0.0
    %6951 = vmatpush.xpose.msra.mxu0 0.0
    %6952 = vmatpush.xpose.msra.mxu0 0.0
    %6953 = vmatpush.xpose.msra.mxu0 0.0
    %6954 = vmatpush.xpose.msra.mxu0 0.0
    %6955 = vmatpush.xpose.msra.mxu0 0.0
    %6956 = vmatpush.xpose.msra.mxu0 0.0
    %6957 = vmatpush.xpose.msra.mxu0 0.0
    %6958 = vmatpush.xpose.msra.mxu0 0.0
    %6959 = vmatpush.xpose.msra.mxu0 %v6942
    %6960 = vmatmul.f32.gmra.mxu0 %v6939
    %v6961 = vpop.f32.mrf.mxu0
    %v6962 = vadd.f32 0.0, %v6961
    %6963 = vdwg.mxu0
    %v6965 = vsel %vm317, %v6678, 0
    %v6968 = vsel %vm317, %v6729, 0
    %6970 = vmatpush.xpose.msra.mxu0 0.0
    %6971 = vmatpush.xpose.msra.mxu0 0.0
    %6972 = vmatpush.xpose.msra.mxu0 0.0
    %6973 = vmatpush.xpose.msra.mxu0 0.0
    %6974 = vmatpush.xpose.msra.mxu0 0.0
    %6975 = vmatpush.xpose.msra.mxu0 0.0
    %6976 = vmatpush.xpose.msra.mxu0 0.0
    %6977 = vmatpush.xpose.msra.mxu0 0.0
    %6978 = vmatpush.xpose.msra.mxu0 0.0
    %6979 = vmatpush.xpose.msra.mxu0 0.0
    %6980 = vmatpush.xpose.msra.mxu0 0.0
    %6981 = vmatpush.xpose.msra.mxu0 0.0
    %6982 = vmatpush.xpose.msra.mxu0 0.0
    %6983 = vmatpush.xpose.msra.mxu0 0.0
    %6984 = vmatpush.xpose.msra.mxu0 0.0
    %6985 = vmatpush.xpose.msra.mxu0 %v6968
    %6986 = vmatmul.f32.gmra.mxu0 %v6965
    %v6987 = vpop.f32.mrf.mxu0
    %v6988 = vadd.f32 0.0, %v6987
    %6989 = vdwg.mxu0
    %v6990 = vmul.f32 %v6806, 0.35355338
    %v6991 = vmul.f32 %v6832, 0.35355338
    %v6992 = vmul.f32 %v6858, 0.35355338
    %v6993 = vmul.f32 %v6884, 0.35355338
    %v6994 = vmul.f32 %v6910, 0.35355338
    %v6995 = vmul.f32 %v6936, 0.35355338
    %v6996 = vmul.f32 %v6962, 0.35355338
    %v6997 = vmul.f32 %v6988, 0.35355338
    %v6998 = vadd.f32 %v6990, %v534
    %v6999 = vadd.f32 %v6991, %v535
    %v7000 = vadd.f32 %v6992, %v536
    %v7001 = vadd.f32 %v6993, %v537
    %v7002 = vadd.f32 %v6994, %v538
    %v7003 = vadd.f32 %v6995, %v539
    %v7004 = vadd.f32 %v6996, %v540
    %v7005 = vadd.f32 %v6997, %v541
    %v7006 = vsel %vm317, %v6998, -inf
    %7007 = vmax.xlane.f32.xlu0 %v7006
    %v7008 = vpop.xlane.xlu0 %7007
    %v7009 = vsel %vm317, %v6999, -inf
    %7010 = vmax.xlane.f32.xlu0 %v7009
    %v7011 = vpop.xlane.xlu0 %7010
    %v7012 = vsel %vm317, %v7000, -inf
    %7013 = vmax.xlane.f32.xlu0 %v7012
    %v7014 = vpop.xlane.xlu0 %7013
    %v7015 = vsel %vm317, %v7001, -inf
    %7016 = vmax.xlane.f32.xlu0 %v7015
    %v7017 = vpop.xlane.xlu0 %7016
    %v7018 = vsel %vm317, %v7002, -inf
    %7019 = vmax.xlane.f32.xlu0 %v7018
    %v7020 = vpop.xlane.xlu0 %7019
    %v7021 = vsel %vm317, %v7003, -inf
    %7022 = vmax.xlane.f32.xlu0 %v7021
    %v7023 = vpop.xlane.xlu0 %7022
    %v7024 = vsel %vm317, %v7004, -inf
    %7025 = vmax.xlane.f32.xlu0 %v7024
    %v7026 = vpop.xlane.xlu0 %7025
    %v7027 = vsel %vm317, %v7005, -inf
    %7028 = vmax.xlane.f32.xlu0 %v7027
    %v7029 = vpop.xlane.xlu0 %7028
    %v7030 = vsub.f32 %v6998, %v7008
    %v7031 = vsub.f32 %v6999, %v7011
    %v7032 = vsub.f32 %v7000, %v7014
    %v7033 = vsub.f32 %v7001, %v7017
    %v7034 = vsub.f32 %v7002, %v7020
    %v7035 = vsub.f32 %v7003, %v7023
    %v7036 = vsub.f32 %v7004, %v7026
    %v7037 = vsub.f32 %v7005, %v7029
    %v7038 = vmul.f32 %v7030, 1.442695
    %v7039 = vpow.pop %v7038
    %v7040 = vmul.f32 %v7031, 1.442695
    %v7041 = vpow.pop %v7040
    %v7042 = vmul.f32 %v7032, 1.442695
    %v7043 = vpow.pop %v7042
    %v7044 = vmul.f32 %v7033, 1.442695
    %v7045 = vpow.pop %v7044
    %v7046 = vmul.f32 %v7034, 1.442695
    %v7047 = vpow.pop %v7046
    %v7048 = vmul.f32 %v7035, 1.442695
    %v7049 = vpow.pop %v7048
    %v7050 = vmul.f32 %v7036, 1.442695
    %v7051 = vpow.pop %v7050
    %v7052 = vmul.f32 %v7037, 1.442695
    %v7053 = vpow.pop %v7052
    %v7054 = vsel %vm317, %v7039, 0.0
    %7055 = vadd.xlane.f32.xlu0 %v7054
    %v7056 = vpop.xlane.xlu0 %7055
    %v7057 = vsel %vm317, %v7041, 0.0
    %7058 = vadd.xlane.f32.xlu0 %v7057
    %v7059 = vpop.xlane.xlu0 %7058
    %v7060 = vsel %vm317, %v7043, 0.0
    %7061 = vadd.xlane.f32.xlu0 %v7060
    %v7062 = vpop.xlane.xlu0 %7061
    %v7063 = vsel %vm317, %v7045, 0.0
    %7064 = vadd.xlane.f32.xlu0 %v7063
    %v7065 = vpop.xlane.xlu0 %7064
    %v7066 = vsel %vm317, %v7047, 0.0
    %7067 = vadd.xlane.f32.xlu0 %v7066
    %v7068 = vpop.xlane.xlu0 %7067
    %v7069 = vsel %vm317, %v7049, 0.0
    %7070 = vadd.xlane.f32.xlu0 %v7069
    %v7071 = vpop.xlane.xlu0 %7070
    %v7072 = vsel %vm317, %v7051, 0.0
    %7073 = vadd.xlane.f32.xlu0 %v7072
    %v7074 = vpop.xlane.xlu0 %7073
    %v7075 = vsel %vm317, %v7053, 0.0
    %7076 = vadd.xlane.f32.xlu0 %v7075
    %v7077 = vpop.xlane.xlu0 %7076
    %v7078 = vrcp.pop %v7056
    %v7079 = vmul.f32 %v7056, %v7078
    %v7080 = vsub.f32 1.0, %v7079
    %v7081 = vmul.f32 %v7078, %v7080
    %v7082 = vadd.f32 %v7078, %v7081
    %vm7083 = vweird.f32 %v7056
    %vm7084 = vweird.f32 %v7078
    %vm7085 = vmor %vm7083, %vm7084
    %v7086 = vsel %vm7085, %v7078, %v7082
    %v7087 = vand.u32 2147483647, %v7056
    %vm7088 = vcmp.eq.f32.partialorder %v7087, 8.507059e+37
    %v7089 = vand.u32 %v7056, 2147483648
    %v7090 = vor.u32 1.1754944e-38, %v7089
    %v7091 = vsel %vm7088, %v7090, %v7086
    %v7092 = vmul.f32 %v7039, %v7091
    %v7093 = vrcp.pop %v7059
    %v7094 = vmul.f32 %v7059, %v7093
    %v7095 = vsub.f32 1.0, %v7094
    %v7096 = vmul.f32 %v7093, %v7095
    %v7097 = vadd.f32 %v7093, %v7096
    %vm7098 = vweird.f32 %v7059
    %vm7099 = vweird.f32 %v7093
    %vm7100 = vmor %vm7098, %vm7099
    %v7101 = vsel %vm7100, %v7093, %v7097
    %v7102 = vand.u32 2147483647, %v7059
    %vm7103 = vcmp.eq.f32.partialorder %v7102, 8.507059e+37
    %v7104 = vand.u32 %v7059, 2147483648
    %v7105 = vor.u32 1.1754944e-38, %v7104
    %v7106 = vsel %vm7103, %v7105, %v7101
    %v7107 = vmul.f32 %v7041, %v7106
    %v7108 = vrcp.pop %v7062
    %v7109 = vmul.f32 %v7062, %v7108
    %v7110 = vsub.f32 1.0, %v7109
    %v7111 = vmul.f32 %v7108, %v7110
    %v7112 = vadd.f32 %v7108, %v7111
    %vm7113 = vweird.f32 %v7062
    %vm7114 = vweird.f32 %v7108
    %vm7115 = vmor %vm7113, %vm7114
    %v7116 = vsel %vm7115, %v7108, %v7112
    %v7117 = vand.u32 2147483647, %v7062
    %vm7118 = vcmp.eq.f32.partialorder %v7117, 8.507059e+37
    %v7119 = vand.u32 %v7062, 2147483648
    %v7120 = vor.u32 1.1754944e-38, %v7119
    %v7121 = vsel %vm7118, %v7120, %v7116
    %v7122 = vmul.f32 %v7043, %v7121
    %v7123 = vrcp.pop %v7065
    %v7124 = vmul.f32 %v7065, %v7123
    %v7125 = vsub.f32 1.0, %v7124
    %v7126 = vmul.f32 %v7123, %v7125
    %v7127 = vadd.f32 %v7123, %v7126
    %vm7128 = vweird.f32 %v7065
    %vm7129 = vweird.f32 %v7123
    %vm7130 = vmor %vm7128, %vm7129
    %v7131 = vsel %vm7130, %v7123, %v7127
    %v7132 = vand.u32 2147483647, %v7065
    %vm7133 = vcmp.eq.f32.partialorder %v7132, 8.507059e+37
    %v7134 = vand.u32 %v7065, 2147483648
    %v7135 = vor.u32 1.1754944e-38, %v7134
    %v7136 = vsel %vm7133, %v7135, %v7131
    %v7137 = vmul.f32 %v7045, %v7136
    %v7138 = vrcp.pop %v7068
    %v7139 = vmul.f32 %v7068, %v7138
    %v7140 = vsub.f32 1.0, %v7139
    %v7141 = vmul.f32 %v7138, %v7140
    %v7142 = vadd.f32 %v7138, %v7141
    %vm7143 = vweird.f32 %v7068
    %vm7144 = vweird.f32 %v7138
    %vm7145 = vmor %vm7143, %vm7144
    %v7146 = vsel %vm7145, %v7138, %v7142
    %v7147 = vand.u32 2147483647, %v7068
    %vm7148 = vcmp.eq.f32.partialorder %v7147, 8.507059e+37
    %v7149 = vand.u32 %v7068, 2147483648
    %v7150 = vor.u32 1.1754944e-38, %v7149
    %v7151 = vsel %vm7148, %v7150, %v7146
    %v7152 = vmul.f32 %v7047, %v7151
    %v7153 = vrcp.pop %v7071
    %v7154 = vmul.f32 %v7071, %v7153
    %v7155 = vsub.f32 1.0, %v7154
    %v7156 = vmul.f32 %v7153, %v7155
    %v7157 = vadd.f32 %v7153, %v7156
    %vm7158 = vweird.f32 %v7071
    %vm7159 = vweird.f32 %v7153
    %vm7160 = vmor %vm7158, %vm7159
    %v7161 = vsel %vm7160, %v7153, %v7157
    %v7162 = vand.u32 2147483647, %v7071
    %vm7163 = vcmp.eq.f32.partialorder %v7162, 8.507059e+37
    %v7164 = vand.u32 %v7071, 2147483648
    %v7165 = vor.u32 1.1754944e-38, %v7164
    %v7166 = vsel %vm7163, %v7165, %v7161
    %v7167 = vmul.f32 %v7049, %v7166
    %v7168 = vrcp.pop %v7074
    %v7169 = vmul.f32 %v7074, %v7168
    %v7170 = vsub.f32 1.0, %v7169
    %v7171 = vmul.f32 %v7168, %v7170
    %v7172 = vadd.f32 %v7168, %v7171
    %vm7173 = vweird.f32 %v7074
    %vm7174 = vweird.f32 %v7168
    %vm7175 = vmor %vm7173, %vm7174
    %v7176 = vsel %vm7175, %v7168, %v7172
    %v7177 = vand.u32 2147483647, %v7074
    %vm7178 = vcmp.eq.f32.partialorder %v7177, 8.507059e+37
    %v7179 = vand.u32 %v7074, 2147483648
    %v7180 = vor.u32 1.1754944e-38, %v7179
    %v7181 = vsel %vm7178, %v7180, %v7176
    %v7182 = vmul.f32 %v7051, %v7181
    %v7183 = vrcp.pop %v7077
    %v7184 = vmul.f32 %v7077, %v7183
    %v7185 = vsub.f32 1.0, %v7184
    %v7186 = vmul.f32 %v7183, %v7185
    %v7187 = vadd.f32 %v7183, %v7186
    %vm7188 = vweird.f32 %v7077
    %vm7189 = vweird.f32 %v7183
    %vm7190 = vmor %vm7188, %vm7189
    %v7191 = vsel %vm7190, %v7183, %v7187
    %v7192 = vand.u32 2147483647, %v7077
    %vm7193 = vcmp.eq.f32.partialorder %v7192, 8.507059e+37
    %v7194 = vand.u32 %v7077, 2147483648
    %v7195 = vor.u32 1.1754944e-38, %v7194
    %v7196 = vsel %vm7193, %v7195, %v7191
    %v7197 = vmul.f32 %v7053, %v7196
    %v7199 = vsel %vm317, %v7092, 0
    %7201 = vmatpush.msra.mxu0 0.0
    %7202 = vmatpush.msra.mxu0 0.0
    %7203 = vmatpush.msra.mxu0 0.0
    %7204 = vmatpush.msra.mxu0 0.0
    %7205 = vmatpush.msra.mxu0 0.0
    %7206 = vmatpush.msra.mxu0 0.0
    %7207 = vmatpush.msra.mxu0 0.0
    %7208 = vmatpush.msra.mxu0 0.0
    %7209 = vmatpush.msra.mxu0 0.0
    %7210 = vmatpush.msra.mxu0 0.0
    %7211 = vmatpush.msra.mxu0 0.0
    %7212 = vmatpush.msra.mxu0 0.0
    %7213 = vmatpush.msra.mxu0 0.0
    %7214 = vmatpush.msra.mxu0 0.0
    %7215 = vmatpush.msra.mxu0 0.0
    %7216 = vmatpush.msra.mxu0 %v6759
    %7217 = vmatmul.f32.gmra.mxu0 %v7199
    %v7218 = vpop.f32.mrf.mxu0
    %v7219 = vadd.f32 0.0, %v7218
    %7220 = vdwg.mxu0
    %v7222 = vsel %vm317, %v7107, 0
    %7224 = vmatpush.msra.mxu0 0.0
    %7225 = vmatpush.msra.mxu0 0.0
    %7226 = vmatpush.msra.mxu0 0.0
    %7227 = vmatpush.msra.mxu0 0.0
    %7228 = vmatpush.msra.mxu0 0.0
    %7229 = vmatpush.msra.mxu0 0.0
    %7230 = vmatpush.msra.mxu0 0.0
    %7231 = vmatpush.msra.mxu0 0.0
    %7232 = vmatpush.msra.mxu0 0.0
    %7233 = vmatpush.msra.mxu0 0.0
    %7234 = vmatpush.msra.mxu0 0.0
    %7235 = vmatpush.msra.mxu0 0.0
    %7236 = vmatpush.msra.mxu0 0.0
    %7237 = vmatpush.msra.mxu0 0.0
    %7238 = vmatpush.msra.mxu0 0.0
    %7239 = vmatpush.msra.mxu0 %v6762
    %7240 = vmatmul.f32.gmra.mxu0 %v7222
    %v7241 = vpop.f32.mrf.mxu0
    %v7242 = vadd.f32 0.0, %v7241
    %7243 = vdwg.mxu0
    %v7245 = vsel %vm317, %v7122, 0
    %7247 = vmatpush.msra.mxu0 0.0
    %7248 = vmatpush.msra.mxu0 0.0
    %7249 = vmatpush.msra.mxu0 0.0
    %7250 = vmatpush.msra.mxu0 0.0
    %7251 = vmatpush.msra.mxu0 0.0
    %7252 = vmatpush.msra.mxu0 0.0
    %7253 = vmatpush.msra.mxu0 0.0
    %7254 = vmatpush.msra.mxu0 0.0
    %7255 = vmatpush.msra.mxu0 0.0
    %7256 = vmatpush.msra.mxu0 0.0
    %7257 = vmatpush.msra.mxu0 0.0
    %7258 = vmatpush.msra.mxu0 0.0
    %7259 = vmatpush.msra.mxu0 0.0
    %7260 = vmatpush.msra.mxu0 0.0
    %7261 = vmatpush.msra.mxu0 0.0
    %7262 = vmatpush.msra.mxu0 %v6765
    %7263 = vmatmul.f32.gmra.mxu0 %v7245
    %v7264 = vpop.f32.mrf.mxu0
    %v7265 = vadd.f32 0.0, %v7264
    %7266 = vdwg.mxu0
    %v7268 = vsel %vm317, %v7137, 0
    %7270 = vmatpush.msra.mxu0 0.0
    %7271 = vmatpush.msra.mxu0 0.0
    %7272 = vmatpush.msra.mxu0 0.0
    %7273 = vmatpush.msra.mxu0 0.0
    %7274 = vmatpush.msra.mxu0 0.0
    %7275 = vmatpush.msra.mxu0 0.0
    %7276 = vmatpush.msra.mxu0 0.0
    %7277 = vmatpush.msra.mxu0 0.0
    %7278 = vmatpush.msra.mxu0 0.0
    %7279 = vmatpush.msra.mxu0 0.0
    %7280 = vmatpush.msra.mxu0 0.0
    %7281 = vmatpush.msra.mxu0 0.0
    %7282 = vmatpush.msra.mxu0 0.0
    %7283 = vmatpush.msra.mxu0 0.0
    %7284 = vmatpush.msra.mxu0 0.0
    %7285 = vmatpush.msra.mxu0 %v6768
    %7286 = vmatmul.f32.gmra.mxu0 %v7268
    %v7287 = vpop.f32.mrf.mxu0
    %v7288 = vadd.f32 0.0, %v7287
    %7289 = vdwg.mxu0
    %v7291 = vsel %vm317, %v7152, 0
    %7293 = vmatpush.msra.mxu0 0.0
    %7294 = vmatpush.msra.mxu0 0.0
    %7295 = vmatpush.msra.mxu0 0.0
    %7296 = vmatpush.msra.mxu0 0.0
    %7297 = vmatpush.msra.mxu0 0.0
    %7298 = vmatpush.msra.mxu0 0.0
    %7299 = vmatpush.msra.mxu0 0.0
    %7300 = vmatpush.msra.mxu0 0.0
    %7301 = vmatpush.msra.mxu0 0.0
    %7302 = vmatpush.msra.mxu0 0.0
    %7303 = vmatpush.msra.mxu0 0.0
    %7304 = vmatpush.msra.mxu0 0.0
    %7305 = vmatpush.msra.mxu0 0.0
    %7306 = vmatpush.msra.mxu0 0.0
    %7307 = vmatpush.msra.mxu0 0.0
    %7308 = vmatpush.msra.mxu0 %v6771
    %7309 = vmatmul.f32.gmra.mxu0 %v7291
    %v7310 = vpop.f32.mrf.mxu0
    %v7311 = vadd.f32 0.0, %v7310
    %7312 = vdwg.mxu0
    %v7314 = vsel %vm317, %v7167, 0
    %7316 = vmatpush.msra.mxu0 0.0
    %7317 = vmatpush.msra.mxu0 0.0
    %7318 = vmatpush.msra.mxu0 0.0
    %7319 = vmatpush.msra.mxu0 0.0
    %7320 = vmatpush.msra.mxu0 0.0
    %7321 = vmatpush.msra.mxu0 0.0
    %7322 = vmatpush.msra.mxu0 0.0
    %7323 = vmatpush.msra.mxu0 0.0
    %7324 = vmatpush.msra.mxu0 0.0
    %7325 = vmatpush.msra.mxu0 0.0
    %7326 = vmatpush.msra.mxu0 0.0
    %7327 = vmatpush.msra.mxu0 0.0
    %7328 = vmatpush.msra.mxu0 0.0
    %7329 = vmatpush.msra.mxu0 0.0
    %7330 = vmatpush.msra.mxu0 0.0
    %7331 = vmatpush.msra.mxu0 %v6774
    %7332 = vmatmul.f32.gmra.mxu0 %v7314
    %v7333 = vpop.f32.mrf.mxu0
    %v7334 = vadd.f32 0.0, %v7333
    %7335 = vdwg.mxu0
    %v7337 = vsel %vm317, %v7182, 0
    %7339 = vmatpush.msra.mxu0 0.0
    %7340 = vmatpush.msra.mxu0 0.0
    %7341 = vmatpush.msra.mxu0 0.0
    %7342 = vmatpush.msra.mxu0 0.0
    %7343 = vmatpush.msra.mxu0 0.0
    %7344 = vmatpush.msra.mxu0 0.0
    %7345 = vmatpush.msra.mxu0 0.0
    %7346 = vmatpush.msra.mxu0 0.0
    %7347 = vmatpush.msra.mxu0 0.0
    %7348 = vmatpush.msra.mxu0 0.0
    %7349 = vmatpush.msra.mxu0 0.0
    %7350 = vmatpush.msra.mxu0 0.0
    %7351 = vmatpush.msra.mxu0 0.0
    %7352 = vmatpush.msra.mxu0 0.0
    %7353 = vmatpush.msra.mxu0 0.0
    %7354 = vmatpush.msra.mxu0 %v6777
    %7355 = vmatmul.f32.gmra.mxu0 %v7337
    %v7356 = vpop.f32.mrf.mxu0
    %v7357 = vadd.f32 0.0, %v7356
    %7358 = vdwg.mxu0
    %v7360 = vsel %vm317, %v7197, 0
    %7362 = vmatpush.msra.mxu0 0.0
    %7363 = vmatpush.msra.mxu0 0.0
    %7364 = vmatpush.msra.mxu0 0.0
    %7365 = vmatpush.msra.mxu0 0.0
    %7366 = vmatpush.msra.mxu0 0.0
    %7367 = vmatpush.msra.mxu0 0.0
    %7368 = vmatpush.msra.mxu0 0.0
    %7369 = vmatpush.msra.mxu0 0.0
    %7370 = vmatpush.msra.mxu0 0.0
    %7371 = vmatpush.msra.mxu0 0.0
    %7372 = vmatpush.msra.mxu0 0.0
    %7373 = vmatpush.msra.mxu0 0.0
    %7374 = vmatpush.msra.mxu0 0.0
    %7375 = vmatpush.msra.mxu0 0.0
    %7376 = vmatpush.msra.mxu0 0.0
    %7377 = vmatpush.msra.mxu0 %v6780
    %7378 = vmatmul.f32.gmra.mxu0 %v7360
    %v7379 = vpop.f32.mrf.mxu0
    %v7380 = vadd.f32 0.0, %v7379
    %7381 = vdwg.mxu0
    %s7382 = scalar_lea.vmem %s6, 56
    %v7383 = vld [vmem:[%s7382] sm:$0xff]
    %v7385 = vsel %vm317, %v7219, 0
    %v7388 = vsel %vm317, %v7242, 0
    %v7391 = vsel %vm317, %v7265, 0
    %v7394 = vsel %vm317, %v7288, 0
    %v7397 = vsel %vm317, %v7311, 0
    %v7400 = vsel %vm317, %v7334, 0
    %v7403 = vsel %vm317, %v7357, 0
    %v7406 = vsel %vm317, %v7380, 0
    %7408 = vmatpush.msra.mxu0 0.0
    %7409 = vmatpush.msra.mxu0 0.0
    %7410 = vmatpush.msra.mxu0 0.0
    %7411 = vmatpush.msra.mxu0 0.0
    %7412 = vmatpush.msra.mxu0 0.0
    %7413 = vmatpush.msra.mxu0 0.0
    %7414 = vmatpush.msra.mxu0 0.0
    %7415 = vmatpush.msra.mxu0 0.0
    %7416 = vmatpush.msra.mxu0 0.0
    %7417 = vmatpush.msra.mxu0 0.0
    %7418 = vmatpush.msra.mxu0 0.0
    %7419 = vmatpush.msra.mxu0 0.0
    %7420 = vmatpush.msra.mxu0 0.0
    %7421 = vmatpush.msra.mxu0 0.0
    %7422 = vmatpush.msra.mxu0 0.0
    %7423 = vmatpush.msra.mxu0 %v7383
    %7424 = vmatmul.f32.gmra.mxu0 %v7385
    %v7425 = vpop.f32.mrf.mxu0
    %v7426 = vadd.f32 0.0, %v7425
    %7427 = vmatmul.f32.gmra.mxu0 %v7388
    %v7428 = vpop.f32.mrf.mxu0
    %v7429 = vadd.f32 0.0, %v7428
    %7430 = vmatmul.f32.gmra.mxu0 %v7391
    %v7431 = vpop.f32.mrf.mxu0
    %v7432 = vadd.f32 0.0, %v7431
    %7433 = vmatmul.f32.gmra.mxu0 %v7394
    %v7434 = vpop.f32.mrf.mxu0
    %v7435 = vadd.f32 0.0, %v7434
    %7436 = vmatmul.f32.gmra.mxu0 %v7397
    %v7437 = vpop.f32.mrf.mxu0
    %v7438 = vadd.f32 0.0, %v7437
    %7439 = vmatmul.f32.gmra.mxu0 %v7400
    %v7440 = vpop.f32.mrf.mxu0
    %v7441 = vadd.f32 0.0, %v7440
    %7442 = vmatmul.f32.gmra.mxu0 %v7403
    %v7443 = vpop.f32.mrf.mxu0
    %v7444 = vadd.f32 0.0, %v7443
    %7445 = vmatmul.f32.gmra.mxu0 %v7406
    %v7446 = vpop.f32.mrf.mxu0
    %v7447 = vadd.f32 0.0, %v7446
    %7448 = vdwg.mxu0
    %v7449 = vadd.f32 %v6621, %v7426
    %v7450 = vadd.f32 %v6622, %v7429
    %v7451 = vadd.f32 %v6623, %v7432
    %v7452 = vadd.f32 %v6624, %v7435
    %v7453 = vadd.f32 %v6625, %v7438
    %v7454 = vadd.f32 %v6626, %v7441
    %v7455 = vadd.f32 %v6627, %v7444
    %v7456 = vadd.f32 %v6628, %v7447
    %s7457 = scalar_lea.vmem %s7, 1
    %v7458 = vld [vmem:[%s7457] sm:$0x1]
    %v7460 = vperm.slane %v7458, 0
    %v7462 = vadd.f32 %v7449, %v7460
    %v7463 = vadd.f32 %v7450, %v7460
    %v7464 = vadd.f32 %v7451, %v7460
    %v7465 = vadd.f32 %v7452, %v7460
    %v7466 = vadd.f32 %v7453, %v7460
    %v7467 = vadd.f32 %v7454, %v7460
    %v7468 = vadd.f32 %v7455, %v7460
    %v7469 = vadd.f32 %v7456, %v7460
    %v7470 = vadd.f32 %v4129, %v7462
    %v7471 = vadd.f32 %v4130, %v7463
    %v7472 = vadd.f32 %v4131, %v7464
    %v7473 = vadd.f32 %v4132, %v7465
    %v7474 = vadd.f32 %v4133, %v7466
    %v7475 = vadd.f32 %v4134, %v7467
    %v7476 = vadd.f32 %v4135, %v7468
    %v7477 = vadd.f32 %v4136, %v7469
    %s7478 = scalar_lea.vmem %s8, 4
    %v7479 = vld [vmem:[%s7478] sm:$0x1]
    %s7480 = scalar_lea.vmem %s8, 5
    %v7481 = vld [vmem:[%s7480] sm:$0x1]
    %v7482 = vsel %vm149, %v7470, 0.0
    %7483 = vadd.xlane.f32.xlu0 %v7482
    %v7484 = vpop.xlane.xlu0 %7483
    %v7485 = vsel %vm149, %v7471, 0.0
    %7486 = vadd.xlane.f32.xlu0 %v7485
    %v7487 = vpop.xlane.xlu0 %7486
    %v7488 = vsel %vm149, %v7472, 0.0
    %7489 = vadd.xlane.f32.xlu0 %v7488
    %v7490 = vpop.xlane.xlu0 %7489
    %v7491 = vsel %vm149, %v7473, 0.0
    %7492 = vadd.xlane.f32.xlu0 %v7491
    %v7493 = vpop.xlane.xlu0 %7492
    %v7494 = vsel %vm149, %v7474, 0.0
    %7495 = vadd.xlane.f32.xlu0 %v7494
    %v7496 = vpop.xlane.xlu0 %7495
    %v7497 = vsel %vm149, %v7475, 0.0
    %7498 = vadd.xlane.f32.xlu0 %v7497
    %v7499 = vpop.xlane.xlu0 %7498
    %v7500 = vsel %vm149, %v7476, 0.0
    %7501 = vadd.xlane.f32.xlu0 %v7500
    %v7502 = vpop.xlane.xlu0 %7501
    %v7503 = vsel %vm149, %v7477, 0.0
    %7504 = vadd.xlane.f32.xlu0 %v7503
    %v7505 = vpop.xlane.xlu0 %7504
    %v7506 = vmul.f32 %v7484, %v3529
    %v7507 = vmul.f32 %v7487, %v3529
    %v7508 = vmul.f32 %v7490, %v3529
    %v7509 = vmul.f32 %v7493, %v3529
    %v7510 = vmul.f32 %v7496, %v3529
    %v7511 = vmul.f32 %v7499, %v3529
    %v7512 = vmul.f32 %v7502, %v3529
    %v7513 = vmul.f32 %v7505, %v3529
    %v7514 = vsub.f32 %v7470, %v7506
    %v7515 = vsub.f32 %v7471, %v7507
    %v7516 = vsub.f32 %v7472, %v7508
    %v7517 = vsub.f32 %v7473, %v7509
    %v7518 = vsub.f32 %v7474, %v7510
    %v7519 = vsub.f32 %v7475, %v7511
    %v7520 = vsub.f32 %v7476, %v7512
    %v7521 = vsub.f32 %v7477, %v7513
    %v7522 = vmul.f32 %v7514, %v7514
    %v7523 = vmul.f32 %v7515, %v7515
    %v7524 = vmul.f32 %v7516, %v7516
    %v7525 = vmul.f32 %v7517, %v7517
    %v7526 = vmul.f32 %v7518, %v7518
    %v7527 = vmul.f32 %v7519, %v7519
    %v7528 = vmul.f32 %v7520, %v7520
    %v7529 = vmul.f32 %v7521, %v7521
    %v7530 = vsel %vm149, %v7522, 0.0
    %7531 = vadd.xlane.f32.xlu0 %v7530
    %v7532 = vpop.xlane.xlu0 %7531
    %v7533 = vsel %vm149, %v7523, 0.0
    %7534 = vadd.xlane.f32.xlu0 %v7533
    %v7535 = vpop.xlane.xlu0 %7534
    %v7536 = vsel %vm149, %v7524, 0.0
    %7537 = vadd.xlane.f32.xlu0 %v7536
    %v7538 = vpop.xlane.xlu0 %7537
    %v7539 = vsel %vm149, %v7525, 0.0
    %7540 = vadd.xlane.f32.xlu0 %v7539
    %v7541 = vpop.xlane.xlu0 %7540
    %v7542 = vsel %vm149, %v7526, 0.0
    %7543 = vadd.xlane.f32.xlu0 %v7542
    %v7544 = vpop.xlane.xlu0 %7543
    %v7545 = vsel %vm149, %v7527, 0.0
    %7546 = vadd.xlane.f32.xlu0 %v7545
    %v7547 = vpop.xlane.xlu0 %7546
    %v7548 = vsel %vm149, %v7528, 0.0
    %7549 = vadd.xlane.f32.xlu0 %v7548
    %v7550 = vpop.xlane.xlu0 %7549
    %v7551 = vsel %vm149, %v7529, 0.0
    %7552 = vadd.xlane.f32.xlu0 %v7551
    %v7553 = vpop.xlane.xlu0 %7552
    %v7554 = vmul.f32 %v7532, %v3529
    %v7555 = vmul.f32 %v7535, %v3529
    %v7556 = vmul.f32 %v7538, %v3529
    %v7557 = vmul.f32 %v7541, %v3529
    %v7558 = vmul.f32 %v7544, %v3529
    %v7559 = vmul.f32 %v7547, %v3529
    %v7560 = vmul.f32 %v7550, %v3529
    %v7561 = vmul.f32 %v7553, %v3529
    %v7562 = vadd.f32 %v7554, 1e-05
    %v7563 = vadd.f32 %v7555, 1e-05
    %v7564 = vadd.f32 %v7556, 1e-05
    %v7565 = vadd.f32 %v7557, 1e-05
    %v7566 = vadd.f32 %v7558, 1e-05
    %v7567 = vadd.f32 %v7559, 1e-05
    %v7568 = vadd.f32 %v7560, 1e-05
    %v7569 = vadd.f32 %v7561, 1e-05
    %v7570 = vrsqrt.pop %v7562
    %v7571 = vmul.f32 %v7570, %v7562
    %v7572 = vmul.f32 %v7571, %v7570
    %v7573 = vmul.f32 0.5, %v7572
    %v7574 = vsub.f32 1.5, %v7573
    %v7575 = vmul.f32 %v7570, %v7574
    %vm7576 = vweird.f32 %v7562
    %vm7577 = vweird.f32 %v7570
    %vm7578 = vmor %vm7576, %vm7577
    %v7579 = vsel %vm7578, %v7570, %v7575
    %v7580 = vrsqrt.pop %v7563
    %v7581 = vmul.f32 %v7580, %v7563
    %v7582 = vmul.f32 %v7581, %v7580
    %v7583 = vmul.f32 0.5, %v7582
    %v7584 = vsub.f32 1.5, %v7583
    %v7585 = vmul.f32 %v7580, %v7584
    %vm7586 = vweird.f32 %v7563
    %vm7587 = vweird.f32 %v7580
    %vm7588 = vmor %vm7586, %vm7587
    %v7589 = vsel %vm7588, %v7580, %v7585
    %v7590 = vrsqrt.pop %v7564
    %v7591 = vmul.f32 %v7590, %v7564
    %v7592 = vmul.f32 %v7591, %v7590
    %v7593 = vmul.f32 0.5, %v7592
    %v7594 = vsub.f32 1.5, %v7593
    %v7595 = vmul.f32 %v7590, %v7594
    %vm7596 = vweird.f32 %v7564
    %vm7597 = vweird.f32 %v7590
    %vm7598 = vmor %vm7596, %vm7597
    %v7599 = vsel %vm7598, %v7590, %v7595
    %v7600 = vrsqrt.pop %v7565
    %v7601 = vmul.f32 %v7600, %v7565
    %v7602 = vmul.f32 %v7601, %v7600
    %v7603 = vmul.f32 0.5, %v7602
    %v7604 = vsub.f32 1.5, %v7603
    %v7605 = vmul.f32 %v7600, %v7604
    %vm7606 = vweird.f32 %v7565
    %vm7607 = vweird.f32 %v7600
    %vm7608 = vmor %vm7606, %vm7607
    %v7609 = vsel %vm7608, %v7600, %v7605
    %v7610 = vrsqrt.pop %v7566
    %v7611 = vmul.f32 %v7610, %v7566
    %v7612 = vmul.f32 %v7611, %v7610
    %v7613 = vmul.f32 0.5, %v7612
    %v7614 = vsub.f32 1.5, %v7613
    %v7615 = vmul.f32 %v7610, %v7614
    %vm7616 = vweird.f32 %v7566
    %vm7617 = vweird.f32 %v7610
    %vm7618 = vmor %vm7616, %vm7617
    %v7619 = vsel %vm7618, %v7610, %v7615
    %v7620 = vrsqrt.pop %v7567
    %v7621 = vmul.f32 %v7620, %v7567
    %v7622 = vmul.f32 %v7621, %v7620
    %v7623 = vmul.f32 0.5, %v7622
    %v7624 = vsub.f32 1.5, %v7623
    %v7625 = vmul.f32 %v7620, %v7624
    %vm7626 = vweird.f32 %v7567
    %vm7627 = vweird.f32 %v7620
    %vm7628 = vmor %vm7626, %vm7627
    %v7629 = vsel %vm7628, %v7620, %v7625
    %v7630 = vrsqrt.pop %v7568
    %v7631 = vmul.f32 %v7630, %v7568
    %v7632 = vmul.f32 %v7631, %v7630
    %v7633 = vmul.f32 0.5, %v7632
    %v7634 = vsub.f32 1.5, %v7633
    %v7635 = vmul.f32 %v7630, %v7634
    %vm7636 = vweird.f32 %v7568
    %vm7637 = vweird.f32 %v7630
    %vm7638 = vmor %vm7636, %vm7637
    %v7639 = vsel %vm7638, %v7630, %v7635
    %v7640 = vrsqrt.pop %v7569
    %v7641 = vmul.f32 %v7640, %v7569
    %v7642 = vmul.f32 %v7641, %v7640
    %v7643 = vmul.f32 0.5, %v7642
    %v7644 = vsub.f32 1.5, %v7643
    %v7645 = vmul.f32 %v7640, %v7644
    %vm7646 = vweird.f32 %v7569
    %vm7647 = vweird.f32 %v7640
    %vm7648 = vmor %vm7646, %vm7647
    %v7649 = vsel %vm7648, %v7640, %v7645
    %v7650 = vmul.f32 %v7514, %v7579
    %v7651 = vmul.f32 %v7515, %v7589
    %v7652 = vmul.f32 %v7516, %v7599
    %v7653 = vmul.f32 %v7517, %v7609
    %v7654 = vmul.f32 %v7518, %v7619
    %v7655 = vmul.f32 %v7519, %v7629
    %v7656 = vmul.f32 %v7520, %v7639
    %v7657 = vmul.f32 %v7521, %v7649
    %v7659 = vperm.slane %v7479, 0
    %v7661 = vmul.f32 %v7650, %v7659
    %v7662 = vmul.f32 %v7651, %v7659
    %v7663 = vmul.f32 %v7652, %v7659
    %v7664 = vmul.f32 %v7653, %v7659
    %v7665 = vmul.f32 %v7654, %v7659
    %v7666 = vmul.f32 %v7655, %v7659
    %v7667 = vmul.f32 %v7656, %v7659
    %v7668 = vmul.f32 %v7657, %v7659
    %v7670 = vperm.slane %v7481, 0
    %v7672 = vadd.f32 %v7661, %v7670
    %v7673 = vadd.f32 %v7662, %v7670
    %v7674 = vadd.f32 %v7663, %v7670
    %v7675 = vadd.f32 %v7664, %v7670
    %v7676 = vadd.f32 %v7665, %v7670
    %v7677 = vadd.f32 %v7666, %v7670
    %v7678 = vadd.f32 %v7667, %v7670
    %v7679 = vadd.f32 %v7668, %v7670
    %s7680 = scalar_lea.vmem %s9, 32
    %v7681 = vld [vmem:[%s7680] sm:$0xff]
    %v7682 = vld [vmem:[%s7680 + $0x8] sm:$0xff]
    %v7683 = vld [vmem:[%s7680 + $0x10] sm:$0xff]
    %v7684 = vld [vmem:[%s7680 + $0x18] sm:$0xff]
    %s7685 = scalar_lea.vmem %s10, 1
    %v7686 = vld [vmem:[%s7685] sm:$0x1]
    %v7688 = vperm.slane %v7686, 0
    %v7691 = vsel %vm149, %v7672, 0
    %v7694 = vsel %vm149, %v7673, 0
    %v7697 = vsel %vm149, %v7674, 0
    %v7700 = vsel %vm149, %v7675, 0
    %v7703 = vsel %vm149, %v7676, 0
    %v7706 = vsel %vm149, %v7677, 0
    %v7709 = vsel %vm149, %v7678, 0
    %v7712 = vsel %vm149, %v7679, 0
    %7714 = vmatpush.msra.mxu0 0.0
    %7715 = vmatpush.msra.mxu0 0.0
    %7716 = vmatpush.msra.mxu0 0.0
    %7717 = vmatpush.msra.mxu0 0.0
    %7718 = vmatpush.msra.mxu0 0.0
    %7719 = vmatpush.msra.mxu0 0.0
    %7720 = vmatpush.msra.mxu0 0.0
    %7721 = vmatpush.msra.mxu0 0.0
    %7722 = vmatpush.msra.mxu0 0.0
    %7723 = vmatpush.msra.mxu0 0.0
    %7724 = vmatpush.msra.mxu0 0.0
    %7725 = vmatpush.msra.mxu0 0.0
    %7726 = vmatpush.msra.mxu0 %v7684
    %7727 = vmatpush.msra.mxu0 %v7683
    %7728 = vmatpush.msra.mxu0 %v7682
    %7729 = vmatpush.msra.mxu0 %v7681
    %7730 = vmatmul.f32.gmra.mxu0 %v7691
    %v7731 = vpop.f32.mrf.mxu0
    %v7732 = vadd.f32 %v7688, %v7731
    %7733 = vmatmul.f32.gmra.mxu0 %v7694
    %v7734 = vpop.f32.mrf.mxu0
    %v7735 = vadd.f32 %v7688, %v7734
    %7736 = vmatmul.f32.gmra.mxu0 %v7697
    %v7737 = vpop.f32.mrf.mxu0
    %v7738 = vadd.f32 %v7688, %v7737
    %7739 = vmatmul.f32.gmra.mxu0 %v7700
    %v7740 = vpop.f32.mrf.mxu0
    %v7741 = vadd.f32 %v7688, %v7740
    %7742 = vmatmul.f32.gmra.mxu0 %v7703
    %v7743 = vpop.f32.mrf.mxu0
    %v7744 = vadd.f32 %v7688, %v7743
    %7745 = vmatmul.f32.gmra.mxu0 %v7706
    %v7746 = vpop.f32.mrf.mxu0
    %v7747 = vadd.f32 %v7688, %v7746
    %7748 = vmatmul.f32.gmra.mxu0 %v7709
    %v7749 = vpop.f32.mrf.mxu0
    %v7750 = vadd.f32 %v7688, %v7749
    %7751 = vmatmul.f32.gmra.mxu0 %v7712
    %v7752 = vpop.f32.mrf.mxu0
    %v7753 = vadd.f32 %v7688, %v7752
    %7754 = vdwg.mxu0
    %v7755 = vmul.f32 %v7732, 0.5
    %v7756 = vmul.f32 %v7735, 0.5
    %v7757 = vmul.f32 %v7738, 0.5
    %v7758 = vmul.f32 %v7741, 0.5
    %v7759 = vmul.f32 %v7744, 0.5
    %v7760 = vmul.f32 %v7747, 0.5
    %v7761 = vmul.f32 %v7750, 0.5
    %v7762 = vmul.f32 %v7753, 0.5
    %v7763 = vmul.f32 %v7732, 0.044715
    %v7764 = vmul.f32 %v7735, 0.044715
    %v7765 = vmul.f32 %v7738, 0.044715
    %v7766 = vmul.f32 %v7741, 0.044715
    %v7767 = vmul.f32 %v7744, 0.044715
    %v7768 = vmul.f32 %v7747, 0.044715
    %v7769 = vmul.f32 %v7750, 0.044715
    %v7770 = vmul.f32 %v7753, 0.044715
    %v7771 = vmul.f32 %v7763, %v7732
    %v7772 = vmul.f32 %v7764, %v7735
    %v7773 = vmul.f32 %v7765, %v7738
    %v7774 = vmul.f32 %v7766, %v7741
    %v7775 = vmul.f32 %v7767, %v7744
    %v7776 = vmul.f32 %v7768, %v7747
    %v7777 = vmul.f32 %v7769, %v7750
    %v7778 = vmul.f32 %v7770, %v7753
    %v7779 = vmul.f32 %v7771, %v7732
    %v7780 = vmul.f32 %v7772, %v7735
    %v7781 = vmul.f32 %v7773, %v7738
    %v7782 = vmul.f32 %v7774, %v7741
    %v7783 = vmul.f32 %v7775, %v7744
    %v7784 = vmul.f32 %v7776, %v7747
    %v7785 = vmul.f32 %v7777, %v7750
    %v7786 = vmul.f32 %v7778, %v7753
    %v7787 = vadd.f32 %v7732, %v7779
    %v7788 = vadd.f32 %v7735, %v7780
    %v7789 = vadd.f32 %v7738, %v7781
    %v7790 = vadd.f32 %v7741, %v7782
    %v7791 = vadd.f32 %v7744, %v7783
    %v7792 = vadd.f32 %v7747, %v7784
    %v7793 = vadd.f32 %v7750, %v7785
    %v7794 = vadd.f32 %v7753, %v7786
    %v7795 = vmul.f32 %v7787, 0.7978846
    %v7796 = vmul.f32 %v7788, 0.7978846
    %v7797 = vmul.f32 %v7789, 0.7978846
    %v7798 = vmul.f32 %v7790, 0.7978846
    %v7799 = vmul.f32 %v7791, 0.7978846
    %v7800 = vmul.f32 %v7792, 0.7978846
    %v7801 = vmul.f32 %v7793, 0.7978846
    %v7802 = vmul.f32 %v7794, 0.7978846
    %v7803 = vtanh.pop %v7795
    %v7804 = vtanh.pop %v7796
    %v7805 = vtanh.pop %v7797
    %v7806 = vtanh.pop %v7798
    %v7807 = vtanh.pop %v7799
    %v7808 = vtanh.pop %v7800
    %v7809 = vtanh.pop %v7801
    %v7810 = vtanh.pop %v7802
    %v7811 = vadd.f32 %v7803, 1.0
    %v7812 = vadd.f32 %v7804, 1.0
    %v7813 = vadd.f32 %v7805, 1.0
    %v7814 = vadd.f32 %v7806, 1.0
    %v7815 = vadd.f32 %v7807, 1.0
    %v7816 = vadd.f32 %v7808, 1.0
    %v7817 = vadd.f32 %v7809, 1.0
    %v7818 = vadd.f32 %v7810, 1.0
    %v7819 = vmul.f32 %v7755, %v7811
    %v7820 = vmul.f32 %v7756, %v7812
    %v7821 = vmul.f32 %v7757, %v7813
    %v7822 = vmul.f32 %v7758, %v7814
    %v7823 = vmul.f32 %v7759, %v7815
    %v7824 = vmul.f32 %v7760, %v7816
    %v7825 = vmul.f32 %v7761, %v7817
    %v7826 = vmul.f32 %v7762, %v7818
    %s7827 = scalar_lea.vmem %s11, 64
    %v7828 = vld [vmem:[%s7827] sm:$0xff]
    %v7829 = vld [vmem:[%s7827 + $0x8] sm:$0xff]
    %v7830 = vld [vmem:[%s7827 + $0x10] sm:$0xff]
    %v7831 = vld [vmem:[%s7827 + $0x18] sm:$0xff]
    %v7832 = vld [vmem:[%s7827 + $0x20] sm:$0xff]
    %v7833 = vld [vmem:[%s7827 + $0x28] sm:$0xff]
    %v7834 = vld [vmem:[%s7827 + $0x30] sm:$0xff]
    %v7835 = vld [vmem:[%s7827 + $0x38] sm:$0xff]
    %s7836 = scalar_lea.vmem %s12, 1
    %v7837 = vld [vmem:[%s7836] sm:$0x1]
    %v7839 = vperm.slane %v7837, 0
    %v7842 = vsel %vm3861, %v7819, 0
    %v7845 = vsel %vm3861, %v7820, 0
    %v7848 = vsel %vm3861, %v7821, 0
    %v7851 = vsel %vm3861, %v7822, 0
    %v7854 = vsel %vm3861, %v7823, 0
    %v7857 = vsel %vm3861, %v7824, 0
    %v7860 = vsel %vm3861, %v7825, 0
    %v7863 = vsel %vm3861, %v7826, 0
    %7865 = vmatpush.msra.mxu0 0.0
    %7866 = vmatpush.msra.mxu0 0.0
    %7867 = vmatpush.msra.mxu0 0.0
    %7868 = vmatpush.msra.mxu0 0.0
    %7869 = vmatpush.msra.mxu0 0.0
    %7870 = vmatpush.msra.mxu0 0.0
    %7871 = vmatpush.msra.mxu0 0.0
    %7872 = vmatpush.msra.mxu0 0.0
    %7873 = vmatpush.msra.mxu0 %v7835
    %7874 = vmatpush.msra.mxu0 %v7834
    %7875 = vmatpush.msra.mxu0 %v7833
    %7876 = vmatpush.msra.mxu0 %v7832
    %7877 = vmatpush.msra.mxu0 %v7831
    %7878 = vmatpush.msra.mxu0 %v7830
    %7879 = vmatpush.msra.mxu0 %v7829
    %7880 = vmatpush.msra.mxu0 %v7828
    %7881 = vmatmul.f32.gmra.mxu0 %v7842
    %v7882 = vpop.f32.mrf.mxu0
    %v7883 = vadd.f32 %v7839, %v7882
    %7884 = vmatmul.f32.gmra.mxu0 %v7845
    %v7885 = vpop.f32.mrf.mxu0
    %v7886 = vadd.f32 %v7839, %v7885
    %7887 = vmatmul.f32.gmra.mxu0 %v7848
    %v7888 = vpop.f32.mrf.mxu0
    %v7889 = vadd.f32 %v7839, %v7888
    %7890 = vmatmul.f32.gmra.mxu0 %v7851
    %v7891 = vpop.f32.mrf.mxu0
    %v7892 = vadd.f32 %v7839, %v7891
    %7893 = vmatmul.f32.gmra.mxu0 %v7854
    %v7894 = vpop.f32.mrf.mxu0
    %v7895 = vadd.f32 %v7839, %v7894
    %7896 = vmatmul.f32.gmra.mxu0 %v7857
    %v7897 = vpop.f32.mrf.mxu0
    %v7898 = vadd.f32 %v7839, %v7897
    %7899 = vmatmul.f32.gmra.mxu0 %v7860
    %v7900 = vpop.f32.mrf.mxu0
    %v7901 = vadd.f32 %v7839, %v7900
    %7902 = vmatmul.f32.gmra.mxu0 %v7863
    %v7903 = vpop.f32.mrf.mxu0
    %v7904 = vadd.f32 %v7839, %v7903
    %7905 = vdwg.mxu0
    %v7906 = vadd.f32 %v7672, %v7883
    %v7907 = vadd.f32 %v7673, %v7886
    %v7908 = vadd.f32 %v7674, %v7889
    %v7909 = vadd.f32 %v7675, %v7892
    %v7910 = vadd.f32 %v7676, %v7895
    %v7911 = vadd.f32 %v7677, %v7898
    %v7912 = vadd.f32 %v7678, %v7901
    %v7913 = vadd.f32 %v7679, %v7904
    %s7914 = scalar_lea.vmem %s8, 6
    %v7915 = vld [vmem:[%s7914] sm:$0x1]
    %s7916 = scalar_lea.vmem %s8, 7
    %v7917 = vld [vmem:[%s7916] sm:$0x1]
    %v7918 = vsel %vm149, %v7906, 0.0
    %7919 = vadd.xlane.f32.xlu0 %v7918
    %v7920 = vpop.xlane.xlu0 %7919
    %v7921 = vsel %vm149, %v7907, 0.0
    %7922 = vadd.xlane.f32.xlu0 %v7921
    %v7923 = vpop.xlane.xlu0 %7922
    %v7924 = vsel %vm149, %v7908, 0.0
    %7925 = vadd.xlane.f32.xlu0 %v7924
    %v7926 = vpop.xlane.xlu0 %7925
    %v7927 = vsel %vm149, %v7909, 0.0
    %7928 = vadd.xlane.f32.xlu0 %v7927
    %v7929 = vpop.xlane.xlu0 %7928
    %v7930 = vsel %vm149, %v7910, 0.0
    %7931 = vadd.xlane.f32.xlu0 %v7930
    %v7932 = vpop.xlane.xlu0 %7931
    %v7933 = vsel %vm149, %v7911, 0.0
    %7934 = vadd.xlane.f32.xlu0 %v7933
    %v7935 = vpop.xlane.xlu0 %7934
    %v7936 = vsel %vm149, %v7912, 0.0
    %7937 = vadd.xlane.f32.xlu0 %v7936
    %v7938 = vpop.xlane.xlu0 %7937
    %v7939 = vsel %vm149, %v7913, 0.0
    %7940 = vadd.xlane.f32.xlu0 %v7939
    %v7941 = vpop.xlane.xlu0 %7940
    %v7942 = vmul.f32 %v7920, %v3529
    %v7943 = vmul.f32 %v7923, %v3529
    %v7944 = vmul.f32 %v7926, %v3529
    %v7945 = vmul.f32 %v7929, %v3529
    %v7946 = vmul.f32 %v7932, %v3529
    %v7947 = vmul.f32 %v7935, %v3529
    %v7948 = vmul.f32 %v7938, %v3529
    %v7949 = vmul.f32 %v7941, %v3529
    %v7950 = vsub.f32 %v7906, %v7942
    %v7951 = vsub.f32 %v7907, %v7943
    %v7952 = vsub.f32 %v7908, %v7944
    %v7953 = vsub.f32 %v7909, %v7945
    %v7954 = vsub.f32 %v7910, %v7946
    %v7955 = vsub.f32 %v7911, %v7947
    %v7956 = vsub.f32 %v7912, %v7948
    %v7957 = vsub.f32 %v7913, %v7949
    %v7958 = vmul.f32 %v7950, %v7950
    %v7959 = vmul.f32 %v7951, %v7951
    %v7960 = vmul.f32 %v7952, %v7952
    %v7961 = vmul.f32 %v7953, %v7953
    %v7962 = vmul.f32 %v7954, %v7954
    %v7963 = vmul.f32 %v7955, %v7955
    %v7964 = vmul.f32 %v7956, %v7956
    %v7965 = vmul.f32 %v7957, %v7957
    %v7966 = vsel %vm149, %v7958, 0.0
    %7967 = vadd.xlane.f32.xlu0 %v7966
    %v7968 = vpop.xlane.xlu0 %7967
    %v7969 = vsel %vm149, %v7959, 0.0
    %7970 = vadd.xlane.f32.xlu0 %v7969
    %v7971 = vpop.xlane.xlu0 %7970
    %v7972 = vsel %vm149, %v7960, 0.0
    %7973 = vadd.xlane.f32.xlu0 %v7972
    %v7974 = vpop.xlane.xlu0 %7973
    %v7975 = vsel %vm149, %v7961, 0.0
    %7976 = vadd.xlane.f32.xlu0 %v7975
    %v7977 = vpop.xlane.xlu0 %7976
    %v7978 = vsel %vm149, %v7962, 0.0
    %7979 = vadd.xlane.f32.xlu0 %v7978
    %v7980 = vpop.xlane.xlu0 %7979
    %v7981 = vsel %vm149, %v7963, 0.0
    %7982 = vadd.xlane.f32.xlu0 %v7981
    %v7983 = vpop.xlane.xlu0 %7982
    %v7984 = vsel %vm149, %v7964, 0.0
    %7985 = vadd.xlane.f32.xlu0 %v7984
    %v7986 = vpop.xlane.xlu0 %7985
    %v7987 = vsel %vm149, %v7965, 0.0
    %7988 = vadd.xlane.f32.xlu0 %v7987
    %v7989 = vpop.xlane.xlu0 %7988
    %v7990 = vmul.f32 %v7968, %v3529
    %v7991 = vmul.f32 %v7971, %v3529
    %v7992 = vmul.f32 %v7974, %v3529
    %v7993 = vmul.f32 %v7977, %v3529
    %v7994 = vmul.f32 %v7980, %v3529
    %v7995 = vmul.f32 %v7983, %v3529
    %v7996 = vmul.f32 %v7986, %v3529
    %v7997 = vmul.f32 %v7989, %v3529
    %v7998 = vadd.f32 %v7990, 1e-05
    %v7999 = vadd.f32 %v7991, 1e-05
    %v8000 = vadd.f32 %v7992, 1e-05
    %v8001 = vadd.f32 %v7993, 1e-05
    %v8002 = vadd.f32 %v7994, 1e-05
    %v8003 = vadd.f32 %v7995, 1e-05
    %v8004 = vadd.f32 %v7996, 1e-05
    %v8005 = vadd.f32 %v7997, 1e-05
    %v8006 = vrsqrt.pop %v7998
    %v8007 = vmul.f32 %v8006, %v7998
    %v8008 = vmul.f32 %v8007, %v8006
    %v8009 = vmul.f32 0.5, %v8008
    %v8010 = vsub.f32 1.5, %v8009
    %v8011 = vmul.f32 %v8006, %v8010
    %vm8012 = vweird.f32 %v7998
    %vm8013 = vweird.f32 %v8006
    %vm8014 = vmor %vm8012, %vm8013
    %v8015 = vsel %vm8014, %v8006, %v8011
    %v8016 = vrsqrt.pop %v7999
    %v8017 = vmul.f32 %v8016, %v7999
    %v8018 = vmul.f32 %v8017, %v8016
    %v8019 = vmul.f32 0.5, %v8018
    %v8020 = vsub.f32 1.5, %v8019
    %v8021 = vmul.f32 %v8016, %v8020
    %vm8022 = vweird.f32 %v7999
    %vm8023 = vweird.f32 %v8016
    %vm8024 = vmor %vm8022, %vm8023
    %v8025 = vsel %vm8024, %v8016, %v8021
    %v8026 = vrsqrt.pop %v8000
    %v8027 = vmul.f32 %v8026, %v8000
    %v8028 = vmul.f32 %v8027, %v8026
    %v8029 = vmul.f32 0.5, %v8028
    %v8030 = vsub.f32 1.5, %v8029
    %v8031 = vmul.f32 %v8026, %v8030
    %vm8032 = vweird.f32 %v8000
    %vm8033 = vweird.f32 %v8026
    %vm8034 = vmor %vm8032, %vm8033
    %v8035 = vsel %vm8034, %v8026, %v8031
    %v8036 = vrsqrt.pop %v8001
    %v8037 = vmul.f32 %v8036, %v8001
    %v8038 = vmul.f32 %v8037, %v8036
    %v8039 = vmul.f32 0.5, %v8038
    %v8040 = vsub.f32 1.5, %v8039
    %v8041 = vmul.f32 %v8036, %v8040
    %vm8042 = vweird.f32 %v8001
    %vm8043 = vweird.f32 %v8036
    %vm8044 = vmor %vm8042, %vm8043
    %v8045 = vsel %vm8044, %v8036, %v8041
    %v8046 = vrsqrt.pop %v8002
    %v8047 = vmul.f32 %v8046, %v8002
    %v8048 = vmul.f32 %v8047, %v8046
    %v8049 = vmul.f32 0.5, %v8048
    %v8050 = vsub.f32 1.5, %v8049
    %v8051 = vmul.f32 %v8046, %v8050
    %vm8052 = vweird.f32 %v8002
    %vm8053 = vweird.f32 %v8046
    %vm8054 = vmor %vm8052, %vm8053
    %v8055 = vsel %vm8054, %v8046, %v8051
    %v8056 = vrsqrt.pop %v8003
    %v8057 = vmul.f32 %v8056, %v8003
    %v8058 = vmul.f32 %v8057, %v8056
    %v8059 = vmul.f32 0.5, %v8058
    %v8060 = vsub.f32 1.5, %v8059
    %v8061 = vmul.f32 %v8056, %v8060
    %vm8062 = vweird.f32 %v8003
    %vm8063 = vweird.f32 %v8056
    %vm8064 = vmor %vm8062, %vm8063
    %v8065 = vsel %vm8064, %v8056, %v8061
    %v8066 = vrsqrt.pop %v8004
    %v8067 = vmul.f32 %v8066, %v8004
    %v8068 = vmul.f32 %v8067, %v8066
    %v8069 = vmul.f32 0.5, %v8068
    %v8070 = vsub.f32 1.5, %v8069
    %v8071 = vmul.f32 %v8066, %v8070
    %vm8072 = vweird.f32 %v8004
    %vm8073 = vweird.f32 %v8066
    %vm8074 = vmor %vm8072, %vm8073
    %v8075 = vsel %vm8074, %v8066, %v8071
    %v8076 = vrsqrt.pop %v8005
    %v8077 = vmul.f32 %v8076, %v8005
    %v8078 = vmul.f32 %v8077, %v8076
    %v8079 = vmul.f32 0.5, %v8078
    %v8080 = vsub.f32 1.5, %v8079
    %v8081 = vmul.f32 %v8076, %v8080
    %vm8082 = vweird.f32 %v8005
    %vm8083 = vweird.f32 %v8076
    %vm8084 = vmor %vm8082, %vm8083
    %v8085 = vsel %vm8084, %v8076, %v8081
    %v8086 = vmul.f32 %v7950, %v8015
    %v8087 = vmul.f32 %v7951, %v8025
    %v8088 = vmul.f32 %v7952, %v8035
    %v8089 = vmul.f32 %v7953, %v8045
    %v8090 = vmul.f32 %v7954, %v8055
    %v8091 = vmul.f32 %v7955, %v8065
    %v8092 = vmul.f32 %v7956, %v8075
    %v8093 = vmul.f32 %v7957, %v8085
    %v8095 = vperm.slane %v7915, 0
    %v8097 = vmul.f32 %v8086, %v8095
    %v8098 = vmul.f32 %v8087, %v8095
    %v8099 = vmul.f32 %v8088, %v8095
    %v8100 = vmul.f32 %v8089, %v8095
    %v8101 = vmul.f32 %v8090, %v8095
    %v8102 = vmul.f32 %v8091, %v8095
    %v8103 = vmul.f32 %v8092, %v8095
    %v8104 = vmul.f32 %v8093, %v8095
    %v8106 = vperm.slane %v7917, 0
    %v8108 = vadd.f32 %v8097, %v8106
    %v8109 = vadd.f32 %v8098, %v8106
    %v8110 = vadd.f32 %v8099, %v8106
    %v8111 = vadd.f32 %v8100, %v8106
    %v8112 = vadd.f32 %v8101, %v8106
    %v8113 = vadd.f32 %v8102, %v8106
    %v8114 = vadd.f32 %v8103, %v8106
    %v8115 = vadd.f32 %v8104, %v8106
    %v8124 = vrot.slane %v8109, 7
    %vm8125 = vcmask 1041409
    %v8126 = vsel %vm8125, %v8124, %v8108
    %v8127 = vrot.slane %v8110, 6
    %vm8128 = vcmask 1042434
    %v8129 = vsel %vm8128, %v8127, %v8126
    %v8130 = vrot.slane %v8111, 5
    %vm8131 = vcmask 1043459
    %v8132 = vsel %vm8131, %v8130, %v8129
    %v8133 = vrot.slane %v8112, 4
    %vm8134 = vcmask 1044484
    %v8135 = vsel %vm8134, %v8133, %v8132
    %v8136 = vrot.slane %v8113, 3
    %vm8137 = vcmask 1045509
    %v8138 = vsel %vm8137, %v8136, %v8135
    %v8139 = vrot.slane %v8114, 2
    %vm8140 = vcmask 1046534
    %v8141 = vsel %vm8140, %v8139, %v8138
    %v8142 = vrot.slane %v8115, 1
    %vm8143 = vcmask 1047559
    %v8144 = vsel %vm8143, %v8142, %v8141
    %8146 = vst.msk [vmem:[#allocation2] sm:$0xff] %vm149, %v8144
    // Predicated region
    $region54: #{tpu_custom_call.1} parent=1 // pred_check
      _
    $region55: #{tpu_custom_call.1} parent=1 // pred_check_branch
      %8148 = sbr.rel (0) target = $region57
    $region56: #{tpu_custom_call.1} parent=1 // pred_region
      %8150 = vsyncadd [#allocation3], 0
      %s8152 = sshll.u32 [#allocation2], 4
      %s8153 = int_to_ptr.vmem [resolvable:$true] %s8152
      %s8154 = sshll.u32 %s13, 4
      %s8155 = int_to_ptr.hbm [resolvable:$true] %s8154
      %8157 = dma.vmem_to_hbm [thread:$0]  %s8153, 128, %s8155, [#allocation3]
    $region57: #{tpu_custom_call.1} parent=1 // pred_fallthru
      _
    // Predicated region
    $region58: #{tpu_custom_call.1} parent=1 // pred_check
      _
    $region59: #{tpu_custom_call.1} parent=1 // pred_check_branch
      %8159 = sbr.rel (0) target = $region61
    $region60: #{tpu_custom_call.1} parent=1 // pred_region
      %8161 = dma.done [#allocation3], 128
    $region61: #{tpu_custom_call.1} parent=1 // pred_fallthru
      _
    %8162 = vsyncpa [#allocation3], 1

</llo_original>
